<compile_context>
chip_gen: v7x
topology: tpu7x:2x2x1
jax: 0.10.0
libtpu: 0.0.40
codegen_flags: <defaults>
</compile_context>

<pallas_src>
import numpy as np
import jax
import jax.numpy as jnp
from jax import lax
from jax.experimental import pallas as pl
from jax.experimental.pallas import tpu as pltpu

# ----- model hyper-parameters (the LSTM input size must be num_S*6*5 == 90
#       => num_S == num_T == 3) -----
SAMPLING_RATE = 1000
CHN_NUM = 4
NUM_T = 3
NUM_S = 3
B = 2
T_LEN = 200

_WIN = [int(w * SAMPLING_RATE) for w in
        [0.5, 0.25, 0.125, 0.0625, 0.03125, 0.015625, 0.0078125]]
# (kernel_width, padding) for Tception2..Tception7 (the branches used in forward()).
BRANCHES = [
    (_WIN[1],     125),
    (_WIN[2] + 1,  63),
    (_WIN[3],      31),
    (_WIN[4] + 1,  16),
    (_WIN[5] + 1,   8),
    (_WIN[6] + 1,   4),
]


# --------------------------- the fused Pallas kernel -------------------------

def _tsception2_kernel(w8_ref, wt_ref, wsp_ref, c_ref, pt_ref, ps_ref, lstm_ref,
                       o_ref, xcol):
    """Whole TSception2 forward (eval mode) for ONE batch element (grid over batch).

    w8_ref  : (chn, 8, W8L)     8-shear of the 125-padded input: w8[ch, r, q] = xpad[ch, r+q]
    wt_ref  : (72, chn*KP)      block-diag temporal weights (6 branches stacked, per EEG chan)
    wsp_ref : (54, 72)          [Sception1 ; Sception2 row0 ; Sception2 row1]
    c_ref   : (72, 4)           [t_bias | sception_bias | bn_scale | bn_shift] (last 3: rows 0-53)
    pt_ref  : (WP, 24)          AvgPool(1,16)/(1,8) matrix (invalid conv columns zeroed)
    ps_ref  : (24, 3)           AvgPool(1,8)/(1,8) matrix
    lstm_ref: (54+45+2, 180)    [Wih folded per source | Whh.T | gate bias | head row]
    o_ref   : (1, 1)            output scalar for this batch element
    xcol    : (chn*KP, WP)      VMEM scratch: im2col matrix built in-kernel
    """
    chn = w8_ref.shape[0]                      # 4
    KP = wt_ref.shape[1] // chn                # 256 (K padded)
    WP = xcol.shape[1]                         # 256 (conv output positions, padded)
    groups = KP // 8                           # 32
    C3 = wsp_ref.shape[0]                      # 54
    hid = lstm_ref.shape[1] // 4               # 45
    seqlen = ps_ref.shape[1]                   # 3

    # ---- expand im2col in VMEM (static slices only: xcol[ch*KP+k, p] = xpad[ch, k+p]) ----
    for ch in range(chn):
        base = ch * KP
        for g in range(groups):
            xcol[base + 8 * g: base + 8 * g + 8, :] = w8_ref[ch, :, 8 * g: 8 * g + WP]

    # ---- temporal inception (all branches x all EEG channels) in ONE matmul ----
    bt = c_ref[:, 0:1]                                                         # (72, 1)
    y = jnp.dot(wt_ref[...], xcol[...], preferred_element_type=jnp.float32)   # (72, WP)
    y = jnp.maximum(y + bt, 0.0)
    # AvgPool(1,16)/(1,8): one matmul with the small per-sample pool matrix
    tp = jnp.dot(y, pt_ref[...], preferred_element_type=jnp.float32)          # (72, 24)

    # ---- Sception1 + Sception2 (both height rows) in ONE matmul ----
    b_sp = c_ref[0:C3, 1:2]
    bn_scale = c_ref[0:C3, 2:3]
    bn_shift = c_ref[0:C3, 3:4]
    z = jnp.dot(wsp_ref[...], tp, preferred_element_type=jnp.float32) + b_sp  # (54, 24)
    # ReLU -> AvgPool(1,8)/(1,8) -> BatchNorm(eval) -> pow(2) -> log
    zp = jnp.dot(jnp.maximum(z, 0.0), ps_ref[...],
                 preferred_element_type=jnp.float32)                          # (54, 3)
    zb = zp * bn_scale + bn_shift
    yfeat = jnp.log(zb * zb)                                                  # (54, 3)

    # ---- LSTM input projection for ALL timesteps (one matmul) + hoisted bias ----
    wih = lstm_ref[0:C3, :]                                                   # (54, 180)
    whh = lstm_ref[C3:C3 + hid, :]                                            # (45, 180)
    bl = lstm_ref[C3 + hid:C3 + hid + 1, :]                                   # (1, 180)
    head = lstm_ref[C3 + hid + 1:C3 + hid + 2, :]                             # (1, 180)
    xg = jnp.dot(yfeat.T, wih, preferred_element_type=jnp.float32) + bl       # (3, 180)

    # ---- LSTM(90, 45) recurrence for this batch row + Linear + ReLU ----
    h = jnp.zeros((1, hid), jnp.float32)
    c = jnp.zeros((1, hid), jnp.float32)
    for t in range(seqlen):                                                   # static unroll
        g_all = xg[t:t + 1, :] + jnp.dot(h, whh, preferred_element_type=jnp.float32)
        i_g = pl.reciprocal(1.0 + jnp.exp(-g_all[:, 0:hid]), approx=True)
        f_g = pl.reciprocal(1.0 + jnp.exp(-g_all[:, hid:2 * hid]), approx=True)
        g_g = jnp.tanh(g_all[:, 2 * hid:3 * hid])
        o_g = pl.reciprocal(1.0 + jnp.exp(-g_all[:, 3 * hid:4 * hid]), approx=True)
        c = f_g * c + i_g * g_g
        h = o_g * jnp.tanh(c)

    wlin = head[:, 0:hid]
    blin = head[:, hid:hid + 1]
    pred = jnp.sum(h * wlin, axis=1, keepdims=True) + blin                    # (1, 1)
    o_ref[...] = jnp.maximum(pred, 0.0)


# --------------------------- parameters -------------------------------------

def init_params(key):
    keys = jax.random.split(key, 10)
    params = {}
    tconvs = []
    for idx, (K, _) in enumerate(BRANCHES):
        kw, kb = jax.random.split(keys[idx])
        w = 0.1 * jax.random.normal(kw, (NUM_T, K), jnp.float32)
        b = 0.1 * jax.random.normal(kb, (NUM_T,), jnp.float32)
        tconvs.append((w, b))
    params['tception'] = tconvs

    C = NUM_S * 6
    k1, k2, k3, k4 = jax.random.split(keys[6], 4)
    params['s1_w'] = 0.1 * jax.random.normal(k1, (C, C, CHN_NUM), jnp.float32)       # (O, I, kh)
    params['s1_b'] = 0.1 * jax.random.normal(k2, (C,), jnp.float32)
    params['s2_w'] = 0.1 * jax.random.normal(k3, (C, C, CHN_NUM // 2), jnp.float32)  # (O, I, kh)
    params['s2_b'] = 0.1 * jax.random.normal(k4, (C,), jnp.float32)

    kb1, kb2, kb3, kb4 = jax.random.split(keys[7], 4)
    params['bn_gamma'] = 1.0 + 0.1 * jax.random.normal(kb1, (C,), jnp.float32)
    params['bn_beta'] = 0.5 + 0.1 * jax.random.normal(kb2, (C,), jnp.float32)
    params['bn_mean'] = 0.05 * jax.random.normal(kb3, (C,), jnp.float32)
    params['bn_var'] = 1.0 + 0.1 * jax.random.uniform(kb4, (C,), jnp.float32)

    IN, HID = 90, 45
    kl = jax.random.split(keys[8], 4)
    params['lstm_wih'] = 0.1 * jax.random.normal(kl[0], (4 * HID, IN), jnp.float32)   # [i,f,g,o]
    params['lstm_whh'] = 0.1 * jax.random.normal(kl[1], (4 * HID, HID), jnp.float32)
    params['lstm_bih'] = 0.05 * jax.random.normal(kl[2], (4 * HID,), jnp.float32)
    params['lstm_bhh'] = 0.05 * jax.random.normal(kl[3], (4 * HID,), jnp.float32)

    km1, km2 = jax.random.split(keys[9])
    params['lin_w'] = 0.1 * jax.random.normal(km1, (1, HID), jnp.float32)
    params['lin_b'] = 0.1 * jax.random.normal(km2, (1,), jnp.float32)
    return params


# --------------------------- forward (Pallas) --------------------------------

def tsception2_forward(x, params):
    # x: (1, B, chnNum, T)  [torch.squeeze(x, 0) then unsqueeze(1)]
    if x.ndim == 4:
        x = jnp.squeeze(x, axis=0)
    batch, chn, tlen = x.shape
    assert chn == CHN_NUM, "Sception2 slicing assumes chnNum == 4"
    C = NUM_T * len(BRANCHES)                   # 18
    K_MAX, PAD_MAX = BRANCHES[0]                # 250, 125
    HID = 45
    half = chn // 2

    wconv = tlen + 2 * PAD_MAX - K_MAX + 1      # 201 valid conv positions (same for all branches)
    wpool = (wconv - 16) // 8 + 1               # 24
    seqlen = (wpool - 8) // 8 + 1               # 3
    KP = ((K_MAX + 7) // 8) * 8                 # 256 (K padded to a multiple of 8)
    WP = ((wconv + 127) // 128) * 128           # 256 (conv positions padded to 128 lanes)
    W8L = (((KP - 8) + WP + 127) // 128) * 128  # 512 (shear row length)
    GROUPS = KP // 8

    # ---- 8-shear of the zero-padded input: w8[b, ch, r, q] = xpad[b, ch, r + q] --------
    # (128 KB total; the full im2col is expanded inside the kernel, in VMEM)
    rpad = W8L + 8 - PAD_MAX - tlen
    xpad = jnp.pad(x.astype(jnp.float32), ((0, 0), (0, 0), (PAD_MAX, rpad)))
    w8 = jnp.stack([xpad[:, :, r:r + W8L] for r in range(8)], axis=2)    # (B, chn, 8, W8L)

    # ---- fuse the 6 temporal branches: zero-pad each (3, K) filter into the common
    #      KP window at offset (125 - pad_j); block-diagonal over EEG channels ----------
    wt = jnp.zeros((C, KP), jnp.float32)
    bt = jnp.zeros((C,), jnp.float32)
    for j, ((K, pad), (w, b)) in enumerate(zip(BRANCHES, params['tception'])):
        assert tlen + 2 * pad - K + 1 == wconv
        off = PAD_MAX - pad
        wt = wt.at[NUM_T * j:NUM_T * (j + 1), off:off + K].set(w)
        bt = bt.at[NUM_T * j:NUM_T * (j + 1)].set(b)
    wt72 = jnp.kron(jnp.eye(chn, dtype=jnp.float32), wt)                # (72, chn*KP)

    # ---- spatial conv weights: one (54, 72) matrix with rows [z1 ; z2 row0 ; z2 row1] --
    w1 = jnp.transpose(params['s1_w'], (0, 2, 1)).reshape(C, chn * C)   # (18, 72)
    w2 = jnp.transpose(params['s2_w'], (0, 2, 1)).reshape(C, half * C)  # (18, 36)
    w_sp = jnp.zeros((3 * C, chn * C), jnp.float32)
    w_sp = w_sp.at[0:C, :].set(w1)
    w_sp = w_sp.at[C:2 * C, 0:half * C].set(w2)
    w_sp = w_sp.at[2 * C:3 * C, half * C:chn * C].set(w2)

    # ---- per-row constants: [t_bias | sception_bias | bn_scale | bn_shift] -------------
    eps = 1e-5
    scale = params['bn_gamma'] / jnp.sqrt(params['bn_var'] + eps)
    shift = params['bn_beta'] - params['bn_mean'] * scale
    c_pack = jnp.zeros((chn * C, 4), jnp.float32)
    c_pack = c_pack.at[:, 0].set(jnp.tile(bt, chn))
    c_pack = c_pack.at[0:3 * C, 1].set(
        jnp.concatenate([params['s1_b'], params['s2_b'], params['s2_b']]))
    c_pack = c_pack.at[0:3 * C, 2].set(jnp.tile(scale, 3))
    c_pack = c_pack.at[0:3 * C, 3].set(jnp.tile(shift, 3))

    # ---- small per-sample pooling matrices (batch handled by the grid) -----------------
    p_t = np.zeros((WP, wpool), np.float32)
    for q in range(wpool):
        p_t[8 * q: 8 * q + 16, q] = 1.0 / 16.0        # rows >= wconv stay zero
    pool_t = jnp.asarray(p_t)                                            # (WP, 24)
    p_s = np.zeros((wpool, seqlen), np.float32)
    for q in range(seqlen):
        p_s[8 * q: 8 * q + 8, q] = 1.0 / 8.0
    pool_s = jnp.asarray(p_s)                                            # (24, 3)

    # ---- LSTM / head parameter pack (54 + 45 + 2, 180) ---------------------------------
    # LSTM feature index = o*5 + h5 with h5: 0 -> z1, 1/3 -> z2/z3 row0, 2/4 -> z2/z3 row1.
    # z3 == z2 (eval mode), so the duplicated weight rows are pre-summed here.
    wihT = params['lstm_wih'].T.reshape(C, 5, 4 * HID)
    wih_pack = jnp.concatenate([wihT[:, 0, :],
                                wihT[:, 1, :] + wihT[:, 3, :],
                                wihT[:, 2, :] + wihT[:, 4, :]], axis=0)  # (54, 180)
    whhT = params['lstm_whh'].T                                          # (45, 180)
    bl = (params['lstm_bih'] + params['lstm_bhh']).reshape(1, 4 * HID)
    head = jnp.zeros((1, 4 * HID), jnp.float32)
    head = head.at[0, 0:HID].set(params['lin_w'][0])
    head = head.at[0, HID].set(params['lin_b'][0])
    lstm_pack = jnp.concatenate([wih_pack, whhT, bl, head], axis=0)      # (101, 180)

    out = pl.pallas_call(
        _tsception2_kernel,
        out_shape=jax.ShapeDtypeStruct((batch, 1, 1), jnp.float32),
        grid=(batch,),
        in_specs=[
            pl.BlockSpec((None, chn, 8, W8L), lambda b: (b, 0, 0, 0)),   # w8 (per batch)
            pl.BlockSpec((chn * C, chn * KP), lambda b: (0, 0)),         # wt72
            pl.BlockSpec((3 * C, chn * C), lambda b: (0, 0)),            # w_sp
            pl.BlockSpec((chn * C, 4), lambda b: (0, 0)),                # c_pack
            pl.BlockSpec((WP, wpool), lambda b: (0, 0)),                 # pool_t
            pl.BlockSpec((wpool, seqlen), lambda b: (0, 0)),             # pool_s
            pl.BlockSpec((3 * C + HID + 2, 4 * HID), lambda b: (0, 0)),  # lstm_pack
        ],
        out_specs=pl.BlockSpec((None, 1, 1), lambda b: (b, 0, 0)),
        scratch_shapes=[pltpu.VMEM((chn * KP, WP), jnp.float32)],        # im2col scratch
        compiler_params=pltpu.CompilerParams(dimension_semantics=("parallel",)),
    )(w8, wt72, w_sp, c_pack, pool_t, pool_s, lstm_pack)

    # torch: squeeze -> (B,), unsqueeze(0) -> (1, B)
    return out[:, 0, 0][None, :]


# --------------------------- pure-JAX reference ------------------------------

def reference_forward(x, params):
    if x.ndim == 4:
        x = jnp.squeeze(x, axis=0)
    batch, chn, _ = x.shape
    xr = x[:, None, :, :].astype(jnp.float32)
    hp = lax.Precision.HIGHEST
    outs = []
    for (K, pad), (w, b) in zip(BRANCHES, params['tception']):
        wk = w.reshape(NUM_T, 1, 1, K)
        y = lax.conv_general_dilated(xr, wk, (1, 1), ((0, 0), (pad, pad)),
                                     dimension_numbers=('NCHW', 'OIHW', 'NCHW'),
                                     precision=hp)
        y = jnp.maximum(y + b.reshape(1, NUM_T, 1, 1), 0.0)
        y = lax.reduce_window(y, 0.0, lax.add, (1, 1, 1, 16), (1, 1, 1, 8), 'VALID') / 16.0
        outs.append(y)
    out_t = jnp.concatenate(outs, axis=1)
    C = NUM_S * 6

    def scept(w, b, kh, stride):
        z = lax.conv_general_dilated(out_t, w.reshape(C, C, kh, 1), (stride, 1), 'VALID',
                                     dimension_numbers=('NCHW', 'OIHW', 'NCHW'),
                                     precision=hp)
        z = jnp.maximum(z + b.reshape(1, C, 1, 1), 0.0)
        return lax.reduce_window(z, 0.0, lax.add, (1, 1, 1, 8), (1, 1, 1, 8), 'VALID') / 8.0

    z1 = scept(params['s1_w'], params['s1_b'], chn, 1)
    z2 = scept(params['s2_w'], params['s2_b'], chn // 2, chn // 2)
    out_final = jnp.concatenate([z1, z2, z2], axis=2)

    eps = 1e-5
    s = params['bn_gamma'] / jnp.sqrt(params['bn_var'] + eps)
    y = (out_final - params['bn_mean'].reshape(1, C, 1, 1)) * s.reshape(1, C, 1, 1) \
        + params['bn_beta'].reshape(1, C, 1, 1)
    y = jnp.log(y * y)
    seqlen = y.shape[3]
    seq = jnp.transpose(y, (0, 3, 1, 2)).reshape(batch, seqlen, -1)

    HID = 45
    wih, whh = params['lstm_wih'], params['lstm_whh']
    bsum = params['lstm_bih'] + params['lstm_bhh']
    h = jnp.zeros((batch, HID), jnp.float32)
    c = jnp.zeros((batch, HID), jnp.float32)
    for t in range(seqlen):
        g = (jnp.dot(seq[:, t, :], wih.T, precision=hp)
             + jnp.dot(h, whh.T, precision=hp) + bsum)
        i_g = jax.nn.sigmoid(g[:, 0:HID])
        f_g = jax.nn.sigmoid(g[:, HID:2 * HID])
        g_g = jnp.tanh(g[:, 2 * HID:3 * HID])
        o_g = jax.nn.sigmoid(g[:, 3 * HID:4 * HID])
        c = f_g * c + i_g * g_g
        h = o_g * jnp.tanh(c)
    pred = jnp.maximum(jnp.dot(h, params['lin_w'].T, precision=hp) + params['lin_b'], 0.0)
    return pred[:, 0][None, :]


# --------------------------- main --------------------------------------------

if __name__ == "__main__":
    key = jax.random.PRNGKey(0)
    pkey, xkey = jax.random.split(key)
    params = init_params(pkey)
    x = jax.random.normal(xkey, (1, B, CHN_NUM, T_LEN), jnp.float32)

    fwd = jax.jit(tsception2_forward)
    pred = jax.block_until_ready(fwd(x, params))

    ref = jax.block_until_ready(reference_forward(x, params))

    assert pred.shape == (1, B), pred.shape
    assert bool(jnp.all(jnp.isfinite(pred))), "non-finite output"
    assert bool(jnp.allclose(pred, ref, rtol=5e-2, atol=5e-2)), (pred, ref)
    print("KERNEL_OK")
</pallas_src>

<mosaic_0001>
module attributes {stable_mosaic.version = 11 : i64} {
  func.func @_tsception2_kernel(%arg0: i32, %arg1: memref<1x4x8x512xf32, #tpu.memory_space<vmem>>, %arg2: memref<72x1024xf32, #tpu.memory_space<vmem>>, %arg3: memref<54x72xf32, #tpu.memory_space<vmem>>, %arg4: memref<72x4xf32, #tpu.memory_space<vmem>>, %arg5: memref<256x24xf32, #tpu.memory_space<vmem>>, %arg6: memref<24x3xf32, #tpu.memory_space<vmem>>, %arg7: memref<101x180xf32, #tpu.memory_space<vmem>>, %arg8: memref<1x1x1xf32, #tpu.memory_space<vmem>>, %arg9: memref<1024x256xf32, #tpu.memory_space<vmem>>) attributes {dimension_semantics = [#tpu.dimension_semantics<parallel>], iteration_bounds = array<i64: 2>, scalar_prefetch = 0 : i64, scratch_operands = 1 : i64, tpu.core_type = #tpu.core_type<tc>, window_params = [{transform_indices = @transform_0, window_bounds = array<i64: 1, 4, 8, 512>}, {pipeline_mode = #tpu.pipeline_mode<synchronous>, transform_indices = @transform_1, window_bounds = array<i64: 72, 1024>}, {pipeline_mode = #tpu.pipeline_mode<synchronous>, transform_indices = @transform_2, window_bounds = array<i64: 54, 72>}, {pipeline_mode = #tpu.pipeline_mode<synchronous>, transform_indices = @transform_3, window_bounds = array<i64: 72, 4>}, {pipeline_mode = #tpu.pipeline_mode<synchronous>, transform_indices = @transform_4, window_bounds = array<i64: 256, 24>}, {pipeline_mode = #tpu.pipeline_mode<synchronous>, transform_indices = @transform_5, window_bounds = array<i64: 24, 3>}, {pipeline_mode = #tpu.pipeline_mode<synchronous>, transform_indices = @transform_6, window_bounds = array<i64: 101, 180>}, {transform_indices = @transform_7, window_bounds = array<i64: 1, 1, 1>}]} {
    %c0 = arith.constant 0 : index
    %c0_0 = arith.constant 0 : index
    %c0_1 = arith.constant 0 : index
    %c0_2 = arith.constant 0 : index
    %0 = vector.load %arg1[%c0, %c0_0, %c0_1, %c0_2] : memref<1x4x8x512xf32, #tpu.memory_space<vmem>>, vector<1x1x8x256xf32>
    %1 = vector.shape_cast %0 : vector<1x1x8x256xf32> to vector<8x256xf32>
    %c0_3 = arith.constant 0 : index
    %c0_4 = arith.constant 0 : index
    %2 = vector.load %arg9[%c0_3, %c0_4] : memref<1024x256xf32, #tpu.memory_space<vmem>>, vector<8x256xf32>
    tpu.vector_store %arg9[%c0_3, %c0_4], %1 {strides = array<i32>} : memref<1024x256xf32, #tpu.memory_space<vmem>>, vector<8x256xf32>,
    %c0_5 = arith.constant 0 : index
    %c0_6 = arith.constant 0 : index
    %c0_7 = arith.constant 0 : index
    %c8 = arith.constant 8 : index
    %3 = vector.load %arg1[%c0_5, %c0_6, %c0_7, %c8] : memref<1x4x8x512xf32, #tpu.memory_space<vmem>>, vector<1x1x8x256xf32>
    %4 = vector.shape_cast %3 : vector<1x1x8x256xf32> to vector<8x256xf32>
    %c8_8 = arith.constant 8 : index
    %c0_9 = arith.constant 0 : index
    %5 = vector.load %arg9[%c8_8, %c0_9] : memref<1024x256xf32, #tpu.memory_space<vmem>>, vector<8x256xf32>
    tpu.vector_store %arg9[%c8_8, %c0_9], %4 {strides = array<i32>} : memref<1024x256xf32, #tpu.memory_space<vmem>>, vector<8x256xf32>,
    %c0_10 = arith.constant 0 : index
    %c0_11 = arith.constant 0 : index
    %c0_12 = arith.constant 0 : index
    %c16 = arith.constant 16 : index
    %6 = vector.load %arg1[%c0_10, %c0_11, %c0_12, %c16] : memref<1x4x8x512xf32, #tpu.memory_space<vmem>>, vector<1x1x8x256xf32>
    %7 = vector.shape_cast %6 : vector<1x1x8x256xf32> to vector<8x256xf32>
    %c16_13 = arith.constant 16 : index
    %c0_14 = arith.constant 0 : index
    %8 = vector.load %arg9[%c16_13, %c0_14] : memref<1024x256xf32, #tpu.memory_space<vmem>>, vector<8x256xf32>
    tpu.vector_store %arg9[%c16_13, %c0_14], %7 {strides = array<i32>} : memref<1024x256xf32, #tpu.memory_space<vmem>>, vector<8x256xf32>,
    %c0_15 = arith.constant 0 : index
    %c0_16 = arith.constant 0 : index
    %c0_17 = arith.constant 0 : index
    %c24 = arith.constant 24 : index
    %9 = vector.load %arg1[%c0_15, %c0_16, %c0_17, %c24] : memref<1x4x8x512xf32, #tpu.memory_space<vmem>>, vector<1x1x8x256xf32>
    %10 = vector.shape_cast %9 : vector<1x1x8x256xf32> to vector<8x256xf32>
    %c24_18 = arith.constant 24 : index
    %c0_19 = arith.constant 0 : index
    %11 = vector.load %arg9[%c24_18, %c0_19] : memref<1024x256xf32, #tpu.memory_space<vmem>>, vector<8x256xf32>
    tpu.vector_store %arg9[%c24_18, %c0_19], %10 {strides = array<i32>} : memref<1024x256xf32, #tpu.memory_space<vmem>>, vector<8x256xf32>,
    %c0_20 = arith.constant 0 : index
    %c0_21 = arith.constant 0 : index
    %c0_22 = arith.constant 0 : index
    %c32 = arith.constant 32 : index
    %12 = vector.load %arg1[%c0_20, %c0_21, %c0_22, %c32] : memref<1x4x8x512xf32, #tpu.memory_space<vmem>>, vector<1x1x8x256xf32>
    %13 = vector.shape_cast %12 : vector<1x1x8x256xf32> to vector<8x256xf32>
    %c32_23 = arith.constant 32 : index
    %c0_24 = arith.constant 0 : index
    %14 = vector.load %arg9[%c32_23, %c0_24] : memref<1024x256xf32, #tpu.memory_space<vmem>>, vector<8x256xf32>
    tpu.vector_store %arg9[%c32_23, %c0_24], %13 {strides = array<i32>} : memref<1024x256xf32, #tpu.memory_space<vmem>>, vector<8x256xf32>,
    %c0_25 = arith.constant 0 : index
    %c0_26 = arith.constant 0 : index
    %c0_27 = arith.constant 0 : index
    %c40 = arith.constant 40 : index
    %15 = vector.load %arg1[%c0_25, %c0_26, %c0_27, %c40] : memref<1x4x8x512xf32, #tpu.memory_space<vmem>>, vector<1x1x8x256xf32>
    %16 = vector.shape_cast %15 : vector<1x1x8x256xf32> to vector<8x256xf32>
    %c40_28 = arith.constant 40 : index
    %c0_29 = arith.constant 0 : index
    %17 = vector.load %arg9[%c40_28, %c0_29] : memref<1024x256xf32, #tpu.memory_space<vmem>>, vector<8x256xf32>
    tpu.vector_store %arg9[%c40_28, %c0_29], %16 {strides = array<i32>} : memref<1024x256xf32, #tpu.memory_space<vmem>>, vector<8x256xf32>,
    %c0_30 = arith.constant 0 : index
    %c0_31 = arith.constant 0 : index
    %c0_32 = arith.constant 0 : index
    %c48 = arith.constant 48 : index
    %18 = vector.load %arg1[%c0_30, %c0_31, %c0_32, %c48] : memref<1x4x8x512xf32, #tpu.memory_space<vmem>>, vector<1x1x8x256xf32>
    %19 = vector.shape_cast %18 : vector<1x1x8x256xf32> to vector<8x256xf32>
    %c48_33 = arith.constant 48 : index
    %c0_34 = arith.constant 0 : index
    %20 = vector.load %arg9[%c48_33, %c0_34] : memref<1024x256xf32, #tpu.memory_space<vmem>>, vector<8x256xf32>
    tpu.vector_store %arg9[%c48_33, %c0_34], %19 {strides = array<i32>} : memref<1024x256xf32, #tpu.memory_space<vmem>>, vector<8x256xf32>,
    %c0_35 = arith.constant 0 : index
    %c0_36 = arith.constant 0 : index
    %c0_37 = arith.constant 0 : index
    %c56 = arith.constant 56 : index
    %21 = vector.load %arg1[%c0_35, %c0_36, %c0_37, %c56] : memref<1x4x8x512xf32, #tpu.memory_space<vmem>>, vector<1x1x8x256xf32>
    %22 = vector.shape_cast %21 : vector<1x1x8x256xf32> to vector<8x256xf32>
    %c56_38 = arith.constant 56 : index
    %c0_39 = arith.constant 0 : index
    %23 = vector.load %arg9[%c56_38, %c0_39] : memref<1024x256xf32, #tpu.memory_space<vmem>>, vector<8x256xf32>
    tpu.vector_store %arg9[%c56_38, %c0_39], %22 {strides = array<i32>} : memref<1024x256xf32, #tpu.memory_space<vmem>>, vector<8x256xf32>,
    %c0_40 = arith.constant 0 : index
    %c0_41 = arith.constant 0 : index
    %c0_42 = arith.constant 0 : index
    %c64 = arith.constant 64 : index
    %24 = vector.load %arg1[%c0_40, %c0_41, %c0_42, %c64] : memref<1x4x8x512xf32, #tpu.memory_space<vmem>>, vector<1x1x8x256xf32>
    %25 = vector.shape_cast %24 : vector<1x1x8x256xf32> to vector<8x256xf32>
    %c64_43 = arith.constant 64 : index
    %c0_44 = arith.constant 0 : index
    %26 = vector.load %arg9[%c64_43, %c0_44] : memref<1024x256xf32, #tpu.memory_space<vmem>>, vector<8x256xf32>
    tpu.vector_store %arg9[%c64_43, %c0_44], %25 {strides = array<i32>} : memref<1024x256xf32, #tpu.memory_space<vmem>>, vector<8x256xf32>,
    %c0_45 = arith.constant 0 : index
    %c0_46 = arith.constant 0 : index
    %c0_47 = arith.constant 0 : index
    %c72 = arith.constant 72 : index
    %27 = vector.load %arg1[%c0_45, %c0_46, %c0_47, %c72] : memref<1x4x8x512xf32, #tpu.memory_space<vmem>>, vector<1x1x8x256xf32>
    %28 = vector.shape_cast %27 : vector<1x1x8x256xf32> to vector<8x256xf32>
    %c72_48 = arith.constant 72 : index
    %c0_49 = arith.constant 0 : index
    %29 = vector.load %arg9[%c72_48, %c0_49] : memref<1024x256xf32, #tpu.memory_space<vmem>>, vector<8x256xf32>
    tpu.vector_store %arg9[%c72_48, %c0_49], %28 {strides = array<i32>} : memref<1024x256xf32, #tpu.memory_space<vmem>>, vector<8x256xf32>,
    %c0_50 = arith.constant 0 : index
    %c0_51 = arith.constant 0 : index
    %c0_52 = arith.constant 0 : index
    %c80 = arith.constant 80 : index
    %30 = vector.load %arg1[%c0_50, %c0_51, %c0_52, %c80] : memref<1x4x8x512xf32, #tpu.memory_space<vmem>>, vector<1x1x8x256xf32>
    %31 = vector.shape_cast %30 : vector<1x1x8x256xf32> to vector<8x256xf32>
    %c80_53 = arith.constant 80 : index
    %c0_54 = arith.constant 0 : index
    %32 = vector.load %arg9[%c80_53, %c0_54] : memref<1024x256xf32, #tpu.memory_space<vmem>>, vector<8x256xf32>
    tpu.vector_store %arg9[%c80_53, %c0_54], %31 {strides = array<i32>} : memref<1024x256xf32, #tpu.memory_space<vmem>>, vector<8x256xf32>,
    %c0_55 = arith.constant 0 : index
    %c0_56 = arith.constant 0 : index
    %c0_57 = arith.constant 0 : index
    %c88 = arith.constant 88 : index
    %33 = vector.load %arg1[%c0_55, %c0_56, %c0_57, %c88] : memref<1x4x8x512xf32, #tpu.memory_space<vmem>>, vector<1x1x8x256xf32>
    %34 = vector.shape_cast %33 : vector<1x1x8x256xf32> to vector<8x256xf32>
    %c88_58 = arith.constant 88 : index
    %c0_59 = arith.constant 0 : index
    %35 = vector.load %arg9[%c88_58, %c0_59] : memref<1024x256xf32, #tpu.memory_space<vmem>>, vector<8x256xf32>
    tpu.vector_store %arg9[%c88_58, %c0_59], %34 {strides = array<i32>} : memref<1024x256xf32, #tpu.memory_space<vmem>>, vector<8x256xf32>,
    %c0_60 = arith.constant 0 : index
    %c0_61 = arith.constant 0 : index
    %c0_62 = arith.constant 0 : index
    %c96 = arith.constant 96 : index
    %36 = vector.load %arg1[%c0_60, %c0_61, %c0_62, %c96] : memref<1x4x8x512xf32, #tpu.memory_space<vmem>>, vector<1x1x8x256xf32>
    %37 = vector.shape_cast %36 : vector<1x1x8x256xf32> to vector<8x256xf32>
    %c96_63 = arith.constant 96 : index
    %c0_64 = arith.constant 0 : index
    %38 = vector.load %arg9[%c96_63, %c0_64] : memref<1024x256xf32, #tpu.memory_space<vmem>>, vector<8x256xf32>
    tpu.vector_store %arg9[%c96_63, %c0_64], %37 {strides = array<i32>} : memref<1024x256xf32, #tpu.memory_space<vmem>>, vector<8x256xf32>,
    %c0_65 = arith.constant 0 : index
    %c0_66 = arith.constant 0 : index
    %c0_67 = arith.constant 0 : index
    %c104 = arith.constant 104 : index
    %39 = vector.load %arg1[%c0_65, %c0_66, %c0_67, %c104] : memref<1x4x8x512xf32, #tpu.memory_space<vmem>>, vector<1x1x8x256xf32>
    %40 = vector.shape_cast %39 : vector<1x1x8x256xf32> to vector<8x256xf32>
    %c104_68 = arith.constant 104 : index
    %c0_69 = arith.constant 0 : index
    %41 = vector.load %arg9[%c104_68, %c0_69] : memref<1024x256xf32, #tpu.memory_space<vmem>>, vector<8x256xf32>
    tpu.vector_store %arg9[%c104_68, %c0_69], %40 {strides = array<i32>} : memref<1024x256xf32, #tpu.memory_space<vmem>>, vector<8x256xf32>,
    %c0_70 = arith.constant 0 : index
    %c0_71 = arith.constant 0 : index
    %c0_72 = arith.constant 0 : index
    %c112 = arith.constant 112 : index
    %42 = vector.load %arg1[%c0_70, %c0_71, %c0_72, %c112] : memref<1x4x8x512xf32, #tpu.memory_space<vmem>>, vector<1x1x8x256xf32>
    %43 = vector.shape_cast %42 : vector<1x1x8x256xf32> to vector<8x256xf32>
    %c112_73 = arith.constant 112 : index
    %c0_74 = arith.constant 0 : index
    %44 = vector.load %arg9[%c112_73, %c0_74] : memref<1024x256xf32, #tpu.memory_space<vmem>>, vector<8x256xf32>
    tpu.vector_store %arg9[%c112_73, %c0_74], %43 {strides = array<i32>} : memref<1024x256xf32, #tpu.memory_space<vmem>>, vector<8x256xf32>,
    %c0_75 = arith.constant 0 : index
    %c0_76 = arith.constant 0 : index
    %c0_77 = arith.constant 0 : index
    %c120 = arith.constant 120 : index
    %45 = vector.load %arg1[%c0_75, %c0_76, %c0_77, %c120] : memref<1x4x8x512xf32, #tpu.memory_space<vmem>>, vector<1x1x8x256xf32>
    %46 = vector.shape_cast %45 : vector<1x1x8x256xf32> to vector<8x256xf32>
    %c120_78 = arith.constant 120 : index
    %c0_79 = arith.constant 0 : index
    %47 = vector.load %arg9[%c120_78, %c0_79] : memref<1024x256xf32, #tpu.memory_space<vmem>>, vector<8x256xf32>
    tpu.vector_store %arg9[%c120_78, %c0_79], %46 {strides = array<i32>} : memref<1024x256xf32, #tpu.memory_space<vmem>>, vector<8x256xf32>,
    %c0_80 = arith.constant 0 : index
    %c0_81 = arith.constant 0 : index
    %c0_82 = arith.constant 0 : index
    %c128 = arith.constant 128 : index
    %48 = vector.load %arg1[%c0_80, %c0_81, %c0_82, %c128] : memref<1x4x8x512xf32, #tpu.memory_space<vmem>>, vector<1x1x8x256xf32>
    %49 = vector.shape_cast %48 : vector<1x1x8x256xf32> to vector<8x256xf32>
    %c128_83 = arith.constant 128 : index
    %c0_84 = arith.constant 0 : index
    %50 = vector.load %arg9[%c128_83, %c0_84] : memref<1024x256xf32, #tpu.memory_space<vmem>>, vector<8x256xf32>
    tpu.vector_store %arg9[%c128_83, %c0_84], %49 {strides = array<i32>} : memref<1024x256xf32, #tpu.memory_space<vmem>>, vector<8x256xf32>,
    %c0_85 = arith.constant 0 : index
    %c0_86 = arith.constant 0 : index
    %c0_87 = arith.constant 0 : index
    %c136 = arith.constant 136 : index
    %51 = vector.load %arg1[%c0_85, %c0_86, %c0_87, %c136] : memref<1x4x8x512xf32, #tpu.memory_space<vmem>>, vector<1x1x8x256xf32>
    %52 = vector.shape_cast %51 : vector<1x1x8x256xf32> to vector<8x256xf32>
    %c136_88 = arith.constant 136 : index
    %c0_89 = arith.constant 0 : index
    %53 = vector.load %arg9[%c136_88, %c0_89] : memref<1024x256xf32, #tpu.memory_space<vmem>>, vector<8x256xf32>
    tpu.vector_store %arg9[%c136_88, %c0_89], %52 {strides = array<i32>} : memref<1024x256xf32, #tpu.memory_space<vmem>>, vector<8x256xf32>,
    %c0_90 = arith.constant 0 : index
    %c0_91 = arith.constant 0 : index
    %c0_92 = arith.constant 0 : index
    %c144 = arith.constant 144 : index
    %54 = vector.load %arg1[%c0_90, %c0_91, %c0_92, %c144] : memref<1x4x8x512xf32, #tpu.memory_space<vmem>>, vector<1x1x8x256xf32>
    %55 = vector.shape_cast %54 : vector<1x1x8x256xf32> to vector<8x256xf32>
    %c144_93 = arith.constant 144 : index
    %c0_94 = arith.constant 0 : index
    %56 = vector.load %arg9[%c144_93, %c0_94] : memref<1024x256xf32, #tpu.memory_space<vmem>>, vector<8x256xf32>
    tpu.vector_store %arg9[%c144_93, %c0_94], %55 {strides = array<i32>} : memref<1024x256xf32, #tpu.memory_space<vmem>>, vector<8x256xf32>,
    %c0_95 = arith.constant 0 : index
    %c0_96 = arith.constant 0 : index
    %c0_97 = arith.constant 0 : index
    %c152 = arith.constant 152 : index
    %57 = vector.load %arg1[%c0_95, %c0_96, %c0_97, %c152] : memref<1x4x8x512xf32, #tpu.memory_space<vmem>>, vector<1x1x8x256xf32>
    %58 = vector.shape_cast %57 : vector<1x1x8x256xf32> to vector<8x256xf32>
    %c152_98 = arith.constant 152 : index
    %c0_99 = arith.constant 0 : index
    %59 = vector.load %arg9[%c152_98, %c0_99] : memref<1024x256xf32, #tpu.memory_space<vmem>>, vector<8x256xf32>
    tpu.vector_store %arg9[%c152_98, %c0_99], %58 {strides = array<i32>} : memref<1024x256xf32, #tpu.memory_space<vmem>>, vector<8x256xf32>,
    %c0_100 = arith.constant 0 : index
    %c0_101 = arith.constant 0 : index
    %c0_102 = arith.constant 0 : index
    %c160 = arith.constant 160 : index
    %60 = vector.load %arg1[%c0_100, %c0_101, %c0_102, %c160] : memref<1x4x8x512xf32, #tpu.memory_space<vmem>>, vector<1x1x8x256xf32>
    %61 = vector.shape_cast %60 : vector<1x1x8x256xf32> to vector<8x256xf32>
    %c160_103 = arith.constant 160 : index
    %c0_104 = arith.constant 0 : index
    %62 = vector.load %arg9[%c160_103, %c0_104] : memref<1024x256xf32, #tpu.memory_space<vmem>>, vector<8x256xf32>
    tpu.vector_store %arg9[%c160_103, %c0_104], %61 {strides = array<i32>} : memref<1024x256xf32, #tpu.memory_space<vmem>>, vector<8x256xf32>,
    %c0_105 = arith.constant 0 : index
    %c0_106 = arith.constant 0 : index
    %c0_107 = arith.constant 0 : index
    %c168 = arith.constant 168 : index
    %63 = vector.load %arg1[%c0_105, %c0_106, %c0_107, %c168] : memref<1x4x8x512xf32, #tpu.memory_space<vmem>>, vector<1x1x8x256xf32>
    %64 = vector.shape_cast %63 : vector<1x1x8x256xf32> to vector<8x256xf32>
    %c168_108 = arith.constant 168 : index
    %c0_109 = arith.constant 0 : index
    %65 = vector.load %arg9[%c168_108, %c0_109] : memref<1024x256xf32, #tpu.memory_space<vmem>>, vector<8x256xf32>
    tpu.vector_store %arg9[%c168_108, %c0_109], %64 {strides = array<i32>} : memref<1024x256xf32, #tpu.memory_space<vmem>>, vector<8x256xf32>,
    %c0_110 = arith.constant 0 : index
    %c0_111 = arith.constant 0 : index
    %c0_112 = arith.constant 0 : index
    %c176 = arith.constant 176 : index
    %66 = vector.load %arg1[%c0_110, %c0_111, %c0_112, %c176] : memref<1x4x8x512xf32, #tpu.memory_space<vmem>>, vector<1x1x8x256xf32>
    %67 = vector.shape_cast %66 : vector<1x1x8x256xf32> to vector<8x256xf32>
    %c176_113 = arith.constant 176 : index
    %c0_114 = arith.constant 0 : index
    %68 = vector.load %arg9[%c176_113, %c0_114] : memref<1024x256xf32, #tpu.memory_space<vmem>>, vector<8x256xf32>
    tpu.vector_store %arg9[%c176_113, %c0_114], %67 {strides = array<i32>} : memref<1024x256xf32, #tpu.memory_space<vmem>>, vector<8x256xf32>,
    %c0_115 = arith.constant 0 : index
    %c0_116 = arith.constant 0 : index
    %c0_117 = arith.constant 0 : index
    %c184 = arith.constant 184 : index
    %69 = vector.load %arg1[%c0_115, %c0_116, %c0_117, %c184] : memref<1x4x8x512xf32, #tpu.memory_space<vmem>>, vector<1x1x8x256xf32>
    %70 = vector.shape_cast %69 : vector<1x1x8x256xf32> to vector<8x256xf32>
    %c184_118 = arith.constant 184 : index
    %c0_119 = arith.constant 0 : index
    %71 = vector.load %arg9[%c184_118, %c0_119] : memref<1024x256xf32, #tpu.memory_space<vmem>>, vector<8x256xf32>
    tpu.vector_store %arg9[%c184_118, %c0_119], %70 {strides = array<i32>} : memref<1024x256xf32, #tpu.memory_space<vmem>>, vector<8x256xf32>,
    %c0_120 = arith.constant 0 : index
    %c0_121 = arith.constant 0 : index
    %c0_122 = arith.constant 0 : index
    %c192 = arith.constant 192 : index
    %72 = vector.load %arg1[%c0_120, %c0_121, %c0_122, %c192] : memref<1x4x8x512xf32, #tpu.memory_space<vmem>>, vector<1x1x8x256xf32>
    %73 = vector.shape_cast %72 : vector<1x1x8x256xf32> to vector<8x256xf32>
    %c192_123 = arith.constant 192 : index
    %c0_124 = arith.constant 0 : index
    %74 = vector.load %arg9[%c192_123, %c0_124] : memref<1024x256xf32, #tpu.memory_space<vmem>>, vector<8x256xf32>
    tpu.vector_store %arg9[%c192_123, %c0_124], %73 {strides = array<i32>} : memref<1024x256xf32, #tpu.memory_space<vmem>>, vector<8x256xf32>,
    %c0_125 = arith.constant 0 : index
    %c0_126 = arith.constant 0 : index
    %c0_127 = arith.constant 0 : index
    %c200 = arith.constant 200 : index
    %75 = vector.load %arg1[%c0_125, %c0_126, %c0_127, %c200] : memref<1x4x8x512xf32, #tpu.memory_space<vmem>>, vector<1x1x8x256xf32>
    %76 = vector.shape_cast %75 : vector<1x1x8x256xf32> to vector<8x256xf32>
    %c200_128 = arith.constant 200 : index
    %c0_129 = arith.constant 0 : index
    %77 = vector.load %arg9[%c200_128, %c0_129] : memref<1024x256xf32, #tpu.memory_space<vmem>>, vector<8x256xf32>
    tpu.vector_store %arg9[%c200_128, %c0_129], %76 {strides = array<i32>} : memref<1024x256xf32, #tpu.memory_space<vmem>>, vector<8x256xf32>,
    %c0_130 = arith.constant 0 : index
    %c0_131 = arith.constant 0 : index
    %c0_132 = arith.constant 0 : index
    %c208 = arith.constant 208 : index
    %78 = vector.load %arg1[%c0_130, %c0_131, %c0_132, %c208] : memref<1x4x8x512xf32, #tpu.memory_space<vmem>>, vector<1x1x8x256xf32>
    %79 = vector.shape_cast %78 : vector<1x1x8x256xf32> to vector<8x256xf32>
    %c208_133 = arith.constant 208 : index
    %c0_134 = arith.constant 0 : index
    %80 = vector.load %arg9[%c208_133, %c0_134] : memref<1024x256xf32, #tpu.memory_space<vmem>>, vector<8x256xf32>
    tpu.vector_store %arg9[%c208_133, %c0_134], %79 {strides = array<i32>} : memref<1024x256xf32, #tpu.memory_space<vmem>>, vector<8x256xf32>,
    %c0_135 = arith.constant 0 : index
    %c0_136 = arith.constant 0 : index
    %c0_137 = arith.constant 0 : index
    %c216 = arith.constant 216 : index
    %81 = vector.load %arg1[%c0_135, %c0_136, %c0_137, %c216] : memref<1x4x8x512xf32, #tpu.memory_space<vmem>>, vector<1x1x8x256xf32>
    %82 = vector.shape_cast %81 : vector<1x1x8x256xf32> to vector<8x256xf32>
    %c216_138 = arith.constant 216 : index
    %c0_139 = arith.constant 0 : index
    %83 = vector.load %arg9[%c216_138, %c0_139] : memref<1024x256xf32, #tpu.memory_space<vmem>>, vector<8x256xf32>
    tpu.vector_store %arg9[%c216_138, %c0_139], %82 {strides = array<i32>} : memref<1024x256xf32, #tpu.memory_space<vmem>>, vector<8x256xf32>,
    %c0_140 = arith.constant 0 : index
    %c0_141 = arith.constant 0 : index
    %c0_142 = arith.constant 0 : index
    %c224 = arith.constant 224 : index
    %84 = vector.load %arg1[%c0_140, %c0_141, %c0_142, %c224] : memref<1x4x8x512xf32, #tpu.memory_space<vmem>>, vector<1x1x8x256xf32>
    %85 = vector.shape_cast %84 : vector<1x1x8x256xf32> to vector<8x256xf32>
    %c224_143 = arith.constant 224 : index
    %c0_144 = arith.constant 0 : index
    %86 = vector.load %arg9[%c224_143, %c0_144] : memref<1024x256xf32, #tpu.memory_space<vmem>>, vector<8x256xf32>
    tpu.vector_store %arg9[%c224_143, %c0_144], %85 {strides = array<i32>} : memref<1024x256xf32, #tpu.memory_space<vmem>>, vector<8x256xf32>,
    %c0_145 = arith.constant 0 : index
    %c0_146 = arith.constant 0 : index
    %c0_147 = arith.constant 0 : index
    %c232 = arith.constant 232 : index
    %87 = vector.load %arg1[%c0_145, %c0_146, %c0_147, %c232] : memref<1x4x8x512xf32, #tpu.memory_space<vmem>>, vector<1x1x8x256xf32>
    %88 = vector.shape_cast %87 : vector<1x1x8x256xf32> to vector<8x256xf32>
    %c232_148 = arith.constant 232 : index
    %c0_149 = arith.constant 0 : index
    %89 = vector.load %arg9[%c232_148, %c0_149] : memref<1024x256xf32, #tpu.memory_space<vmem>>, vector<8x256xf32>
    tpu.vector_store %arg9[%c232_148, %c0_149], %88 {strides = array<i32>} : memref<1024x256xf32, #tpu.memory_space<vmem>>, vector<8x256xf32>,
    %c0_150 = arith.constant 0 : index
    %c0_151 = arith.constant 0 : index
    %c0_152 = arith.constant 0 : index
    %c240 = arith.constant 240 : index
    %90 = vector.load %arg1[%c0_150, %c0_151, %c0_152, %c240] : memref<1x4x8x512xf32, #tpu.memory_space<vmem>>, vector<1x1x8x256xf32>
    %91 = vector.shape_cast %90 : vector<1x1x8x256xf32> to vector<8x256xf32>
    %c240_153 = arith.constant 240 : index
    %c0_154 = arith.constant 0 : index
    %92 = vector.load %arg9[%c240_153, %c0_154] : memref<1024x256xf32, #tpu.memory_space<vmem>>, vector<8x256xf32>
    tpu.vector_store %arg9[%c240_153, %c0_154], %91 {strides = array<i32>} : memref<1024x256xf32, #tpu.memory_space<vmem>>, vector<8x256xf32>,
    %c0_155 = arith.constant 0 : index
    %c0_156 = arith.constant 0 : index
    %c0_157 = arith.constant 0 : index
    %c248 = arith.constant 248 : index
    %93 = vector.load %arg1[%c0_155, %c0_156, %c0_157, %c248] : memref<1x4x8x512xf32, #tpu.memory_space<vmem>>, vector<1x1x8x256xf32>
    %94 = vector.shape_cast %93 : vector<1x1x8x256xf32> to vector<8x256xf32>
    %c248_158 = arith.constant 248 : index
    %c0_159 = arith.constant 0 : index
    %95 = vector.load %arg9[%c248_158, %c0_159] : memref<1024x256xf32, #tpu.memory_space<vmem>>, vector<8x256xf32>
    tpu.vector_store %arg9[%c248_158, %c0_159], %94 {strides = array<i32>} : memref<1024x256xf32, #tpu.memory_space<vmem>>, vector<8x256xf32>,
    %c0_160 = arith.constant 0 : index
    %c1 = arith.constant 1 : index
    %c0_161 = arith.constant 0 : index
    %c0_162 = arith.constant 0 : index
    %96 = vector.load %arg1[%c0_160, %c1, %c0_161, %c0_162] : memref<1x4x8x512xf32, #tpu.memory_space<vmem>>, vector<1x1x8x256xf32>
    %97 = vector.shape_cast %96 : vector<1x1x8x256xf32> to vector<8x256xf32>
    %c256 = arith.constant 256 : index
    %c0_163 = arith.constant 0 : index
    %98 = vector.load %arg9[%c256, %c0_163] : memref<1024x256xf32, #tpu.memory_space<vmem>>, vector<8x256xf32>
    tpu.vector_store %arg9[%c256, %c0_163], %97 {strides = array<i32>} : memref<1024x256xf32, #tpu.memory_space<vmem>>, vector<8x256xf32>,
    %c0_164 = arith.constant 0 : index
    %c1_165 = arith.constant 1 : index
    %c0_166 = arith.constant 0 : index
    %c8_167 = arith.constant 8 : index
    %99 = vector.load %arg1[%c0_164, %c1_165, %c0_166, %c8_167] : memref<1x4x8x512xf32, #tpu.memory_space<vmem>>, vector<1x1x8x256xf32>
    %100 = vector.shape_cast %99 : vector<1x1x8x256xf32> to vector<8x256xf32>
    %c264 = arith.constant 264 : index
    %c0_168 = arith.constant 0 : index
    %101 = vector.load %arg9[%c264, %c0_168] : memref<1024x256xf32, #tpu.memory_space<vmem>>, vector<8x256xf32>
    tpu.vector_store %arg9[%c264, %c0_168], %100 {strides = array<i32>} : memref<1024x256xf32, #tpu.memory_space<vmem>>, vector<8x256xf32>,
    %c0_169 = arith.constant 0 : index
    %c1_170 = arith.constant 1 : index
    %c0_171 = arith.constant 0 : index
    %c16_172 = arith.constant 16 : index
    %102 = vector.load %arg1[%c0_169, %c1_170, %c0_171, %c16_172] : memref<1x4x8x512xf32, #tpu.memory_space<vmem>>, vector<1x1x8x256xf32>
    %103 = vector.shape_cast %102 : vector<1x1x8x256xf32> to vector<8x256xf32>
    %c272 = arith.constant 272 : index
    %c0_173 = arith.constant 0 : index
    %104 = vector.load %arg9[%c272, %c0_173] : memref<1024x256xf32, #tpu.memory_space<vmem>>, vector<8x256xf32>
    tpu.vector_store %arg9[%c272, %c0_173], %103 {strides = array<i32>} : memref<1024x256xf32, #tpu.memory_space<vmem>>, vector<8x256xf32>,
    %c0_174 = arith.constant 0 : index
    %c1_175 = arith.constant 1 : index
    %c0_176 = arith.constant 0 : index
    %c24_177 = arith.constant 24 : index
    %105 = vector.load %arg1[%c0_174, %c1_175, %c0_176, %c24_177] : memref<1x4x8x512xf32, #tpu.memory_space<vmem>>, vector<1x1x8x256xf32>
    %106 = vector.shape_cast %105 : vector<1x1x8x256xf32> to vector<8x256xf32>
    %c280 = arith.constant 280 : index
    %c0_178 = arith.constant 0 : index
    %107 = vector.load %arg9[%c280, %c0_178] : memref<1024x256xf32, #tpu.memory_space<vmem>>, vector<8x256xf32>
    tpu.vector_store %arg9[%c280, %c0_178], %106 {strides = array<i32>} : memref<1024x256xf32, #tpu.memory_space<vmem>>, vector<8x256xf32>,
    %c0_179 = arith.constant 0 : index
    %c1_180 = arith.constant 1 : index
    %c0_181 = arith.constant 0 : index
    %c32_182 = arith.constant 32 : index
    %108 = vector.load %arg1[%c0_179, %c1_180, %c0_181, %c32_182] : memref<1x4x8x512xf32, #tpu.memory_space<vmem>>, vector<1x1x8x256xf32>
    %109 = vector.shape_cast %108 : vector<1x1x8x256xf32> to vector<8x256xf32>
    %c288 = arith.constant 288 : index
    %c0_183 = arith.constant 0 : index
    %110 = vector.load %arg9[%c288, %c0_183] : memref<1024x256xf32, #tpu.memory_space<vmem>>, vector<8x256xf32>
    tpu.vector_store %arg9[%c288, %c0_183], %109 {strides = array<i32>} : memref<1024x256xf32, #tpu.memory_space<vmem>>, vector<8x256xf32>,
    %c0_184 = arith.constant 0 : index
    %c1_185 = arith.constant 1 : index
    %c0_186 = arith.constant 0 : index
    %c40_187 = arith.constant 40 : index
    %111 = vector.load %arg1[%c0_184, %c1_185, %c0_186, %c40_187] : memref<1x4x8x512xf32, #tpu.memory_space<vmem>>, vector<1x1x8x256xf32>
    %112 = vector.shape_cast %111 : vector<1x1x8x256xf32> to vector<8x256xf32>
    %c296 = arith.constant 296 : index
    %c0_188 = arith.constant 0 : index
    %113 = vector.load %arg9[%c296, %c0_188] : memref<1024x256xf32, #tpu.memory_space<vmem>>, vector<8x256xf32>
    tpu.vector_store %arg9[%c296, %c0_188], %112 {strides = array<i32>} : memref<1024x256xf32, #tpu.memory_space<vmem>>, vector<8x256xf32>,
    %c0_189 = arith.constant 0 : index
    %c1_190 = arith.constant 1 : index
    %c0_191 = arith.constant 0 : index
    %c48_192 = arith.constant 48 : index
    %114 = vector.load %arg1[%c0_189, %c1_190, %c0_191, %c48_192] : memref<1x4x8x512xf32, #tpu.memory_space<vmem>>, vector<1x1x8x256xf32>
    %115 = vector.shape_cast %114 : vector<1x1x8x256xf32> to vector<8x256xf32>
    %c304 = arith.constant 304 : index
    %c0_193 = arith.constant 0 : index
    %116 = vector.load %arg9[%c304, %c0_193] : memref<1024x256xf32, #tpu.memory_space<vmem>>, vector<8x256xf32>
    tpu.vector_store %arg9[%c304, %c0_193], %115 {strides = array<i32>} : memref<1024x256xf32, #tpu.memory_space<vmem>>, vector<8x256xf32>,
    %c0_194 = arith.constant 0 : index
    %c1_195 = arith.constant 1 : index
    %c0_196 = arith.constant 0 : index
    %c56_197 = arith.constant 56 : index
    %117 = vector.load %arg1[%c0_194, %c1_195, %c0_196, %c56_197] : memref<1x4x8x512xf32, #tpu.memory_space<vmem>>, vector<1x1x8x256xf32>
    %118 = vector.shape_cast %117 : vector<1x1x8x256xf32> to vector<8x256xf32>
    %c312 = arith.constant 312 : index
    %c0_198 = arith.constant 0 : index
    %119 = vector.load %arg9[%c312, %c0_198] : memref<1024x256xf32, #tpu.memory_space<vmem>>, vector<8x256xf32>
    tpu.vector_store %arg9[%c312, %c0_198], %118 {strides = array<i32>} : memref<1024x256xf32, #tpu.memory_space<vmem>>, vector<8x256xf32>,
    %c0_199 = arith.constant 0 : index
    %c1_200 = arith.constant 1 : index
    %c0_201 = arith.constant 0 : index
    %c64_202 = arith.constant 64 : index
    %120 = vector.load %arg1[%c0_199, %c1_200, %c0_201, %c64_202] : memref<1x4x8x512xf32, #tpu.memory_space<vmem>>, vector<1x1x8x256xf32>
    %121 = vector.shape_cast %120 : vector<1x1x8x256xf32> to vector<8x256xf32>
    %c320 = arith.constant 320 : index
    %c0_203 = arith.constant 0 : index
    %122 = vector.load %arg9[%c320, %c0_203] : memref<1024x256xf32, #tpu.memory_space<vmem>>, vector<8x256xf32>
    tpu.vector_store %arg9[%c320, %c0_203], %121 {strides = array<i32>} : memref<1024x256xf32, #tpu.memory_space<vmem>>, vector<8x256xf32>,
    %c0_204 = arith.constant 0 : index
    %c1_205 = arith.constant 1 : index
    %c0_206 = arith.constant 0 : index
    %c72_207 = arith.constant 72 : index
    %123 = vector.load %arg1[%c0_204, %c1_205, %c0_206, %c72_207] : memref<1x4x8x512xf32, #tpu.memory_space<vmem>>, vector<1x1x8x256xf32>
    %124 = vector.shape_cast %123 : vector<1x1x8x256xf32> to vector<8x256xf32>
    %c328 = arith.constant 328 : index
    %c0_208 = arith.constant 0 : index
    %125 = vector.load %arg9[%c328, %c0_208] : memref<1024x256xf32, #tpu.memory_space<vmem>>, vector<8x256xf32>
    tpu.vector_store %arg9[%c328, %c0_208], %124 {strides = array<i32>} : memref<1024x256xf32, #tpu.memory_space<vmem>>, vector<8x256xf32>,
    %c0_209 = arith.constant 0 : index
    %c1_210 = arith.constant 1 : index
    %c0_211 = arith.constant 0 : index
    %c80_212 = arith.constant 80 : index
    %126 = vector.load %arg1[%c0_209, %c1_210, %c0_211, %c80_212] : memref<1x4x8x512xf32, #tpu.memory_space<vmem>>, vector<1x1x8x256xf32>
    %127 = vector.shape_cast %126 : vector<1x1x8x256xf32> to vector<8x256xf32>
    %c336 = arith.constant 336 : index
    %c0_213 = arith.constant 0 : index
    %128 = vector.load %arg9[%c336, %c0_213] : memref<1024x256xf32, #tpu.memory_space<vmem>>, vector<8x256xf32>
    tpu.vector_store %arg9[%c336, %c0_213], %127 {strides = array<i32>} : memref<1024x256xf32, #tpu.memory_space<vmem>>, vector<8x256xf32>,
    %c0_214 = arith.constant 0 : index
    %c1_215 = arith.constant 1 : index
    %c0_216 = arith.constant 0 : index
    %c88_217 = arith.constant 88 : index
    %129 = vector.load %arg1[%c0_214, %c1_215, %c0_216, %c88_217] : memref<1x4x8x512xf32, #tpu.memory_space<vmem>>, vector<1x1x8x256xf32>
    %130 = vector.shape_cast %129 : vector<1x1x8x256xf32> to vector<8x256xf32>
    %c344 = arith.constant 344 : index
    %c0_218 = arith.constant 0 : index
    %131 = vector.load %arg9[%c344, %c0_218] : memref<1024x256xf32, #tpu.memory_space<vmem>>, vector<8x256xf32>
    tpu.vector_store %arg9[%c344, %c0_218], %130 {strides = array<i32>} : memref<1024x256xf32, #tpu.memory_space<vmem>>, vector<8x256xf32>,
    %c0_219 = arith.constant 0 : index
    %c1_220 = arith.constant 1 : index
    %c0_221 = arith.constant 0 : index
    %c96_222 = arith.constant 96 : index
    %132 = vector.load %arg1[%c0_219, %c1_220, %c0_221, %c96_222] : memref<1x4x8x512xf32, #tpu.memory_space<vmem>>, vector<1x1x8x256xf32>
    %133 = vector.shape_cast %132 : vector<1x1x8x256xf32> to vector<8x256xf32>
    %c352 = arith.constant 352 : index
    %c0_223 = arith.constant 0 : index
    %134 = vector.load %arg9[%c352, %c0_223] : memref<1024x256xf32, #tpu.memory_space<vmem>>, vector<8x256xf32>
    tpu.vector_store %arg9[%c352, %c0_223], %133 {strides = array<i32>} : memref<1024x256xf32, #tpu.memory_space<vmem>>, vector<8x256xf32>,
    %c0_224 = arith.constant 0 : index
    %c1_225 = arith.constant 1 : index
    %c0_226 = arith.constant 0 : index
    %c104_227 = arith.constant 104 : index
    %135 = vector.load %arg1[%c0_224, %c1_225, %c0_226, %c104_227] : memref<1x4x8x512xf32, #tpu.memory_space<vmem>>, vector<1x1x8x256xf32>
    %136 = vector.shape_cast %135 : vector<1x1x8x256xf32> to vector<8x256xf32>
    %c360 = arith.constant 360 : index
    %c0_228 = arith.constant 0 : index
    %137 = vector.load %arg9[%c360, %c0_228] : memref<1024x256xf32, #tpu.memory_space<vmem>>, vector<8x256xf32>
    tpu.vector_store %arg9[%c360, %c0_228], %136 {strides = array<i32>} : memref<1024x256xf32, #tpu.memory_space<vmem>>, vector<8x256xf32>,
    %c0_229 = arith.constant 0 : index
    %c1_230 = arith.constant 1 : index
    %c0_231 = arith.constant 0 : index
    %c112_232 = arith.constant 112 : index
    %138 = vector.load %arg1[%c0_229, %c1_230, %c0_231, %c112_232] : memref<1x4x8x512xf32, #tpu.memory_space<vmem>>, vector<1x1x8x256xf32>
    %139 = vector.shape_cast %138 : vector<1x1x8x256xf32> to vector<8x256xf32>
    %c368 = arith.constant 368 : index
    %c0_233 = arith.constant 0 : index
    %140 = vector.load %arg9[%c368, %c0_233] : memref<1024x256xf32, #tpu.memory_space<vmem>>, vector<8x256xf32>
    tpu.vector_store %arg9[%c368, %c0_233], %139 {strides = array<i32>} : memref<1024x256xf32, #tpu.memory_space<vmem>>, vector<8x256xf32>,
    %c0_234 = arith.constant 0 : index
    %c1_235 = arith.constant 1 : index
    %c0_236 = arith.constant 0 : index
    %c120_237 = arith.constant 120 : index
    %141 = vector.load %arg1[%c0_234, %c1_235, %c0_236, %c120_237] : memref<1x4x8x512xf32, #tpu.memory_space<vmem>>, vector<1x1x8x256xf32>
    %142 = vector.shape_cast %141 : vector<1x1x8x256xf32> to vector<8x256xf32>
    %c376 = arith.constant 376 : index
    %c0_238 = arith.constant 0 : index
    %143 = vector.load %arg9[%c376, %c0_238] : memref<1024x256xf32, #tpu.memory_space<vmem>>, vector<8x256xf32>
    tpu.vector_store %arg9[%c376, %c0_238], %142 {strides = array<i32>} : memref<1024x256xf32, #tpu.memory_space<vmem>>, vector<8x256xf32>,
    %c0_239 = arith.constant 0 : index
    %c1_240 = arith.constant 1 : index
    %c0_241 = arith.constant 0 : index
    %c128_242 = arith.constant 128 : index
    %144 = vector.load %arg1[%c0_239, %c1_240, %c0_241, %c128_242] : memref<1x4x8x512xf32, #tpu.memory_space<vmem>>, vector<1x1x8x256xf32>
    %145 = vector.shape_cast %144 : vector<1x1x8x256xf32> to vector<8x256xf32>
    %c384 = arith.constant 384 : index
    %c0_243 = arith.constant 0 : index
    %146 = vector.load %arg9[%c384, %c0_243] : memref<1024x256xf32, #tpu.memory_space<vmem>>, vector<8x256xf32>
    tpu.vector_store %arg9[%c384, %c0_243], %145 {strides = array<i32>} : memref<1024x256xf32, #tpu.memory_space<vmem>>, vector<8x256xf32>,
    %c0_244 = arith.constant 0 : index
    %c1_245 = arith.constant 1 : index
    %c0_246 = arith.constant 0 : index
    %c136_247 = arith.constant 136 : index
    %147 = vector.load %arg1[%c0_244, %c1_245, %c0_246, %c136_247] : memref<1x4x8x512xf32, #tpu.memory_space<vmem>>, vector<1x1x8x256xf32>
    %148 = vector.shape_cast %147 : vector<1x1x8x256xf32> to vector<8x256xf32>
    %c392 = arith.constant 392 : index
    %c0_248 = arith.constant 0 : index
    %149 = vector.load %arg9[%c392, %c0_248] : memref<1024x256xf32, #tpu.memory_space<vmem>>, vector<8x256xf32>
    tpu.vector_store %arg9[%c392, %c0_248], %148 {strides = array<i32>} : memref<1024x256xf32, #tpu.memory_space<vmem>>, vector<8x256xf32>,
    %c0_249 = arith.constant 0 : index
    %c1_250 = arith.constant 1 : index
    %c0_251 = arith.constant 0 : index
    %c144_252 = arith.constant 144 : index
    %150 = vector.load %arg1[%c0_249, %c1_250, %c0_251, %c144_252] : memref<1x4x8x512xf32, #tpu.memory_space<vmem>>, vector<1x1x8x256xf32>
    %151 = vector.shape_cast %150 : vector<1x1x8x256xf32> to vector<8x256xf32>
    %c400 = arith.constant 400 : index
    %c0_253 = arith.constant 0 : index
    %152 = vector.load %arg9[%c400, %c0_253] : memref<1024x256xf32, #tpu.memory_space<vmem>>, vector<8x256xf32>
    tpu.vector_store %arg9[%c400, %c0_253], %151 {strides = array<i32>} : memref<1024x256xf32, #tpu.memory_space<vmem>>, vector<8x256xf32>,
    %c0_254 = arith.constant 0 : index
    %c1_255 = arith.constant 1 : index
    %c0_256 = arith.constant 0 : index
    %c152_257 = arith.constant 152 : index
    %153 = vector.load %arg1[%c0_254, %c1_255, %c0_256, %c152_257] : memref<1x4x8x512xf32, #tpu.memory_space<vmem>>, vector<1x1x8x256xf32>
    %154 = vector.shape_cast %153 : vector<1x1x8x256xf32> to vector<8x256xf32>
    %c408 = arith.constant 408 : index
    %c0_258 = arith.constant 0 : index
    %155 = vector.load %arg9[%c408, %c0_258] : memref<1024x256xf32, #tpu.memory_space<vmem>>, vector<8x256xf32>
    tpu.vector_store %arg9[%c408, %c0_258], %154 {strides = array<i32>} : memref<1024x256xf32, #tpu.memory_space<vmem>>, vector<8x256xf32>,
    %c0_259 = arith.constant 0 : index
    %c1_260 = arith.constant 1 : index
    %c0_261 = arith.constant 0 : index
    %c160_262 = arith.constant 160 : index
    %156 = vector.load %arg1[%c0_259, %c1_260, %c0_261, %c160_262] : memref<1x4x8x512xf32, #tpu.memory_space<vmem>>, vector<1x1x8x256xf32>
    %157 = vector.shape_cast %156 : vector<1x1x8x256xf32> to vector<8x256xf32>
    %c416 = arith.constant 416 : index
    %c0_263 = arith.constant 0 : index
    %158 = vector.load %arg9[%c416, %c0_263] : memref<1024x256xf32, #tpu.memory_space<vmem>>, vector<8x256xf32>
    tpu.vector_store %arg9[%c416, %c0_263], %157 {strides = array<i32>} : memref<1024x256xf32, #tpu.memory_space<vmem>>, vector<8x256xf32>,
    %c0_264 = arith.constant 0 : index
    %c1_265 = arith.constant 1 : index
    %c0_266 = arith.constant 0 : index
    %c168_267 = arith.constant 168 : index
    %159 = vector.load %arg1[%c0_264, %c1_265, %c0_266, %c168_267] : memref<1x4x8x512xf32, #tpu.memory_space<vmem>>, vector<1x1x8x256xf32>
    %160 = vector.shape_cast %159 : vector<1x1x8x256xf32> to vector<8x256xf32>
    %c424 = arith.constant 424 : index
    %c0_268 = arith.constant 0 : index
    %161 = vector.load %arg9[%c424, %c0_268] : memref<1024x256xf32, #tpu.memory_space<vmem>>, vector<8x256xf32>
    tpu.vector_store %arg9[%c424, %c0_268], %160 {strides = array<i32>} : memref<1024x256xf32, #tpu.memory_space<vmem>>, vector<8x256xf32>,
    %c0_269 = arith.constant 0 : index
    %c1_270 = arith.constant 1 : index
    %c0_271 = arith.constant 0 : index
    %c176_272 = arith.constant 176 : index
    %162 = vector.load %arg1[%c0_269, %c1_270, %c0_271, %c176_272] : memref<1x4x8x512xf32, #tpu.memory_space<vmem>>, vector<1x1x8x256xf32>
    %163 = vector.shape_cast %162 : vector<1x1x8x256xf32> to vector<8x256xf32>
    %c432 = arith.constant 432 : index
    %c0_273 = arith.constant 0 : index
    %164 = vector.load %arg9[%c432, %c0_273] : memref<1024x256xf32, #tpu.memory_space<vmem>>, vector<8x256xf32>
    tpu.vector_store %arg9[%c432, %c0_273], %163 {strides = array<i32>} : memref<1024x256xf32, #tpu.memory_space<vmem>>, vector<8x256xf32>,
    %c0_274 = arith.constant 0 : index
    %c1_275 = arith.constant 1 : index
    %c0_276 = arith.constant 0 : index
    %c184_277 = arith.constant 184 : index
    %165 = vector.load %arg1[%c0_274, %c1_275, %c0_276, %c184_277] : memref<1x4x8x512xf32, #tpu.memory_space<vmem>>, vector<1x1x8x256xf32>
    %166 = vector.shape_cast %165 : vector<1x1x8x256xf32> to vector<8x256xf32>
    %c440 = arith.constant 440 : index
    %c0_278 = arith.constant 0 : index
    %167 = vector.load %arg9[%c440, %c0_278] : memref<1024x256xf32, #tpu.memory_space<vmem>>, vector<8x256xf32>
    tpu.vector_store %arg9[%c440, %c0_278], %166 {strides = array<i32>} : memref<1024x256xf32, #tpu.memory_space<vmem>>, vector<8x256xf32>,
    %c0_279 = arith.constant 0 : index
    %c1_280 = arith.constant 1 : index
    %c0_281 = arith.constant 0 : index
    %c192_282 = arith.constant 192 : index
    %168 = vector.load %arg1[%c0_279, %c1_280, %c0_281, %c192_282] : memref<1x4x8x512xf32, #tpu.memory_space<vmem>>, vector<1x1x8x256xf32>
    %169 = vector.shape_cast %168 : vector<1x1x8x256xf32> to vector<8x256xf32>
    %c448 = arith.constant 448 : index
    %c0_283 = arith.constant 0 : index
    %170 = vector.load %arg9[%c448, %c0_283] : memref<1024x256xf32, #tpu.memory_space<vmem>>, vector<8x256xf32>
    tpu.vector_store %arg9[%c448, %c0_283], %169 {strides = array<i32>} : memref<1024x256xf32, #tpu.memory_space<vmem>>, vector<8x256xf32>,
    %c0_284 = arith.constant 0 : index
    %c1_285 = arith.constant 1 : index
    %c0_286 = arith.constant 0 : index
    %c200_287 = arith.constant 200 : index
    %171 = vector.load %arg1[%c0_284, %c1_285, %c0_286, %c200_287] : memref<1x4x8x512xf32, #tpu.memory_space<vmem>>, vector<1x1x8x256xf32>
    %172 = vector.shape_cast %171 : vector<1x1x8x256xf32> to vector<8x256xf32>
    %c456 = arith.constant 456 : index
    %c0_288 = arith.constant 0 : index
    %173 = vector.load %arg9[%c456, %c0_288] : memref<1024x256xf32, #tpu.memory_space<vmem>>, vector<8x256xf32>
    tpu.vector_store %arg9[%c456, %c0_288], %172 {strides = array<i32>} : memref<1024x256xf32, #tpu.memory_space<vmem>>, vector<8x256xf32>,
    %c0_289 = arith.constant 0 : index
    %c1_290 = arith.constant 1 : index
    %c0_291 = arith.constant 0 : index
    %c208_292 = arith.constant 208 : index
    %174 = vector.load %arg1[%c0_289, %c1_290, %c0_291, %c208_292] : memref<1x4x8x512xf32, #tpu.memory_space<vmem>>, vector<1x1x8x256xf32>
    %175 = vector.shape_cast %174 : vector<1x1x8x256xf32> to vector<8x256xf32>
    %c464 = arith.constant 464 : index
    %c0_293 = arith.constant 0 : index
    %176 = vector.load %arg9[%c464, %c0_293] : memref<1024x256xf32, #tpu.memory_space<vmem>>, vector<8x256xf32>
    tpu.vector_store %arg9[%c464, %c0_293], %175 {strides = array<i32>} : memref<1024x256xf32, #tpu.memory_space<vmem>>, vector<8x256xf32>,
    %c0_294 = arith.constant 0 : index
    %c1_295 = arith.constant 1 : index
    %c0_296 = arith.constant 0 : index
    %c216_297 = arith.constant 216 : index
    %177 = vector.load %arg1[%c0_294, %c1_295, %c0_296, %c216_297] : memref<1x4x8x512xf32, #tpu.memory_space<vmem>>, vector<1x1x8x256xf32>
    %178 = vector.shape_cast %177 : vector<1x1x8x256xf32> to vector<8x256xf32>
    %c472 = arith.constant 472 : index
    %c0_298 = arith.constant 0 : index
    %179 = vector.load %arg9[%c472, %c0_298] : memref<1024x256xf32, #tpu.memory_space<vmem>>, vector<8x256xf32>
    tpu.vector_store %arg9[%c472, %c0_298], %178 {strides = array<i32>} : memref<1024x256xf32, #tpu.memory_space<vmem>>, vector<8x256xf32>,
    %c0_299 = arith.constant 0 : index
    %c1_300 = arith.constant 1 : index
    %c0_301 = arith.constant 0 : index
    %c224_302 = arith.constant 224 : index
    %180 = vector.load %arg1[%c0_299, %c1_300, %c0_301, %c224_302] : memref<1x4x8x512xf32, #tpu.memory_space<vmem>>, vector<1x1x8x256xf32>
    %181 = vector.shape_cast %180 : vector<1x1x8x256xf32> to vector<8x256xf32>
    %c480 = arith.constant 480 : index
    %c0_303 = arith.constant 0 : index
    %182 = vector.load %arg9[%c480, %c0_303] : memref<1024x256xf32, #tpu.memory_space<vmem>>, vector<8x256xf32>
    tpu.vector_store %arg9[%c480, %c0_303], %181 {strides = array<i32>} : memref<1024x256xf32, #tpu.memory_space<vmem>>, vector<8x256xf32>,
    %c0_304 = arith.constant 0 : index
    %c1_305 = arith.constant 1 : index
    %c0_306 = arith.constant 0 : index
    %c232_307 = arith.constant 232 : index
    %183 = vector.load %arg1[%c0_304, %c1_305, %c0_306, %c232_307] : memref<1x4x8x512xf32, #tpu.memory_space<vmem>>, vector<1x1x8x256xf32>
    %184 = vector.shape_cast %183 : vector<1x1x8x256xf32> to vector<8x256xf32>
    %c488 = arith.constant 488 : index
    %c0_308 = arith.constant 0 : index
    %185 = vector.load %arg9[%c488, %c0_308] : memref<1024x256xf32, #tpu.memory_space<vmem>>, vector<8x256xf32>
    tpu.vector_store %arg9[%c488, %c0_308], %184 {strides = array<i32>} : memref<1024x256xf32, #tpu.memory_space<vmem>>, vector<8x256xf32>,
    %c0_309 = arith.constant 0 : index
    %c1_310 = arith.constant 1 : index
    %c0_311 = arith.constant 0 : index
    %c240_312 = arith.constant 240 : index
    %186 = vector.load %arg1[%c0_309, %c1_310, %c0_311, %c240_312] : memref<1x4x8x512xf32, #tpu.memory_space<vmem>>, vector<1x1x8x256xf32>
    %187 = vector.shape_cast %186 : vector<1x1x8x256xf32> to vector<8x256xf32>
    %c496 = arith.constant 496 : index
    %c0_313 = arith.constant 0 : index
    %188 = vector.load %arg9[%c496, %c0_313] : memref<1024x256xf32, #tpu.memory_space<vmem>>, vector<8x256xf32>
    tpu.vector_store %arg9[%c496, %c0_313], %187 {strides = array<i32>} : memref<1024x256xf32, #tpu.memory_space<vmem>>, vector<8x256xf32>,
    %c0_314 = arith.constant 0 : index
    %c1_315 = arith.constant 1 : index
    %c0_316 = arith.constant 0 : index
    %c248_317 = arith.constant 248 : index
    %189 = vector.load %arg1[%c0_314, %c1_315, %c0_316, %c248_317] : memref<1x4x8x512xf32, #tpu.memory_space<vmem>>, vector<1x1x8x256xf32>
    %190 = vector.shape_cast %189 : vector<1x1x8x256xf32> to vector<8x256xf32>
    %c504 = arith.constant 504 : index
    %c0_318 = arith.constant 0 : index
    %191 = vector.load %arg9[%c504, %c0_318] : memref<1024x256xf32, #tpu.memory_space<vmem>>, vector<8x256xf32>
    tpu.vector_store %arg9[%c504, %c0_318], %190 {strides = array<i32>} : memref<1024x256xf32, #tpu.memory_space<vmem>>, vector<8x256xf32>,
    %c0_319 = arith.constant 0 : index
    %c2 = arith.constant 2 : index
    %c0_320 = arith.constant 0 : index
    %c0_321 = arith.constant 0 : index
    %192 = vector.load %arg1[%c0_319, %c2, %c0_320, %c0_321] : memref<1x4x8x512xf32, #tpu.memory_space<vmem>>, vector<1x1x8x256xf32>
    %193 = vector.shape_cast %192 : vector<1x1x8x256xf32> to vector<8x256xf32>
    %c512 = arith.constant 512 : index
    %c0_322 = arith.constant 0 : index
    %194 = vector.load %arg9[%c512, %c0_322] : memref<1024x256xf32, #tpu.memory_space<vmem>>, vector<8x256xf32>
    tpu.vector_store %arg9[%c512, %c0_322], %193 {strides = array<i32>} : memref<1024x256xf32, #tpu.memory_space<vmem>>, vector<8x256xf32>,
    %c0_323 = arith.constant 0 : index
    %c2_324 = arith.constant 2 : index
    %c0_325 = arith.constant 0 : index
    %c8_326 = arith.constant 8 : index
    %195 = vector.load %arg1[%c0_323, %c2_324, %c0_325, %c8_326] : memref<1x4x8x512xf32, #tpu.memory_space<vmem>>, vector<1x1x8x256xf32>
    %196 = vector.shape_cast %195 : vector<1x1x8x256xf32> to vector<8x256xf32>
    %c520 = arith.constant 520 : index
    %c0_327 = arith.constant 0 : index
    %197 = vector.load %arg9[%c520, %c0_327] : memref<1024x256xf32, #tpu.memory_space<vmem>>, vector<8x256xf32>
    tpu.vector_store %arg9[%c520, %c0_327], %196 {strides = array<i32>} : memref<1024x256xf32, #tpu.memory_space<vmem>>, vector<8x256xf32>,
    %c0_328 = arith.constant 0 : index
    %c2_329 = arith.constant 2 : index
    %c0_330 = arith.constant 0 : index
    %c16_331 = arith.constant 16 : index
    %198 = vector.load %arg1[%c0_328, %c2_329, %c0_330, %c16_331] : memref<1x4x8x512xf32, #tpu.memory_space<vmem>>, vector<1x1x8x256xf32>
    %199 = vector.shape_cast %198 : vector<1x1x8x256xf32> to vector<8x256xf32>
    %c528 = arith.constant 528 : index
    %c0_332 = arith.constant 0 : index
    %200 = vector.load %arg9[%c528, %c0_332] : memref<1024x256xf32, #tpu.memory_space<vmem>>, vector<8x256xf32>
    tpu.vector_store %arg9[%c528, %c0_332], %199 {strides = array<i32>} : memref<1024x256xf32, #tpu.memory_space<vmem>>, vector<8x256xf32>,
    %c0_333 = arith.constant 0 : index
    %c2_334 = arith.constant 2 : index
    %c0_335 = arith.constant 0 : index
    %c24_336 = arith.constant 24 : index
    %201 = vector.load %arg1[%c0_333, %c2_334, %c0_335, %c24_336] : memref<1x4x8x512xf32, #tpu.memory_space<vmem>>, vector<1x1x8x256xf32>
    %202 = vector.shape_cast %201 : vector<1x1x8x256xf32> to vector<8x256xf32>
    %c536 = arith.constant 536 : index
    %c0_337 = arith.constant 0 : index
    %203 = vector.load %arg9[%c536, %c0_337] : memref<1024x256xf32, #tpu.memory_space<vmem>>, vector<8x256xf32>
    tpu.vector_store %arg9[%c536, %c0_337], %202 {strides = array<i32>} : memref<1024x256xf32, #tpu.memory_space<vmem>>, vector<8x256xf32>,
    %c0_338 = arith.constant 0 : index
    %c2_339 = arith.constant 2 : index
    %c0_340 = arith.constant 0 : index
    %c32_341 = arith.constant 32 : index
    %204 = vector.load %arg1[%c0_338, %c2_339, %c0_340, %c32_341] : memref<1x4x8x512xf32, #tpu.memory_space<vmem>>, vector<1x1x8x256xf32>
    %205 = vector.shape_cast %204 : vector<1x1x8x256xf32> to vector<8x256xf32>
    %c544 = arith.constant 544 : index
    %c0_342 = arith.constant 0 : index
    %206 = vector.load %arg9[%c544, %c0_342] : memref<1024x256xf32, #tpu.memory_space<vmem>>, vector<8x256xf32>
    tpu.vector_store %arg9[%c544, %c0_342], %205 {strides = array<i32>} : memref<1024x256xf32, #tpu.memory_space<vmem>>, vector<8x256xf32>,
    %c0_343 = arith.constant 0 : index
    %c2_344 = arith.constant 2 : index
    %c0_345 = arith.constant 0 : index
    %c40_346 = arith.constant 40 : index
    %207 = vector.load %arg1[%c0_343, %c2_344, %c0_345, %c40_346] : memref<1x4x8x512xf32, #tpu.memory_space<vmem>>, vector<1x1x8x256xf32>
    %208 = vector.shape_cast %207 : vector<1x1x8x256xf32> to vector<8x256xf32>
    %c552 = arith.constant 552 : index
    %c0_347 = arith.constant 0 : index
    %209 = vector.load %arg9[%c552, %c0_347] : memref<1024x256xf32, #tpu.memory_space<vmem>>, vector<8x256xf32>
    tpu.vector_store %arg9[%c552, %c0_347], %208 {strides = array<i32>} : memref<1024x256xf32, #tpu.memory_space<vmem>>, vector<8x256xf32>,
    %c0_348 = arith.constant 0 : index
    %c2_349 = arith.constant 2 : index
    %c0_350 = arith.constant 0 : index
    %c48_351 = arith.constant 48 : index
    %210 = vector.load %arg1[%c0_348, %c2_349, %c0_350, %c48_351] : memref<1x4x8x512xf32, #tpu.memory_space<vmem>>, vector<1x1x8x256xf32>
    %211 = vector.shape_cast %210 : vector<1x1x8x256xf32> to vector<8x256xf32>
    %c560 = arith.constant 560 : index
    %c0_352 = arith.constant 0 : index
    %212 = vector.load %arg9[%c560, %c0_352] : memref<1024x256xf32, #tpu.memory_space<vmem>>, vector<8x256xf32>
    tpu.vector_store %arg9[%c560, %c0_352], %211 {strides = array<i32>} : memref<1024x256xf32, #tpu.memory_space<vmem>>, vector<8x256xf32>,
    %c0_353 = arith.constant 0 : index
    %c2_354 = arith.constant 2 : index
    %c0_355 = arith.constant 0 : index
    %c56_356 = arith.constant 56 : index
    %213 = vector.load %arg1[%c0_353, %c2_354, %c0_355, %c56_356] : memref<1x4x8x512xf32, #tpu.memory_space<vmem>>, vector<1x1x8x256xf32>
    %214 = vector.shape_cast %213 : vector<1x1x8x256xf32> to vector<8x256xf32>
    %c568 = arith.constant 568 : index
    %c0_357 = arith.constant 0 : index
    %215 = vector.load %arg9[%c568, %c0_357] : memref<1024x256xf32, #tpu.memory_space<vmem>>, vector<8x256xf32>
    tpu.vector_store %arg9[%c568, %c0_357], %214 {strides = array<i32>} : memref<1024x256xf32, #tpu.memory_space<vmem>>, vector<8x256xf32>,
    %c0_358 = arith.constant 0 : index
    %c2_359 = arith.constant 2 : index
    %c0_360 = arith.constant 0 : index
    %c64_361 = arith.constant 64 : index
    %216 = vector.load %arg1[%c0_358, %c2_359, %c0_360, %c64_361] : memref<1x4x8x512xf32, #tpu.memory_space<vmem>>, vector<1x1x8x256xf32>
    %217 = vector.shape_cast %216 : vector<1x1x8x256xf32> to vector<8x256xf32>
    %c576 = arith.constant 576 : index
    %c0_362 = arith.constant 0 : index
    %218 = vector.load %arg9[%c576, %c0_362] : memref<1024x256xf32, #tpu.memory_space<vmem>>, vector<8x256xf32>
    tpu.vector_store %arg9[%c576, %c0_362], %217 {strides = array<i32>} : memref<1024x256xf32, #tpu.memory_space<vmem>>, vector<8x256xf32>,
    %c0_363 = arith.constant 0 : index
    %c2_364 = arith.constant 2 : index
    %c0_365 = arith.constant 0 : index
    %c72_366 = arith.constant 72 : index
    %219 = vector.load %arg1[%c0_363, %c2_364, %c0_365, %c72_366] : memref<1x4x8x512xf32, #tpu.memory_space<vmem>>, vector<1x1x8x256xf32>
    %220 = vector.shape_cast %219 : vector<1x1x8x256xf32> to vector<8x256xf32>
    %c584 = arith.constant 584 : index
    %c0_367 = arith.constant 0 : index
    %221 = vector.load %arg9[%c584, %c0_367] : memref<1024x256xf32, #tpu.memory_space<vmem>>, vector<8x256xf32>
    tpu.vector_store %arg9[%c584, %c0_367], %220 {strides = array<i32>} : memref<1024x256xf32, #tpu.memory_space<vmem>>, vector<8x256xf32>,
    %c0_368 = arith.constant 0 : index
    %c2_369 = arith.constant 2 : index
    %c0_370 = arith.constant 0 : index
    %c80_371 = arith.constant 80 : index
    %222 = vector.load %arg1[%c0_368, %c2_369, %c0_370, %c80_371] : memref<1x4x8x512xf32, #tpu.memory_space<vmem>>, vector<1x1x8x256xf32>
    %223 = vector.shape_cast %222 : vector<1x1x8x256xf32> to vector<8x256xf32>
    %c592 = arith.constant 592 : index
    %c0_372 = arith.constant 0 : index
    %224 = vector.load %arg9[%c592, %c0_372] : memref<1024x256xf32, #tpu.memory_space<vmem>>, vector<8x256xf32>
    tpu.vector_store %arg9[%c592, %c0_372], %223 {strides = array<i32>} : memref<1024x256xf32, #tpu.memory_space<vmem>>, vector<8x256xf32>,
    %c0_373 = arith.constant 0 : index
    %c2_374 = arith.constant 2 : index
    %c0_375 = arith.constant 0 : index
    %c88_376 = arith.constant 88 : index
    %225 = vector.load %arg1[%c0_373, %c2_374, %c0_375, %c88_376] : memref<1x4x8x512xf32, #tpu.memory_space<vmem>>, vector<1x1x8x256xf32>
    %226 = vector.shape_cast %225 : vector<1x1x8x256xf32> to vector<8x256xf32>
    %c600 = arith.constant 600 : index
    %c0_377 = arith.constant 0 : index
    %227 = vector.load %arg9[%c600, %c0_377] : memref<1024x256xf32, #tpu.memory_space<vmem>>, vector<8x256xf32>
    tpu.vector_store %arg9[%c600, %c0_377], %226 {strides = array<i32>} : memref<1024x256xf32, #tpu.memory_space<vmem>>, vector<8x256xf32>,
    %c0_378 = arith.constant 0 : index
    %c2_379 = arith.constant 2 : index
    %c0_380 = arith.constant 0 : index
    %c96_381 = arith.constant 96 : index
    %228 = vector.load %arg1[%c0_378, %c2_379, %c0_380, %c96_381] : memref<1x4x8x512xf32, #tpu.memory_space<vmem>>, vector<1x1x8x256xf32>
    %229 = vector.shape_cast %228 : vector<1x1x8x256xf32> to vector<8x256xf32>
    %c608 = arith.constant 608 : index
    %c0_382 = arith.constant 0 : index
    %230 = vector.load %arg9[%c608, %c0_382] : memref<1024x256xf32, #tpu.memory_space<vmem>>, vector<8x256xf32>
    tpu.vector_store %arg9[%c608, %c0_382], %229 {strides = array<i32>} : memref<1024x256xf32, #tpu.memory_space<vmem>>, vector<8x256xf32>,
    %c0_383 = arith.constant 0 : index
    %c2_384 = arith.constant 2 : index
    %c0_385 = arith.constant 0 : index
    %c104_386 = arith.constant 104 : index
    %231 = vector.load %arg1[%c0_383, %c2_384, %c0_385, %c104_386] : memref<1x4x8x512xf32, #tpu.memory_space<vmem>>, vector<1x1x8x256xf32>
    %232 = vector.shape_cast %231 : vector<1x1x8x256xf32> to vector<8x256xf32>
    %c616 = arith.constant 616 : index
    %c0_387 = arith.constant 0 : index
    %233 = vector.load %arg9[%c616, %c0_387] : memref<1024x256xf32, #tpu.memory_space<vmem>>, vector<8x256xf32>
    tpu.vector_store %arg9[%c616, %c0_387], %232 {strides = array<i32>} : memref<1024x256xf32, #tpu.memory_space<vmem>>, vector<8x256xf32>,
    %c0_388 = arith.constant 0 : index
    %c2_389 = arith.constant 2 : index
    %c0_390 = arith.constant 0 : index
    %c112_391 = arith.constant 112 : index
    %234 = vector.load %arg1[%c0_388, %c2_389, %c0_390, %c112_391] : memref<1x4x8x512xf32, #tpu.memory_space<vmem>>, vector<1x1x8x256xf32>
    %235 = vector.shape_cast %234 : vector<1x1x8x256xf32> to vector<8x256xf32>
    %c624 = arith.constant 624 : index
    %c0_392 = arith.constant 0 : index
    %236 = vector.load %arg9[%c624, %c0_392] : memref<1024x256xf32, #tpu.memory_space<vmem>>, vector<8x256xf32>
    tpu.vector_store %arg9[%c624, %c0_392], %235 {strides = array<i32>} : memref<1024x256xf32, #tpu.memory_space<vmem>>, vector<8x256xf32>,
    %c0_393 = arith.constant 0 : index
    %c2_394 = arith.constant 2 : index
    %c0_395 = arith.constant 0 : index
    %c120_396 = arith.constant 120 : index
    %237 = vector.load %arg1[%c0_393, %c2_394, %c0_395, %c120_396] : memref<1x4x8x512xf32, #tpu.memory_space<vmem>>, vector<1x1x8x256xf32>
    %238 = vector.shape_cast %237 : vector<1x1x8x256xf32> to vector<8x256xf32>
    %c632 = arith.constant 632 : index
    %c0_397 = arith.constant 0 : index
    %239 = vector.load %arg9[%c632, %c0_397] : memref<1024x256xf32, #tpu.memory_space<vmem>>, vector<8x256xf32>
    tpu.vector_store %arg9[%c632, %c0_397], %238 {strides = array<i32>} : memref<1024x256xf32, #tpu.memory_space<vmem>>, vector<8x256xf32>,
    %c0_398 = arith.constant 0 : index
    %c2_399 = arith.constant 2 : index
    %c0_400 = arith.constant 0 : index
    %c128_401 = arith.constant 128 : index
    %240 = vector.load %arg1[%c0_398, %c2_399, %c0_400, %c128_401] : memref<1x4x8x512xf32, #tpu.memory_space<vmem>>, vector<1x1x8x256xf32>
    %241 = vector.shape_cast %240 : vector<1x1x8x256xf32> to vector<8x256xf32>
    %c640 = arith.constant 640 : index
    %c0_402 = arith.constant 0 : index
    %242 = vector.load %arg9[%c640, %c0_402] : memref<1024x256xf32, #tpu.memory_space<vmem>>, vector<8x256xf32>
    tpu.vector_store %arg9[%c640, %c0_402], %241 {strides = array<i32>} : memref<1024x256xf32, #tpu.memory_space<vmem>>, vector<8x256xf32>,
    %c0_403 = arith.constant 0 : index
    %c2_404 = arith.constant 2 : index
    %c0_405 = arith.constant 0 : index
    %c136_406 = arith.constant 136 : index
    %243 = vector.load %arg1[%c0_403, %c2_404, %c0_405, %c136_406] : memref<1x4x8x512xf32, #tpu.memory_space<vmem>>, vector<1x1x8x256xf32>
    %244 = vector.shape_cast %243 : vector<1x1x8x256xf32> to vector<8x256xf32>
    %c648 = arith.constant 648 : index
    %c0_407 = arith.constant 0 : index
    %245 = vector.load %arg9[%c648, %c0_407] : memref<1024x256xf32, #tpu.memory_space<vmem>>, vector<8x256xf32>
    tpu.vector_store %arg9[%c648, %c0_407], %244 {strides = array<i32>} : memref<1024x256xf32, #tpu.memory_space<vmem>>, vector<8x256xf32>,
    %c0_408 = arith.constant 0 : index
    %c2_409 = arith.constant 2 : index
    %c0_410 = arith.constant 0 : index
    %c144_411 = arith.constant 144 : index
    %246 = vector.load %arg1[%c0_408, %c2_409, %c0_410, %c144_411] : memref<1x4x8x512xf32, #tpu.memory_space<vmem>>, vector<1x1x8x256xf32>
    %247 = vector.shape_cast %246 : vector<1x1x8x256xf32> to vector<8x256xf32>
    %c656 = arith.constant 656 : index
    %c0_412 = arith.constant 0 : index
    %248 = vector.load %arg9[%c656, %c0_412] : memref<1024x256xf32, #tpu.memory_space<vmem>>, vector<8x256xf32>
    tpu.vector_store %arg9[%c656, %c0_412], %247 {strides = array<i32>} : memref<1024x256xf32, #tpu.memory_space<vmem>>, vector<8x256xf32>,
    %c0_413 = arith.constant 0 : index
    %c2_414 = arith.constant 2 : index
    %c0_415 = arith.constant 0 : index
    %c152_416 = arith.constant 152 : index
    %249 = vector.load %arg1[%c0_413, %c2_414, %c0_415, %c152_416] : memref<1x4x8x512xf32, #tpu.memory_space<vmem>>, vector<1x1x8x256xf32>
    %250 = vector.shape_cast %249 : vector<1x1x8x256xf32> to vector<8x256xf32>
    %c664 = arith.constant 664 : index
    %c0_417 = arith.constant 0 : index
    %251 = vector.load %arg9[%c664, %c0_417] : memref<1024x256xf32, #tpu.memory_space<vmem>>, vector<8x256xf32>
    tpu.vector_store %arg9[%c664, %c0_417], %250 {strides = array<i32>} : memref<1024x256xf32, #tpu.memory_space<vmem>>, vector<8x256xf32>,
    %c0_418 = arith.constant 0 : index
    %c2_419 = arith.constant 2 : index
    %c0_420 = arith.constant 0 : index
    %c160_421 = arith.constant 160 : index
    %252 = vector.load %arg1[%c0_418, %c2_419, %c0_420, %c160_421] : memref<1x4x8x512xf32, #tpu.memory_space<vmem>>, vector<1x1x8x256xf32>
    %253 = vector.shape_cast %252 : vector<1x1x8x256xf32> to vector<8x256xf32>
    %c672 = arith.constant 672 : index
    %c0_422 = arith.constant 0 : index
    %254 = vector.load %arg9[%c672, %c0_422] : memref<1024x256xf32, #tpu.memory_space<vmem>>, vector<8x256xf32>
    tpu.vector_store %arg9[%c672, %c0_422], %253 {strides = array<i32>} : memref<1024x256xf32, #tpu.memory_space<vmem>>, vector<8x256xf32>,
    %c0_423 = arith.constant 0 : index
    %c2_424 = arith.constant 2 : index
    %c0_425 = arith.constant 0 : index
    %c168_426 = arith.constant 168 : index
    %255 = vector.load %arg1[%c0_423, %c2_424, %c0_425, %c168_426] : memref<1x4x8x512xf32, #tpu.memory_space<vmem>>, vector<1x1x8x256xf32>
    %256 = vector.shape_cast %255 : vector<1x1x8x256xf32> to vector<8x256xf32>
    %c680 = arith.constant 680 : index
    %c0_427 = arith.constant 0 : index
    %257 = vector.load %arg9[%c680, %c0_427] : memref<1024x256xf32, #tpu.memory_space<vmem>>, vector<8x256xf32>
    tpu.vector_store %arg9[%c680, %c0_427], %256 {strides = array<i32>} : memref<1024x256xf32, #tpu.memory_space<vmem>>, vector<8x256xf32>,
    %c0_428 = arith.constant 0 : index
    %c2_429 = arith.constant 2 : index
    %c0_430 = arith.constant 0 : index
    %c176_431 = arith.constant 176 : index
    %258 = vector.load %arg1[%c0_428, %c2_429, %c0_430, %c176_431] : memref<1x4x8x512xf32, #tpu.memory_space<vmem>>, vector<1x1x8x256xf32>
    %259 = vector.shape_cast %258 : vector<1x1x8x256xf32> to vector<8x256xf32>
    %c688 = arith.constant 688 : index
    %c0_432 = arith.constant 0 : index
    %260 = vector.load %arg9[%c688, %c0_432] : memref<1024x256xf32, #tpu.memory_space<vmem>>, vector<8x256xf32>
    tpu.vector_store %arg9[%c688, %c0_432], %259 {strides = array<i32>} : memref<1024x256xf32, #tpu.memory_space<vmem>>, vector<8x256xf32>,
    %c0_433 = arith.constant 0 : index
    %c2_434 = arith.constant 2 : index
    %c0_435 = arith.constant 0 : index
    %c184_436 = arith.constant 184 : index
    %261 = vector.load %arg1[%c0_433, %c2_434, %c0_435, %c184_436] : memref<1x4x8x512xf32, #tpu.memory_space<vmem>>, vector<1x1x8x256xf32>
    %262 = vector.shape_cast %261 : vector<1x1x8x256xf32> to vector<8x256xf32>
    %c696 = arith.constant 696 : index
    %c0_437 = arith.constant 0 : index
    %263 = vector.load %arg9[%c696, %c0_437] : memref<1024x256xf32, #tpu.memory_space<vmem>>, vector<8x256xf32>
    tpu.vector_store %arg9[%c696, %c0_437], %262 {strides = array<i32>} : memref<1024x256xf32, #tpu.memory_space<vmem>>, vector<8x256xf32>,
    %c0_438 = arith.constant 0 : index
    %c2_439 = arith.constant 2 : index
    %c0_440 = arith.constant 0 : index
    %c192_441 = arith.constant 192 : index
    %264 = vector.load %arg1[%c0_438, %c2_439, %c0_440, %c192_441] : memref<1x4x8x512xf32, #tpu.memory_space<vmem>>, vector<1x1x8x256xf32>
    %265 = vector.shape_cast %264 : vector<1x1x8x256xf32> to vector<8x256xf32>
    %c704 = arith.constant 704 : index
    %c0_442 = arith.constant 0 : index
    %266 = vector.load %arg9[%c704, %c0_442] : memref<1024x256xf32, #tpu.memory_space<vmem>>, vector<8x256xf32>
    tpu.vector_store %arg9[%c704, %c0_442], %265 {strides = array<i32>} : memref<1024x256xf32, #tpu.memory_space<vmem>>, vector<8x256xf32>,
    %c0_443 = arith.constant 0 : index
    %c2_444 = arith.constant 2 : index
    %c0_445 = arith.constant 0 : index
    %c200_446 = arith.constant 200 : index
    %267 = vector.load %arg1[%c0_443, %c2_444, %c0_445, %c200_446] : memref<1x4x8x512xf32, #tpu.memory_space<vmem>>, vector<1x1x8x256xf32>
    %268 = vector.shape_cast %267 : vector<1x1x8x256xf32> to vector<8x256xf32>
    %c712 = arith.constant 712 : index
    %c0_447 = arith.constant 0 : index
    %269 = vector.load %arg9[%c712, %c0_447] : memref<1024x256xf32, #tpu.memory_space<vmem>>, vector<8x256xf32>
    tpu.vector_store %arg9[%c712, %c0_447], %268 {strides = array<i32>} : memref<1024x256xf32, #tpu.memory_space<vmem>>, vector<8x256xf32>,
    %c0_448 = arith.constant 0 : index
    %c2_449 = arith.constant 2 : index
    %c0_450 = arith.constant 0 : index
    %c208_451 = arith.constant 208 : index
    %270 = vector.load %arg1[%c0_448, %c2_449, %c0_450, %c208_451] : memref<1x4x8x512xf32, #tpu.memory_space<vmem>>, vector<1x1x8x256xf32>
    %271 = vector.shape_cast %270 : vector<1x1x8x256xf32> to vector<8x256xf32>
    %c720 = arith.constant 720 : index
    %c0_452 = arith.constant 0 : index
    %272 = vector.load %arg9[%c720, %c0_452] : memref<1024x256xf32, #tpu.memory_space<vmem>>, vector<8x256xf32>
    tpu.vector_store %arg9[%c720, %c0_452], %271 {strides = array<i32>} : memref<1024x256xf32, #tpu.memory_space<vmem>>, vector<8x256xf32>,
    %c0_453 = arith.constant 0 : index
    %c2_454 = arith.constant 2 : index
    %c0_455 = arith.constant 0 : index
    %c216_456 = arith.constant 216 : index
    %273 = vector.load %arg1[%c0_453, %c2_454, %c0_455, %c216_456] : memref<1x4x8x512xf32, #tpu.memory_space<vmem>>, vector<1x1x8x256xf32>
    %274 = vector.shape_cast %273 : vector<1x1x8x256xf32> to vector<8x256xf32>
    %c728 = arith.constant 728 : index
    %c0_457 = arith.constant 0 : index
    %275 = vector.load %arg9[%c728, %c0_457] : memref<1024x256xf32, #tpu.memory_space<vmem>>, vector<8x256xf32>
    tpu.vector_store %arg9[%c728, %c0_457], %274 {strides = array<i32>} : memref<1024x256xf32, #tpu.memory_space<vmem>>, vector<8x256xf32>,
    %c0_458 = arith.constant 0 : index
    %c2_459 = arith.constant 2 : index
    %c0_460 = arith.constant 0 : index
    %c224_461 = arith.constant 224 : index
    %276 = vector.load %arg1[%c0_458, %c2_459, %c0_460, %c224_461] : memref<1x4x8x512xf32, #tpu.memory_space<vmem>>, vector<1x1x8x256xf32>
    %277 = vector.shape_cast %276 : vector<1x1x8x256xf32> to vector<8x256xf32>
    %c736 = arith.constant 736 : index
    %c0_462 = arith.constant 0 : index
    %278 = vector.load %arg9[%c736, %c0_462] : memref<1024x256xf32, #tpu.memory_space<vmem>>, vector<8x256xf32>
    tpu.vector_store %arg9[%c736, %c0_462], %277 {strides = array<i32>} : memref<1024x256xf32, #tpu.memory_space<vmem>>, vector<8x256xf32>,
    %c0_463 = arith.constant 0 : index
    %c2_464 = arith.constant 2 : index
    %c0_465 = arith.constant 0 : index
    %c232_466 = arith.constant 232 : index
    %279 = vector.load %arg1[%c0_463, %c2_464, %c0_465, %c232_466] : memref<1x4x8x512xf32, #tpu.memory_space<vmem>>, vector<1x1x8x256xf32>
    %280 = vector.shape_cast %279 : vector<1x1x8x256xf32> to vector<8x256xf32>
    %c744 = arith.constant 744 : index
    %c0_467 = arith.constant 0 : index
    %281 = vector.load %arg9[%c744, %c0_467] : memref<1024x256xf32, #tpu.memory_space<vmem>>, vector<8x256xf32>
    tpu.vector_store %arg9[%c744, %c0_467], %280 {strides = array<i32>} : memref<1024x256xf32, #tpu.memory_space<vmem>>, vector<8x256xf32>,
    %c0_468 = arith.constant 0 : index
    %c2_469 = arith.constant 2 : index
    %c0_470 = arith.constant 0 : index
    %c240_471 = arith.constant 240 : index
    %282 = vector.load %arg1[%c0_468, %c2_469, %c0_470, %c240_471] : memref<1x4x8x512xf32, #tpu.memory_space<vmem>>, vector<1x1x8x256xf32>
    %283 = vector.shape_cast %282 : vector<1x1x8x256xf32> to vector<8x256xf32>
    %c752 = arith.constant 752 : index
    %c0_472 = arith.constant 0 : index
    %284 = vector.load %arg9[%c752, %c0_472] : memref<1024x256xf32, #tpu.memory_space<vmem>>, vector<8x256xf32>
    tpu.vector_store %arg9[%c752, %c0_472], %283 {strides = array<i32>} : memref<1024x256xf32, #tpu.memory_space<vmem>>, vector<8x256xf32>,
    %c0_473 = arith.constant 0 : index
    %c2_474 = arith.constant 2 : index
    %c0_475 = arith.constant 0 : index
    %c248_476 = arith.constant 248 : index
    %285 = vector.load %arg1[%c0_473, %c2_474, %c0_475, %c248_476] : memref<1x4x8x512xf32, #tpu.memory_space<vmem>>, vector<1x1x8x256xf32>
    %286 = vector.shape_cast %285 : vector<1x1x8x256xf32> to vector<8x256xf32>
    %c760 = arith.constant 760 : index
    %c0_477 = arith.constant 0 : index
    %287 = vector.load %arg9[%c760, %c0_477] : memref<1024x256xf32, #tpu.memory_space<vmem>>, vector<8x256xf32>
    tpu.vector_store %arg9[%c760, %c0_477], %286 {strides = array<i32>} : memref<1024x256xf32, #tpu.memory_space<vmem>>, vector<8x256xf32>,
    %c0_478 = arith.constant 0 : index
    %c3 = arith.constant 3 : index
    %c0_479 = arith.constant 0 : index
    %c0_480 = arith.constant 0 : index
    %288 = vector.load %arg1[%c0_478, %c3, %c0_479, %c0_480] : memref<1x4x8x512xf32, #tpu.memory_space<vmem>>, vector<1x1x8x256xf32>
    %289 = vector.shape_cast %288 : vector<1x1x8x256xf32> to vector<8x256xf32>
    %c768 = arith.constant 768 : index
    %c0_481 = arith.constant 0 : index
    %290 = vector.load %arg9[%c768, %c0_481] : memref<1024x256xf32, #tpu.memory_space<vmem>>, vector<8x256xf32>
    tpu.vector_store %arg9[%c768, %c0_481], %289 {strides = array<i32>} : memref<1024x256xf32, #tpu.memory_space<vmem>>, vector<8x256xf32>,
    %c0_482 = arith.constant 0 : index
    %c3_483 = arith.constant 3 : index
    %c0_484 = arith.constant 0 : index
    %c8_485 = arith.constant 8 : index
    %291 = vector.load %arg1[%c0_482, %c3_483, %c0_484, %c8_485] : memref<1x4x8x512xf32, #tpu.memory_space<vmem>>, vector<1x1x8x256xf32>
    %292 = vector.shape_cast %291 : vector<1x1x8x256xf32> to vector<8x256xf32>
    %c776 = arith.constant 776 : index
    %c0_486 = arith.constant 0 : index
    %293 = vector.load %arg9[%c776, %c0_486] : memref<1024x256xf32, #tpu.memory_space<vmem>>, vector<8x256xf32>
    tpu.vector_store %arg9[%c776, %c0_486], %292 {strides = array<i32>} : memref<1024x256xf32, #tpu.memory_space<vmem>>, vector<8x256xf32>,
    %c0_487 = arith.constant 0 : index
    %c3_488 = arith.constant 3 : index
    %c0_489 = arith.constant 0 : index
    %c16_490 = arith.constant 16 : index
    %294 = vector.load %arg1[%c0_487, %c3_488, %c0_489, %c16_490] : memref<1x4x8x512xf32, #tpu.memory_space<vmem>>, vector<1x1x8x256xf32>
    %295 = vector.shape_cast %294 : vector<1x1x8x256xf32> to vector<8x256xf32>
    %c784 = arith.constant 784 : index
    %c0_491 = arith.constant 0 : index
    %296 = vector.load %arg9[%c784, %c0_491] : memref<1024x256xf32, #tpu.memory_space<vmem>>, vector<8x256xf32>
    tpu.vector_store %arg9[%c784, %c0_491], %295 {strides = array<i32>} : memref<1024x256xf32, #tpu.memory_space<vmem>>, vector<8x256xf32>,
    %c0_492 = arith.constant 0 : index
    %c3_493 = arith.constant 3 : index
    %c0_494 = arith.constant 0 : index
    %c24_495 = arith.constant 24 : index
    %297 = vector.load %arg1[%c0_492, %c3_493, %c0_494, %c24_495] : memref<1x4x8x512xf32, #tpu.memory_space<vmem>>, vector<1x1x8x256xf32>
    %298 = vector.shape_cast %297 : vector<1x1x8x256xf32> to vector<8x256xf32>
    %c792 = arith.constant 792 : index
    %c0_496 = arith.constant 0 : index
    %299 = vector.load %arg9[%c792, %c0_496] : memref<1024x256xf32, #tpu.memory_space<vmem>>, vector<8x256xf32>
    tpu.vector_store %arg9[%c792, %c0_496], %298 {strides = array<i32>} : memref<1024x256xf32, #tpu.memory_space<vmem>>, vector<8x256xf32>,
    %c0_497 = arith.constant 0 : index
    %c3_498 = arith.constant 3 : index
    %c0_499 = arith.constant 0 : index
    %c32_500 = arith.constant 32 : index
    %300 = vector.load %arg1[%c0_497, %c3_498, %c0_499, %c32_500] : memref<1x4x8x512xf32, #tpu.memory_space<vmem>>, vector<1x1x8x256xf32>
    %301 = vector.shape_cast %300 : vector<1x1x8x256xf32> to vector<8x256xf32>
    %c800 = arith.constant 800 : index
    %c0_501 = arith.constant 0 : index
    %302 = vector.load %arg9[%c800, %c0_501] : memref<1024x256xf32, #tpu.memory_space<vmem>>, vector<8x256xf32>
    tpu.vector_store %arg9[%c800, %c0_501], %301 {strides = array<i32>} : memref<1024x256xf32, #tpu.memory_space<vmem>>, vector<8x256xf32>,
    %c0_502 = arith.constant 0 : index
    %c3_503 = arith.constant 3 : index
    %c0_504 = arith.constant 0 : index
    %c40_505 = arith.constant 40 : index
    %303 = vector.load %arg1[%c0_502, %c3_503, %c0_504, %c40_505] : memref<1x4x8x512xf32, #tpu.memory_space<vmem>>, vector<1x1x8x256xf32>
    %304 = vector.shape_cast %303 : vector<1x1x8x256xf32> to vector<8x256xf32>
    %c808 = arith.constant 808 : index
    %c0_506 = arith.constant 0 : index
    %305 = vector.load %arg9[%c808, %c0_506] : memref<1024x256xf32, #tpu.memory_space<vmem>>, vector<8x256xf32>
    tpu.vector_store %arg9[%c808, %c0_506], %304 {strides = array<i32>} : memref<1024x256xf32, #tpu.memory_space<vmem>>, vector<8x256xf32>,
    %c0_507 = arith.constant 0 : index
    %c3_508 = arith.constant 3 : index
    %c0_509 = arith.constant 0 : index
    %c48_510 = arith.constant 48 : index
    %306 = vector.load %arg1[%c0_507, %c3_508, %c0_509, %c48_510] : memref<1x4x8x512xf32, #tpu.memory_space<vmem>>, vector<1x1x8x256xf32>
    %307 = vector.shape_cast %306 : vector<1x1x8x256xf32> to vector<8x256xf32>
    %c816 = arith.constant 816 : index
    %c0_511 = arith.constant 0 : index
    %308 = vector.load %arg9[%c816, %c0_511] : memref<1024x256xf32, #tpu.memory_space<vmem>>, vector<8x256xf32>
    tpu.vector_store %arg9[%c816, %c0_511], %307 {strides = array<i32>} : memref<1024x256xf32, #tpu.memory_space<vmem>>, vector<8x256xf32>,
    %c0_512 = arith.constant 0 : index
    %c3_513 = arith.constant 3 : index
    %c0_514 = arith.constant 0 : index
    %c56_515 = arith.constant 56 : index
    %309 = vector.load %arg1[%c0_512, %c3_513, %c0_514, %c56_515] : memref<1x4x8x512xf32, #tpu.memory_space<vmem>>, vector<1x1x8x256xf32>
    %310 = vector.shape_cast %309 : vector<1x1x8x256xf32> to vector<8x256xf32>
    %c824 = arith.constant 824 : index
    %c0_516 = arith.constant 0 : index
    %311 = vector.load %arg9[%c824, %c0_516] : memref<1024x256xf32, #tpu.memory_space<vmem>>, vector<8x256xf32>
    tpu.vector_store %arg9[%c824, %c0_516], %310 {strides = array<i32>} : memref<1024x256xf32, #tpu.memory_space<vmem>>, vector<8x256xf32>,
    %c0_517 = arith.constant 0 : index
    %c3_518 = arith.constant 3 : index
    %c0_519 = arith.constant 0 : index
    %c64_520 = arith.constant 64 : index
    %312 = vector.load %arg1[%c0_517, %c3_518, %c0_519, %c64_520] : memref<1x4x8x512xf32, #tpu.memory_space<vmem>>, vector<1x1x8x256xf32>
    %313 = vector.shape_cast %312 : vector<1x1x8x256xf32> to vector<8x256xf32>
    %c832 = arith.constant 832 : index
    %c0_521 = arith.constant 0 : index
    %314 = vector.load %arg9[%c832, %c0_521] : memref<1024x256xf32, #tpu.memory_space<vmem>>, vector<8x256xf32>
    tpu.vector_store %arg9[%c832, %c0_521], %313 {strides = array<i32>} : memref<1024x256xf32, #tpu.memory_space<vmem>>, vector<8x256xf32>,
    %c0_522 = arith.constant 0 : index
    %c3_523 = arith.constant 3 : index
    %c0_524 = arith.constant 0 : index
    %c72_525 = arith.constant 72 : index
    %315 = vector.load %arg1[%c0_522, %c3_523, %c0_524, %c72_525] : memref<1x4x8x512xf32, #tpu.memory_space<vmem>>, vector<1x1x8x256xf32>
    %316 = vector.shape_cast %315 : vector<1x1x8x256xf32> to vector<8x256xf32>
    %c840 = arith.constant 840 : index
    %c0_526 = arith.constant 0 : index
    %317 = vector.load %arg9[%c840, %c0_526] : memref<1024x256xf32, #tpu.memory_space<vmem>>, vector<8x256xf32>
    tpu.vector_store %arg9[%c840, %c0_526], %316 {strides = array<i32>} : memref<1024x256xf32, #tpu.memory_space<vmem>>, vector<8x256xf32>,
    %c0_527 = arith.constant 0 : index
    %c3_528 = arith.constant 3 : index
    %c0_529 = arith.constant 0 : index
    %c80_530 = arith.constant 80 : index
    %318 = vector.load %arg1[%c0_527, %c3_528, %c0_529, %c80_530] : memref<1x4x8x512xf32, #tpu.memory_space<vmem>>, vector<1x1x8x256xf32>
    %319 = vector.shape_cast %318 : vector<1x1x8x256xf32> to vector<8x256xf32>
    %c848 = arith.constant 848 : index
    %c0_531 = arith.constant 0 : index
    %320 = vector.load %arg9[%c848, %c0_531] : memref<1024x256xf32, #tpu.memory_space<vmem>>, vector<8x256xf32>
    tpu.vector_store %arg9[%c848, %c0_531], %319 {strides = array<i32>} : memref<1024x256xf32, #tpu.memory_space<vmem>>, vector<8x256xf32>,
    %c0_532 = arith.constant 0 : index
    %c3_533 = arith.constant 3 : index
    %c0_534 = arith.constant 0 : index
    %c88_535 = arith.constant 88 : index
    %321 = vector.load %arg1[%c0_532, %c3_533, %c0_534, %c88_535] : memref<1x4x8x512xf32, #tpu.memory_space<vmem>>, vector<1x1x8x256xf32>
    %322 = vector.shape_cast %321 : vector<1x1x8x256xf32> to vector<8x256xf32>
    %c856 = arith.constant 856 : index
    %c0_536 = arith.constant 0 : index
    %323 = vector.load %arg9[%c856, %c0_536] : memref<1024x256xf32, #tpu.memory_space<vmem>>, vector<8x256xf32>
    tpu.vector_store %arg9[%c856, %c0_536], %322 {strides = array<i32>} : memref<1024x256xf32, #tpu.memory_space<vmem>>, vector<8x256xf32>,
    %c0_537 = arith.constant 0 : index
    %c3_538 = arith.constant 3 : index
    %c0_539 = arith.constant 0 : index
    %c96_540 = arith.constant 96 : index
    %324 = vector.load %arg1[%c0_537, %c3_538, %c0_539, %c96_540] : memref<1x4x8x512xf32, #tpu.memory_space<vmem>>, vector<1x1x8x256xf32>
    %325 = vector.shape_cast %324 : vector<1x1x8x256xf32> to vector<8x256xf32>
    %c864 = arith.constant 864 : index
    %c0_541 = arith.constant 0 : index
    %326 = vector.load %arg9[%c864, %c0_541] : memref<1024x256xf32, #tpu.memory_space<vmem>>, vector<8x256xf32>
    tpu.vector_store %arg9[%c864, %c0_541], %325 {strides = array<i32>} : memref<1024x256xf32, #tpu.memory_space<vmem>>, vector<8x256xf32>,
    %c0_542 = arith.constant 0 : index
    %c3_543 = arith.constant 3 : index
    %c0_544 = arith.constant 0 : index
    %c104_545 = arith.constant 104 : index
    %327 = vector.load %arg1[%c0_542, %c3_543, %c0_544, %c104_545] : memref<1x4x8x512xf32, #tpu.memory_space<vmem>>, vector<1x1x8x256xf32>
    %328 = vector.shape_cast %327 : vector<1x1x8x256xf32> to vector<8x256xf32>
    %c872 = arith.constant 872 : index
    %c0_546 = arith.constant 0 : index
    %329 = vector.load %arg9[%c872, %c0_546] : memref<1024x256xf32, #tpu.memory_space<vmem>>, vector<8x256xf32>
    tpu.vector_store %arg9[%c872, %c0_546], %328 {strides = array<i32>} : memref<1024x256xf32, #tpu.memory_space<vmem>>, vector<8x256xf32>,
    %c0_547 = arith.constant 0 : index
    %c3_548 = arith.constant 3 : index
    %c0_549 = arith.constant 0 : index
    %c112_550 = arith.constant 112 : index
    %330 = vector.load %arg1[%c0_547, %c3_548, %c0_549, %c112_550] : memref<1x4x8x512xf32, #tpu.memory_space<vmem>>, vector<1x1x8x256xf32>
    %331 = vector.shape_cast %330 : vector<1x1x8x256xf32> to vector<8x256xf32>
    %c880 = arith.constant 880 : index
    %c0_551 = arith.constant 0 : index
    %332 = vector.load %arg9[%c880, %c0_551] : memref<1024x256xf32, #tpu.memory_space<vmem>>, vector<8x256xf32>
    tpu.vector_store %arg9[%c880, %c0_551], %331 {strides = array<i32>} : memref<1024x256xf32, #tpu.memory_space<vmem>>, vector<8x256xf32>,
    %c0_552 = arith.constant 0 : index
    %c3_553 = arith.constant 3 : index
    %c0_554 = arith.constant 0 : index
    %c120_555 = arith.constant 120 : index
    %333 = vector.load %arg1[%c0_552, %c3_553, %c0_554, %c120_555] : memref<1x4x8x512xf32, #tpu.memory_space<vmem>>, vector<1x1x8x256xf32>
    %334 = vector.shape_cast %333 : vector<1x1x8x256xf32> to vector<8x256xf32>
    %c888 = arith.constant 888 : index
    %c0_556 = arith.constant 0 : index
    %335 = vector.load %arg9[%c888, %c0_556] : memref<1024x256xf32, #tpu.memory_space<vmem>>, vector<8x256xf32>
    tpu.vector_store %arg9[%c888, %c0_556], %334 {strides = array<i32>} : memref<1024x256xf32, #tpu.memory_space<vmem>>, vector<8x256xf32>,
    %c0_557 = arith.constant 0 : index
    %c3_558 = arith.constant 3 : index
    %c0_559 = arith.constant 0 : index
    %c128_560 = arith.constant 128 : index
    %336 = vector.load %arg1[%c0_557, %c3_558, %c0_559, %c128_560] : memref<1x4x8x512xf32, #tpu.memory_space<vmem>>, vector<1x1x8x256xf32>
    %337 = vector.shape_cast %336 : vector<1x1x8x256xf32> to vector<8x256xf32>
    %c896 = arith.constant 896 : index
    %c0_561 = arith.constant 0 : index
    %338 = vector.load %arg9[%c896, %c0_561] : memref<1024x256xf32, #tpu.memory_space<vmem>>, vector<8x256xf32>
    tpu.vector_store %arg9[%c896, %c0_561], %337 {strides = array<i32>} : memref<1024x256xf32, #tpu.memory_space<vmem>>, vector<8x256xf32>,
    %c0_562 = arith.constant 0 : index
    %c3_563 = arith.constant 3 : index
    %c0_564 = arith.constant 0 : index
    %c136_565 = arith.constant 136 : index
    %339 = vector.load %arg1[%c0_562, %c3_563, %c0_564, %c136_565] : memref<1x4x8x512xf32, #tpu.memory_space<vmem>>, vector<1x1x8x256xf32>
    %340 = vector.shape_cast %339 : vector<1x1x8x256xf32> to vector<8x256xf32>
    %c904 = arith.constant 904 : index
    %c0_566 = arith.constant 0 : index
    %341 = vector.load %arg9[%c904, %c0_566] : memref<1024x256xf32, #tpu.memory_space<vmem>>, vector<8x256xf32>
    tpu.vector_store %arg9[%c904, %c0_566], %340 {strides = array<i32>} : memref<1024x256xf32, #tpu.memory_space<vmem>>, vector<8x256xf32>,
    %c0_567 = arith.constant 0 : index
    %c3_568 = arith.constant 3 : index
    %c0_569 = arith.constant 0 : index
    %c144_570 = arith.constant 144 : index
    %342 = vector.load %arg1[%c0_567, %c3_568, %c0_569, %c144_570] : memref<1x4x8x512xf32, #tpu.memory_space<vmem>>, vector<1x1x8x256xf32>
    %343 = vector.shape_cast %342 : vector<1x1x8x256xf32> to vector<8x256xf32>
    %c912 = arith.constant 912 : index
    %c0_571 = arith.constant 0 : index
    %344 = vector.load %arg9[%c912, %c0_571] : memref<1024x256xf32, #tpu.memory_space<vmem>>, vector<8x256xf32>
    tpu.vector_store %arg9[%c912, %c0_571], %343 {strides = array<i32>} : memref<1024x256xf32, #tpu.memory_space<vmem>>, vector<8x256xf32>,
    %c0_572 = arith.constant 0 : index
    %c3_573 = arith.constant 3 : index
    %c0_574 = arith.constant 0 : index
    %c152_575 = arith.constant 152 : index
    %345 = vector.load %arg1[%c0_572, %c3_573, %c0_574, %c152_575] : memref<1x4x8x512xf32, #tpu.memory_space<vmem>>, vector<1x1x8x256xf32>
    %346 = vector.shape_cast %345 : vector<1x1x8x256xf32> to vector<8x256xf32>
    %c920 = arith.constant 920 : index
    %c0_576 = arith.constant 0 : index
    %347 = vector.load %arg9[%c920, %c0_576] : memref<1024x256xf32, #tpu.memory_space<vmem>>, vector<8x256xf32>
    tpu.vector_store %arg9[%c920, %c0_576], %346 {strides = array<i32>} : memref<1024x256xf32, #tpu.memory_space<vmem>>, vector<8x256xf32>,
    %c0_577 = arith.constant 0 : index
    %c3_578 = arith.constant 3 : index
    %c0_579 = arith.constant 0 : index
    %c160_580 = arith.constant 160 : index
    %348 = vector.load %arg1[%c0_577, %c3_578, %c0_579, %c160_580] : memref<1x4x8x512xf32, #tpu.memory_space<vmem>>, vector<1x1x8x256xf32>
    %349 = vector.shape_cast %348 : vector<1x1x8x256xf32> to vector<8x256xf32>
    %c928 = arith.constant 928 : index
    %c0_581 = arith.constant 0 : index
    %350 = vector.load %arg9[%c928, %c0_581] : memref<1024x256xf32, #tpu.memory_space<vmem>>, vector<8x256xf32>
    tpu.vector_store %arg9[%c928, %c0_581], %349 {strides = array<i32>} : memref<1024x256xf32, #tpu.memory_space<vmem>>, vector<8x256xf32>,
    %c0_582 = arith.constant 0 : index
    %c3_583 = arith.constant 3 : index
    %c0_584 = arith.constant 0 : index
    %c168_585 = arith.constant 168 : index
    %351 = vector.load %arg1[%c0_582, %c3_583, %c0_584, %c168_585] : memref<1x4x8x512xf32, #tpu.memory_space<vmem>>, vector<1x1x8x256xf32>
    %352 = vector.shape_cast %351 : vector<1x1x8x256xf32> to vector<8x256xf32>
    %c936 = arith.constant 936 : index
    %c0_586 = arith.constant 0 : index
    %353 = vector.load %arg9[%c936, %c0_586] : memref<1024x256xf32, #tpu.memory_space<vmem>>, vector<8x256xf32>
    tpu.vector_store %arg9[%c936, %c0_586], %352 {strides = array<i32>} : memref<1024x256xf32, #tpu.memory_space<vmem>>, vector<8x256xf32>,
    %c0_587 = arith.constant 0 : index
    %c3_588 = arith.constant 3 : index
    %c0_589 = arith.constant 0 : index
    %c176_590 = arith.constant 176 : index
    %354 = vector.load %arg1[%c0_587, %c3_588, %c0_589, %c176_590] : memref<1x4x8x512xf32, #tpu.memory_space<vmem>>, vector<1x1x8x256xf32>
    %355 = vector.shape_cast %354 : vector<1x1x8x256xf32> to vector<8x256xf32>
    %c944 = arith.constant 944 : index
    %c0_591 = arith.constant 0 : index
    %356 = vector.load %arg9[%c944, %c0_591] : memref<1024x256xf32, #tpu.memory_space<vmem>>, vector<8x256xf32>
    tpu.vector_store %arg9[%c944, %c0_591], %355 {strides = array<i32>} : memref<1024x256xf32, #tpu.memory_space<vmem>>, vector<8x256xf32>,
    %c0_592 = arith.constant 0 : index
    %c3_593 = arith.constant 3 : index
    %c0_594 = arith.constant 0 : index
    %c184_595 = arith.constant 184 : index
    %357 = vector.load %arg1[%c0_592, %c3_593, %c0_594, %c184_595] : memref<1x4x8x512xf32, #tpu.memory_space<vmem>>, vector<1x1x8x256xf32>
    %358 = vector.shape_cast %357 : vector<1x1x8x256xf32> to vector<8x256xf32>
    %c952 = arith.constant 952 : index
    %c0_596 = arith.constant 0 : index
    %359 = vector.load %arg9[%c952, %c0_596] : memref<1024x256xf32, #tpu.memory_space<vmem>>, vector<8x256xf32>
    tpu.vector_store %arg9[%c952, %c0_596], %358 {strides = array<i32>} : memref<1024x256xf32, #tpu.memory_space<vmem>>, vector<8x256xf32>,
    %c0_597 = arith.constant 0 : index
    %c3_598 = arith.constant 3 : index
    %c0_599 = arith.constant 0 : index
    %c192_600 = arith.constant 192 : index
    %360 = vector.load %arg1[%c0_597, %c3_598, %c0_599, %c192_600] : memref<1x4x8x512xf32, #tpu.memory_space<vmem>>, vector<1x1x8x256xf32>
    %361 = vector.shape_cast %360 : vector<1x1x8x256xf32> to vector<8x256xf32>
    %c960 = arith.constant 960 : index
    %c0_601 = arith.constant 0 : index
    %362 = vector.load %arg9[%c960, %c0_601] : memref<1024x256xf32, #tpu.memory_space<vmem>>, vector<8x256xf32>
    tpu.vector_store %arg9[%c960, %c0_601], %361 {strides = array<i32>} : memref<1024x256xf32, #tpu.memory_space<vmem>>, vector<8x256xf32>,
    %c0_602 = arith.constant 0 : index
    %c3_603 = arith.constant 3 : index
    %c0_604 = arith.constant 0 : index
    %c200_605 = arith.constant 200 : index
    %363 = vector.load %arg1[%c0_602, %c3_603, %c0_604, %c200_605] : memref<1x4x8x512xf32, #tpu.memory_space<vmem>>, vector<1x1x8x256xf32>
    %364 = vector.shape_cast %363 : vector<1x1x8x256xf32> to vector<8x256xf32>
    %c968 = arith.constant 968 : index
    %c0_606 = arith.constant 0 : index
    %365 = vector.load %arg9[%c968, %c0_606] : memref<1024x256xf32, #tpu.memory_space<vmem>>, vector<8x256xf32>
    tpu.vector_store %arg9[%c968, %c0_606], %364 {strides = array<i32>} : memref<1024x256xf32, #tpu.memory_space<vmem>>, vector<8x256xf32>,
    %c0_607 = arith.constant 0 : index
    %c3_608 = arith.constant 3 : index
    %c0_609 = arith.constant 0 : index
    %c208_610 = arith.constant 208 : index
    %366 = vector.load %arg1[%c0_607, %c3_608, %c0_609, %c208_610] : memref<1x4x8x512xf32, #tpu.memory_space<vmem>>, vector<1x1x8x256xf32>
    %367 = vector.shape_cast %366 : vector<1x1x8x256xf32> to vector<8x256xf32>
    %c976 = arith.constant 976 : index
    %c0_611 = arith.constant 0 : index
    %368 = vector.load %arg9[%c976, %c0_611] : memref<1024x256xf32, #tpu.memory_space<vmem>>, vector<8x256xf32>
    tpu.vector_store %arg9[%c976, %c0_611], %367 {strides = array<i32>} : memref<1024x256xf32, #tpu.memory_space<vmem>>, vector<8x256xf32>,
    %c0_612 = arith.constant 0 : index
    %c3_613 = arith.constant 3 : index
    %c0_614 = arith.constant 0 : index
    %c216_615 = arith.constant 216 : index
    %369 = vector.load %arg1[%c0_612, %c3_613, %c0_614, %c216_615] : memref<1x4x8x512xf32, #tpu.memory_space<vmem>>, vector<1x1x8x256xf32>
    %370 = vector.shape_cast %369 : vector<1x1x8x256xf32> to vector<8x256xf32>
    %c984 = arith.constant 984 : index
    %c0_616 = arith.constant 0 : index
    %371 = vector.load %arg9[%c984, %c0_616] : memref<1024x256xf32, #tpu.memory_space<vmem>>, vector<8x256xf32>
    tpu.vector_store %arg9[%c984, %c0_616], %370 {strides = array<i32>} : memref<1024x256xf32, #tpu.memory_space<vmem>>, vector<8x256xf32>,
    %c0_617 = arith.constant 0 : index
    %c3_618 = arith.constant 3 : index
    %c0_619 = arith.constant 0 : index
    %c224_620 = arith.constant 224 : index
    %372 = vector.load %arg1[%c0_617, %c3_618, %c0_619, %c224_620] : memref<1x4x8x512xf32, #tpu.memory_space<vmem>>, vector<1x1x8x256xf32>
    %373 = vector.shape_cast %372 : vector<1x1x8x256xf32> to vector<8x256xf32>
    %c992 = arith.constant 992 : index
    %c0_621 = arith.constant 0 : index
    %374 = vector.load %arg9[%c992, %c0_621] : memref<1024x256xf32, #tpu.memory_space<vmem>>, vector<8x256xf32>
    tpu.vector_store %arg9[%c992, %c0_621], %373 {strides = array<i32>} : memref<1024x256xf32, #tpu.memory_space<vmem>>, vector<8x256xf32>,
    %c0_622 = arith.constant 0 : index
    %c3_623 = arith.constant 3 : index
    %c0_624 = arith.constant 0 : index
    %c232_625 = arith.constant 232 : index
    %375 = vector.load %arg1[%c0_622, %c3_623, %c0_624, %c232_625] : memref<1x4x8x512xf32, #tpu.memory_space<vmem>>, vector<1x1x8x256xf32>
    %376 = vector.shape_cast %375 : vector<1x1x8x256xf32> to vector<8x256xf32>
    %c1000 = arith.constant 1000 : index
    %c0_626 = arith.constant 0 : index
    %377 = vector.load %arg9[%c1000, %c0_626] : memref<1024x256xf32, #tpu.memory_space<vmem>>, vector<8x256xf32>
    tpu.vector_store %arg9[%c1000, %c0_626], %376 {strides = array<i32>} : memref<1024x256xf32, #tpu.memory_space<vmem>>, vector<8x256xf32>,
    %c0_627 = arith.constant 0 : index
    %c3_628 = arith.constant 3 : index
    %c0_629 = arith.constant 0 : index
    %c240_630 = arith.constant 240 : index
    %378 = vector.load %arg1[%c0_627, %c3_628, %c0_629, %c240_630] : memref<1x4x8x512xf32, #tpu.memory_space<vmem>>, vector<1x1x8x256xf32>
    %379 = vector.shape_cast %378 : vector<1x1x8x256xf32> to vector<8x256xf32>
    %c1008 = arith.constant 1008 : index
    %c0_631 = arith.constant 0 : index
    %380 = vector.load %arg9[%c1008, %c0_631] : memref<1024x256xf32, #tpu.memory_space<vmem>>, vector<8x256xf32>
    tpu.vector_store %arg9[%c1008, %c0_631], %379 {strides = array<i32>} : memref<1024x256xf32, #tpu.memory_space<vmem>>, vector<8x256xf32>,
    %c0_632 = arith.constant 0 : index
    %c3_633 = arith.constant 3 : index
    %c0_634 = arith.constant 0 : index
    %c248_635 = arith.constant 248 : index
    %381 = vector.load %arg1[%c0_632, %c3_633, %c0_634, %c248_635] : memref<1x4x8x512xf32, #tpu.memory_space<vmem>>, vector<1x1x8x256xf32>
    %382 = vector.shape_cast %381 : vector<1x1x8x256xf32> to vector<8x256xf32>
    %c1016 = arith.constant 1016 : index
    %c0_636 = arith.constant 0 : index
    %383 = vector.load %arg9[%c1016, %c0_636] : memref<1024x256xf32, #tpu.memory_space<vmem>>, vector<8x256xf32>
    tpu.vector_store %arg9[%c1016, %c0_636], %382 {strides = array<i32>} : memref<1024x256xf32, #tpu.memory_space<vmem>>, vector<8x256xf32>,
    %c0_637 = arith.constant 0 : index
    %c0_638 = arith.constant 0 : index
    %384 = vector.load %arg4[%c0_637, %c0_638] : memref<72x4xf32, #tpu.memory_space<vmem>>, vector<72x1xf32>
    %c0_639 = arith.constant 0 : index
    %c0_640 = arith.constant 0 : index
    %385 = vector.load %arg2[%c0_639, %c0_640] : memref<72x1024xf32, #tpu.memory_space<vmem>>, vector<72x1024xf32>
    %c0_641 = arith.constant 0 : index
    %c0_642 = arith.constant 0 : index
    %386 = vector.load %arg9[%c0_641, %c0_642] : memref<1024x256xf32, #tpu.memory_space<vmem>>, vector<1024x256xf32>
    %cst = arith.constant dense<0.000000e+00> : vector<72x256xf32>
    %387 = tpu.matmul %385, %386, %cst {dimension_numbers = #tpu.dot_dimension_numbers<[1], [0], [0], [1], [0, 0, 1, 1], [], []>} : vector<72x1024xf32>, vector<1024x256xf32>, vector<72x256xf32> -> vector<72x256xf32>
    %388 = vector.broadcast %384 : vector<72x1xf32> to vector<72x256xf32>
    %389 = arith.addf %387, %388 : vector<72x256xf32>
    %cst_643 = arith.constant 0.000000e+00 : f32
    %390 = vector.broadcast %cst_643 : f32 to vector<72x256xf32>
    %391 = arith.maximumf %389, %390 : vector<72x256xf32>
    %c0_644 = arith.constant 0 : index
    %c0_645 = arith.constant 0 : index
    %392 = vector.load %arg5[%c0_644, %c0_645] : memref<256x24xf32, #tpu.memory_space<vmem>>, vector<256x24xf32>
    %cst_646 = arith.constant dense<0.000000e+00> : vector<72x24xf32>
    %393 = tpu.matmul %391, %392, %cst_646 {dimension_numbers = #tpu.dot_dimension_numbers<[1], [0], [0], [1], [0, 0, 1, 1], [], []>} : vector<72x256xf32>, vector<256x24xf32>, vector<72x24xf32> -> vector<72x24xf32>
    %c0_647 = arith.constant 0 : index
    %c1_648 = arith.constant 1 : index
    %394 = vector.load %arg4[%c0_647, %c1_648] : memref<72x4xf32, #tpu.memory_space<vmem>>, vector<54x1xf32>
    %c0_649 = arith.constant 0 : index
    %c2_650 = arith.constant 2 : index
    %395 = vector.load %arg4[%c0_649, %c2_650] : memref<72x4xf32, #tpu.memory_space<vmem>>, vector<54x1xf32>
    %c0_651 = arith.constant 0 : index
    %c3_652 = arith.constant 3 : index
    %396 = vector.load %arg4[%c0_651, %c3_652] : memref<72x4xf32, #tpu.memory_space<vmem>>, vector<54x1xf32>
    %c0_653 = arith.constant 0 : index
    %c0_654 = arith.constant 0 : index
    %397 = vector.load %arg3[%c0_653, %c0_654] : memref<54x72xf32, #tpu.memory_space<vmem>>, vector<54x72xf32>
    %cst_655 = arith.constant dense<0.000000e+00> : vector<54x24xf32>
    %398 = tpu.matmul %397, %393, %cst_655 {dimension_numbers = #tpu.dot_dimension_numbers<[1], [0], [0], [1], [0, 0, 1, 1], [], []>} : vector<54x72xf32>, vector<72x24xf32>, vector<54x24xf32> -> vector<54x24xf32>
    %399 = vector.broadcast %394 : vector<54x1xf32> to vector<54x24xf32>
    %400 = arith.addf %398, %399 : vector<54x24xf32>
    %cst_656 = arith.constant 0.000000e+00 : f32
    %401 = vector.broadcast %cst_656 : f32 to vector<54x24xf32>
    %402 = arith.maximumf %400, %401 : vector<54x24xf32>
    %c0_657 = arith.constant 0 : index
    %c0_658 = arith.constant 0 : index
    %403 = vector.load %arg6[%c0_657, %c0_658] : memref<24x3xf32, #tpu.memory_space<vmem>>, vector<24x3xf32>
    %cst_659 = arith.constant dense<0.000000e+00> : vector<54x3xf32>
    %404 = tpu.matmul %402, %403, %cst_659 {dimension_numbers = #tpu.dot_dimension_numbers<[1], [0], [0], [1], [0, 0, 1, 1], [], []>} : vector<54x24xf32>, vector<24x3xf32>, vector<54x3xf32> -> vector<54x3xf32>
    %405 = vector.broadcast %395 : vector<54x1xf32> to vector<54x3xf32>
    %406 = arith.mulf %404, %405 : vector<54x3xf32>
    %407 = vector.broadcast %396 : vector<54x1xf32> to vector<54x3xf32>
    %408 = arith.addf %406, %407 : vector<54x3xf32>
    %409 = arith.mulf %408, %408 : vector<54x3xf32>
    %410 = math.log %409 : vector<54x3xf32>
    %c0_660 = arith.constant 0 : index
    %c0_661 = arith.constant 0 : index
    %411 = vector.load %arg7[%c0_660, %c0_661] : memref<101x180xf32, #tpu.memory_space<vmem>>, vector<54x180xf32>
    %c54 = arith.constant 54 : index
    %c0_662 = arith.constant 0 : index
    %412 = vector.load %arg7[%c54, %c0_662] : memref<101x180xf32, #tpu.memory_space<vmem>>, vector<45x180xf32>
    %c99 = arith.constant 99 : index
    %c0_663 = arith.constant 0 : index
    %413 = vector.load %arg7[%c99, %c0_663] : memref<101x180xf32, #tpu.memory_space<vmem>>, vector<1x180xf32>
    %c100 = arith.constant 100 : index
    %c0_664 = arith.constant 0 : index
    %414 = vector.load %arg7[%c100, %c0_664] : memref<101x180xf32, #tpu.memory_space<vmem>>, vector<1x180xf32>
    %415 = tpu.transpose %410, [1, 0] : vector<54x3xf32> -> vector<3x54xf32>
    %cst_665 = arith.constant dense<0.000000e+00> : vector<3x180xf32>
    %416 = tpu.matmul %415, %411, %cst_665 {dimension_numbers = #tpu.dot_dimension_numbers<[1], [0], [0], [1], [0, 0, 1, 1], [], []>} : vector<3x54xf32>, vector<54x180xf32>, vector<3x180xf32> -> vector<3x180xf32>
    %417 = vector.broadcast %413 : vector<1x180xf32> to vector<3x180xf32>
    %418 = arith.addf %416, %417 : vector<3x180xf32>
    %cst_666 = arith.constant 0.000000e+00 : f32
    %419 = vector.broadcast %cst_666 : f32 to vector<1x45xf32>
    %cst_667 = arith.constant 0.000000e+00 : f32
    %420 = vector.broadcast %cst_667 : f32 to vector<1x45xf32>
    %421 = vector.extract_strided_slice %418 {offsets = [0, 0], sizes = [1, 180], strides = [1, 1]} : vector<3x180xf32> to vector<1x180xf32>
    %cst_668 = arith.constant dense<0.000000e+00> : vector<1x180xf32>
    %422 = tpu.matmul %419, %412, %cst_668 {dimension_numbers = #tpu.dot_dimension_numbers<[1], [0], [0], [1], [0, 0, 1, 1], [], []>} : vector<1x45xf32>, vector<45x180xf32>, vector<1x180xf32> -> vector<1x180xf32>
    %423 = arith.addf %421, %422 : vector<1x180xf32>
    %424 = vector.extract_strided_slice %423 {offsets = [0, 0], sizes = [1, 45], strides = [1, 1]} : vector<1x180xf32> to vector<1x45xf32>
    %cst_669 = arith.constant 0.000000e+00 : f32
    %425 = vector.broadcast %cst_669 : f32 to vector<1x45xf32>
    %426 = arith.subf %425, %424 : vector<1x45xf32>
    %427 = math.exp %426 : vector<1x45xf32>
    %cst_670 = arith.constant 1.000000e+00 : f32
    %428 = vector.broadcast %cst_670 : f32 to vector<1x45xf32>
    %429 = arith.addf %428, %427 : vector<1x45xf32>
    %430 = tpu.reciprocal %429 {approx = true} : vector<1x45xf32> -> vector<1x45xf32>
    %431 = vector.extract_strided_slice %423 {offsets = [0, 45], sizes = [1, 45], strides = [1, 1]} : vector<1x180xf32> to vector<1x45xf32>
    %cst_671 = arith.constant 0.000000e+00 : f32
    %432 = vector.broadcast %cst_671 : f32 to vector<1x45xf32>
    %433 = arith.subf %432, %431 : vector<1x45xf32>
    %434 = math.exp %433 : vector<1x45xf32>
    %cst_672 = arith.constant 1.000000e+00 : f32
    %435 = vector.broadcast %cst_672 : f32 to vector<1x45xf32>
    %436 = arith.addf %435, %434 : vector<1x45xf32>
    %437 = tpu.reciprocal %436 {approx = true} : vector<1x45xf32> -> vector<1x45xf32>
    %438 = vector.extract_strided_slice %423 {offsets = [0, 90], sizes = [1, 45], strides = [1, 1]} : vector<1x180xf32> to vector<1x45xf32>
    %439 = math.tanh %438 : vector<1x45xf32>
    %440 = vector.extract_strided_slice %423 {offsets = [0, 135], sizes = [1, 45], strides = [1, 1]} : vector<1x180xf32> to vector<1x45xf32>
    %cst_673 = arith.constant 0.000000e+00 : f32
    %441 = vector.broadcast %cst_673 : f32 to vector<1x45xf32>
    %442 = arith.subf %441, %440 : vector<1x45xf32>
    %443 = math.exp %442 : vector<1x45xf32>
    %cst_674 = arith.constant 1.000000e+00 : f32
    %444 = vector.broadcast %cst_674 : f32 to vector<1x45xf32>
    %445 = arith.addf %444, %443 : vector<1x45xf32>
    %446 = tpu.reciprocal %445 {approx = true} : vector<1x45xf32> -> vector<1x45xf32>
    %447 = arith.mulf %437, %420 : vector<1x45xf32>
    %448 = arith.mulf %430, %439 : vector<1x45xf32>
    %449 = arith.addf %447, %448 : vector<1x45xf32>
    %450 = math.tanh %449 : vector<1x45xf32>
    %451 = arith.mulf %446, %450 : vector<1x45xf32>
    %452 = vector.extract_strided_slice %418 {offsets = [1, 0], sizes = [1, 180], strides = [1, 1]} : vector<3x180xf32> to vector<1x180xf32>
    %cst_675 = arith.constant dense<0.000000e+00> : vector<1x180xf32>
    %453 = tpu.matmul %451, %412, %cst_675 {dimension_numbers = #tpu.dot_dimension_numbers<[1], [0], [0], [1], [0, 0, 1, 1], [], []>} : vector<1x45xf32>, vector<45x180xf32>, vector<1x180xf32> -> vector<1x180xf32>
    %454 = arith.addf %452, %453 : vector<1x180xf32>
    %455 = vector.extract_strided_slice %454 {offsets = [0, 0], sizes = [1, 45], strides = [1, 1]} : vector<1x180xf32> to vector<1x45xf32>
    %cst_676 = arith.constant 0.000000e+00 : f32
    %456 = vector.broadcast %cst_676 : f32 to vector<1x45xf32>
    %457 = arith.subf %456, %455 : vector<1x45xf32>
    %458 = math.exp %457 : vector<1x45xf32>
    %cst_677 = arith.constant 1.000000e+00 : f32
    %459 = vector.broadcast %cst_677 : f32 to vector<1x45xf32>
    %460 = arith.addf %459, %458 : vector<1x45xf32>
    %461 = tpu.reciprocal %460 {approx = true} : vector<1x45xf32> -> vector<1x45xf32>
    %462 = vector.extract_strided_slice %454 {offsets = [0, 45], sizes = [1, 45], strides = [1, 1]} : vector<1x180xf32> to vector<1x45xf32>
    %cst_678 = arith.constant 0.000000e+00 : f32
    %463 = vector.broadcast %cst_678 : f32 to vector<1x45xf32>
    %464 = arith.subf %463, %462 : vector<1x45xf32>
    %465 = math.exp %464 : vector<1x45xf32>
    %cst_679 = arith.constant 1.000000e+00 : f32
    %466 = vector.broadcast %cst_679 : f32 to vector<1x45xf32>
    %467 = arith.addf %466, %465 : vector<1x45xf32>
    %468 = tpu.reciprocal %467 {approx = true} : vector<1x45xf32> -> vector<1x45xf32>
    %469 = vector.extract_strided_slice %454 {offsets = [0, 90], sizes = [1, 45], strides = [1, 1]} : vector<1x180xf32> to vector<1x45xf32>
    %470 = math.tanh %469 : vector<1x45xf32>
    %471 = vector.extract_strided_slice %454 {offsets = [0, 135], sizes = [1, 45], strides = [1, 1]} : vector<1x180xf32> to vector<1x45xf32>
    %cst_680 = arith.constant 0.000000e+00 : f32
    %472 = vector.broadcast %cst_680 : f32 to vector<1x45xf32>
    %473 = arith.subf %472, %471 : vector<1x45xf32>
    %474 = math.exp %473 : vector<1x45xf32>
    %cst_681 = arith.constant 1.000000e+00 : f32
    %475 = vector.broadcast %cst_681 : f32 to vector<1x45xf32>
    %476 = arith.addf %475, %474 : vector<1x45xf32>
    %477 = tpu.reciprocal %476 {approx = true} : vector<1x45xf32> -> vector<1x45xf32>
    %478 = arith.mulf %468, %449 : vector<1x45xf32>
    %479 = arith.mulf %461, %470 : vector<1x45xf32>
    %480 = arith.addf %478, %479 : vector<1x45xf32>
    %481 = math.tanh %480 : vector<1x45xf32>
    %482 = arith.mulf %477, %481 : vector<1x45xf32>
    %483 = vector.extract_strided_slice %418 {offsets = [2, 0], sizes = [1, 180], strides = [1, 1]} : vector<3x180xf32> to vector<1x180xf32>
    %cst_682 = arith.constant dense<0.000000e+00> : vector<1x180xf32>
    %484 = tpu.matmul %482, %412, %cst_682 {dimension_numbers = #tpu.dot_dimension_numbers<[1], [0], [0], [1], [0, 0, 1, 1], [], []>} : vector<1x45xf32>, vector<45x180xf32>, vector<1x180xf32> -> vector<1x180xf32>
    %485 = arith.addf %483, %484 : vector<1x180xf32>
    %486 = vector.extract_strided_slice %485 {offsets = [0, 0], sizes = [1, 45], strides = [1, 1]} : vector<1x180xf32> to vector<1x45xf32>
    %cst_683 = arith.constant 0.000000e+00 : f32
    %487 = vector.broadcast %cst_683 : f32 to vector<1x45xf32>
    %488 = arith.subf %487, %486 : vector<1x45xf32>
    %489 = math.exp %488 : vector<1x45xf32>
    %cst_684 = arith.constant 1.000000e+00 : f32
    %490 = vector.broadcast %cst_684 : f32 to vector<1x45xf32>
    %491 = arith.addf %490, %489 : vector<1x45xf32>
    %492 = tpu.reciprocal %491 {approx = true} : vector<1x45xf32> -> vector<1x45xf32>
    %493 = vector.extract_strided_slice %485 {offsets = [0, 45], sizes = [1, 45], strides = [1, 1]} : vector<1x180xf32> to vector<1x45xf32>
    %cst_685 = arith.constant 0.000000e+00 : f32
    %494 = vector.broadcast %cst_685 : f32 to vector<1x45xf32>
    %495 = arith.subf %494, %493 : vector<1x45xf32>
    %496 = math.exp %495 : vector<1x45xf32>
    %cst_686 = arith.constant 1.000000e+00 : f32
    %497 = vector.broadcast %cst_686 : f32 to vector<1x45xf32>
    %498 = arith.addf %497, %496 : vector<1x45xf32>
    %499 = tpu.reciprocal %498 {approx = true} : vector<1x45xf32> -> vector<1x45xf32>
    %500 = vector.extract_strided_slice %485 {offsets = [0, 90], sizes = [1, 45], strides = [1, 1]} : vector<1x180xf32> to vector<1x45xf32>
    %501 = math.tanh %500 : vector<1x45xf32>
    %502 = vector.extract_strided_slice %485 {offsets = [0, 135], sizes = [1, 45], strides = [1, 1]} : vector<1x180xf32> to vector<1x45xf32>
    %cst_687 = arith.constant 0.000000e+00 : f32
    %503 = vector.broadcast %cst_687 : f32 to vector<1x45xf32>
    %504 = arith.subf %503, %502 : vector<1x45xf32>
    %505 = math.exp %504 : vector<1x45xf32>
    %cst_688 = arith.constant 1.000000e+00 : f32
    %506 = vector.broadcast %cst_688 : f32 to vector<1x45xf32>
    %507 = arith.addf %506, %505 : vector<1x45xf32>
    %508 = tpu.reciprocal %507 {approx = true} : vector<1x45xf32> -> vector<1x45xf32>
    %509 = arith.mulf %499, %480 : vector<1x45xf32>
    %510 = arith.mulf %492, %501 : vector<1x45xf32>
    %511 = arith.addf %509, %510 : vector<1x45xf32>
    %512 = math.tanh %511 : vector<1x45xf32>
    %513 = arith.mulf %508, %512 : vector<1x45xf32>
    %514 = vector.extract_strided_slice %414 {offsets = [0, 0], sizes = [1, 45], strides = [1, 1]} : vector<1x180xf32> to vector<1x45xf32>
    %515 = vector.extract_strided_slice %414 {offsets = [0, 45], sizes = [1, 1], strides = [1, 1]} : vector<1x180xf32> to vector<1x1xf32>
    %516 = arith.mulf %513, %514 : vector<1x45xf32>
    %cst_689 = arith.constant dense<0.000000e+00> : vector<1xf32>
    %517 = vector.multi_reduction <add>, %516, %cst_689 [1] : vector<1x45xf32> to vector<1xf32>
    %518 = vector.shape_cast %517 : vector<1xf32> to vector<1x1xf32>
    %519 = arith.addf %518, %515 : vector<1x1xf32>
    %cst_690 = arith.constant 0.000000e+00 : f32
    %520 = vector.broadcast %cst_690 : f32 to vector<1x1xf32>
    %521 = arith.maximumf %519, %520 : vector<1x1xf32>
    %c0_691 = arith.constant 0 : index
    %c0_692 = arith.constant 0 : index
    %c0_693 = arith.constant 0 : index
    %522 = vector.load %arg8[%c0_691, %c0_692, %c0_693] : memref<1x1x1xf32, #tpu.memory_space<vmem>>, vector<1x1x1xf32>
    %523 = vector.shape_cast %522 : vector<1x1x1xf32> to vector<1x1xf32>
    %524 = vector.shape_cast %521 : vector<1x1xf32> to vector<1x1x1xf32>
    tpu.vector_store %arg8[%c0_691, %c0_692, %c0_693], %524 {strides = array<i32>} : memref<1x1x1xf32, #tpu.memory_space<vmem>>, vector<1x1x1xf32>,
    return
  }
  func.func @transform_0(%arg0: i32) -> (i32, i32, i32, i32) {
    %c0_i32 = arith.constant 0 : i32
    %c0_i32_0 = arith.constant 0 : i32
    %c0_i32_1 = arith.constant 0 : i32
    %c0_i32_2 = arith.constant 0 : i32
    return %arg0, %c0_i32, %c0_i32_0, %c0_i32_1 : i32, i32, i32, i32
  }
  func.func @transform_1(%arg0: i32) -> (i32, i32) {
    %c0_i32 = arith.constant 0 : i32
    %c0_i32_0 = arith.constant 0 : i32
    %c0_i32_1 = arith.constant 0 : i32
    return %c0_i32, %c0_i32_0 : i32, i32
  }
  func.func @transform_2(%arg0: i32) -> (i32, i32) {
    %c0_i32 = arith.constant 0 : i32
    %c0_i32_0 = arith.constant 0 : i32
    %c0_i32_1 = arith.constant 0 : i32
    return %c0_i32, %c0_i32_0 : i32, i32
  }
  func.func @transform_3(%arg0: i32) -> (i32, i32) {
    %c0_i32 = arith.constant 0 : i32
    %c0_i32_0 = arith.constant 0 : i32
    %c0_i32_1 = arith.constant 0 : i32
    return %c0_i32, %c0_i32_0 : i32, i32
  }
  func.func @transform_4(%arg0: i32) -> (i32, i32) {
    %c0_i32 = arith.constant 0 : i32
    %c0_i32_0 = arith.constant 0 : i32
    %c0_i32_1 = arith.constant 0 : i32
    return %c0_i32, %c0_i32_0 : i32, i32
  }
  func.func @transform_5(%arg0: i32) -> (i32, i32) {
    %c0_i32 = arith.constant 0 : i32
    %c0_i32_0 = arith.constant 0 : i32
    %c0_i32_1 = arith.constant 0 : i32
    return %c0_i32, %c0_i32_0 : i32, i32
  }
  func.func @transform_6(%arg0: i32) -> (i32, i32) {
    %c0_i32 = arith.constant 0 : i32
    %c0_i32_0 = arith.constant 0 : i32
    %c0_i32_1 = arith.constant 0 : i32
    return %c0_i32, %c0_i32_0 : i32, i32
  }
  func.func @transform_7(%arg0: i32) -> (i32, i32, i32) {
    %c0_i32 = arith.constant 0 : i32
    %c0_i32_0 = arith.constant 0 : i32
    %c0_i32_1 = arith.constant 0 : i32
    return %arg0, %c0_i32, %c0_i32_0 : i32, i32, i32
  }
}

</mosaic_0001>

<llo_original>
// kernel: tile.23
$region0: #{tile.23}
  #allocation0 [shape = 's32[1]{0}', space=sflag, size = 0x4, scoped, tag = 'scoped memory for tile.23']
  %s0 = inlined_call_operand.vmem [shape: f32[18], index: 0, kind: input, shape index: {}]
  %s1 = inlined_call_operand.vmem [shape: f32[3,18], index: 1, kind: output, shape index: {}]
  // Predicated region
  $region2: #{tile.23} parent=0 // pred_check
    _
  $region3: #{tile.23} parent=0 // pred_check_branch
    %3 = sbr.rel (0) target = $region5
  $region4: #{tile.23} parent=0 // pred_region
    _
  $region5: #{tile.23} parent=0 // pred_fallthru
    _
  %v4 = vld [vmem:[%s0] ss:$0 sm:$0xff]
  %5 = vst [vmem:[%s1] sm:$0xf] %v4

// kernel: tsception2_forward.1
$region0: #{tsception2_forward.1}
  #allocation0 [shape = 'u32[]', space=smem, size = 0x4, offset = 0x4, fixed_abs, tag = 'smem constant byte address 0x4 - core index']
  #allocation1 [shape = 'u32[144,128]{1,0:T(1,128)}', space=vmem, size = 0x12000, scoped, tag = 'internal scratch']
  #allocation2 [shape = 'f32[1024,256]{1,0:T(8,128)}', space=vmem, size = 0x100000, scoped, tag = 'scratch operand']
  %s0 = inlined_call_operand.vmem [shape: f32[2,4,8,512], index: 0, kind: input, shape index: {}]
  %s1 = inlined_call_operand.vmem [shape: f32[72,1024], index: 1, kind: input, shape index: {}]
  %s2 = inlined_call_operand.vmem [shape: f32[54,72], index: 2, kind: input, shape index: {}]
  %s3 = inlined_call_operand.vmem [shape: f32[72,4], index: 3, kind: input, shape index: {}]
  %s4 = inlined_call_operand.vmem [shape: f32[256,24], index: 4, kind: input, shape index: {}]
  %s5 = inlined_call_operand.vmem [shape: f32[24,3], index: 5, kind: input, shape index: {}]
  %s6 = inlined_call_operand.vmem [shape: f32[101,180], index: 6, kind: input, shape index: {}]
  %s7 = inlined_call_operand.vmem [shape: f32[2,1,1], index: 7, kind: output, shape index: {}]
  %s8 = sld [smem:[#allocation0]]
  $region61: #{tsception2_forward.1} parent=0
    _
  %s10 = ssub.s32 1, %s8
  %s11 = scalar_select 0, %s10, %s8
  loop: start=0, step=1, limit=4
  $region2: #{tsception2_forward.1} parent=0 // loop_pre_header
    _
  $region3: #{tsception2_forward.1} parent=0 // loop_header
    %s13 = sphi 0, %s17
    %p14 = scmp.ge.s32.totalorder %s13, 4
    %s23 = sphi 0, %s25
    %s26 = sphi 0, %s23
    %s27 = sphi 0, %s26
    %s43 = sphi 0, %s27
    %s47 = sphi 0, %s47
    %s49 = sphi 0, %s47
    %s50 = sphi 0, %s49
    %s64 = sphi 0, %s50
    %s68 = sphi 0, %s68
    %s70 = sphi 0, %s68
    %s71 = sphi 0, %s70
    %s85 = sphi 0, %s71
    %s89 = sphi 0, %s89
    %s91 = sphi 0, %s89
    %s92 = sphi 0, %s91
    %s106 = sphi 0, %s92
    %s110 = sphi 0, %s110
    %s112 = sphi 0, %s110
    %s113 = sphi 0, %s112
    %s127 = sphi 0, %s113
    %s131 = sphi 0, %s131
    %s133 = sphi 0, %s131
    %s134 = sphi 0, %s133
    %s148 = sphi 0, %s134
    %s152 = sphi 0, %s152
    %s154 = sphi 0, %s152
    %s155 = sphi 0, %s154
    %s169 = sphi 0, %s155
    %s175 = sphi 0, %s177
    %s178 = sphi 0, %s175
    %s179 = sphi 0, %s178
    %s195 = sphi 0, %s179
  $region4: #{tsception2_forward.1} parent=0 // loop_header_branch
    %16 = sbr.rel (%p14) target = $region8
  $region5: #{tsception2_forward.1} parent=0 // loop_body
    %s18 = ssub.s32 %s13, 1
    %s19 = ssub.s32 %s13, 2
    %s20 = sadd.s32 %s13, 1
    %s21 = ssub.s32 %s13, %s20
    %p22 = scmp.eq.s32.totalorder %s21, 0
    %s24 = sadd.s32 %s23, 1
    %s25 = scalar_select %p22, %s23, %s24
    %p28 = pneg %p22
    %p29 = scmp.eq.s32.totalorder %s13, 1
    %p30 = por %p28, %p29
    %p31 = scmp.ne.s32.totalorder %s23, %s26
    %p32 = scmp.eq.s32.totalorder %s13, 0
    %p33 = por %p31, %p32
    %p34 = scmp.ne.s32.totalorder %s23, %s26
    %p35 = scmp.eq.s32.totalorder %s18, 1
    %p36 = por %p34, %p35
    %p37 = scmp.ne.s32.totalorder %s26, %s27
    %p38 = scmp.eq.s32.totalorder %s18, 0
    %p39 = por %p37, %p38
    %p40 = scmp.ne.s32.totalorder %s26, %s27
    %p41 = scmp.eq.s32.totalorder %s19, 1
    %p42 = por %p40, %p41
    %p44 = scmp.ne.s32.totalorder %s27, %s43
    %p45 = scmp.eq.s32.totalorder %s19, 0
    %p46 = por %p44, %p45
    %s48 = sadd.s32 %s47, 1
    %p51 = scmp.eq.s32.totalorder %s13, 1
    %p52 = scmp.ne.s32.totalorder %s47, %s49
    %p53 = scmp.eq.s32.totalorder %s13, 0
    %p54 = por %p52, %p53
    %p55 = scmp.ne.s32.totalorder %s47, %s49
    %p56 = scmp.eq.s32.totalorder %s18, 1
    %p57 = por %p55, %p56
    %p58 = scmp.ne.s32.totalorder %s49, %s50
    %p59 = scmp.eq.s32.totalorder %s18, 0
    %p60 = por %p58, %p59
    %p61 = scmp.ne.s32.totalorder %s49, %s50
    %p62 = scmp.eq.s32.totalorder %s19, 1
    %p63 = por %p61, %p62
    %p65 = scmp.ne.s32.totalorder %s50, %s64
    %p66 = scmp.eq.s32.totalorder %s19, 0
    %p67 = por %p65, %p66
    %s69 = sadd.s32 %s68, 1
    %p72 = scmp.eq.s32.totalorder %s13, 1
    %p73 = scmp.ne.s32.totalorder %s68, %s70
    %p74 = scmp.eq.s32.totalorder %s13, 0
    %p75 = por %p73, %p74
    %p76 = scmp.ne.s32.totalorder %s68, %s70
    %p77 = scmp.eq.s32.totalorder %s18, 1
    %p78 = por %p76, %p77
    %p79 = scmp.ne.s32.totalorder %s70, %s71
    %p80 = scmp.eq.s32.totalorder %s18, 0
    %p81 = por %p79, %p80
    %p82 = scmp.ne.s32.totalorder %s70, %s71
    %p83 = scmp.eq.s32.totalorder %s19, 1
    %p84 = por %p82, %p83
    %p86 = scmp.ne.s32.totalorder %s71, %s85
    %p87 = scmp.eq.s32.totalorder %s19, 0
    %p88 = por %p86, %p87
    %s90 = sadd.s32 %s89, 1
    %p93 = scmp.eq.s32.totalorder %s13, 1
    %p94 = scmp.ne.s32.totalorder %s89, %s91
    %p95 = scmp.eq.s32.totalorder %s13, 0
    %p96 = por %p94, %p95
    %p97 = scmp.ne.s32.totalorder %s89, %s91
    %p98 = scmp.eq.s32.totalorder %s18, 1
    %p99 = por %p97, %p98
    %p100 = scmp.ne.s32.totalorder %s91, %s92
    %p101 = scmp.eq.s32.totalorder %s18, 0
    %p102 = por %p100, %p101
    %p103 = scmp.ne.s32.totalorder %s91, %s92
    %p104 = scmp.eq.s32.totalorder %s19, 1
    %p105 = por %p103, %p104
    %p107 = scmp.ne.s32.totalorder %s92, %s106
    %p108 = scmp.eq.s32.totalorder %s19, 0
    %p109 = por %p107, %p108
    %s111 = sadd.s32 %s110, 1
    %p114 = scmp.eq.s32.totalorder %s13, 1
    %p115 = scmp.ne.s32.totalorder %s110, %s112
    %p116 = scmp.eq.s32.totalorder %s13, 0
    %p117 = por %p115, %p116
    %p118 = scmp.ne.s32.totalorder %s110, %s112
    %p119 = scmp.eq.s32.totalorder %s18, 1
    %p120 = por %p118, %p119
    %p121 = scmp.ne.s32.totalorder %s112, %s113
    %p122 = scmp.eq.s32.totalorder %s18, 0
    %p123 = por %p121, %p122
    %p124 = scmp.ne.s32.totalorder %s112, %s113
    %p125 = scmp.eq.s32.totalorder %s19, 1
    %p126 = por %p124, %p125
    %p128 = scmp.ne.s32.totalorder %s113, %s127
    %p129 = scmp.eq.s32.totalorder %s19, 0
    %p130 = por %p128, %p129
    %s132 = sadd.s32 %s131, 1
    %p135 = scmp.eq.s32.totalorder %s13, 1
    %p136 = scmp.ne.s32.totalorder %s131, %s133
    %p137 = scmp.eq.s32.totalorder %s13, 0
    %p138 = por %p136, %p137
    %p139 = scmp.ne.s32.totalorder %s131, %s133
    %p140 = scmp.eq.s32.totalorder %s18, 1
    %p141 = por %p139, %p140
    %p142 = scmp.ne.s32.totalorder %s133, %s134
    %p143 = scmp.eq.s32.totalorder %s18, 0
    %p144 = por %p142, %p143
    %p145 = scmp.ne.s32.totalorder %s133, %s134
    %p146 = scmp.eq.s32.totalorder %s19, 1
    %p147 = por %p145, %p146
    %p149 = scmp.ne.s32.totalorder %s134, %s148
    %p150 = scmp.eq.s32.totalorder %s19, 0
    %p151 = por %p149, %p150
    %s153 = sadd.s32 %s152, 1
    %p156 = scmp.eq.s32.totalorder %s13, 1
    %p157 = scmp.ne.s32.totalorder %s152, %s154
    %p158 = scmp.eq.s32.totalorder %s13, 0
    %p159 = por %p157, %p158
    %p160 = scmp.ne.s32.totalorder %s152, %s154
    %p161 = scmp.eq.s32.totalorder %s18, 1
    %p162 = por %p160, %p161
    %p163 = scmp.ne.s32.totalorder %s154, %s155
    %p164 = scmp.eq.s32.totalorder %s18, 0
    %p165 = por %p163, %p164
    %p166 = scmp.ne.s32.totalorder %s154, %s155
    %p167 = scmp.eq.s32.totalorder %s19, 1
    %p168 = por %p166, %p167
    %p170 = scmp.ne.s32.totalorder %s155, %s169
    %p171 = scmp.eq.s32.totalorder %s19, 0
    %p172 = por %p170, %p171
    %s173 = ssub.s32 %s13, %s20
    %p174 = scmp.eq.s32.totalorder %s173, 0
    %s176 = sadd.s32 %s175, 1
    %s177 = scalar_select %p174, %s175, %s176
    %p180 = pneg %p174
    %p181 = scmp.eq.s32.totalorder %s13, 1
    %p182 = por %p180, %p181
    %p183 = scmp.ne.s32.totalorder %s175, %s178
    %p184 = scmp.eq.s32.totalorder %s13, 0
    %p185 = por %p183, %p184
    %p186 = scmp.ne.s32.totalorder %s175, %s178
    %p187 = scmp.eq.s32.totalorder %s18, 1
    %p188 = por %p186, %p187
    %p189 = scmp.ne.s32.totalorder %s178, %s179
    %p190 = scmp.eq.s32.totalorder %s18, 0
    %p191 = por %p189, %p190
    %p192 = scmp.ne.s32.totalorder %s178, %s179
    %p193 = scmp.eq.s32.totalorder %s19, 1
    %p194 = por %p192, %p193
    %p196 = scmp.ne.s32.totalorder %s179, %s195
    %p197 = scmp.eq.s32.totalorder %s19, 0
    %p198 = por %p196, %p197
    %p199 = scmp.le.s32.totalorder 1, %s13
    %p200 = scmp.lt.s32.totalorder %s13, 3
    %p201 = pnand %p199, %p200
    %p202 = pneg %p201
    // Predicated region
    $region9: #{tsception2_forward.1} parent=5 // pred_check
      _
    $region10: #{tsception2_forward.1} parent=5 // pred_check_branch
      %204 = sbr.rel (%p201) target = $region12
    $region11: #{tsception2_forward.1} parent=5 // pred_region
      %s205 = ssub.s32 %s13, 1
      // Predicated region
      $region13: #{tsception2_forward.1} parent=11 // pred_check
        %p206 = pneg %p60
      $region14: #{tsception2_forward.1} parent=11 // pred_check_branch
        %208 = sbr.rel (%p206) target = $region16
      $region15: #{tsception2_forward.1} parent=11 // pred_region
        _
      $region16: #{tsception2_forward.1} parent=11 // pred_fallthru
        _
      // Predicated region
      $region17: #{tsception2_forward.1} parent=11 // pred_check
        %p209 = pneg %p81
      $region18: #{tsception2_forward.1} parent=11 // pred_check_branch
        %211 = sbr.rel (%p209) target = $region20
      $region19: #{tsception2_forward.1} parent=11 // pred_region
        _
      $region20: #{tsception2_forward.1} parent=11 // pred_fallthru
        _
      // Predicated region
      $region21: #{tsception2_forward.1} parent=11 // pred_check
        %p212 = pneg %p102
      $region22: #{tsception2_forward.1} parent=11 // pred_check_branch
        %214 = sbr.rel (%p212) target = $region24
      $region23: #{tsception2_forward.1} parent=11 // pred_region
        _
      $region24: #{tsception2_forward.1} parent=11 // pred_fallthru
        _
      // Predicated region
      $region25: #{tsception2_forward.1} parent=11 // pred_check
        %p215 = pneg %p123
      $region26: #{tsception2_forward.1} parent=11 // pred_check_branch
        %217 = sbr.rel (%p215) target = $region28
      $region27: #{tsception2_forward.1} parent=11 // pred_region
        _
      $region28: #{tsception2_forward.1} parent=11 // pred_fallthru
        _
      // Predicated region
      $region29: #{tsception2_forward.1} parent=11 // pred_check
        %p218 = pneg %p144
      $region30: #{tsception2_forward.1} parent=11 // pred_check_branch
        %220 = sbr.rel (%p218) target = $region32
      $region31: #{tsception2_forward.1} parent=11 // pred_region
        _
      $region32: #{tsception2_forward.1} parent=11 // pred_fallthru
        _
      // Predicated region
      $region33: #{tsception2_forward.1} parent=11 // pred_check
        %p221 = pneg %p165
      $region34: #{tsception2_forward.1} parent=11 // pred_check_branch
        %223 = sbr.rel (%p221) target = $region36
      $region35: #{tsception2_forward.1} parent=11 // pred_region
        _
      $region36: #{tsception2_forward.1} parent=11 // pred_fallthru
        _
    $region12: #{tsception2_forward.1} parent=5 // pred_fallthru
      _
    %p224 = scmp.lt.s32.totalorder %s13, 2
    // Predicated region
    $region37: #{tsception2_forward.1} parent=5 // pred_check
      %p225 = pneg %p224
    $region38: #{tsception2_forward.1} parent=5 // pred_check_branch
      %227 = sbr.rel (%p225) target = $region40
    $region39: #{tsception2_forward.1} parent=5 // pred_region
      // Predicated region
      $region41: #{tsception2_forward.1} parent=39 // pred_check
        %p228 = pneg %p33
      $region42: #{tsception2_forward.1} parent=39 // pred_check_branch
        %230 = sbr.rel (%p228) target = $region44
      $region43: #{tsception2_forward.1} parent=39 // pred_region
        %p231 = scmp.lt.s32.totalorder %s13, 1
        %s232 = scalar_select %p231, %s13, 1
        %s233 = smul.addr %s232, 16
        %s234 = smul.addr %s233, 8
        %s235 = scalar_lea.vmem %s0, %s234
      $region44: #{tsception2_forward.1} parent=39 // pred_fallthru
        _
    $region40: #{tsception2_forward.1} parent=5 // pred_fallthru
      _
    %p236 = scmp.le.s32.totalorder 1, %s13
    %p237 = scmp.lt.s32.totalorder %s13, 3
    %p238 = pnand %p236, %p237
    %p239 = pneg %p238
    // Predicated region
    $region45: #{tsception2_forward.1} parent=5 // pred_check
      _
    $region46: #{tsception2_forward.1} parent=5 // pred_check_branch
      %241 = sbr.rel (%p238) target = $region48
    $region47: #{tsception2_forward.1} parent=5 // pred_region
      %s242 = ssub.s32 %s13, 1
      %p243 = scmp.lt.s32.totalorder %s18, 1
      %s244 = scalar_select %p243, %s18, 1
      %s245 = smul.addr %s244, 16
      %s246 = smul.addr %s245, 8
      %s247 = scalar_lea.vmem %s0, %s246
      %p248 = pneg %p39
      %p249 = pneg %p36
      %p250 = pneg %p60
      %p251 = pneg %p57
      %p252 = pneg %p81
      %p253 = pneg %p78
      %p254 = pneg %p102
      %p255 = pneg %p99
      %p256 = pneg %p123
      %p257 = pneg %p120
      %p258 = pneg %p144
      %p259 = pneg %p141
      %p260 = pneg %p165
      %p261 = pneg %p162
      %p262 = pneg %p191
      %p263 = pneg %p188
      %p264 = scmp.lt.s32.totalorder %s18, 1
      %s265 = scalar_select %p264, %s18, 1
      %s266 = scalar_lea.vmem %s7, %s265
      %p267 = scmp.lt.s32.totalorder %s18, 1
      %s268 = scalar_select %p267, %s18, 1
      %s269 = smul.addr %s268, 16
      %s270 = smul.addr %s269, 8
      %s271 = scalar_lea.vmem %s0, %s270
      %p272 = scmp.lt.s32.totalorder %s18, 1
      %s273 = scalar_select %p272, %s18, 1
      %s274 = scalar_lea.vmem %s7, %s273
      %v275 = vld [vmem:[%s271] sm:$0xff]
      %v276 = vld [vmem:[%s271 + $0x8] sm:$0xff]
      %277 = vst [vmem:[#allocation2] sm:$0xff] %v275
      %278 = vst [vmem:[#allocation2 + $0x8] sm:$0xff] %v276
      %v279 = vld [vmem:[%s271] sm:$0xff]
      %v280 = vld [vmem:[%s271 + $0x8] sm:$0xff]
      %v281 = vld [vmem:[%s271 + $0x10] sm:$0xff]
      %285 = vrot.lane.b32.xlu0 %v279, 120
      %v286 = vpop.permute.xlu0 %285
      %287 = vrot.lane.b32.xlu0 %v280, 120
      %v288 = vpop.permute.xlu0 %287
      %289 = vrot.lane.b32.xlu0 %v281, 120
      %v290 = vpop.permute.xlu0 %289
      %vm291 = vcmask 982016
      %v292 = vsel %vm291, %v286, %v288
      %v293 = vsel %vm291, %v288, %v290
      %296 = vst [vmem:[#allocation2 + $0x10] sm:$0xff] %v292
      %297 = vst [vmem:[#allocation2 + $0x18] sm:$0xff] %v293
      %v298 = vld [vmem:[%s271] sm:$0xff]
      %v299 = vld [vmem:[%s271 + $0x8] sm:$0xff]
      %v300 = vld [vmem:[%s271 + $0x10] sm:$0xff]
      %304 = vrot.lane.b32.xlu0 %v298, 112
      %v305 = vpop.permute.xlu0 %304
      %306 = vrot.lane.b32.xlu0 %v299, 112
      %v307 = vpop.permute.xlu0 %306
      %308 = vrot.lane.b32.xlu0 %v300, 112
      %v309 = vpop.permute.xlu0 %308
      %vm310 = vcmask 916480
      %v311 = vsel %vm310, %v305, %v307
      %v312 = vsel %vm310, %v307, %v309
      %315 = vst [vmem:[#allocation2 + $0x20] sm:$0xff] %v311
      %316 = vst [vmem:[#allocation2 + $0x28] sm:$0xff] %v312
      %v317 = vld [vmem:[%s271] sm:$0xff]
      %v318 = vld [vmem:[%s271 + $0x8] sm:$0xff]
      %v319 = vld [vmem:[%s271 + $0x10] sm:$0xff]
      %323 = vrot.lane.b32.xlu0 %v317, 104
      %v324 = vpop.permute.xlu0 %323
      %325 = vrot.lane.b32.xlu0 %v318, 104
      %v326 = vpop.permute.xlu0 %325
      %327 = vrot.lane.b32.xlu0 %v319, 104
      %v328 = vpop.permute.xlu0 %327
      %vm329 = vcmask 850944
      %v330 = vsel %vm329, %v324, %v326
      %v331 = vsel %vm329, %v326, %v328
      %334 = vst [vmem:[#allocation2 + $0x30] sm:$0xff] %v330
      %335 = vst [vmem:[#allocation2 + $0x38] sm:$0xff] %v331
      %v336 = vld [vmem:[%s271] sm:$0xff]
      %v337 = vld [vmem:[%s271 + $0x8] sm:$0xff]
      %v338 = vld [vmem:[%s271 + $0x10] sm:$0xff]
      %342 = vrot.lane.b32.xlu0 %v336, 96
      %v343 = vpop.permute.xlu0 %342
      %344 = vrot.lane.b32.xlu0 %v337, 96
      %v345 = vpop.permute.xlu0 %344
      %346 = vrot.lane.b32.xlu0 %v338, 96
      %v347 = vpop.permute.xlu0 %346
      %vm348 = vcmask 785408
      %v349 = vsel %vm348, %v343, %v345
      %v350 = vsel %vm348, %v345, %v347
      %353 = vst [vmem:[#allocation2 + $0x40] sm:$0xff] %v349
      %354 = vst [vmem:[#allocation2 + $0x48] sm:$0xff] %v350
      %v355 = vld [vmem:[%s271] sm:$0xff]
      %v356 = vld [vmem:[%s271 + $0x8] sm:$0xff]
      %v357 = vld [vmem:[%s271 + $0x10] sm:$0xff]
      %361 = vrot.lane.b32.xlu0 %v355, 88
      %v362 = vpop.permute.xlu0 %361
      %363 = vrot.lane.b32.xlu0 %v356, 88
      %v364 = vpop.permute.xlu0 %363
      %365 = vrot.lane.b32.xlu0 %v357, 88
      %v366 = vpop.permute.xlu0 %365
      %vm367 = vcmask 719872
      %v368 = vsel %vm367, %v362, %v364
      %v369 = vsel %vm367, %v364, %v366
      %372 = vst [vmem:[#allocation2 + $0x50] sm:$0xff] %v368
      %373 = vst [vmem:[#allocation2 + $0x58] sm:$0xff] %v369
      %v374 = vld [vmem:[%s271] sm:$0xff]
      %v375 = vld [vmem:[%s271 + $0x8] sm:$0xff]
      %v376 = vld [vmem:[%s271 + $0x10] sm:$0xff]
      %380 = vrot.lane.b32.xlu0 %v374, 80
      %v381 = vpop.permute.xlu0 %380
      %382 = vrot.lane.b32.xlu0 %v375, 80
      %v383 = vpop.permute.xlu0 %382
      %384 = vrot.lane.b32.xlu0 %v376, 80
      %v385 = vpop.permute.xlu0 %384
      %vm386 = vcmask 654336
      %v387 = vsel %vm386, %v381, %v383
      %v388 = vsel %vm386, %v383, %v385
      %391 = vst [vmem:[#allocation2 + $0x60] sm:$0xff] %v387
      %392 = vst [vmem:[#allocation2 + $0x68] sm:$0xff] %v388
      %v393 = vld [vmem:[%s271] sm:$0xff]
      %v394 = vld [vmem:[%s271 + $0x8] sm:$0xff]
      %v395 = vld [vmem:[%s271 + $0x10] sm:$0xff]
      %399 = vrot.lane.b32.xlu0 %v393, 72
      %v400 = vpop.permute.xlu0 %399
      %401 = vrot.lane.b32.xlu0 %v394, 72
      %v402 = vpop.permute.xlu0 %401
      %403 = vrot.lane.b32.xlu0 %v395, 72
      %v404 = vpop.permute.xlu0 %403
      %vm405 = vcmask 588800
      %v406 = vsel %vm405, %v400, %v402
      %v407 = vsel %vm405, %v402, %v404
      %410 = vst [vmem:[#allocation2 + $0x70] sm:$0xff] %v406
      %411 = vst [vmem:[#allocation2 + $0x78] sm:$0xff] %v407
      %v412 = vld [vmem:[%s271] sm:$0xff]
      %v413 = vld [vmem:[%s271 + $0x8] sm:$0xff]
      %v414 = vld [vmem:[%s271 + $0x10] sm:$0xff]
      %418 = vrot.lane.b32.xlu0 %v412, 64
      %v419 = vpop.permute.xlu0 %418
      %420 = vrot.lane.b32.xlu0 %v413, 64
      %v421 = vpop.permute.xlu0 %420
      %422 = vrot.lane.b32.xlu0 %v414, 64
      %v423 = vpop.permute.xlu0 %422
      %vm424 = vcmask 523264
      %v425 = vsel %vm424, %v419, %v421
      %v426 = vsel %vm424, %v421, %v423
      %429 = vst [vmem:[#allocation2 + $0x80] sm:$0xff] %v425
      %430 = vst [vmem:[#allocation2 + $0x88] sm:$0xff] %v426
      %v431 = vld [vmem:[%s271] sm:$0xff]
      %v432 = vld [vmem:[%s271 + $0x8] sm:$0xff]
      %v433 = vld [vmem:[%s271 + $0x10] sm:$0xff]
      %437 = vrot.lane.b32.xlu0 %v431, 56
      %v438 = vpop.permute.xlu0 %437
      %439 = vrot.lane.b32.xlu0 %v432, 56
      %v440 = vpop.permute.xlu0 %439
      %441 = vrot.lane.b32.xlu0 %v433, 56
      %v442 = vpop.permute.xlu0 %441
      %vm443 = vcmask 457728
      %v444 = vsel %vm443, %v438, %v440
      %v445 = vsel %vm443, %v440, %v442
      %448 = vst [vmem:[#allocation2 + $0x90] sm:$0xff] %v444
      %449 = vst [vmem:[#allocation2 + $0x98] sm:$0xff] %v445
      %v450 = vld [vmem:[%s271] sm:$0xff]
      %v451 = vld [vmem:[%s271 + $0x8] sm:$0xff]
      %v452 = vld [vmem:[%s271 + $0x10] sm:$0xff]
      %456 = vrot.lane.b32.xlu0 %v450, 48
      %v457 = vpop.permute.xlu0 %456
      %458 = vrot.lane.b32.xlu0 %v451, 48
      %v459 = vpop.permute.xlu0 %458
      %460 = vrot.lane.b32.xlu0 %v452, 48
      %v461 = vpop.permute.xlu0 %460
      %vm462 = vcmask 392192
      %v463 = vsel %vm462, %v457, %v459
      %v464 = vsel %vm462, %v459, %v461
      %467 = vst [vmem:[#allocation2 + $0xa0] sm:$0xff] %v463
      %468 = vst [vmem:[#allocation2 + $0xa8] sm:$0xff] %v464
      %v469 = vld [vmem:[%s271] sm:$0xff]
      %v470 = vld [vmem:[%s271 + $0x8] sm:$0xff]
      %v471 = vld [vmem:[%s271 + $0x10] sm:$0xff]
      %475 = vrot.lane.b32.xlu0 %v469, 40
      %v476 = vpop.permute.xlu0 %475
      %477 = vrot.lane.b32.xlu0 %v470, 40
      %v478 = vpop.permute.xlu0 %477
      %479 = vrot.lane.b32.xlu0 %v471, 40
      %v480 = vpop.permute.xlu0 %479
      %vm481 = vcmask 326656
      %v482 = vsel %vm481, %v476, %v478
      %v483 = vsel %vm481, %v478, %v480
      %486 = vst [vmem:[#allocation2 + $0xb0] sm:$0xff] %v482
      %487 = vst [vmem:[#allocation2 + $0xb8] sm:$0xff] %v483
      %v488 = vld [vmem:[%s271] sm:$0xff]
      %v489 = vld [vmem:[%s271 + $0x8] sm:$0xff]
      %v490 = vld [vmem:[%s271 + $0x10] sm:$0xff]
      %494 = vrot.lane.b32.xlu0 %v488, 32
      %v495 = vpop.permute.xlu0 %494
      %496 = vrot.lane.b32.xlu0 %v489, 32
      %v497 = vpop.permute.xlu0 %496
      %498 = vrot.lane.b32.xlu0 %v490, 32
      %v499 = vpop.permute.xlu0 %498
      %vm500 = vcmask 261120
      %v501 = vsel %vm500, %v495, %v497
      %v502 = vsel %vm500, %v497, %v499
      %505 = vst [vmem:[#allocation2 + $0xc0] sm:$0xff] %v501
      %506 = vst [vmem:[#allocation2 + $0xc8] sm:$0xff] %v502
      %v507 = vld [vmem:[%s271] sm:$0xff]
      %v508 = vld [vmem:[%s271 + $0x8] sm:$0xff]
      %v509 = vld [vmem:[%s271 + $0x10] sm:$0xff]
      %513 = vrot.lane.b32.xlu0 %v507, 24
      %v514 = vpop.permute.xlu0 %513
      %515 = vrot.lane.b32.xlu0 %v508, 24
      %v516 = vpop.permute.xlu0 %515
      %517 = vrot.lane.b32.xlu0 %v509, 24
      %v518 = vpop.permute.xlu0 %517
      %vm519 = vcmask 195584
      %v520 = vsel %vm519, %v514, %v516
      %v521 = vsel %vm519, %v516, %v518
      %524 = vst [vmem:[#allocation2 + $0xd0] sm:$0xff] %v520
      %525 = vst [vmem:[#allocation2 + $0xd8] sm:$0xff] %v521
      %v526 = vld [vmem:[%s271] sm:$0xff]
      %v527 = vld [vmem:[%s271 + $0x8] sm:$0xff]
      %v528 = vld [vmem:[%s271 + $0x10] sm:$0xff]
      %532 = vrot.lane.b32.xlu0 %v526, 16
      %v533 = vpop.permute.xlu0 %532
      %534 = vrot.lane.b32.xlu0 %v527, 16
      %v535 = vpop.permute.xlu0 %534
      %536 = vrot.lane.b32.xlu0 %v528, 16
      %v537 = vpop.permute.xlu0 %536
      %vm538 = vcmask 130048
      %v539 = vsel %vm538, %v533, %v535
      %v540 = vsel %vm538, %v535, %v537
      %543 = vst [vmem:[#allocation2 + $0xe0] sm:$0xff] %v539
      %544 = vst [vmem:[#allocation2 + $0xe8] sm:$0xff] %v540
      %v545 = vld [vmem:[%s271] sm:$0xff]
      %v546 = vld [vmem:[%s271 + $0x8] sm:$0xff]
      %v547 = vld [vmem:[%s271 + $0x10] sm:$0xff]
      %551 = vrot.lane.b32.xlu0 %v545, 8
      %v552 = vpop.permute.xlu0 %551
      %553 = vrot.lane.b32.xlu0 %v546, 8
      %v554 = vpop.permute.xlu0 %553
      %555 = vrot.lane.b32.xlu0 %v547, 8
      %v556 = vpop.permute.xlu0 %555
      %vm557 = vcmask 64512
      %v558 = vsel %vm557, %v552, %v554
      %v559 = vsel %vm557, %v554, %v556
      %562 = vst [vmem:[#allocation2 + $0xf0] sm:$0xff] %v558
      %563 = vst [vmem:[#allocation2 + $0xf8] sm:$0xff] %v559
      %v564 = vld [vmem:[%s271 + $0x8] sm:$0xff]
      %v565 = vld [vmem:[%s271 + $0x10] sm:$0xff]
      %566 = vst [vmem:[#allocation2 + $0x100] sm:$0xff] %v564
      %567 = vst [vmem:[#allocation2 + $0x108] sm:$0xff] %v565
      %v568 = vld [vmem:[%s271 + $0x8] sm:$0xff]
      %v569 = vld [vmem:[%s271 + $0x10] sm:$0xff]
      %v570 = vld [vmem:[%s271 + $0x18] sm:$0xff]
      %574 = vrot.lane.b32.xlu0 %v568, 120
      %v575 = vpop.permute.xlu0 %574
      %576 = vrot.lane.b32.xlu0 %v569, 120
      %v577 = vpop.permute.xlu0 %576
      %578 = vrot.lane.b32.xlu0 %v570, 120
      %v579 = vpop.permute.xlu0 %578
      %v580 = vsel %vm291, %v575, %v577
      %v581 = vsel %vm291, %v577, %v579
      %584 = vst [vmem:[#allocation2 + $0x110] sm:$0xff] %v580
      %585 = vst [vmem:[#allocation2 + $0x118] sm:$0xff] %v581
      %v586 = vld [vmem:[%s271 + $0x8] sm:$0xff]
      %v587 = vld [vmem:[%s271 + $0x10] sm:$0xff]
      %v588 = vld [vmem:[%s271 + $0x18] sm:$0xff]
      %592 = vrot.lane.b32.xlu0 %v586, 112
      %v593 = vpop.permute.xlu0 %592
      %594 = vrot.lane.b32.xlu0 %v587, 112
      %v595 = vpop.permute.xlu0 %594
      %596 = vrot.lane.b32.xlu0 %v588, 112
      %v597 = vpop.permute.xlu0 %596
      %v598 = vsel %vm310, %v593, %v595
      %v599 = vsel %vm310, %v595, %v597
      %602 = vst [vmem:[#allocation2 + $0x120] sm:$0xff] %v598
      %603 = vst [vmem:[#allocation2 + $0x128] sm:$0xff] %v599
      %v604 = vld [vmem:[%s271 + $0x8] sm:$0xff]
      %v605 = vld [vmem:[%s271 + $0x10] sm:$0xff]
      %v606 = vld [vmem:[%s271 + $0x18] sm:$0xff]
      %610 = vrot.lane.b32.xlu0 %v604, 104
      %v611 = vpop.permute.xlu0 %610
      %612 = vrot.lane.b32.xlu0 %v605, 104
      %v613 = vpop.permute.xlu0 %612
      %614 = vrot.lane.b32.xlu0 %v606, 104
      %v615 = vpop.permute.xlu0 %614
      %v616 = vsel %vm329, %v611, %v613
      %v617 = vsel %vm329, %v613, %v615
      %620 = vst [vmem:[#allocation2 + $0x130] sm:$0xff] %v616
      %621 = vst [vmem:[#allocation2 + $0x138] sm:$0xff] %v617
      %v622 = vld [vmem:[%s271 + $0x8] sm:$0xff]
      %v623 = vld [vmem:[%s271 + $0x10] sm:$0xff]
      %v624 = vld [vmem:[%s271 + $0x18] sm:$0xff]
      %628 = vrot.lane.b32.xlu0 %v622, 96
      %v629 = vpop.permute.xlu0 %628
      %630 = vrot.lane.b32.xlu0 %v623, 96
      %v631 = vpop.permute.xlu0 %630
      %632 = vrot.lane.b32.xlu0 %v624, 96
      %v633 = vpop.permute.xlu0 %632
      %v634 = vsel %vm348, %v629, %v631
      %v635 = vsel %vm348, %v631, %v633
      %638 = vst [vmem:[#allocation2 + $0x140] sm:$0xff] %v634
      %639 = vst [vmem:[#allocation2 + $0x148] sm:$0xff] %v635
      %v640 = vld [vmem:[%s271 + $0x8] sm:$0xff]
      %v641 = vld [vmem:[%s271 + $0x10] sm:$0xff]
      %v642 = vld [vmem:[%s271 + $0x18] sm:$0xff]
      %646 = vrot.lane.b32.xlu0 %v640, 88
      %v647 = vpop.permute.xlu0 %646
      %648 = vrot.lane.b32.xlu0 %v641, 88
      %v649 = vpop.permute.xlu0 %648
      %650 = vrot.lane.b32.xlu0 %v642, 88
      %v651 = vpop.permute.xlu0 %650
      %v652 = vsel %vm367, %v647, %v649
      %v653 = vsel %vm367, %v649, %v651
      %656 = vst [vmem:[#allocation2 + $0x150] sm:$0xff] %v652
      %657 = vst [vmem:[#allocation2 + $0x158] sm:$0xff] %v653
      %v658 = vld [vmem:[%s271 + $0x8] sm:$0xff]
      %v659 = vld [vmem:[%s271 + $0x10] sm:$0xff]
      %v660 = vld [vmem:[%s271 + $0x18] sm:$0xff]
      %664 = vrot.lane.b32.xlu0 %v658, 80
      %v665 = vpop.permute.xlu0 %664
      %666 = vrot.lane.b32.xlu0 %v659, 80
      %v667 = vpop.permute.xlu0 %666
      %668 = vrot.lane.b32.xlu0 %v660, 80
      %v669 = vpop.permute.xlu0 %668
      %v670 = vsel %vm386, %v665, %v667
      %v671 = vsel %vm386, %v667, %v669
      %674 = vst [vmem:[#allocation2 + $0x160] sm:$0xff] %v670
      %675 = vst [vmem:[#allocation2 + $0x168] sm:$0xff] %v671
      %v676 = vld [vmem:[%s271 + $0x8] sm:$0xff]
      %v677 = vld [vmem:[%s271 + $0x10] sm:$0xff]
      %v678 = vld [vmem:[%s271 + $0x18] sm:$0xff]
      %682 = vrot.lane.b32.xlu0 %v676, 72
      %v683 = vpop.permute.xlu0 %682
      %684 = vrot.lane.b32.xlu0 %v677, 72
      %v685 = vpop.permute.xlu0 %684
      %686 = vrot.lane.b32.xlu0 %v678, 72
      %v687 = vpop.permute.xlu0 %686
      %v688 = vsel %vm405, %v683, %v685
      %v689 = vsel %vm405, %v685, %v687
      %692 = vst [vmem:[#allocation2 + $0x170] sm:$0xff] %v688
      %693 = vst [vmem:[#allocation2 + $0x178] sm:$0xff] %v689
      %v694 = vld [vmem:[%s271 + $0x8] sm:$0xff]
      %v695 = vld [vmem:[%s271 + $0x10] sm:$0xff]
      %v696 = vld [vmem:[%s271 + $0x18] sm:$0xff]
      %700 = vrot.lane.b32.xlu0 %v694, 64
      %v701 = vpop.permute.xlu0 %700
      %702 = vrot.lane.b32.xlu0 %v695, 64
      %v703 = vpop.permute.xlu0 %702
      %704 = vrot.lane.b32.xlu0 %v696, 64
      %v705 = vpop.permute.xlu0 %704
      %v706 = vsel %vm424, %v701, %v703
      %v707 = vsel %vm424, %v703, %v705
      %710 = vst [vmem:[#allocation2 + $0x180] sm:$0xff] %v706
      %711 = vst [vmem:[#allocation2 + $0x188] sm:$0xff] %v707
      %v712 = vld [vmem:[%s271 + $0x8] sm:$0xff]
      %v713 = vld [vmem:[%s271 + $0x10] sm:$0xff]
      %v714 = vld [vmem:[%s271 + $0x18] sm:$0xff]
      %718 = vrot.lane.b32.xlu0 %v712, 56
      %v719 = vpop.permute.xlu0 %718
      %720 = vrot.lane.b32.xlu0 %v713, 56
      %v721 = vpop.permute.xlu0 %720
      %722 = vrot.lane.b32.xlu0 %v714, 56
      %v723 = vpop.permute.xlu0 %722
      %v724 = vsel %vm443, %v719, %v721
      %v725 = vsel %vm443, %v721, %v723
      %728 = vst [vmem:[#allocation2 + $0x190] sm:$0xff] %v724
      %729 = vst [vmem:[#allocation2 + $0x198] sm:$0xff] %v725
      %v730 = vld [vmem:[%s271 + $0x8] sm:$0xff]
      %v731 = vld [vmem:[%s271 + $0x10] sm:$0xff]
      %v732 = vld [vmem:[%s271 + $0x18] sm:$0xff]
      %736 = vrot.lane.b32.xlu0 %v730, 48
      %v737 = vpop.permute.xlu0 %736
      %738 = vrot.lane.b32.xlu0 %v731, 48
      %v739 = vpop.permute.xlu0 %738
      %740 = vrot.lane.b32.xlu0 %v732, 48
      %v741 = vpop.permute.xlu0 %740
      %v742 = vsel %vm462, %v737, %v739
      %v743 = vsel %vm462, %v739, %v741
      %746 = vst [vmem:[#allocation2 + $0x1a0] sm:$0xff] %v742
      %747 = vst [vmem:[#allocation2 + $0x1a8] sm:$0xff] %v743
      %v748 = vld [vmem:[%s271 + $0x8] sm:$0xff]
      %v749 = vld [vmem:[%s271 + $0x10] sm:$0xff]
      %v750 = vld [vmem:[%s271 + $0x18] sm:$0xff]
      %754 = vrot.lane.b32.xlu0 %v748, 40
      %v755 = vpop.permute.xlu0 %754
      %756 = vrot.lane.b32.xlu0 %v749, 40
      %v757 = vpop.permute.xlu0 %756
      %758 = vrot.lane.b32.xlu0 %v750, 40
      %v759 = vpop.permute.xlu0 %758
      %v760 = vsel %vm481, %v755, %v757
      %v761 = vsel %vm481, %v757, %v759
      %764 = vst [vmem:[#allocation2 + $0x1b0] sm:$0xff] %v760
      %765 = vst [vmem:[#allocation2 + $0x1b8] sm:$0xff] %v761
      %v766 = vld [vmem:[%s271 + $0x8] sm:$0xff]
      %v767 = vld [vmem:[%s271 + $0x10] sm:$0xff]
      %v768 = vld [vmem:[%s271 + $0x18] sm:$0xff]
      %772 = vrot.lane.b32.xlu0 %v766, 32
      %v773 = vpop.permute.xlu0 %772
      %774 = vrot.lane.b32.xlu0 %v767, 32
      %v775 = vpop.permute.xlu0 %774
      %776 = vrot.lane.b32.xlu0 %v768, 32
      %v777 = vpop.permute.xlu0 %776
      %v778 = vsel %vm500, %v773, %v775
      %v779 = vsel %vm500, %v775, %v777
      %782 = vst [vmem:[#allocation2 + $0x1c0] sm:$0xff] %v778
      %783 = vst [vmem:[#allocation2 + $0x1c8] sm:$0xff] %v779
      %v784 = vld [vmem:[%s271 + $0x8] sm:$0xff]
      %v785 = vld [vmem:[%s271 + $0x10] sm:$0xff]
      %v786 = vld [vmem:[%s271 + $0x18] sm:$0xff]
      %790 = vrot.lane.b32.xlu0 %v784, 24
      %v791 = vpop.permute.xlu0 %790
      %792 = vrot.lane.b32.xlu0 %v785, 24
      %v793 = vpop.permute.xlu0 %792
      %794 = vrot.lane.b32.xlu0 %v786, 24
      %v795 = vpop.permute.xlu0 %794
      %v796 = vsel %vm519, %v791, %v793
      %v797 = vsel %vm519, %v793, %v795
      %800 = vst [vmem:[#allocation2 + $0x1d0] sm:$0xff] %v796
      %801 = vst [vmem:[#allocation2 + $0x1d8] sm:$0xff] %v797
      %v802 = vld [vmem:[%s271 + $0x8] sm:$0xff]
      %v803 = vld [vmem:[%s271 + $0x10] sm:$0xff]
      %v804 = vld [vmem:[%s271 + $0x18] sm:$0xff]
      %808 = vrot.lane.b32.xlu0 %v802, 16
      %v809 = vpop.permute.xlu0 %808
      %810 = vrot.lane.b32.xlu0 %v803, 16
      %v811 = vpop.permute.xlu0 %810
      %812 = vrot.lane.b32.xlu0 %v804, 16
      %v813 = vpop.permute.xlu0 %812
      %v814 = vsel %vm538, %v809, %v811
      %v815 = vsel %vm538, %v811, %v813
      %818 = vst [vmem:[#allocation2 + $0x1e0] sm:$0xff] %v814
      %819 = vst [vmem:[#allocation2 + $0x1e8] sm:$0xff] %v815
      %v820 = vld [vmem:[%s271 + $0x8] sm:$0xff]
      %v821 = vld [vmem:[%s271 + $0x10] sm:$0xff]
      %v822 = vld [vmem:[%s271 + $0x18] sm:$0xff]
      %826 = vrot.lane.b32.xlu0 %v820, 8
      %v827 = vpop.permute.xlu0 %826
      %828 = vrot.lane.b32.xlu0 %v821, 8
      %v829 = vpop.permute.xlu0 %828
      %830 = vrot.lane.b32.xlu0 %v822, 8
      %v831 = vpop.permute.xlu0 %830
      %v832 = vsel %vm557, %v827, %v829
      %v833 = vsel %vm557, %v829, %v831
      %836 = vst [vmem:[#allocation2 + $0x1f0] sm:$0xff] %v832
      %837 = vst [vmem:[#allocation2 + $0x1f8] sm:$0xff] %v833
      %s838 = scalar_lea.vmem %s271, 32
      %v839 = vld [vmem:[%s838] sm:$0xff]
      %v840 = vld [vmem:[%s838 + $0x8] sm:$0xff]
      %841 = vst [vmem:[#allocation2 + $0x200] sm:$0xff] %v839
      %842 = vst [vmem:[#allocation2 + $0x208] sm:$0xff] %v840
      %v843 = vld [vmem:[%s838] sm:$0xff]
      %v844 = vld [vmem:[%s838 + $0x8] sm:$0xff]
      %v845 = vld [vmem:[%s838 + $0x10] sm:$0xff]
      %849 = vrot.lane.b32.xlu0 %v843, 120
      %v850 = vpop.permute.xlu0 %849
      %851 = vrot.lane.b32.xlu0 %v844, 120
      %v852 = vpop.permute.xlu0 %851
      %853 = vrot.lane.b32.xlu0 %v845, 120
      %v854 = vpop.permute.xlu0 %853
      %v855 = vsel %vm291, %v850, %v852
      %v856 = vsel %vm291, %v852, %v854
      %859 = vst [vmem:[#allocation2 + $0x210] sm:$0xff] %v855
      %860 = vst [vmem:[#allocation2 + $0x218] sm:$0xff] %v856
      %v861 = vld [vmem:[%s838] sm:$0xff]
      %v862 = vld [vmem:[%s838 + $0x8] sm:$0xff]
      %v863 = vld [vmem:[%s838 + $0x10] sm:$0xff]
      %867 = vrot.lane.b32.xlu0 %v861, 112
      %v868 = vpop.permute.xlu0 %867
      %869 = vrot.lane.b32.xlu0 %v862, 112
      %v870 = vpop.permute.xlu0 %869
      %871 = vrot.lane.b32.xlu0 %v863, 112
      %v872 = vpop.permute.xlu0 %871
      %v873 = vsel %vm310, %v868, %v870
      %v874 = vsel %vm310, %v870, %v872
      %877 = vst [vmem:[#allocation2 + $0x220] sm:$0xff] %v873
      %878 = vst [vmem:[#allocation2 + $0x228] sm:$0xff] %v874
      %v879 = vld [vmem:[%s838] sm:$0xff]
      %v880 = vld [vmem:[%s838 + $0x8] sm:$0xff]
      %v881 = vld [vmem:[%s838 + $0x10] sm:$0xff]
      %885 = vrot.lane.b32.xlu0 %v879, 104
      %v886 = vpop.permute.xlu0 %885
      %887 = vrot.lane.b32.xlu0 %v880, 104
      %v888 = vpop.permute.xlu0 %887
      %889 = vrot.lane.b32.xlu0 %v881, 104
      %v890 = vpop.permute.xlu0 %889
      %v891 = vsel %vm329, %v886, %v888
      %v892 = vsel %vm329, %v888, %v890
      %895 = vst [vmem:[#allocation2 + $0x230] sm:$0xff] %v891
      %896 = vst [vmem:[#allocation2 + $0x238] sm:$0xff] %v892
      %v897 = vld [vmem:[%s838] sm:$0xff]
      %v898 = vld [vmem:[%s838 + $0x8] sm:$0xff]
      %v899 = vld [vmem:[%s838 + $0x10] sm:$0xff]
      %903 = vrot.lane.b32.xlu0 %v897, 96
      %v904 = vpop.permute.xlu0 %903
      %905 = vrot.lane.b32.xlu0 %v898, 96
      %v906 = vpop.permute.xlu0 %905
      %907 = vrot.lane.b32.xlu0 %v899, 96
      %v908 = vpop.permute.xlu0 %907
      %v909 = vsel %vm348, %v904, %v906
      %v910 = vsel %vm348, %v906, %v908
      %913 = vst [vmem:[#allocation2 + $0x240] sm:$0xff] %v909
      %914 = vst [vmem:[#allocation2 + $0x248] sm:$0xff] %v910
      %v915 = vld [vmem:[%s838] sm:$0xff]
      %v916 = vld [vmem:[%s838 + $0x8] sm:$0xff]
      %v917 = vld [vmem:[%s838 + $0x10] sm:$0xff]
      %921 = vrot.lane.b32.xlu0 %v915, 88
      %v922 = vpop.permute.xlu0 %921
      %923 = vrot.lane.b32.xlu0 %v916, 88
      %v924 = vpop.permute.xlu0 %923
      %925 = vrot.lane.b32.xlu0 %v917, 88
      %v926 = vpop.permute.xlu0 %925
      %v927 = vsel %vm367, %v922, %v924
      %v928 = vsel %vm367, %v924, %v926
      %931 = vst [vmem:[#allocation2 + $0x250] sm:$0xff] %v927
      %932 = vst [vmem:[#allocation2 + $0x258] sm:$0xff] %v928
      %v933 = vld [vmem:[%s838] sm:$0xff]
      %v934 = vld [vmem:[%s838 + $0x8] sm:$0xff]
      %v935 = vld [vmem:[%s838 + $0x10] sm:$0xff]
      %939 = vrot.lane.b32.xlu0 %v933, 80
      %v940 = vpop.permute.xlu0 %939
      %941 = vrot.lane.b32.xlu0 %v934, 80
      %v942 = vpop.permute.xlu0 %941
      %943 = vrot.lane.b32.xlu0 %v935, 80
      %v944 = vpop.permute.xlu0 %943
      %v945 = vsel %vm386, %v940, %v942
      %v946 = vsel %vm386, %v942, %v944
      %949 = vst [vmem:[#allocation2 + $0x260] sm:$0xff] %v945
      %950 = vst [vmem:[#allocation2 + $0x268] sm:$0xff] %v946
      %v951 = vld [vmem:[%s838] sm:$0xff]
      %v952 = vld [vmem:[%s838 + $0x8] sm:$0xff]
      %v953 = vld [vmem:[%s838 + $0x10] sm:$0xff]
      %957 = vrot.lane.b32.xlu0 %v951, 72
      %v958 = vpop.permute.xlu0 %957
      %959 = vrot.lane.b32.xlu0 %v952, 72
      %v960 = vpop.permute.xlu0 %959
      %961 = vrot.lane.b32.xlu0 %v953, 72
      %v962 = vpop.permute.xlu0 %961
      %v963 = vsel %vm405, %v958, %v960
      %v964 = vsel %vm405, %v960, %v962
      %967 = vst [vmem:[#allocation2 + $0x270] sm:$0xff] %v963
      %968 = vst [vmem:[#allocation2 + $0x278] sm:$0xff] %v964
      %v969 = vld [vmem:[%s838] sm:$0xff]
      %v970 = vld [vmem:[%s838 + $0x8] sm:$0xff]
      %v971 = vld [vmem:[%s838 + $0x10] sm:$0xff]
      %975 = vrot.lane.b32.xlu0 %v969, 64
      %v976 = vpop.permute.xlu0 %975
      %977 = vrot.lane.b32.xlu0 %v970, 64
      %v978 = vpop.permute.xlu0 %977
      %979 = vrot.lane.b32.xlu0 %v971, 64
      %v980 = vpop.permute.xlu0 %979
      %v981 = vsel %vm424, %v976, %v978
      %v982 = vsel %vm424, %v978, %v980
      %985 = vst [vmem:[#allocation2 + $0x280] sm:$0xff] %v981
      %986 = vst [vmem:[#allocation2 + $0x288] sm:$0xff] %v982
      %v987 = vld [vmem:[%s838] sm:$0xff]
      %v988 = vld [vmem:[%s838 + $0x8] sm:$0xff]
      %v989 = vld [vmem:[%s838 + $0x10] sm:$0xff]
      %993 = vrot.lane.b32.xlu0 %v987, 56
      %v994 = vpop.permute.xlu0 %993
      %995 = vrot.lane.b32.xlu0 %v988, 56
      %v996 = vpop.permute.xlu0 %995
      %997 = vrot.lane.b32.xlu0 %v989, 56
      %v998 = vpop.permute.xlu0 %997
      %v999 = vsel %vm443, %v994, %v996
      %v1000 = vsel %vm443, %v996, %v998
      %1003 = vst [vmem:[#allocation2 + $0x290] sm:$0xff] %v999
      %1004 = vst [vmem:[#allocation2 + $0x298] sm:$0xff] %v1000
      %v1005 = vld [vmem:[%s838] sm:$0xff]
      %v1006 = vld [vmem:[%s838 + $0x8] sm:$0xff]
      %v1007 = vld [vmem:[%s838 + $0x10] sm:$0xff]
      %1011 = vrot.lane.b32.xlu0 %v1005, 48
      %v1012 = vpop.permute.xlu0 %1011
      %1013 = vrot.lane.b32.xlu0 %v1006, 48
      %v1014 = vpop.permute.xlu0 %1013
      %1015 = vrot.lane.b32.xlu0 %v1007, 48
      %v1016 = vpop.permute.xlu0 %1015
      %v1017 = vsel %vm462, %v1012, %v1014
      %v1018 = vsel %vm462, %v1014, %v1016
      %1021 = vst [vmem:[#allocation2 + $0x2a0] sm:$0xff] %v1017
      %1022 = vst [vmem:[#allocation2 + $0x2a8] sm:$0xff] %v1018
      %v1023 = vld [vmem:[%s838] sm:$0xff]
      %v1024 = vld [vmem:[%s838 + $0x8] sm:$0xff]
      %v1025 = vld [vmem:[%s838 + $0x10] sm:$0xff]
      %1029 = vrot.lane.b32.xlu0 %v1023, 40
      %v1030 = vpop.permute.xlu0 %1029
      %1031 = vrot.lane.b32.xlu0 %v1024, 40
      %v1032 = vpop.permute.xlu0 %1031
      %1033 = vrot.lane.b32.xlu0 %v1025, 40
      %v1034 = vpop.permute.xlu0 %1033
      %v1035 = vsel %vm481, %v1030, %v1032
      %v1036 = vsel %vm481, %v1032, %v1034
      %1039 = vst [vmem:[#allocation2 + $0x2b0] sm:$0xff] %v1035
      %1040 = vst [vmem:[#allocation2 + $0x2b8] sm:$0xff] %v1036
      %v1041 = vld [vmem:[%s838] sm:$0xff]
      %v1042 = vld [vmem:[%s838 + $0x8] sm:$0xff]
      %v1043 = vld [vmem:[%s838 + $0x10] sm:$0xff]
      %1047 = vrot.lane.b32.xlu0 %v1041, 32
      %v1048 = vpop.permute.xlu0 %1047
      %1049 = vrot.lane.b32.xlu0 %v1042, 32
      %v1050 = vpop.permute.xlu0 %1049
      %1051 = vrot.lane.b32.xlu0 %v1043, 32
      %v1052 = vpop.permute.xlu0 %1051
      %v1053 = vsel %vm500, %v1048, %v1050
      %v1054 = vsel %vm500, %v1050, %v1052
      %1057 = vst [vmem:[#allocation2 + $0x2c0] sm:$0xff] %v1053
      %1058 = vst [vmem:[#allocation2 + $0x2c8] sm:$0xff] %v1054
      %v1059 = vld [vmem:[%s838] sm:$0xff]
      %v1060 = vld [vmem:[%s838 + $0x8] sm:$0xff]
      %v1061 = vld [vmem:[%s838 + $0x10] sm:$0xff]
      %1065 = vrot.lane.b32.xlu0 %v1059, 24
      %v1066 = vpop.permute.xlu0 %1065
      %1067 = vrot.lane.b32.xlu0 %v1060, 24
      %v1068 = vpop.permute.xlu0 %1067
      %1069 = vrot.lane.b32.xlu0 %v1061, 24
      %v1070 = vpop.permute.xlu0 %1069
      %v1071 = vsel %vm519, %v1066, %v1068
      %v1072 = vsel %vm519, %v1068, %v1070
      %1075 = vst [vmem:[#allocation2 + $0x2d0] sm:$0xff] %v1071
      %1076 = vst [vmem:[#allocation2 + $0x2d8] sm:$0xff] %v1072
      %v1077 = vld [vmem:[%s838] sm:$0xff]
      %v1078 = vld [vmem:[%s838 + $0x8] sm:$0xff]
      %v1079 = vld [vmem:[%s838 + $0x10] sm:$0xff]
      %1083 = vrot.lane.b32.xlu0 %v1077, 16
      %v1084 = vpop.permute.xlu0 %1083
      %1085 = vrot.lane.b32.xlu0 %v1078, 16
      %v1086 = vpop.permute.xlu0 %1085
      %1087 = vrot.lane.b32.xlu0 %v1079, 16
      %v1088 = vpop.permute.xlu0 %1087
      %v1089 = vsel %vm538, %v1084, %v1086
      %v1090 = vsel %vm538, %v1086, %v1088
      %1093 = vst [vmem:[#allocation2 + $0x2e0] sm:$0xff] %v1089
      %1094 = vst [vmem:[#allocation2 + $0x2e8] sm:$0xff] %v1090
      %v1095 = vld [vmem:[%s838] sm:$0xff]
      %v1096 = vld [vmem:[%s838 + $0x8] sm:$0xff]
      %v1097 = vld [vmem:[%s838 + $0x10] sm:$0xff]
      %1101 = vrot.lane.b32.xlu0 %v1095, 8
      %v1102 = vpop.permute.xlu0 %1101
      %1103 = vrot.lane.b32.xlu0 %v1096, 8
      %v1104 = vpop.permute.xlu0 %1103
      %1105 = vrot.lane.b32.xlu0 %v1097, 8
      %v1106 = vpop.permute.xlu0 %1105
      %v1107 = vsel %vm557, %v1102, %v1104
      %v1108 = vsel %vm557, %v1104, %v1106
      %1111 = vst [vmem:[#allocation2 + $0x2f0] sm:$0xff] %v1107
      %1112 = vst [vmem:[#allocation2 + $0x2f8] sm:$0xff] %v1108
      %v1113 = vld [vmem:[%s838 + $0x8] sm:$0xff]
      %v1114 = vld [vmem:[%s838 + $0x10] sm:$0xff]
      %1115 = vst [vmem:[#allocation2 + $0x300] sm:$0xff] %v1113
      %1116 = vst [vmem:[#allocation2 + $0x308] sm:$0xff] %v1114
      %v1117 = vld [vmem:[%s838 + $0x8] sm:$0xff]
      %v1118 = vld [vmem:[%s838 + $0x10] sm:$0xff]
      %v1119 = vld [vmem:[%s838 + $0x18] sm:$0xff]
      %1123 = vrot.lane.b32.xlu0 %v1117, 120
      %v1124 = vpop.permute.xlu0 %1123
      %1125 = vrot.lane.b32.xlu0 %v1118, 120
      %v1126 = vpop.permute.xlu0 %1125
      %1127 = vrot.lane.b32.xlu0 %v1119, 120
      %v1128 = vpop.permute.xlu0 %1127
      %v1129 = vsel %vm291, %v1124, %v1126
      %v1130 = vsel %vm291, %v1126, %v1128
      %1133 = vst [vmem:[#allocation2 + $0x310] sm:$0xff] %v1129
      %1134 = vst [vmem:[#allocation2 + $0x318] sm:$0xff] %v1130
      %v1135 = vld [vmem:[%s838 + $0x8] sm:$0xff]
      %v1136 = vld [vmem:[%s838 + $0x10] sm:$0xff]
      %v1137 = vld [vmem:[%s838 + $0x18] sm:$0xff]
      %1141 = vrot.lane.b32.xlu0 %v1135, 112
      %v1142 = vpop.permute.xlu0 %1141
      %1143 = vrot.lane.b32.xlu0 %v1136, 112
      %v1144 = vpop.permute.xlu0 %1143
      %1145 = vrot.lane.b32.xlu0 %v1137, 112
      %v1146 = vpop.permute.xlu0 %1145
      %v1147 = vsel %vm310, %v1142, %v1144
      %v1148 = vsel %vm310, %v1144, %v1146
      %1151 = vst [vmem:[#allocation2 + $0x320] sm:$0xff] %v1147
      %1152 = vst [vmem:[#allocation2 + $0x328] sm:$0xff] %v1148
      %v1153 = vld [vmem:[%s838 + $0x8] sm:$0xff]
      %v1154 = vld [vmem:[%s838 + $0x10] sm:$0xff]
      %v1155 = vld [vmem:[%s838 + $0x18] sm:$0xff]
      %1159 = vrot.lane.b32.xlu0 %v1153, 104
      %v1160 = vpop.permute.xlu0 %1159
      %1161 = vrot.lane.b32.xlu0 %v1154, 104
      %v1162 = vpop.permute.xlu0 %1161
      %1163 = vrot.lane.b32.xlu0 %v1155, 104
      %v1164 = vpop.permute.xlu0 %1163
      %v1165 = vsel %vm329, %v1160, %v1162
      %v1166 = vsel %vm329, %v1162, %v1164
      %1169 = vst [vmem:[#allocation2 + $0x330] sm:$0xff] %v1165
      %1170 = vst [vmem:[#allocation2 + $0x338] sm:$0xff] %v1166
      %v1171 = vld [vmem:[%s838 + $0x8] sm:$0xff]
      %v1172 = vld [vmem:[%s838 + $0x10] sm:$0xff]
      %v1173 = vld [vmem:[%s838 + $0x18] sm:$0xff]
      %1177 = vrot.lane.b32.xlu0 %v1171, 96
      %v1178 = vpop.permute.xlu0 %1177
      %1179 = vrot.lane.b32.xlu0 %v1172, 96
      %v1180 = vpop.permute.xlu0 %1179
      %1181 = vrot.lane.b32.xlu0 %v1173, 96
      %v1182 = vpop.permute.xlu0 %1181
      %v1183 = vsel %vm348, %v1178, %v1180
      %v1184 = vsel %vm348, %v1180, %v1182
      %1187 = vst [vmem:[#allocation2 + $0x340] sm:$0xff] %v1183
      %1188 = vst [vmem:[#allocation2 + $0x348] sm:$0xff] %v1184
      %v1189 = vld [vmem:[%s838 + $0x8] sm:$0xff]
      %v1190 = vld [vmem:[%s838 + $0x10] sm:$0xff]
      %v1191 = vld [vmem:[%s838 + $0x18] sm:$0xff]
      %1195 = vrot.lane.b32.xlu0 %v1189, 88
      %v1196 = vpop.permute.xlu0 %1195
      %1197 = vrot.lane.b32.xlu0 %v1190, 88
      %v1198 = vpop.permute.xlu0 %1197
      %1199 = vrot.lane.b32.xlu0 %v1191, 88
      %v1200 = vpop.permute.xlu0 %1199
      %v1201 = vsel %vm367, %v1196, %v1198
      %v1202 = vsel %vm367, %v1198, %v1200
      %1205 = vst [vmem:[#allocation2 + $0x350] sm:$0xff] %v1201
      %1206 = vst [vmem:[#allocation2 + $0x358] sm:$0xff] %v1202
      %v1207 = vld [vmem:[%s838 + $0x8] sm:$0xff]
      %v1208 = vld [vmem:[%s838 + $0x10] sm:$0xff]
      %v1209 = vld [vmem:[%s838 + $0x18] sm:$0xff]
      %1213 = vrot.lane.b32.xlu0 %v1207, 80
      %v1214 = vpop.permute.xlu0 %1213
      %1215 = vrot.lane.b32.xlu0 %v1208, 80
      %v1216 = vpop.permute.xlu0 %1215
      %1217 = vrot.lane.b32.xlu0 %v1209, 80
      %v1218 = vpop.permute.xlu0 %1217
      %v1219 = vsel %vm386, %v1214, %v1216
      %v1220 = vsel %vm386, %v1216, %v1218
      %1223 = vst [vmem:[#allocation2 + $0x360] sm:$0xff] %v1219
      %1224 = vst [vmem:[#allocation2 + $0x368] sm:$0xff] %v1220
      %v1225 = vld [vmem:[%s838 + $0x8] sm:$0xff]
      %v1226 = vld [vmem:[%s838 + $0x10] sm:$0xff]
      %v1227 = vld [vmem:[%s838 + $0x18] sm:$0xff]
      %1231 = vrot.lane.b32.xlu0 %v1225, 72
      %v1232 = vpop.permute.xlu0 %1231
      %1233 = vrot.lane.b32.xlu0 %v1226, 72
      %v1234 = vpop.permute.xlu0 %1233
      %1235 = vrot.lane.b32.xlu0 %v1227, 72
      %v1236 = vpop.permute.xlu0 %1235
      %v1237 = vsel %vm405, %v1232, %v1234
      %v1238 = vsel %vm405, %v1234, %v1236
      %1241 = vst [vmem:[#allocation2 + $0x370] sm:$0xff] %v1237
      %1242 = vst [vmem:[#allocation2 + $0x378] sm:$0xff] %v1238
      %v1243 = vld [vmem:[%s838 + $0x8] sm:$0xff]
      %v1244 = vld [vmem:[%s838 + $0x10] sm:$0xff]
      %v1245 = vld [vmem:[%s838 + $0x18] sm:$0xff]
      %1249 = vrot.lane.b32.xlu0 %v1243, 64
      %v1250 = vpop.permute.xlu0 %1249
      %1251 = vrot.lane.b32.xlu0 %v1244, 64
      %v1252 = vpop.permute.xlu0 %1251
      %1253 = vrot.lane.b32.xlu0 %v1245, 64
      %v1254 = vpop.permute.xlu0 %1253
      %v1255 = vsel %vm424, %v1250, %v1252
      %v1256 = vsel %vm424, %v1252, %v1254
      %1259 = vst [vmem:[#allocation2 + $0x380] sm:$0xff] %v1255
      %1260 = vst [vmem:[#allocation2 + $0x388] sm:$0xff] %v1256
      %v1261 = vld [vmem:[%s838 + $0x8] sm:$0xff]
      %v1262 = vld [vmem:[%s838 + $0x10] sm:$0xff]
      %v1263 = vld [vmem:[%s838 + $0x18] sm:$0xff]
      %1267 = vrot.lane.b32.xlu0 %v1261, 56
      %v1268 = vpop.permute.xlu0 %1267
      %1269 = vrot.lane.b32.xlu0 %v1262, 56
      %v1270 = vpop.permute.xlu0 %1269
      %1271 = vrot.lane.b32.xlu0 %v1263, 56
      %v1272 = vpop.permute.xlu0 %1271
      %v1273 = vsel %vm443, %v1268, %v1270
      %v1274 = vsel %vm443, %v1270, %v1272
      %1277 = vst [vmem:[#allocation2 + $0x390] sm:$0xff] %v1273
      %1278 = vst [vmem:[#allocation2 + $0x398] sm:$0xff] %v1274
      %v1279 = vld [vmem:[%s838 + $0x8] sm:$0xff]
      %v1280 = vld [vmem:[%s838 + $0x10] sm:$0xff]
      %v1281 = vld [vmem:[%s838 + $0x18] sm:$0xff]
      %1285 = vrot.lane.b32.xlu0 %v1279, 48
      %v1286 = vpop.permute.xlu0 %1285
      %1287 = vrot.lane.b32.xlu0 %v1280, 48
      %v1288 = vpop.permute.xlu0 %1287
      %1289 = vrot.lane.b32.xlu0 %v1281, 48
      %v1290 = vpop.permute.xlu0 %1289
      %v1291 = vsel %vm462, %v1286, %v1288
      %v1292 = vsel %vm462, %v1288, %v1290
      %1295 = vst [vmem:[#allocation2 + $0x3a0] sm:$0xff] %v1291
      %1296 = vst [vmem:[#allocation2 + $0x3a8] sm:$0xff] %v1292
      %v1297 = vld [vmem:[%s838 + $0x8] sm:$0xff]
      %v1298 = vld [vmem:[%s838 + $0x10] sm:$0xff]
      %v1299 = vld [vmem:[%s838 + $0x18] sm:$0xff]
      %1303 = vrot.lane.b32.xlu0 %v1297, 40
      %v1304 = vpop.permute.xlu0 %1303
      %1305 = vrot.lane.b32.xlu0 %v1298, 40
      %v1306 = vpop.permute.xlu0 %1305
      %1307 = vrot.lane.b32.xlu0 %v1299, 40
      %v1308 = vpop.permute.xlu0 %1307
      %v1309 = vsel %vm481, %v1304, %v1306
      %v1310 = vsel %vm481, %v1306, %v1308
      %1313 = vst [vmem:[#allocation2 + $0x3b0] sm:$0xff] %v1309
      %1314 = vst [vmem:[#allocation2 + $0x3b8] sm:$0xff] %v1310
      %v1315 = vld [vmem:[%s838 + $0x8] sm:$0xff]
      %v1316 = vld [vmem:[%s838 + $0x10] sm:$0xff]
      %v1317 = vld [vmem:[%s838 + $0x18] sm:$0xff]
      %1321 = vrot.lane.b32.xlu0 %v1315, 32
      %v1322 = vpop.permute.xlu0 %1321
      %1323 = vrot.lane.b32.xlu0 %v1316, 32
      %v1324 = vpop.permute.xlu0 %1323
      %1325 = vrot.lane.b32.xlu0 %v1317, 32
      %v1326 = vpop.permute.xlu0 %1325
      %v1327 = vsel %vm500, %v1322, %v1324
      %v1328 = vsel %vm500, %v1324, %v1326
      %1331 = vst [vmem:[#allocation2 + $0x3c0] sm:$0xff] %v1327
      %1332 = vst [vmem:[#allocation2 + $0x3c8] sm:$0xff] %v1328
      %v1333 = vld [vmem:[%s838 + $0x8] sm:$0xff]
      %v1334 = vld [vmem:[%s838 + $0x10] sm:$0xff]
      %v1335 = vld [vmem:[%s838 + $0x18] sm:$0xff]
      %1339 = vrot.lane.b32.xlu0 %v1333, 24
      %v1340 = vpop.permute.xlu0 %1339
      %1341 = vrot.lane.b32.xlu0 %v1334, 24
      %v1342 = vpop.permute.xlu0 %1341
      %1343 = vrot.lane.b32.xlu0 %v1335, 24
      %v1344 = vpop.permute.xlu0 %1343
      %v1345 = vsel %vm519, %v1340, %v1342
      %v1346 = vsel %vm519, %v1342, %v1344
      %1349 = vst [vmem:[#allocation2 + $0x3d0] sm:$0xff] %v1345
      %1350 = vst [vmem:[#allocation2 + $0x3d8] sm:$0xff] %v1346
      %v1351 = vld [vmem:[%s838 + $0x8] sm:$0xff]
      %v1352 = vld [vmem:[%s838 + $0x10] sm:$0xff]
      %v1353 = vld [vmem:[%s838 + $0x18] sm:$0xff]
      %1357 = vrot.lane.b32.xlu0 %v1351, 16
      %v1358 = vpop.permute.xlu0 %1357
      %1359 = vrot.lane.b32.xlu0 %v1352, 16
      %v1360 = vpop.permute.xlu0 %1359
      %1361 = vrot.lane.b32.xlu0 %v1353, 16
      %v1362 = vpop.permute.xlu0 %1361
      %v1363 = vsel %vm538, %v1358, %v1360
      %v1364 = vsel %vm538, %v1360, %v1362
      %1367 = vst [vmem:[#allocation2 + $0x3e0] sm:$0xff] %v1363
      %1368 = vst [vmem:[#allocation2 + $0x3e8] sm:$0xff] %v1364
      %v1369 = vld [vmem:[%s838 + $0x8] sm:$0xff]
      %v1370 = vld [vmem:[%s838 + $0x10] sm:$0xff]
      %v1371 = vld [vmem:[%s838 + $0x18] sm:$0xff]
      %1375 = vrot.lane.b32.xlu0 %v1369, 8
      %v1376 = vpop.permute.xlu0 %1375
      %1377 = vrot.lane.b32.xlu0 %v1370, 8
      %v1378 = vpop.permute.xlu0 %1377
      %1379 = vrot.lane.b32.xlu0 %v1371, 8
      %v1380 = vpop.permute.xlu0 %1379
      %v1381 = vsel %vm557, %v1376, %v1378
      %v1382 = vsel %vm557, %v1378, %v1380
      %1385 = vst [vmem:[#allocation2 + $0x3f0] sm:$0xff] %v1381
      %1386 = vst [vmem:[#allocation2 + $0x3f8] sm:$0xff] %v1382
      %s1387 = scalar_lea.vmem %s271, 64
      %v1388 = vld [vmem:[%s1387] sm:$0xff]
      %v1389 = vld [vmem:[%s1387 + $0x8] sm:$0xff]
      %1390 = vst [vmem:[#allocation2 + $0x400] sm:$0xff] %v1388
      %1391 = vst [vmem:[#allocation2 + $0x408] sm:$0xff] %v1389
      %v1392 = vld [vmem:[%s1387] sm:$0xff]
      %v1393 = vld [vmem:[%s1387 + $0x8] sm:$0xff]
      %v1394 = vld [vmem:[%s1387 + $0x10] sm:$0xff]
      %1398 = vrot.lane.b32.xlu0 %v1392, 120
      %v1399 = vpop.permute.xlu0 %1398
      %1400 = vrot.lane.b32.xlu0 %v1393, 120
      %v1401 = vpop.permute.xlu0 %1400
      %1402 = vrot.lane.b32.xlu0 %v1394, 120
      %v1403 = vpop.permute.xlu0 %1402
      %v1404 = vsel %vm291, %v1399, %v1401
      %v1405 = vsel %vm291, %v1401, %v1403
      %1408 = vst [vmem:[#allocation2 + $0x410] sm:$0xff] %v1404
      %1409 = vst [vmem:[#allocation2 + $0x418] sm:$0xff] %v1405
      %v1410 = vld [vmem:[%s1387] sm:$0xff]
      %v1411 = vld [vmem:[%s1387 + $0x8] sm:$0xff]
      %v1412 = vld [vmem:[%s1387 + $0x10] sm:$0xff]
      %1416 = vrot.lane.b32.xlu0 %v1410, 112
      %v1417 = vpop.permute.xlu0 %1416
      %1418 = vrot.lane.b32.xlu0 %v1411, 112
      %v1419 = vpop.permute.xlu0 %1418
      %1420 = vrot.lane.b32.xlu0 %v1412, 112
      %v1421 = vpop.permute.xlu0 %1420
      %v1422 = vsel %vm310, %v1417, %v1419
      %v1423 = vsel %vm310, %v1419, %v1421
      %1426 = vst [vmem:[#allocation2 + $0x420] sm:$0xff] %v1422
      %1427 = vst [vmem:[#allocation2 + $0x428] sm:$0xff] %v1423
      %v1428 = vld [vmem:[%s1387] sm:$0xff]
      %v1429 = vld [vmem:[%s1387 + $0x8] sm:$0xff]
      %v1430 = vld [vmem:[%s1387 + $0x10] sm:$0xff]
      %1434 = vrot.lane.b32.xlu0 %v1428, 104
      %v1435 = vpop.permute.xlu0 %1434
      %1436 = vrot.lane.b32.xlu0 %v1429, 104
      %v1437 = vpop.permute.xlu0 %1436
      %1438 = vrot.lane.b32.xlu0 %v1430, 104
      %v1439 = vpop.permute.xlu0 %1438
      %v1440 = vsel %vm329, %v1435, %v1437
      %v1441 = vsel %vm329, %v1437, %v1439
      %1444 = vst [vmem:[#allocation2 + $0x430] sm:$0xff] %v1440
      %1445 = vst [vmem:[#allocation2 + $0x438] sm:$0xff] %v1441
      %v1446 = vld [vmem:[%s1387] sm:$0xff]
      %v1447 = vld [vmem:[%s1387 + $0x8] sm:$0xff]
      %v1448 = vld [vmem:[%s1387 + $0x10] sm:$0xff]
      %1452 = vrot.lane.b32.xlu0 %v1446, 96
      %v1453 = vpop.permute.xlu0 %1452
      %1454 = vrot.lane.b32.xlu0 %v1447, 96
      %v1455 = vpop.permute.xlu0 %1454
      %1456 = vrot.lane.b32.xlu0 %v1448, 96
      %v1457 = vpop.permute.xlu0 %1456
      %v1458 = vsel %vm348, %v1453, %v1455
      %v1459 = vsel %vm348, %v1455, %v1457
      %1462 = vst [vmem:[#allocation2 + $0x440] sm:$0xff] %v1458
      %1463 = vst [vmem:[#allocation2 + $0x448] sm:$0xff] %v1459
      %v1464 = vld [vmem:[%s1387] sm:$0xff]
      %v1465 = vld [vmem:[%s1387 + $0x8] sm:$0xff]
      %v1466 = vld [vmem:[%s1387 + $0x10] sm:$0xff]
      %1470 = vrot.lane.b32.xlu0 %v1464, 88
      %v1471 = vpop.permute.xlu0 %1470
      %1472 = vrot.lane.b32.xlu0 %v1465, 88
      %v1473 = vpop.permute.xlu0 %1472
      %1474 = vrot.lane.b32.xlu0 %v1466, 88
      %v1475 = vpop.permute.xlu0 %1474
      %v1476 = vsel %vm367, %v1471, %v1473
      %v1477 = vsel %vm367, %v1473, %v1475
      %1480 = vst [vmem:[#allocation2 + $0x450] sm:$0xff] %v1476
      %1481 = vst [vmem:[#allocation2 + $0x458] sm:$0xff] %v1477
      %v1482 = vld [vmem:[%s1387] sm:$0xff]
      %v1483 = vld [vmem:[%s1387 + $0x8] sm:$0xff]
      %v1484 = vld [vmem:[%s1387 + $0x10] sm:$0xff]
      %1488 = vrot.lane.b32.xlu0 %v1482, 80
      %v1489 = vpop.permute.xlu0 %1488
      %1490 = vrot.lane.b32.xlu0 %v1483, 80
      %v1491 = vpop.permute.xlu0 %1490
      %1492 = vrot.lane.b32.xlu0 %v1484, 80
      %v1493 = vpop.permute.xlu0 %1492
      %v1494 = vsel %vm386, %v1489, %v1491
      %v1495 = vsel %vm386, %v1491, %v1493
      %1498 = vst [vmem:[#allocation2 + $0x460] sm:$0xff] %v1494
      %1499 = vst [vmem:[#allocation2 + $0x468] sm:$0xff] %v1495
      %v1500 = vld [vmem:[%s1387] sm:$0xff]
      %v1501 = vld [vmem:[%s1387 + $0x8] sm:$0xff]
      %v1502 = vld [vmem:[%s1387 + $0x10] sm:$0xff]
      %1506 = vrot.lane.b32.xlu0 %v1500, 72
      %v1507 = vpop.permute.xlu0 %1506
      %1508 = vrot.lane.b32.xlu0 %v1501, 72
      %v1509 = vpop.permute.xlu0 %1508
      %1510 = vrot.lane.b32.xlu0 %v1502, 72
      %v1511 = vpop.permute.xlu0 %1510
      %v1512 = vsel %vm405, %v1507, %v1509
      %v1513 = vsel %vm405, %v1509, %v1511
      %1516 = vst [vmem:[#allocation2 + $0x470] sm:$0xff] %v1512
      %1517 = vst [vmem:[#allocation2 + $0x478] sm:$0xff] %v1513
      %v1518 = vld [vmem:[%s1387] sm:$0xff]
      %v1519 = vld [vmem:[%s1387 + $0x8] sm:$0xff]
      %v1520 = vld [vmem:[%s1387 + $0x10] sm:$0xff]
      %1524 = vrot.lane.b32.xlu0 %v1518, 64
      %v1525 = vpop.permute.xlu0 %1524
      %1526 = vrot.lane.b32.xlu0 %v1519, 64
      %v1527 = vpop.permute.xlu0 %1526
      %1528 = vrot.lane.b32.xlu0 %v1520, 64
      %v1529 = vpop.permute.xlu0 %1528
      %v1530 = vsel %vm424, %v1525, %v1527
      %v1531 = vsel %vm424, %v1527, %v1529
      %1534 = vst [vmem:[#allocation2 + $0x480] sm:$0xff] %v1530
      %1535 = vst [vmem:[#allocation2 + $0x488] sm:$0xff] %v1531
      %v1536 = vld [vmem:[%s1387] sm:$0xff]
      %v1537 = vld [vmem:[%s1387 + $0x8] sm:$0xff]
      %v1538 = vld [vmem:[%s1387 + $0x10] sm:$0xff]
      %1542 = vrot.lane.b32.xlu0 %v1536, 56
      %v1543 = vpop.permute.xlu0 %1542
      %1544 = vrot.lane.b32.xlu0 %v1537, 56
      %v1545 = vpop.permute.xlu0 %1544
      %1546 = vrot.lane.b32.xlu0 %v1538, 56
      %v1547 = vpop.permute.xlu0 %1546
      %v1548 = vsel %vm443, %v1543, %v1545
      %v1549 = vsel %vm443, %v1545, %v1547
      %1552 = vst [vmem:[#allocation2 + $0x490] sm:$0xff] %v1548
      %1553 = vst [vmem:[#allocation2 + $0x498] sm:$0xff] %v1549
      %v1554 = vld [vmem:[%s1387] sm:$0xff]
      %v1555 = vld [vmem:[%s1387 + $0x8] sm:$0xff]
      %v1556 = vld [vmem:[%s1387 + $0x10] sm:$0xff]
      %1560 = vrot.lane.b32.xlu0 %v1554, 48
      %v1561 = vpop.permute.xlu0 %1560
      %1562 = vrot.lane.b32.xlu0 %v1555, 48
      %v1563 = vpop.permute.xlu0 %1562
      %1564 = vrot.lane.b32.xlu0 %v1556, 48
      %v1565 = vpop.permute.xlu0 %1564
      %v1566 = vsel %vm462, %v1561, %v1563
      %v1567 = vsel %vm462, %v1563, %v1565
      %1570 = vst [vmem:[#allocation2 + $0x4a0] sm:$0xff] %v1566
      %1571 = vst [vmem:[#allocation2 + $0x4a8] sm:$0xff] %v1567
      %v1572 = vld [vmem:[%s1387] sm:$0xff]
      %v1573 = vld [vmem:[%s1387 + $0x8] sm:$0xff]
      %v1574 = vld [vmem:[%s1387 + $0x10] sm:$0xff]
      %1578 = vrot.lane.b32.xlu0 %v1572, 40
      %v1579 = vpop.permute.xlu0 %1578
      %1580 = vrot.lane.b32.xlu0 %v1573, 40
      %v1581 = vpop.permute.xlu0 %1580
      %1582 = vrot.lane.b32.xlu0 %v1574, 40
      %v1583 = vpop.permute.xlu0 %1582
      %v1584 = vsel %vm481, %v1579, %v1581
      %v1585 = vsel %vm481, %v1581, %v1583
      %1588 = vst [vmem:[#allocation2 + $0x4b0] sm:$0xff] %v1584
      %1589 = vst [vmem:[#allocation2 + $0x4b8] sm:$0xff] %v1585
      %v1590 = vld [vmem:[%s1387] sm:$0xff]
      %v1591 = vld [vmem:[%s1387 + $0x8] sm:$0xff]
      %v1592 = vld [vmem:[%s1387 + $0x10] sm:$0xff]
      %1596 = vrot.lane.b32.xlu0 %v1590, 32
      %v1597 = vpop.permute.xlu0 %1596
      %1598 = vrot.lane.b32.xlu0 %v1591, 32
      %v1599 = vpop.permute.xlu0 %1598
      %1600 = vrot.lane.b32.xlu0 %v1592, 32
      %v1601 = vpop.permute.xlu0 %1600
      %v1602 = vsel %vm500, %v1597, %v1599
      %v1603 = vsel %vm500, %v1599, %v1601
      %1606 = vst [vmem:[#allocation2 + $0x4c0] sm:$0xff] %v1602
      %1607 = vst [vmem:[#allocation2 + $0x4c8] sm:$0xff] %v1603
      %v1608 = vld [vmem:[%s1387] sm:$0xff]
      %v1609 = vld [vmem:[%s1387 + $0x8] sm:$0xff]
      %v1610 = vld [vmem:[%s1387 + $0x10] sm:$0xff]
      %1614 = vrot.lane.b32.xlu0 %v1608, 24
      %v1615 = vpop.permute.xlu0 %1614
      %1616 = vrot.lane.b32.xlu0 %v1609, 24
      %v1617 = vpop.permute.xlu0 %1616
      %1618 = vrot.lane.b32.xlu0 %v1610, 24
      %v1619 = vpop.permute.xlu0 %1618
      %v1620 = vsel %vm519, %v1615, %v1617
      %v1621 = vsel %vm519, %v1617, %v1619
      %1624 = vst [vmem:[#allocation2 + $0x4d0] sm:$0xff] %v1620
      %1625 = vst [vmem:[#allocation2 + $0x4d8] sm:$0xff] %v1621
      %v1626 = vld [vmem:[%s1387] sm:$0xff]
      %v1627 = vld [vmem:[%s1387 + $0x8] sm:$0xff]
      %v1628 = vld [vmem:[%s1387 + $0x10] sm:$0xff]
      %1632 = vrot.lane.b32.xlu0 %v1626, 16
      %v1633 = vpop.permute.xlu0 %1632
      %1634 = vrot.lane.b32.xlu0 %v1627, 16
      %v1635 = vpop.permute.xlu0 %1634
      %1636 = vrot.lane.b32.xlu0 %v1628, 16
      %v1637 = vpop.permute.xlu0 %1636
      %v1638 = vsel %vm538, %v1633, %v1635
      %v1639 = vsel %vm538, %v1635, %v1637
      %1642 = vst [vmem:[#allocation2 + $0x4e0] sm:$0xff] %v1638
      %1643 = vst [vmem:[#allocation2 + $0x4e8] sm:$0xff] %v1639
      %v1644 = vld [vmem:[%s1387] sm:$0xff]
      %v1645 = vld [vmem:[%s1387 + $0x8] sm:$0xff]
      %v1646 = vld [vmem:[%s1387 + $0x10] sm:$0xff]
      %1650 = vrot.lane.b32.xlu0 %v1644, 8
      %v1651 = vpop.permute.xlu0 %1650
      %1652 = vrot.lane.b32.xlu0 %v1645, 8
      %v1653 = vpop.permute.xlu0 %1652
      %1654 = vrot.lane.b32.xlu0 %v1646, 8
      %v1655 = vpop.permute.xlu0 %1654
      %v1656 = vsel %vm557, %v1651, %v1653
      %v1657 = vsel %vm557, %v1653, %v1655
      %1660 = vst [vmem:[#allocation2 + $0x4f0] sm:$0xff] %v1656
      %1661 = vst [vmem:[#allocation2 + $0x4f8] sm:$0xff] %v1657
      %v1662 = vld [vmem:[%s1387 + $0x8] sm:$0xff]
      %v1663 = vld [vmem:[%s1387 + $0x10] sm:$0xff]
      %1664 = vst [vmem:[#allocation2 + $0x500] sm:$0xff] %v1662
      %1665 = vst [vmem:[#allocation2 + $0x508] sm:$0xff] %v1663
      %v1666 = vld [vmem:[%s1387 + $0x8] sm:$0xff]
      %v1667 = vld [vmem:[%s1387 + $0x10] sm:$0xff]
      %v1668 = vld [vmem:[%s1387 + $0x18] sm:$0xff]
      %1672 = vrot.lane.b32.xlu0 %v1666, 120
      %v1673 = vpop.permute.xlu0 %1672
      %1674 = vrot.lane.b32.xlu0 %v1667, 120
      %v1675 = vpop.permute.xlu0 %1674
      %1676 = vrot.lane.b32.xlu0 %v1668, 120
      %v1677 = vpop.permute.xlu0 %1676
      %v1678 = vsel %vm291, %v1673, %v1675
      %v1679 = vsel %vm291, %v1675, %v1677
      %1682 = vst [vmem:[#allocation2 + $0x510] sm:$0xff] %v1678
      %1683 = vst [vmem:[#allocation2 + $0x518] sm:$0xff] %v1679
      %v1684 = vld [vmem:[%s1387 + $0x8] sm:$0xff]
      %v1685 = vld [vmem:[%s1387 + $0x10] sm:$0xff]
      %v1686 = vld [vmem:[%s1387 + $0x18] sm:$0xff]
      %1690 = vrot.lane.b32.xlu0 %v1684, 112
      %v1691 = vpop.permute.xlu0 %1690
      %1692 = vrot.lane.b32.xlu0 %v1685, 112
      %v1693 = vpop.permute.xlu0 %1692
      %1694 = vrot.lane.b32.xlu0 %v1686, 112
      %v1695 = vpop.permute.xlu0 %1694
      %v1696 = vsel %vm310, %v1691, %v1693
      %v1697 = vsel %vm310, %v1693, %v1695
      %1700 = vst [vmem:[#allocation2 + $0x520] sm:$0xff] %v1696
      %1701 = vst [vmem:[#allocation2 + $0x528] sm:$0xff] %v1697
      %v1702 = vld [vmem:[%s1387 + $0x8] sm:$0xff]
      %v1703 = vld [vmem:[%s1387 + $0x10] sm:$0xff]
      %v1704 = vld [vmem:[%s1387 + $0x18] sm:$0xff]
      %1708 = vrot.lane.b32.xlu0 %v1702, 104
      %v1709 = vpop.permute.xlu0 %1708
      %1710 = vrot.lane.b32.xlu0 %v1703, 104
      %v1711 = vpop.permute.xlu0 %1710
      %1712 = vrot.lane.b32.xlu0 %v1704, 104
      %v1713 = vpop.permute.xlu0 %1712
      %v1714 = vsel %vm329, %v1709, %v1711
      %v1715 = vsel %vm329, %v1711, %v1713
      %1718 = vst [vmem:[#allocation2 + $0x530] sm:$0xff] %v1714
      %1719 = vst [vmem:[#allocation2 + $0x538] sm:$0xff] %v1715
      %v1720 = vld [vmem:[%s1387 + $0x8] sm:$0xff]
      %v1721 = vld [vmem:[%s1387 + $0x10] sm:$0xff]
      %v1722 = vld [vmem:[%s1387 + $0x18] sm:$0xff]
      %1726 = vrot.lane.b32.xlu0 %v1720, 96
      %v1727 = vpop.permute.xlu0 %1726
      %1728 = vrot.lane.b32.xlu0 %v1721, 96
      %v1729 = vpop.permute.xlu0 %1728
      %1730 = vrot.lane.b32.xlu0 %v1722, 96
      %v1731 = vpop.permute.xlu0 %1730
      %v1732 = vsel %vm348, %v1727, %v1729
      %v1733 = vsel %vm348, %v1729, %v1731
      %1736 = vst [vmem:[#allocation2 + $0x540] sm:$0xff] %v1732
      %1737 = vst [vmem:[#allocation2 + $0x548] sm:$0xff] %v1733
      %v1738 = vld [vmem:[%s1387 + $0x8] sm:$0xff]
      %v1739 = vld [vmem:[%s1387 + $0x10] sm:$0xff]
      %v1740 = vld [vmem:[%s1387 + $0x18] sm:$0xff]
      %1744 = vrot.lane.b32.xlu0 %v1738, 88
      %v1745 = vpop.permute.xlu0 %1744
      %1746 = vrot.lane.b32.xlu0 %v1739, 88
      %v1747 = vpop.permute.xlu0 %1746
      %1748 = vrot.lane.b32.xlu0 %v1740, 88
      %v1749 = vpop.permute.xlu0 %1748
      %v1750 = vsel %vm367, %v1745, %v1747
      %v1751 = vsel %vm367, %v1747, %v1749
      %1754 = vst [vmem:[#allocation2 + $0x550] sm:$0xff] %v1750
      %1755 = vst [vmem:[#allocation2 + $0x558] sm:$0xff] %v1751
      %v1756 = vld [vmem:[%s1387 + $0x8] sm:$0xff]
      %v1757 = vld [vmem:[%s1387 + $0x10] sm:$0xff]
      %v1758 = vld [vmem:[%s1387 + $0x18] sm:$0xff]
      %1762 = vrot.lane.b32.xlu0 %v1756, 80
      %v1763 = vpop.permute.xlu0 %1762
      %1764 = vrot.lane.b32.xlu0 %v1757, 80
      %v1765 = vpop.permute.xlu0 %1764
      %1766 = vrot.lane.b32.xlu0 %v1758, 80
      %v1767 = vpop.permute.xlu0 %1766
      %v1768 = vsel %vm386, %v1763, %v1765
      %v1769 = vsel %vm386, %v1765, %v1767
      %1772 = vst [vmem:[#allocation2 + $0x560] sm:$0xff] %v1768
      %1773 = vst [vmem:[#allocation2 + $0x568] sm:$0xff] %v1769
      %v1774 = vld [vmem:[%s1387 + $0x8] sm:$0xff]
      %v1775 = vld [vmem:[%s1387 + $0x10] sm:$0xff]
      %v1776 = vld [vmem:[%s1387 + $0x18] sm:$0xff]
      %1780 = vrot.lane.b32.xlu0 %v1774, 72
      %v1781 = vpop.permute.xlu0 %1780
      %1782 = vrot.lane.b32.xlu0 %v1775, 72
      %v1783 = vpop.permute.xlu0 %1782
      %1784 = vrot.lane.b32.xlu0 %v1776, 72
      %v1785 = vpop.permute.xlu0 %1784
      %v1786 = vsel %vm405, %v1781, %v1783
      %v1787 = vsel %vm405, %v1783, %v1785
      %1790 = vst [vmem:[#allocation2 + $0x570] sm:$0xff] %v1786
      %1791 = vst [vmem:[#allocation2 + $0x578] sm:$0xff] %v1787
      %v1792 = vld [vmem:[%s1387 + $0x8] sm:$0xff]
      %v1793 = vld [vmem:[%s1387 + $0x10] sm:$0xff]
      %v1794 = vld [vmem:[%s1387 + $0x18] sm:$0xff]
      %1798 = vrot.lane.b32.xlu0 %v1792, 64
      %v1799 = vpop.permute.xlu0 %1798
      %1800 = vrot.lane.b32.xlu0 %v1793, 64
      %v1801 = vpop.permute.xlu0 %1800
      %1802 = vrot.lane.b32.xlu0 %v1794, 64
      %v1803 = vpop.permute.xlu0 %1802
      %v1804 = vsel %vm424, %v1799, %v1801
      %v1805 = vsel %vm424, %v1801, %v1803
      %1808 = vst [vmem:[#allocation2 + $0x580] sm:$0xff] %v1804
      %1809 = vst [vmem:[#allocation2 + $0x588] sm:$0xff] %v1805
      %v1810 = vld [vmem:[%s1387 + $0x8] sm:$0xff]
      %v1811 = vld [vmem:[%s1387 + $0x10] sm:$0xff]
      %v1812 = vld [vmem:[%s1387 + $0x18] sm:$0xff]
      %1816 = vrot.lane.b32.xlu0 %v1810, 56
      %v1817 = vpop.permute.xlu0 %1816
      %1818 = vrot.lane.b32.xlu0 %v1811, 56
      %v1819 = vpop.permute.xlu0 %1818
      %1820 = vrot.lane.b32.xlu0 %v1812, 56
      %v1821 = vpop.permute.xlu0 %1820
      %v1822 = vsel %vm443, %v1817, %v1819
      %v1823 = vsel %vm443, %v1819, %v1821
      %1826 = vst [vmem:[#allocation2 + $0x590] sm:$0xff] %v1822
      %1827 = vst [vmem:[#allocation2 + $0x598] sm:$0xff] %v1823
      %v1828 = vld [vmem:[%s1387 + $0x8] sm:$0xff]
      %v1829 = vld [vmem:[%s1387 + $0x10] sm:$0xff]
      %v1830 = vld [vmem:[%s1387 + $0x18] sm:$0xff]
      %1834 = vrot.lane.b32.xlu0 %v1828, 48
      %v1835 = vpop.permute.xlu0 %1834
      %1836 = vrot.lane.b32.xlu0 %v1829, 48
      %v1837 = vpop.permute.xlu0 %1836
      %1838 = vrot.lane.b32.xlu0 %v1830, 48
      %v1839 = vpop.permute.xlu0 %1838
      %v1840 = vsel %vm462, %v1835, %v1837
      %v1841 = vsel %vm462, %v1837, %v1839
      %1844 = vst [vmem:[#allocation2 + $0x5a0] sm:$0xff] %v1840
      %1845 = vst [vmem:[#allocation2 + $0x5a8] sm:$0xff] %v1841
      %v1846 = vld [vmem:[%s1387 + $0x8] sm:$0xff]
      %v1847 = vld [vmem:[%s1387 + $0x10] sm:$0xff]
      %v1848 = vld [vmem:[%s1387 + $0x18] sm:$0xff]
      %1852 = vrot.lane.b32.xlu0 %v1846, 40
      %v1853 = vpop.permute.xlu0 %1852
      %1854 = vrot.lane.b32.xlu0 %v1847, 40
      %v1855 = vpop.permute.xlu0 %1854
      %1856 = vrot.lane.b32.xlu0 %v1848, 40
      %v1857 = vpop.permute.xlu0 %1856
      %v1858 = vsel %vm481, %v1853, %v1855
      %v1859 = vsel %vm481, %v1855, %v1857
      %1862 = vst [vmem:[#allocation2 + $0x5b0] sm:$0xff] %v1858
      %1863 = vst [vmem:[#allocation2 + $0x5b8] sm:$0xff] %v1859
      %v1864 = vld [vmem:[%s1387 + $0x8] sm:$0xff]
      %v1865 = vld [vmem:[%s1387 + $0x10] sm:$0xff]
      %v1866 = vld [vmem:[%s1387 + $0x18] sm:$0xff]
      %1870 = vrot.lane.b32.xlu0 %v1864, 32
      %v1871 = vpop.permute.xlu0 %1870
      %1872 = vrot.lane.b32.xlu0 %v1865, 32
      %v1873 = vpop.permute.xlu0 %1872
      %1874 = vrot.lane.b32.xlu0 %v1866, 32
      %v1875 = vpop.permute.xlu0 %1874
      %v1876 = vsel %vm500, %v1871, %v1873
      %v1877 = vsel %vm500, %v1873, %v1875
      %1880 = vst [vmem:[#allocation2 + $0x5c0] sm:$0xff] %v1876
      %1881 = vst [vmem:[#allocation2 + $0x5c8] sm:$0xff] %v1877
      %v1882 = vld [vmem:[%s1387 + $0x8] sm:$0xff]
      %v1883 = vld [vmem:[%s1387 + $0x10] sm:$0xff]
      %v1884 = vld [vmem:[%s1387 + $0x18] sm:$0xff]
      %1888 = vrot.lane.b32.xlu0 %v1882, 24
      %v1889 = vpop.permute.xlu0 %1888
      %1890 = vrot.lane.b32.xlu0 %v1883, 24
      %v1891 = vpop.permute.xlu0 %1890
      %1892 = vrot.lane.b32.xlu0 %v1884, 24
      %v1893 = vpop.permute.xlu0 %1892
      %v1894 = vsel %vm519, %v1889, %v1891
      %v1895 = vsel %vm519, %v1891, %v1893
      %1898 = vst [vmem:[#allocation2 + $0x5d0] sm:$0xff] %v1894
      %1899 = vst [vmem:[#allocation2 + $0x5d8] sm:$0xff] %v1895
      %v1900 = vld [vmem:[%s1387 + $0x8] sm:$0xff]
      %v1901 = vld [vmem:[%s1387 + $0x10] sm:$0xff]
      %v1902 = vld [vmem:[%s1387 + $0x18] sm:$0xff]
      %1906 = vrot.lane.b32.xlu0 %v1900, 16
      %v1907 = vpop.permute.xlu0 %1906
      %1908 = vrot.lane.b32.xlu0 %v1901, 16
      %v1909 = vpop.permute.xlu0 %1908
      %1910 = vrot.lane.b32.xlu0 %v1902, 16
      %v1911 = vpop.permute.xlu0 %1910
      %v1912 = vsel %vm538, %v1907, %v1909
      %v1913 = vsel %vm538, %v1909, %v1911
      %1916 = vst [vmem:[#allocation2 + $0x5e0] sm:$0xff] %v1912
      %1917 = vst [vmem:[#allocation2 + $0x5e8] sm:$0xff] %v1913
      %v1918 = vld [vmem:[%s1387 + $0x8] sm:$0xff]
      %v1919 = vld [vmem:[%s1387 + $0x10] sm:$0xff]
      %v1920 = vld [vmem:[%s1387 + $0x18] sm:$0xff]
      %1924 = vrot.lane.b32.xlu0 %v1918, 8
      %v1925 = vpop.permute.xlu0 %1924
      %1926 = vrot.lane.b32.xlu0 %v1919, 8
      %v1927 = vpop.permute.xlu0 %1926
      %1928 = vrot.lane.b32.xlu0 %v1920, 8
      %v1929 = vpop.permute.xlu0 %1928
      %v1930 = vsel %vm557, %v1925, %v1927
      %v1931 = vsel %vm557, %v1927, %v1929
      %1934 = vst [vmem:[#allocation2 + $0x5f0] sm:$0xff] %v1930
      %1935 = vst [vmem:[#allocation2 + $0x5f8] sm:$0xff] %v1931
      %s1936 = scalar_lea.vmem %s271, 96
      %v1937 = vld [vmem:[%s1936] sm:$0xff]
      %v1938 = vld [vmem:[%s1936 + $0x8] sm:$0xff]
      %1939 = vst [vmem:[#allocation2 + $0x600] sm:$0xff] %v1937
      %1940 = vst [vmem:[#allocation2 + $0x608] sm:$0xff] %v1938
      %v1941 = vld [vmem:[%s1936] sm:$0xff]
      %v1942 = vld [vmem:[%s1936 + $0x8] sm:$0xff]
      %v1943 = vld [vmem:[%s1936 + $0x10] sm:$0xff]
      %1947 = vrot.lane.b32.xlu0 %v1941, 120
      %v1948 = vpop.permute.xlu0 %1947
      %1949 = vrot.lane.b32.xlu0 %v1942, 120
      %v1950 = vpop.permute.xlu0 %1949
      %1951 = vrot.lane.b32.xlu0 %v1943, 120
      %v1952 = vpop.permute.xlu0 %1951
      %v1953 = vsel %vm291, %v1948, %v1950
      %v1954 = vsel %vm291, %v1950, %v1952
      %1957 = vst [vmem:[#allocation2 + $0x610] sm:$0xff] %v1953
      %1958 = vst [vmem:[#allocation2 + $0x618] sm:$0xff] %v1954
      %v1959 = vld [vmem:[%s1936] sm:$0xff]
      %v1960 = vld [vmem:[%s1936 + $0x8] sm:$0xff]
      %v1961 = vld [vmem:[%s1936 + $0x10] sm:$0xff]
      %1965 = vrot.lane.b32.xlu0 %v1959, 112
      %v1966 = vpop.permute.xlu0 %1965
      %1967 = vrot.lane.b32.xlu0 %v1960, 112
      %v1968 = vpop.permute.xlu0 %1967
      %1969 = vrot.lane.b32.xlu0 %v1961, 112
      %v1970 = vpop.permute.xlu0 %1969
      %v1971 = vsel %vm310, %v1966, %v1968
      %v1972 = vsel %vm310, %v1968, %v1970
      %1975 = vst [vmem:[#allocation2 + $0x620] sm:$0xff] %v1971
      %1976 = vst [vmem:[#allocation2 + $0x628] sm:$0xff] %v1972
      %v1977 = vld [vmem:[%s1936] sm:$0xff]
      %v1978 = vld [vmem:[%s1936 + $0x8] sm:$0xff]
      %v1979 = vld [vmem:[%s1936 + $0x10] sm:$0xff]
      %1983 = vrot.lane.b32.xlu0 %v1977, 104
      %v1984 = vpop.permute.xlu0 %1983
      %1985 = vrot.lane.b32.xlu0 %v1978, 104
      %v1986 = vpop.permute.xlu0 %1985
      %1987 = vrot.lane.b32.xlu0 %v1979, 104
      %v1988 = vpop.permute.xlu0 %1987
      %v1989 = vsel %vm329, %v1984, %v1986
      %v1990 = vsel %vm329, %v1986, %v1988
      %1993 = vst [vmem:[#allocation2 + $0x630] sm:$0xff] %v1989
      %1994 = vst [vmem:[#allocation2 + $0x638] sm:$0xff] %v1990
      %v1995 = vld [vmem:[%s1936] sm:$0xff]
      %v1996 = vld [vmem:[%s1936 + $0x8] sm:$0xff]
      %v1997 = vld [vmem:[%s1936 + $0x10] sm:$0xff]
      %2001 = vrot.lane.b32.xlu0 %v1995, 96
      %v2002 = vpop.permute.xlu0 %2001
      %2003 = vrot.lane.b32.xlu0 %v1996, 96
      %v2004 = vpop.permute.xlu0 %2003
      %2005 = vrot.lane.b32.xlu0 %v1997, 96
      %v2006 = vpop.permute.xlu0 %2005
      %v2007 = vsel %vm348, %v2002, %v2004
      %v2008 = vsel %vm348, %v2004, %v2006
      %2011 = vst [vmem:[#allocation2 + $0x640] sm:$0xff] %v2007
      %2012 = vst [vmem:[#allocation2 + $0x648] sm:$0xff] %v2008
      %v2013 = vld [vmem:[%s1936] sm:$0xff]
      %v2014 = vld [vmem:[%s1936 + $0x8] sm:$0xff]
      %v2015 = vld [vmem:[%s1936 + $0x10] sm:$0xff]
      %2019 = vrot.lane.b32.xlu0 %v2013, 88
      %v2020 = vpop.permute.xlu0 %2019
      %2021 = vrot.lane.b32.xlu0 %v2014, 88
      %v2022 = vpop.permute.xlu0 %2021
      %2023 = vrot.lane.b32.xlu0 %v2015, 88
      %v2024 = vpop.permute.xlu0 %2023
      %v2025 = vsel %vm367, %v2020, %v2022
      %v2026 = vsel %vm367, %v2022, %v2024
      %2029 = vst [vmem:[#allocation2 + $0x650] sm:$0xff] %v2025
      %2030 = vst [vmem:[#allocation2 + $0x658] sm:$0xff] %v2026
      %v2031 = vld [vmem:[%s1936] sm:$0xff]
      %v2032 = vld [vmem:[%s1936 + $0x8] sm:$0xff]
      %v2033 = vld [vmem:[%s1936 + $0x10] sm:$0xff]
      %2037 = vrot.lane.b32.xlu0 %v2031, 80
      %v2038 = vpop.permute.xlu0 %2037
      %2039 = vrot.lane.b32.xlu0 %v2032, 80
      %v2040 = vpop.permute.xlu0 %2039
      %2041 = vrot.lane.b32.xlu0 %v2033, 80
      %v2042 = vpop.permute.xlu0 %2041
      %v2043 = vsel %vm386, %v2038, %v2040
      %v2044 = vsel %vm386, %v2040, %v2042
      %2047 = vst [vmem:[#allocation2 + $0x660] sm:$0xff] %v2043
      %2048 = vst [vmem:[#allocation2 + $0x668] sm:$0xff] %v2044
      %v2049 = vld [vmem:[%s1936] sm:$0xff]
      %v2050 = vld [vmem:[%s1936 + $0x8] sm:$0xff]
      %v2051 = vld [vmem:[%s1936 + $0x10] sm:$0xff]
      %2055 = vrot.lane.b32.xlu0 %v2049, 72
      %v2056 = vpop.permute.xlu0 %2055
      %2057 = vrot.lane.b32.xlu0 %v2050, 72
      %v2058 = vpop.permute.xlu0 %2057
      %2059 = vrot.lane.b32.xlu0 %v2051, 72
      %v2060 = vpop.permute.xlu0 %2059
      %v2061 = vsel %vm405, %v2056, %v2058
      %v2062 = vsel %vm405, %v2058, %v2060
      %2065 = vst [vmem:[#allocation2 + $0x670] sm:$0xff] %v2061
      %2066 = vst [vmem:[#allocation2 + $0x678] sm:$0xff] %v2062
      %v2067 = vld [vmem:[%s1936] sm:$0xff]
      %v2068 = vld [vmem:[%s1936 + $0x8] sm:$0xff]
      %v2069 = vld [vmem:[%s1936 + $0x10] sm:$0xff]
      %2073 = vrot.lane.b32.xlu0 %v2067, 64
      %v2074 = vpop.permute.xlu0 %2073
      %2075 = vrot.lane.b32.xlu0 %v2068, 64
      %v2076 = vpop.permute.xlu0 %2075
      %2077 = vrot.lane.b32.xlu0 %v2069, 64
      %v2078 = vpop.permute.xlu0 %2077
      %v2079 = vsel %vm424, %v2074, %v2076
      %v2080 = vsel %vm424, %v2076, %v2078
      %2083 = vst [vmem:[#allocation2 + $0x680] sm:$0xff] %v2079
      %2084 = vst [vmem:[#allocation2 + $0x688] sm:$0xff] %v2080
      %v2085 = vld [vmem:[%s1936] sm:$0xff]
      %v2086 = vld [vmem:[%s1936 + $0x8] sm:$0xff]
      %v2087 = vld [vmem:[%s1936 + $0x10] sm:$0xff]
      %2091 = vrot.lane.b32.xlu0 %v2085, 56
      %v2092 = vpop.permute.xlu0 %2091
      %2093 = vrot.lane.b32.xlu0 %v2086, 56
      %v2094 = vpop.permute.xlu0 %2093
      %2095 = vrot.lane.b32.xlu0 %v2087, 56
      %v2096 = vpop.permute.xlu0 %2095
      %v2097 = vsel %vm443, %v2092, %v2094
      %v2098 = vsel %vm443, %v2094, %v2096
      %2101 = vst [vmem:[#allocation2 + $0x690] sm:$0xff] %v2097
      %2102 = vst [vmem:[#allocation2 + $0x698] sm:$0xff] %v2098
      %v2103 = vld [vmem:[%s1936] sm:$0xff]
      %v2104 = vld [vmem:[%s1936 + $0x8] sm:$0xff]
      %v2105 = vld [vmem:[%s1936 + $0x10] sm:$0xff]
      %2109 = vrot.lane.b32.xlu0 %v2103, 48
      %v2110 = vpop.permute.xlu0 %2109
      %2111 = vrot.lane.b32.xlu0 %v2104, 48
      %v2112 = vpop.permute.xlu0 %2111
      %2113 = vrot.lane.b32.xlu0 %v2105, 48
      %v2114 = vpop.permute.xlu0 %2113
      %v2115 = vsel %vm462, %v2110, %v2112
      %v2116 = vsel %vm462, %v2112, %v2114
      %2119 = vst [vmem:[#allocation2 + $0x6a0] sm:$0xff] %v2115
      %2120 = vst [vmem:[#allocation2 + $0x6a8] sm:$0xff] %v2116
      %v2121 = vld [vmem:[%s1936] sm:$0xff]
      %v2122 = vld [vmem:[%s1936 + $0x8] sm:$0xff]
      %v2123 = vld [vmem:[%s1936 + $0x10] sm:$0xff]
      %2127 = vrot.lane.b32.xlu0 %v2121, 40
      %v2128 = vpop.permute.xlu0 %2127
      %2129 = vrot.lane.b32.xlu0 %v2122, 40
      %v2130 = vpop.permute.xlu0 %2129
      %2131 = vrot.lane.b32.xlu0 %v2123, 40
      %v2132 = vpop.permute.xlu0 %2131
      %v2133 = vsel %vm481, %v2128, %v2130
      %v2134 = vsel %vm481, %v2130, %v2132
      %2137 = vst [vmem:[#allocation2 + $0x6b0] sm:$0xff] %v2133
      %2138 = vst [vmem:[#allocation2 + $0x6b8] sm:$0xff] %v2134
      %v2139 = vld [vmem:[%s1936] sm:$0xff]
      %v2140 = vld [vmem:[%s1936 + $0x8] sm:$0xff]
      %v2141 = vld [vmem:[%s1936 + $0x10] sm:$0xff]
      %2145 = vrot.lane.b32.xlu0 %v2139, 32
      %v2146 = vpop.permute.xlu0 %2145
      %2147 = vrot.lane.b32.xlu0 %v2140, 32
      %v2148 = vpop.permute.xlu0 %2147
      %2149 = vrot.lane.b32.xlu0 %v2141, 32
      %v2150 = vpop.permute.xlu0 %2149
      %v2151 = vsel %vm500, %v2146, %v2148
      %v2152 = vsel %vm500, %v2148, %v2150
      %2155 = vst [vmem:[#allocation2 + $0x6c0] sm:$0xff] %v2151
      %2156 = vst [vmem:[#allocation2 + $0x6c8] sm:$0xff] %v2152
      %v2157 = vld [vmem:[%s1936] sm:$0xff]
      %v2158 = vld [vmem:[%s1936 + $0x8] sm:$0xff]
      %v2159 = vld [vmem:[%s1936 + $0x10] sm:$0xff]
      %2163 = vrot.lane.b32.xlu0 %v2157, 24
      %v2164 = vpop.permute.xlu0 %2163
      %2165 = vrot.lane.b32.xlu0 %v2158, 24
      %v2166 = vpop.permute.xlu0 %2165
      %2167 = vrot.lane.b32.xlu0 %v2159, 24
      %v2168 = vpop.permute.xlu0 %2167
      %v2169 = vsel %vm519, %v2164, %v2166
      %v2170 = vsel %vm519, %v2166, %v2168
      %2173 = vst [vmem:[#allocation2 + $0x6d0] sm:$0xff] %v2169
      %2174 = vst [vmem:[#allocation2 + $0x6d8] sm:$0xff] %v2170
      %v2175 = vld [vmem:[%s1936] sm:$0xff]
      %v2176 = vld [vmem:[%s1936 + $0x8] sm:$0xff]
      %v2177 = vld [vmem:[%s1936 + $0x10] sm:$0xff]
      %2181 = vrot.lane.b32.xlu0 %v2175, 16
      %v2182 = vpop.permute.xlu0 %2181
      %2183 = vrot.lane.b32.xlu0 %v2176, 16
      %v2184 = vpop.permute.xlu0 %2183
      %2185 = vrot.lane.b32.xlu0 %v2177, 16
      %v2186 = vpop.permute.xlu0 %2185
      %v2187 = vsel %vm538, %v2182, %v2184
      %v2188 = vsel %vm538, %v2184, %v2186
      %2191 = vst [vmem:[#allocation2 + $0x6e0] sm:$0xff] %v2187
      %2192 = vst [vmem:[#allocation2 + $0x6e8] sm:$0xff] %v2188
      %v2193 = vld [vmem:[%s1936] sm:$0xff]
      %v2194 = vld [vmem:[%s1936 + $0x8] sm:$0xff]
      %v2195 = vld [vmem:[%s1936 + $0x10] sm:$0xff]
      %2199 = vrot.lane.b32.xlu0 %v2193, 8
      %v2200 = vpop.permute.xlu0 %2199
      %2201 = vrot.lane.b32.xlu0 %v2194, 8
      %v2202 = vpop.permute.xlu0 %2201
      %2203 = vrot.lane.b32.xlu0 %v2195, 8
      %v2204 = vpop.permute.xlu0 %2203
      %v2205 = vsel %vm557, %v2200, %v2202
      %v2206 = vsel %vm557, %v2202, %v2204
      %2209 = vst [vmem:[#allocation2 + $0x6f0] sm:$0xff] %v2205
      %2210 = vst [vmem:[#allocation2 + $0x6f8] sm:$0xff] %v2206
      %v2211 = vld [vmem:[%s1936 + $0x8] sm:$0xff]
      %v2212 = vld [vmem:[%s1936 + $0x10] sm:$0xff]
      %2213 = vst [vmem:[#allocation2 + $0x700] sm:$0xff] %v2211
      %2214 = vst [vmem:[#allocation2 + $0x708] sm:$0xff] %v2212
      %v2215 = vld [vmem:[%s1936 + $0x8] sm:$0xff]
      %v2216 = vld [vmem:[%s1936 + $0x10] sm:$0xff]
      %v2217 = vld [vmem:[%s1936 + $0x18] sm:$0xff]
      %2221 = vrot.lane.b32.xlu0 %v2215, 120
      %v2222 = vpop.permute.xlu0 %2221
      %2223 = vrot.lane.b32.xlu0 %v2216, 120
      %v2224 = vpop.permute.xlu0 %2223
      %2225 = vrot.lane.b32.xlu0 %v2217, 120
      %v2226 = vpop.permute.xlu0 %2225
      %v2227 = vsel %vm291, %v2222, %v2224
      %v2228 = vsel %vm291, %v2224, %v2226
      %2231 = vst [vmem:[#allocation2 + $0x710] sm:$0xff] %v2227
      %2232 = vst [vmem:[#allocation2 + $0x718] sm:$0xff] %v2228
      %v2233 = vld [vmem:[%s1936 + $0x8] sm:$0xff]
      %v2234 = vld [vmem:[%s1936 + $0x10] sm:$0xff]
      %v2235 = vld [vmem:[%s1936 + $0x18] sm:$0xff]
      %2239 = vrot.lane.b32.xlu0 %v2233, 112
      %v2240 = vpop.permute.xlu0 %2239
      %2241 = vrot.lane.b32.xlu0 %v2234, 112
      %v2242 = vpop.permute.xlu0 %2241
      %2243 = vrot.lane.b32.xlu0 %v2235, 112
      %v2244 = vpop.permute.xlu0 %2243
      %v2245 = vsel %vm310, %v2240, %v2242
      %v2246 = vsel %vm310, %v2242, %v2244
      %2249 = vst [vmem:[#allocation2 + $0x720] sm:$0xff] %v2245
      %2250 = vst [vmem:[#allocation2 + $0x728] sm:$0xff] %v2246
      %v2251 = vld [vmem:[%s1936 + $0x8] sm:$0xff]
      %v2252 = vld [vmem:[%s1936 + $0x10] sm:$0xff]
      %v2253 = vld [vmem:[%s1936 + $0x18] sm:$0xff]
      %2257 = vrot.lane.b32.xlu0 %v2251, 104
      %v2258 = vpop.permute.xlu0 %2257
      %2259 = vrot.lane.b32.xlu0 %v2252, 104
      %v2260 = vpop.permute.xlu0 %2259
      %2261 = vrot.lane.b32.xlu0 %v2253, 104
      %v2262 = vpop.permute.xlu0 %2261
      %v2263 = vsel %vm329, %v2258, %v2260
      %v2264 = vsel %vm329, %v2260, %v2262
      %2267 = vst [vmem:[#allocation2 + $0x730] sm:$0xff] %v2263
      %2268 = vst [vmem:[#allocation2 + $0x738] sm:$0xff] %v2264
      %v2269 = vld [vmem:[%s1936 + $0x8] sm:$0xff]
      %v2270 = vld [vmem:[%s1936 + $0x10] sm:$0xff]
      %v2271 = vld [vmem:[%s1936 + $0x18] sm:$0xff]
      %2275 = vrot.lane.b32.xlu0 %v2269, 96
      %v2276 = vpop.permute.xlu0 %2275
      %2277 = vrot.lane.b32.xlu0 %v2270, 96
      %v2278 = vpop.permute.xlu0 %2277
      %2279 = vrot.lane.b32.xlu0 %v2271, 96
      %v2280 = vpop.permute.xlu0 %2279
      %v2281 = vsel %vm348, %v2276, %v2278
      %v2282 = vsel %vm348, %v2278, %v2280
      %2285 = vst [vmem:[#allocation2 + $0x740] sm:$0xff] %v2281
      %2286 = vst [vmem:[#allocation2 + $0x748] sm:$0xff] %v2282
      %v2287 = vld [vmem:[%s1936 + $0x8] sm:$0xff]
      %v2288 = vld [vmem:[%s1936 + $0x10] sm:$0xff]
      %v2289 = vld [vmem:[%s1936 + $0x18] sm:$0xff]
      %2293 = vrot.lane.b32.xlu0 %v2287, 88
      %v2294 = vpop.permute.xlu0 %2293
      %2295 = vrot.lane.b32.xlu0 %v2288, 88
      %v2296 = vpop.permute.xlu0 %2295
      %2297 = vrot.lane.b32.xlu0 %v2289, 88
      %v2298 = vpop.permute.xlu0 %2297
      %v2299 = vsel %vm367, %v2294, %v2296
      %v2300 = vsel %vm367, %v2296, %v2298
      %2303 = vst [vmem:[#allocation2 + $0x750] sm:$0xff] %v2299
      %2304 = vst [vmem:[#allocation2 + $0x758] sm:$0xff] %v2300
      %v2305 = vld [vmem:[%s1936 + $0x8] sm:$0xff]
      %v2306 = vld [vmem:[%s1936 + $0x10] sm:$0xff]
      %v2307 = vld [vmem:[%s1936 + $0x18] sm:$0xff]
      %2311 = vrot.lane.b32.xlu0 %v2305, 80
      %v2312 = vpop.permute.xlu0 %2311
      %2313 = vrot.lane.b32.xlu0 %v2306, 80
      %v2314 = vpop.permute.xlu0 %2313
      %2315 = vrot.lane.b32.xlu0 %v2307, 80
      %v2316 = vpop.permute.xlu0 %2315
      %v2317 = vsel %vm386, %v2312, %v2314
      %v2318 = vsel %vm386, %v2314, %v2316
      %2321 = vst [vmem:[#allocation2 + $0x760] sm:$0xff] %v2317
      %2322 = vst [vmem:[#allocation2 + $0x768] sm:$0xff] %v2318
      %v2323 = vld [vmem:[%s1936 + $0x8] sm:$0xff]
      %v2324 = vld [vmem:[%s1936 + $0x10] sm:$0xff]
      %v2325 = vld [vmem:[%s1936 + $0x18] sm:$0xff]
      %2329 = vrot.lane.b32.xlu0 %v2323, 72
      %v2330 = vpop.permute.xlu0 %2329
      %2331 = vrot.lane.b32.xlu0 %v2324, 72
      %v2332 = vpop.permute.xlu0 %2331
      %2333 = vrot.lane.b32.xlu0 %v2325, 72
      %v2334 = vpop.permute.xlu0 %2333
      %v2335 = vsel %vm405, %v2330, %v2332
      %v2336 = vsel %vm405, %v2332, %v2334
      %2339 = vst [vmem:[#allocation2 + $0x770] sm:$0xff] %v2335
      %2340 = vst [vmem:[#allocation2 + $0x778] sm:$0xff] %v2336
      %v2341 = vld [vmem:[%s1936 + $0x8] sm:$0xff]
      %v2342 = vld [vmem:[%s1936 + $0x10] sm:$0xff]
      %v2343 = vld [vmem:[%s1936 + $0x18] sm:$0xff]
      %2347 = vrot.lane.b32.xlu0 %v2341, 64
      %v2348 = vpop.permute.xlu0 %2347
      %2349 = vrot.lane.b32.xlu0 %v2342, 64
      %v2350 = vpop.permute.xlu0 %2349
      %2351 = vrot.lane.b32.xlu0 %v2343, 64
      %v2352 = vpop.permute.xlu0 %2351
      %v2353 = vsel %vm424, %v2348, %v2350
      %v2354 = vsel %vm424, %v2350, %v2352
      %2357 = vst [vmem:[#allocation2 + $0x780] sm:$0xff] %v2353
      %2358 = vst [vmem:[#allocation2 + $0x788] sm:$0xff] %v2354
      %v2359 = vld [vmem:[%s1936 + $0x8] sm:$0xff]
      %v2360 = vld [vmem:[%s1936 + $0x10] sm:$0xff]
      %v2361 = vld [vmem:[%s1936 + $0x18] sm:$0xff]
      %2365 = vrot.lane.b32.xlu0 %v2359, 56
      %v2366 = vpop.permute.xlu0 %2365
      %2367 = vrot.lane.b32.xlu0 %v2360, 56
      %v2368 = vpop.permute.xlu0 %2367
      %2369 = vrot.lane.b32.xlu0 %v2361, 56
      %v2370 = vpop.permute.xlu0 %2369
      %v2371 = vsel %vm443, %v2366, %v2368
      %v2372 = vsel %vm443, %v2368, %v2370
      %2375 = vst [vmem:[#allocation2 + $0x790] sm:$0xff] %v2371
      %2376 = vst [vmem:[#allocation2 + $0x798] sm:$0xff] %v2372
      %v2377 = vld [vmem:[%s1936 + $0x8] sm:$0xff]
      %v2378 = vld [vmem:[%s1936 + $0x10] sm:$0xff]
      %v2379 = vld [vmem:[%s1936 + $0x18] sm:$0xff]
      %2383 = vrot.lane.b32.xlu0 %v2377, 48
      %v2384 = vpop.permute.xlu0 %2383
      %2385 = vrot.lane.b32.xlu0 %v2378, 48
      %v2386 = vpop.permute.xlu0 %2385
      %2387 = vrot.lane.b32.xlu0 %v2379, 48
      %v2388 = vpop.permute.xlu0 %2387
      %v2389 = vsel %vm462, %v2384, %v2386
      %v2390 = vsel %vm462, %v2386, %v2388
      %2393 = vst [vmem:[#allocation2 + $0x7a0] sm:$0xff] %v2389
      %2394 = vst [vmem:[#allocation2 + $0x7a8] sm:$0xff] %v2390
      %v2395 = vld [vmem:[%s1936 + $0x8] sm:$0xff]
      %v2396 = vld [vmem:[%s1936 + $0x10] sm:$0xff]
      %v2397 = vld [vmem:[%s1936 + $0x18] sm:$0xff]
      %2401 = vrot.lane.b32.xlu0 %v2395, 40
      %v2402 = vpop.permute.xlu0 %2401
      %2403 = vrot.lane.b32.xlu0 %v2396, 40
      %v2404 = vpop.permute.xlu0 %2403
      %2405 = vrot.lane.b32.xlu0 %v2397, 40
      %v2406 = vpop.permute.xlu0 %2405
      %v2407 = vsel %vm481, %v2402, %v2404
      %v2408 = vsel %vm481, %v2404, %v2406
      %2411 = vst [vmem:[#allocation2 + $0x7b0] sm:$0xff] %v2407
      %2412 = vst [vmem:[#allocation2 + $0x7b8] sm:$0xff] %v2408
      %v2413 = vld [vmem:[%s1936 + $0x8] sm:$0xff]
      %v2414 = vld [vmem:[%s1936 + $0x10] sm:$0xff]
      %v2415 = vld [vmem:[%s1936 + $0x18] sm:$0xff]
      %2419 = vrot.lane.b32.xlu0 %v2413, 32
      %v2420 = vpop.permute.xlu0 %2419
      %2421 = vrot.lane.b32.xlu0 %v2414, 32
      %v2422 = vpop.permute.xlu0 %2421
      %2423 = vrot.lane.b32.xlu0 %v2415, 32
      %v2424 = vpop.permute.xlu0 %2423
      %v2425 = vsel %vm500, %v2420, %v2422
      %v2426 = vsel %vm500, %v2422, %v2424
      %2429 = vst [vmem:[#allocation2 + $0x7c0] sm:$0xff] %v2425
      %2430 = vst [vmem:[#allocation2 + $0x7c8] sm:$0xff] %v2426
      %v2431 = vld [vmem:[%s1936 + $0x8] sm:$0xff]
      %v2432 = vld [vmem:[%s1936 + $0x10] sm:$0xff]
      %v2433 = vld [vmem:[%s1936 + $0x18] sm:$0xff]
      %2437 = vrot.lane.b32.xlu0 %v2431, 24
      %v2438 = vpop.permute.xlu0 %2437
      %2439 = vrot.lane.b32.xlu0 %v2432, 24
      %v2440 = vpop.permute.xlu0 %2439
      %2441 = vrot.lane.b32.xlu0 %v2433, 24
      %v2442 = vpop.permute.xlu0 %2441
      %v2443 = vsel %vm519, %v2438, %v2440
      %v2444 = vsel %vm519, %v2440, %v2442
      %2447 = vst [vmem:[#allocation2 + $0x7d0] sm:$0xff] %v2443
      %2448 = vst [vmem:[#allocation2 + $0x7d8] sm:$0xff] %v2444
      %v2449 = vld [vmem:[%s1936 + $0x8] sm:$0xff]
      %v2450 = vld [vmem:[%s1936 + $0x10] sm:$0xff]
      %v2451 = vld [vmem:[%s1936 + $0x18] sm:$0xff]
      %2455 = vrot.lane.b32.xlu0 %v2449, 16
      %v2456 = vpop.permute.xlu0 %2455
      %2457 = vrot.lane.b32.xlu0 %v2450, 16
      %v2458 = vpop.permute.xlu0 %2457
      %2459 = vrot.lane.b32.xlu0 %v2451, 16
      %v2460 = vpop.permute.xlu0 %2459
      %v2461 = vsel %vm538, %v2456, %v2458
      %v2462 = vsel %vm538, %v2458, %v2460
      %2465 = vst [vmem:[#allocation2 + $0x7e0] sm:$0xff] %v2461
      %2466 = vst [vmem:[#allocation2 + $0x7e8] sm:$0xff] %v2462
      %v2467 = vld [vmem:[%s1936 + $0x8] sm:$0xff]
      %v2468 = vld [vmem:[%s1936 + $0x10] sm:$0xff]
      %v2469 = vld [vmem:[%s1936 + $0x18] sm:$0xff]
      %2473 = vrot.lane.b32.xlu0 %v2467, 8
      %v2474 = vpop.permute.xlu0 %2473
      %2475 = vrot.lane.b32.xlu0 %v2468, 8
      %v2476 = vpop.permute.xlu0 %2475
      %2477 = vrot.lane.b32.xlu0 %v2469, 8
      %v2478 = vpop.permute.xlu0 %2477
      %v2479 = vsel %vm557, %v2474, %v2476
      %v2480 = vsel %vm557, %v2476, %v2478
      %2483 = vst [vmem:[#allocation2 + $0x7f0] sm:$0xff] %v2479
      %2484 = vst [vmem:[#allocation2 + $0x7f8] sm:$0xff] %v2480
      %v2485 = vld [vmem:[%s3] sm:$0xff]
      %v2486 = vld [vmem:[%s3 + $0x8] sm:$0xff]
      %v2487 = vld [vmem:[%s3 + $0x10] sm:$0xff]
      %v2488 = vld [vmem:[%s3 + $0x18] sm:$0xff]
      %v2489 = vld [vmem:[%s3 + $0x20] sm:$0xff]
      %v2490 = vld [vmem:[%s3 + $0x28] sm:$0xff]
      %v2491 = vld [vmem:[%s3 + $0x30] sm:$0xff]
      %v2492 = vld [vmem:[%s3 + $0x38] sm:$0xff]
      %v2493 = vld [vmem:[%s3 + $0x40] sm:$0xff]
      %v2494 = vld [vmem:[%s1] sm:$0xff]
      %v2495 = vld [vmem:[%s1 + $0x8] sm:$0xff]
      %v2496 = vld [vmem:[%s1 + $0x10] sm:$0xff]
      %v2497 = vld [vmem:[%s1 + $0x18] sm:$0xff]
      %v2498 = vld [vmem:[%s1 + $0x20] sm:$0xff]
      %v2499 = vld [vmem:[%s1 + $0x28] sm:$0xff]
      %v2500 = vld [vmem:[%s1 + $0x30] sm:$0xff]
      %v2501 = vld [vmem:[%s1 + $0x38] sm:$0xff]
      %v2502 = vld [vmem:[%s1 + $0x40] sm:$0xff]
      %v2503 = vld [vmem:[%s1 + $0x48] sm:$0xff]
      %v2504 = vld [vmem:[%s1 + $0x50] sm:$0xff]
      %v2505 = vld [vmem:[%s1 + $0x58] sm:$0xff]
      %v2506 = vld [vmem:[%s1 + $0x60] sm:$0xff]
      %v2507 = vld [vmem:[%s1 + $0x68] sm:$0xff]
      %v2508 = vld [vmem:[%s1 + $0x70] sm:$0xff]
      %v2509 = vld [vmem:[%s1 + $0x78] sm:$0xff]
      %v2510 = vld [vmem:[%s1 + $0x80] sm:$0xff]
      %v2511 = vld [vmem:[%s1 + $0x88] sm:$0xff]
      %v2512 = vld [vmem:[%s1 + $0x90] sm:$0xff]
      %v2513 = vld [vmem:[%s1 + $0x98] sm:$0xff]
      %v2514 = vld [vmem:[%s1 + $0xa0] sm:$0xff]
      %v2515 = vld [vmem:[%s1 + $0xa8] sm:$0xff]
      %v2516 = vld [vmem:[%s1 + $0xb0] sm:$0xff]
      %v2517 = vld [vmem:[%s1 + $0xb8] sm:$0xff]
      %v2518 = vld [vmem:[%s1 + $0xc0] sm:$0xff]
      %v2519 = vld [vmem:[%s1 + $0xc8] sm:$0xff]
      %v2520 = vld [vmem:[%s1 + $0xd0] sm:$0xff]
      %v2521 = vld [vmem:[%s1 + $0xd8] sm:$0xff]
      %v2522 = vld [vmem:[%s1 + $0xe0] sm:$0xff]
      %v2523 = vld [vmem:[%s1 + $0xe8] sm:$0xff]
      %v2524 = vld [vmem:[%s1 + $0xf0] sm:$0xff]
      %v2525 = vld [vmem:[%s1 + $0xf8] sm:$0xff]
      %v2526 = vld [vmem:[%s1 + $0x100] sm:$0xff]
      %v2527 = vld [vmem:[%s1 + $0x108] sm:$0xff]
      %v2528 = vld [vmem:[%s1 + $0x110] sm:$0xff]
      %v2529 = vld [vmem:[%s1 + $0x118] sm:$0xff]
      %v2530 = vld [vmem:[%s1 + $0x120] sm:$0xff]
      %v2531 = vld [vmem:[%s1 + $0x128] sm:$0xff]
      %v2532 = vld [vmem:[%s1 + $0x130] sm:$0xff]
      %v2533 = vld [vmem:[%s1 + $0x138] sm:$0xff]
      %v2534 = vld [vmem:[%s1 + $0x140] sm:$0xff]
      %v2535 = vld [vmem:[%s1 + $0x148] sm:$0xff]
      %v2536 = vld [vmem:[%s1 + $0x150] sm:$0xff]
      %v2537 = vld [vmem:[%s1 + $0x158] sm:$0xff]
      %v2538 = vld [vmem:[%s1 + $0x160] sm:$0xff]
      %v2539 = vld [vmem:[%s1 + $0x168] sm:$0xff]
      %v2540 = vld [vmem:[%s1 + $0x170] sm:$0xff]
      %v2541 = vld [vmem:[%s1 + $0x178] sm:$0xff]
      %v2542 = vld [vmem:[%s1 + $0x180] sm:$0xff]
      %v2543 = vld [vmem:[%s1 + $0x188] sm:$0xff]
      %v2544 = vld [vmem:[%s1 + $0x190] sm:$0xff]
      %v2545 = vld [vmem:[%s1 + $0x198] sm:$0xff]
      %v2546 = vld [vmem:[%s1 + $0x1a0] sm:$0xff]
      %v2547 = vld [vmem:[%s1 + $0x1a8] sm:$0xff]
      %v2548 = vld [vmem:[%s1 + $0x1b0] sm:$0xff]
      %v2549 = vld [vmem:[%s1 + $0x1b8] sm:$0xff]
      %v2550 = vld [vmem:[%s1 + $0x1c0] sm:$0xff]
      %v2551 = vld [vmem:[%s1 + $0x1c8] sm:$0xff]
      %v2552 = vld [vmem:[%s1 + $0x1d0] sm:$0xff]
      %v2553 = vld [vmem:[%s1 + $0x1d8] sm:$0xff]
      %v2554 = vld [vmem:[%s1 + $0x1e0] sm:$0xff]
      %v2555 = vld [vmem:[%s1 + $0x1e8] sm:$0xff]
      %v2556 = vld [vmem:[%s1 + $0x1f0] sm:$0xff]
      %v2557 = vld [vmem:[%s1 + $0x1f8] sm:$0xff]
      %v2558 = vld [vmem:[%s1 + $0x200] sm:$0xff]
      %v2559 = vld [vmem:[%s1 + $0x208] sm:$0xff]
      %v2560 = vld [vmem:[%s1 + $0x210] sm:$0xff]
      %v2561 = vld [vmem:[%s1 + $0x218] sm:$0xff]
      %v2562 = vld [vmem:[%s1 + $0x220] sm:$0xff]
      %v2563 = vld [vmem:[%s1 + $0x228] sm:$0xff]
      %v2564 = vld [vmem:[%s1 + $0x230] sm:$0xff]
      %v2565 = vld [vmem:[%s1 + $0x238] sm:$0xff]
      %v2566 = vld [vmem:[#allocation2] sm:$0xff]
      %v2567 = vld [vmem:[#allocation2 + $0x8] sm:$0xff]
      %v2568 = vld [vmem:[#allocation2 + $0x10] sm:$0xff]
      %v2569 = vld [vmem:[#allocation2 + $0x18] sm:$0xff]
      %v2570 = vld [vmem:[#allocation2 + $0x20] sm:$0xff]
      %v2571 = vld [vmem:[#allocation2 + $0x28] sm:$0xff]
      %v2572 = vld [vmem:[#allocation2 + $0x30] sm:$0xff]
      %v2573 = vld [vmem:[#allocation2 + $0x38] sm:$0xff]
      %v2574 = vld [vmem:[#allocation2 + $0x40] sm:$0xff]
      %v2575 = vld [vmem:[#allocation2 + $0x48] sm:$0xff]
      %v2576 = vld [vmem:[#allocation2 + $0x50] sm:$0xff]
      %v2577 = vld [vmem:[#allocation2 + $0x58] sm:$0xff]
      %v2578 = vld [vmem:[#allocation2 + $0x60] sm:$0xff]
      %v2579 = vld [vmem:[#allocation2 + $0x68] sm:$0xff]
      %v2580 = vld [vmem:[#allocation2 + $0x70] sm:$0xff]
      %v2581 = vld [vmem:[#allocation2 + $0x78] sm:$0xff]
      %v2582 = vld [vmem:[#allocation2 + $0x80] sm:$0xff]
      %v2583 = vld [vmem:[#allocation2 + $0x88] sm:$0xff]
      %v2584 = vld [vmem:[#allocation2 + $0x90] sm:$0xff]
      %v2585 = vld [vmem:[#allocation2 + $0x98] sm:$0xff]
      %v2586 = vld [vmem:[#allocation2 + $0xa0] sm:$0xff]
      %v2587 = vld [vmem:[#allocation2 + $0xa8] sm:$0xff]
      %v2588 = vld [vmem:[#allocation2 + $0xb0] sm:$0xff]
      %v2589 = vld [vmem:[#allocation2 + $0xb8] sm:$0xff]
      %v2590 = vld [vmem:[#allocation2 + $0xc0] sm:$0xff]
      %v2591 = vld [vmem:[#allocation2 + $0xc8] sm:$0xff]
      %v2592 = vld [vmem:[#allocation2 + $0xd0] sm:$0xff]
      %v2593 = vld [vmem:[#allocation2 + $0xd8] sm:$0xff]
      %v2594 = vld [vmem:[#allocation2 + $0xe0] sm:$0xff]
      %v2595 = vld [vmem:[#allocation2 + $0xe8] sm:$0xff]
      %v2596 = vld [vmem:[#allocation2 + $0xf0] sm:$0xff]
      %v2597 = vld [vmem:[#allocation2 + $0xf8] sm:$0xff]
      %v2598 = vld [vmem:[#allocation2 + $0x100] sm:$0xff]
      %v2599 = vld [vmem:[#allocation2 + $0x108] sm:$0xff]
      %v2600 = vld [vmem:[#allocation2 + $0x110] sm:$0xff]
      %v2601 = vld [vmem:[#allocation2 + $0x118] sm:$0xff]
      %v2602 = vld [vmem:[#allocation2 + $0x120] sm:$0xff]
      %v2603 = vld [vmem:[#allocation2 + $0x128] sm:$0xff]
      %v2604 = vld [vmem:[#allocation2 + $0x130] sm:$0xff]
      %v2605 = vld [vmem:[#allocation2 + $0x138] sm:$0xff]
      %v2606 = vld [vmem:[#allocation2 + $0x140] sm:$0xff]
      %v2607 = vld [vmem:[#allocation2 + $0x148] sm:$0xff]
      %v2608 = vld [vmem:[#allocation2 + $0x150] sm:$0xff]
      %v2609 = vld [vmem:[#allocation2 + $0x158] sm:$0xff]
      %v2610 = vld [vmem:[#allocation2 + $0x160] sm:$0xff]
      %v2611 = vld [vmem:[#allocation2 + $0x168] sm:$0xff]
      %v2612 = vld [vmem:[#allocation2 + $0x170] sm:$0xff]
      %v2613 = vld [vmem:[#allocation2 + $0x178] sm:$0xff]
      %v2614 = vld [vmem:[#allocation2 + $0x180] sm:$0xff]
      %v2615 = vld [vmem:[#allocation2 + $0x188] sm:$0xff]
      %v2616 = vld [vmem:[#allocation2 + $0x190] sm:$0xff]
      %v2617 = vld [vmem:[#allocation2 + $0x198] sm:$0xff]
      %v2618 = vld [vmem:[#allocation2 + $0x1a0] sm:$0xff]
      %v2619 = vld [vmem:[#allocation2 + $0x1a8] sm:$0xff]
      %v2620 = vld [vmem:[#allocation2 + $0x1b0] sm:$0xff]
      %v2621 = vld [vmem:[#allocation2 + $0x1b8] sm:$0xff]
      %v2622 = vld [vmem:[#allocation2 + $0x1c0] sm:$0xff]
      %v2623 = vld [vmem:[#allocation2 + $0x1c8] sm:$0xff]
      %v2624 = vld [vmem:[#allocation2 + $0x1d0] sm:$0xff]
      %v2625 = vld [vmem:[#allocation2 + $0x1d8] sm:$0xff]
      %v2626 = vld [vmem:[#allocation2 + $0x1e0] sm:$0xff]
      %v2627 = vld [vmem:[#allocation2 + $0x1e8] sm:$0xff]
      %v2628 = vld [vmem:[#allocation2 + $0x1f0] sm:$0xff]
      %v2629 = vld [vmem:[#allocation2 + $0x1f8] sm:$0xff]
      %v2630 = vld [vmem:[#allocation2 + $0x200] sm:$0xff]
      %v2631 = vld [vmem:[#allocation2 + $0x208] sm:$0xff]
      %v2632 = vld [vmem:[#allocation2 + $0x210] sm:$0xff]
      %v2633 = vld [vmem:[#allocation2 + $0x218] sm:$0xff]
      %v2634 = vld [vmem:[#allocation2 + $0x220] sm:$0xff]
      %v2635 = vld [vmem:[#allocation2 + $0x228] sm:$0xff]
      %v2636 = vld [vmem:[#allocation2 + $0x230] sm:$0xff]
      %v2637 = vld [vmem:[#allocation2 + $0x238] sm:$0xff]
      %v2638 = vld [vmem:[#allocation2 + $0x240] sm:$0xff]
      %v2639 = vld [vmem:[#allocation2 + $0x248] sm:$0xff]
      %v2640 = vld [vmem:[#allocation2 + $0x250] sm:$0xff]
      %v2641 = vld [vmem:[#allocation2 + $0x258] sm:$0xff]
      %v2642 = vld [vmem:[#allocation2 + $0x260] sm:$0xff]
      %v2643 = vld [vmem:[#allocation2 + $0x268] sm:$0xff]
      %v2644 = vld [vmem:[#allocation2 + $0x270] sm:$0xff]
      %v2645 = vld [vmem:[#allocation2 + $0x278] sm:$0xff]
      %v2646 = vld [vmem:[#allocation2 + $0x280] sm:$0xff]
      %v2647 = vld [vmem:[#allocation2 + $0x288] sm:$0xff]
      %v2648 = vld [vmem:[#allocation2 + $0x290] sm:$0xff]
      %v2649 = vld [vmem:[#allocation2 + $0x298] sm:$0xff]
      %v2650 = vld [vmem:[#allocation2 + $0x2a0] sm:$0xff]
      %v2651 = vld [vmem:[#allocation2 + $0x2a8] sm:$0xff]
      %v2652 = vld [vmem:[#allocation2 + $0x2b0] sm:$0xff]
      %v2653 = vld [vmem:[#allocation2 + $0x2b8] sm:$0xff]
      %v2654 = vld [vmem:[#allocation2 + $0x2c0] sm:$0xff]
      %v2655 = vld [vmem:[#allocation2 + $0x2c8] sm:$0xff]
      %v2656 = vld [vmem:[#allocation2 + $0x2d0] sm:$0xff]
      %v2657 = vld [vmem:[#allocation2 + $0x2d8] sm:$0xff]
      %v2658 = vld [vmem:[#allocation2 + $0x2e0] sm:$0xff]
      %v2659 = vld [vmem:[#allocation2 + $0x2e8] sm:$0xff]
      %v2660 = vld [vmem:[#allocation2 + $0x2f0] sm:$0xff]
      %v2661 = vld [vmem:[#allocation2 + $0x2f8] sm:$0xff]
      %v2662 = vld [vmem:[#allocation2 + $0x300] sm:$0xff]
      %v2663 = vld [vmem:[#allocation2 + $0x308] sm:$0xff]
      %v2664 = vld [vmem:[#allocation2 + $0x310] sm:$0xff]
      %v2665 = vld [vmem:[#allocation2 + $0x318] sm:$0xff]
      %v2666 = vld [vmem:[#allocation2 + $0x320] sm:$0xff]
      %v2667 = vld [vmem:[#allocation2 + $0x328] sm:$0xff]
      %v2668 = vld [vmem:[#allocation2 + $0x330] sm:$0xff]
      %v2669 = vld [vmem:[#allocation2 + $0x338] sm:$0xff]
      %v2670 = vld [vmem:[#allocation2 + $0x340] sm:$0xff]
      %v2671 = vld [vmem:[#allocation2 + $0x348] sm:$0xff]
      %v2672 = vld [vmem:[#allocation2 + $0x350] sm:$0xff]
      %v2673 = vld [vmem:[#allocation2 + $0x358] sm:$0xff]
      %v2674 = vld [vmem:[#allocation2 + $0x360] sm:$0xff]
      %v2675 = vld [vmem:[#allocation2 + $0x368] sm:$0xff]
      %v2676 = vld [vmem:[#allocation2 + $0x370] sm:$0xff]
      %v2677 = vld [vmem:[#allocation2 + $0x378] sm:$0xff]
      %v2678 = vld [vmem:[#allocation2 + $0x380] sm:$0xff]
      %v2679 = vld [vmem:[#allocation2 + $0x388] sm:$0xff]
      %v2680 = vld [vmem:[#allocation2 + $0x390] sm:$0xff]
      %v2681 = vld [vmem:[#allocation2 + $0x398] sm:$0xff]
      %v2682 = vld [vmem:[#allocation2 + $0x3a0] sm:$0xff]
      %v2683 = vld [vmem:[#allocation2 + $0x3a8] sm:$0xff]
      %v2684 = vld [vmem:[#allocation2 + $0x3b0] sm:$0xff]
      %v2685 = vld [vmem:[#allocation2 + $0x3b8] sm:$0xff]
      %v2686 = vld [vmem:[#allocation2 + $0x3c0] sm:$0xff]
      %v2687 = vld [vmem:[#allocation2 + $0x3c8] sm:$0xff]
      %v2688 = vld [vmem:[#allocation2 + $0x3d0] sm:$0xff]
      %v2689 = vld [vmem:[#allocation2 + $0x3d8] sm:$0xff]
      %v2690 = vld [vmem:[#allocation2 + $0x3e0] sm:$0xff]
      %v2691 = vld [vmem:[#allocation2 + $0x3e8] sm:$0xff]
      %v2692 = vld [vmem:[#allocation2 + $0x3f0] sm:$0xff]
      %v2693 = vld [vmem:[#allocation2 + $0x3f8] sm:$0xff]
      %v2694 = vld [vmem:[#allocation2 + $0x400] sm:$0xff]
      %v2695 = vld [vmem:[#allocation2 + $0x408] sm:$0xff]
      %v2696 = vld [vmem:[#allocation2 + $0x410] sm:$0xff]
      %v2697 = vld [vmem:[#allocation2 + $0x418] sm:$0xff]
      %v2698 = vld [vmem:[#allocation2 + $0x420] sm:$0xff]
      %v2699 = vld [vmem:[#allocation2 + $0x428] sm:$0xff]
      %v2700 = vld [vmem:[#allocation2 + $0x430] sm:$0xff]
      %v2701 = vld [vmem:[#allocation2 + $0x438] sm:$0xff]
      %v2702 = vld [vmem:[#allocation2 + $0x440] sm:$0xff]
      %v2703 = vld [vmem:[#allocation2 + $0x448] sm:$0xff]
      %v2704 = vld [vmem:[#allocation2 + $0x450] sm:$0xff]
      %v2705 = vld [vmem:[#allocation2 + $0x458] sm:$0xff]
      %v2706 = vld [vmem:[#allocation2 + $0x460] sm:$0xff]
      %v2707 = vld [vmem:[#allocation2 + $0x468] sm:$0xff]
      %v2708 = vld [vmem:[#allocation2 + $0x470] sm:$0xff]
      %v2709 = vld [vmem:[#allocation2 + $0x478] sm:$0xff]
      %v2710 = vld [vmem:[#allocation2 + $0x480] sm:$0xff]
      %v2711 = vld [vmem:[#allocation2 + $0x488] sm:$0xff]
      %v2712 = vld [vmem:[#allocation2 + $0x490] sm:$0xff]
      %v2713 = vld [vmem:[#allocation2 + $0x498] sm:$0xff]
      %v2714 = vld [vmem:[#allocation2 + $0x4a0] sm:$0xff]
      %v2715 = vld [vmem:[#allocation2 + $0x4a8] sm:$0xff]
      %v2716 = vld [vmem:[#allocation2 + $0x4b0] sm:$0xff]
      %v2717 = vld [vmem:[#allocation2 + $0x4b8] sm:$0xff]
      %v2718 = vld [vmem:[#allocation2 + $0x4c0] sm:$0xff]
      %v2719 = vld [vmem:[#allocation2 + $0x4c8] sm:$0xff]
      %v2720 = vld [vmem:[#allocation2 + $0x4d0] sm:$0xff]
      %v2721 = vld [vmem:[#allocation2 + $0x4d8] sm:$0xff]
      %v2722 = vld [vmem:[#allocation2 + $0x4e0] sm:$0xff]
      %v2723 = vld [vmem:[#allocation2 + $0x4e8] sm:$0xff]
      %v2724 = vld [vmem:[#allocation2 + $0x4f0] sm:$0xff]
      %v2725 = vld [vmem:[#allocation2 + $0x4f8] sm:$0xff]
      %v2726 = vld [vmem:[#allocation2 + $0x500] sm:$0xff]
      %v2727 = vld [vmem:[#allocation2 + $0x508] sm:$0xff]
      %v2728 = vld [vmem:[#allocation2 + $0x510] sm:$0xff]
      %v2729 = vld [vmem:[#allocation2 + $0x518] sm:$0xff]
      %v2730 = vld [vmem:[#allocation2 + $0x520] sm:$0xff]
      %v2731 = vld [vmem:[#allocation2 + $0x528] sm:$0xff]
      %v2732 = vld [vmem:[#allocation2 + $0x530] sm:$0xff]
      %v2733 = vld [vmem:[#allocation2 + $0x538] sm:$0xff]
      %v2734 = vld [vmem:[#allocation2 + $0x540] sm:$0xff]
      %v2735 = vld [vmem:[#allocation2 + $0x548] sm:$0xff]
      %v2736 = vld [vmem:[#allocation2 + $0x550] sm:$0xff]
      %v2737 = vld [vmem:[#allocation2 + $0x558] sm:$0xff]
      %v2738 = vld [vmem:[#allocation2 + $0x560] sm:$0xff]
      %v2739 = vld [vmem:[#allocation2 + $0x568] sm:$0xff]
      %v2740 = vld [vmem:[#allocation2 + $0x570] sm:$0xff]
      %v2741 = vld [vmem:[#allocation2 + $0x578] sm:$0xff]
      %v2742 = vld [vmem:[#allocation2 + $0x580] sm:$0xff]
      %v2743 = vld [vmem:[#allocation2 + $0x588] sm:$0xff]
      %v2744 = vld [vmem:[#allocation2 + $0x590] sm:$0xff]
      %v2745 = vld [vmem:[#allocation2 + $0x598] sm:$0xff]
      %v2746 = vld [vmem:[#allocation2 + $0x5a0] sm:$0xff]
      %v2747 = vld [vmem:[#allocation2 + $0x5a8] sm:$0xff]
      %v2748 = vld [vmem:[#allocation2 + $0x5b0] sm:$0xff]
      %v2749 = vld [vmem:[#allocation2 + $0x5b8] sm:$0xff]
      %v2750 = vld [vmem:[#allocation2 + $0x5c0] sm:$0xff]
      %v2751 = vld [vmem:[#allocation2 + $0x5c8] sm:$0xff]
      %v2752 = vld [vmem:[#allocation2 + $0x5d0] sm:$0xff]
      %v2753 = vld [vmem:[#allocation2 + $0x5d8] sm:$0xff]
      %v2754 = vld [vmem:[#allocation2 + $0x5e0] sm:$0xff]
      %v2755 = vld [vmem:[#allocation2 + $0x5e8] sm:$0xff]
      %v2756 = vld [vmem:[#allocation2 + $0x5f0] sm:$0xff]
      %v2757 = vld [vmem:[#allocation2 + $0x5f8] sm:$0xff]
      %v2758 = vld [vmem:[#allocation2 + $0x600] sm:$0xff]
      %v2759 = vld [vmem:[#allocation2 + $0x608] sm:$0xff]
      %v2760 = vld [vmem:[#allocation2 + $0x610] sm:$0xff]
      %v2761 = vld [vmem:[#allocation2 + $0x618] sm:$0xff]
      %v2762 = vld [vmem:[#allocation2 + $0x620] sm:$0xff]
      %v2763 = vld [vmem:[#allocation2 + $0x628] sm:$0xff]
      %v2764 = vld [vmem:[#allocation2 + $0x630] sm:$0xff]
      %v2765 = vld [vmem:[#allocation2 + $0x638] sm:$0xff]
      %v2766 = vld [vmem:[#allocation2 + $0x640] sm:$0xff]
      %v2767 = vld [vmem:[#allocation2 + $0x648] sm:$0xff]
      %v2768 = vld [vmem:[#allocation2 + $0x650] sm:$0xff]
      %v2769 = vld [vmem:[#allocation2 + $0x658] sm:$0xff]
      %v2770 = vld [vmem:[#allocation2 + $0x660] sm:$0xff]
      %v2771 = vld [vmem:[#allocation2 + $0x668] sm:$0xff]
      %v2772 = vld [vmem:[#allocation2 + $0x670] sm:$0xff]
      %v2773 = vld [vmem:[#allocation2 + $0x678] sm:$0xff]
      %v2774 = vld [vmem:[#allocation2 + $0x680] sm:$0xff]
      %v2775 = vld [vmem:[#allocation2 + $0x688] sm:$0xff]
      %v2776 = vld [vmem:[#allocation2 + $0x690] sm:$0xff]
      %v2777 = vld [vmem:[#allocation2 + $0x698] sm:$0xff]
      %v2778 = vld [vmem:[#allocation2 + $0x6a0] sm:$0xff]
      %v2779 = vld [vmem:[#allocation2 + $0x6a8] sm:$0xff]
      %v2780 = vld [vmem:[#allocation2 + $0x6b0] sm:$0xff]
      %v2781 = vld [vmem:[#allocation2 + $0x6b8] sm:$0xff]
      %v2782 = vld [vmem:[#allocation2 + $0x6c0] sm:$0xff]
      %v2783 = vld [vmem:[#allocation2 + $0x6c8] sm:$0xff]
      %v2784 = vld [vmem:[#allocation2 + $0x6d0] sm:$0xff]
      %v2785 = vld [vmem:[#allocation2 + $0x6d8] sm:$0xff]
      %v2786 = vld [vmem:[#allocation2 + $0x6e0] sm:$0xff]
      %v2787 = vld [vmem:[#allocation2 + $0x6e8] sm:$0xff]
      %v2788 = vld [vmem:[#allocation2 + $0x6f0] sm:$0xff]
      %v2789 = vld [vmem:[#allocation2 + $0x6f8] sm:$0xff]
      %v2790 = vld [vmem:[#allocation2 + $0x700] sm:$0xff]
      %v2791 = vld [vmem:[#allocation2 + $0x708] sm:$0xff]
      %v2792 = vld [vmem:[#allocation2 + $0x710] sm:$0xff]
      %v2793 = vld [vmem:[#allocation2 + $0x718] sm:$0xff]
      %v2794 = vld [vmem:[#allocation2 + $0x720] sm:$0xff]
      %v2795 = vld [vmem:[#allocation2 + $0x728] sm:$0xff]
      %v2796 = vld [vmem:[#allocation2 + $0x730] sm:$0xff]
      %v2797 = vld [vmem:[#allocation2 + $0x738] sm:$0xff]
      %v2798 = vld [vmem:[#allocation2 + $0x740] sm:$0xff]
      %v2799 = vld [vmem:[#allocation2 + $0x748] sm:$0xff]
      %v2800 = vld [vmem:[#allocation2 + $0x750] sm:$0xff]
      %v2801 = vld [vmem:[#allocation2 + $0x758] sm:$0xff]
      %v2802 = vld [vmem:[#allocation2 + $0x760] sm:$0xff]
      %v2803 = vld [vmem:[#allocation2 + $0x768] sm:$0xff]
      %v2804 = vld [vmem:[#allocation2 + $0x770] sm:$0xff]
      %v2805 = vld [vmem:[#allocation2 + $0x778] sm:$0xff]
      %v2806 = vld [vmem:[#allocation2 + $0x780] sm:$0xff]
      %v2807 = vld [vmem:[#allocation2 + $0x788] sm:$0xff]
      %v2808 = vld [vmem:[#allocation2 + $0x790] sm:$0xff]
      %v2809 = vld [vmem:[#allocation2 + $0x798] sm:$0xff]
      %v2810 = vld [vmem:[#allocation2 + $0x7a0] sm:$0xff]
      %v2811 = vld [vmem:[#allocation2 + $0x7a8] sm:$0xff]
      %v2812 = vld [vmem:[#allocation2 + $0x7b0] sm:$0xff]
      %v2813 = vld [vmem:[#allocation2 + $0x7b8] sm:$0xff]
      %v2814 = vld [vmem:[#allocation2 + $0x7c0] sm:$0xff]
      %v2815 = vld [vmem:[#allocation2 + $0x7c8] sm:$0xff]
      %v2816 = vld [vmem:[#allocation2 + $0x7d0] sm:$0xff]
      %v2817 = vld [vmem:[#allocation2 + $0x7d8] sm:$0xff]
      %v2818 = vld [vmem:[#allocation2 + $0x7e0] sm:$0xff]
      %v2819 = vld [vmem:[#allocation2 + $0x7e8] sm:$0xff]
      %v2820 = vld [vmem:[#allocation2 + $0x7f0] sm:$0xff]
      %v2821 = vld [vmem:[#allocation2 + $0x7f8] sm:$0xff]
      %2823 = vset.pattern.permute.xlu0 0
      %2824 = vperm.xlu0 %2823, %v2485
      %v2825 = vpop.permute.xlu0 %2824
      %2828 = vset.pattern.permute.xlu0 0
      %2829 = vperm.xlu0 %2828, %v2486
      %v2830 = vpop.permute.xlu0 %2829
      %2833 = vset.pattern.permute.xlu0 0
      %2834 = vperm.xlu0 %2833, %v2487
      %v2835 = vpop.permute.xlu0 %2834
      %2838 = vset.pattern.permute.xlu0 0
      %2839 = vperm.xlu0 %2838, %v2488
      %v2840 = vpop.permute.xlu0 %2839
      %2843 = vset.pattern.permute.xlu0 0
      %2844 = vperm.xlu0 %2843, %v2489
      %v2845 = vpop.permute.xlu0 %2844
      %2848 = vset.pattern.permute.xlu0 0
      %2849 = vperm.xlu0 %2848, %v2490
      %v2850 = vpop.permute.xlu0 %2849
      %2853 = vset.pattern.permute.xlu0 0
      %2854 = vperm.xlu0 %2853, %v2491
      %v2855 = vpop.permute.xlu0 %2854
      %2858 = vset.pattern.permute.xlu0 0
      %2859 = vperm.xlu0 %2858, %v2492
      %v2860 = vpop.permute.xlu0 %2859
      %2863 = vset.pattern.permute.xlu0 0
      %2864 = vperm.xlu0 %2863, %v2493
      %v2865 = vpop.permute.xlu0 %2864
      %2867 = vmatprep.subr.mxu0 %v2567
      %2868 = vmatpush1.msra.mxu0 %v2566
      %2869 = vmatprep.subr.mxu0 %v2569
      %2870 = vmatpush1.msra.mxu0 %v2568
      %2871 = vmatprep.subr.mxu0 %v2571
      %2872 = vmatpush1.msra.mxu0 %v2570
      %2873 = vmatprep.subr.mxu0 %v2573
      %2874 = vmatpush1.msra.mxu0 %v2572
      %2875 = vmatprep.subr.mxu0 %v2575
      %2876 = vmatpush1.msra.mxu0 %v2574
      %2877 = vmatprep.subr.mxu0 %v2577
      %2878 = vmatpush1.msra.mxu0 %v2576
      %2879 = vmatprep.subr.mxu0 %v2579
      %2880 = vmatpush1.msra.mxu0 %v2578
      %2881 = vmatprep.subr.mxu0 %v2581
      %2882 = vmatpush1.msra.mxu0 %v2580
      %2883 = vmatprep.subr.mxu0 %v2583
      %2884 = vmatpush1.msra.mxu0 %v2582
      %2885 = vmatprep.subr.mxu0 %v2585
      %2886 = vmatpush1.msra.mxu0 %v2584
      %2887 = vmatprep.subr.mxu0 %v2587
      %2888 = vmatpush1.msra.mxu0 %v2586
      %2889 = vmatprep.subr.mxu0 %v2589
      %2890 = vmatpush1.msra.mxu0 %v2588
      %2891 = vmatprep.subr.mxu0 %v2591
      %2892 = vmatpush1.msra.mxu0 %v2590
      %2893 = vmatprep.subr.mxu0 %v2593
      %2894 = vmatpush1.msra.mxu0 %v2592
      %2895 = vmatprep.subr.mxu0 %v2595
      %2896 = vmatpush1.msra.mxu0 %v2594
      %2897 = vmatprep.subr.mxu0 %v2597
      %2898 = vmatpush1.msra.mxu0 %v2596
      %2899 = vmatprep.subr.mxu0 %v2599
      %2900 = vmatpush1.msra.mxu0 %v2598
      %2901 = vmatprep.subr.mxu0 %v2601
      %2902 = vmatpush1.msra.mxu0 %v2600
      %2903 = vmatprep.subr.mxu0 %v2603
      %2904 = vmatpush1.msra.mxu0 %v2602
      %2905 = vmatprep.subr.mxu0 %v2605
      %2906 = vmatpush1.msra.mxu0 %v2604
      %2907 = vmatprep.subr.mxu0 %v2607
      %2908 = vmatpush1.msra.mxu0 %v2606
      %2909 = vmatprep.subr.mxu0 %v2609
      %2910 = vmatpush1.msra.mxu0 %v2608
      %2911 = vmatprep.subr.mxu0 %v2611
      %2912 = vmatpush1.msra.mxu0 %v2610
      %2913 = vmatprep.subr.mxu0 %v2613
      %2914 = vmatpush1.msra.mxu0 %v2612
      %2915 = vmatprep.subr.mxu0 %v2615
      %2916 = vmatpush1.msra.mxu0 %v2614
      %2917 = vmatprep.subr.mxu0 %v2617
      %2918 = vmatpush1.msra.mxu0 %v2616
      %2919 = vmatprep.subr.mxu0 %v2619
      %2920 = vmatpush1.msra.mxu0 %v2618
      %2921 = vmatprep.subr.mxu0 %v2621
      %2922 = vmatpush1.msra.mxu0 %v2620
      %2923 = vmatprep.subr.mxu0 %v2623
      %2924 = vmatpush1.msra.mxu0 %v2622
      %2925 = vmatprep.subr.mxu0 %v2625
      %2926 = vmatpush1.msra.mxu0 %v2624
      %2927 = vmatprep.subr.mxu0 %v2627
      %2928 = vmatpush1.msra.mxu0 %v2626
      %2929 = vmatprep.subr.mxu0 %v2629
      %2930 = vmatpush1.msra.mxu0 %v2628
      %2931 = vmatprep.mubr.f32.mxu0 %v2495
      %2932 = vmatmul.mubr.f32.gmra.mrb[0].mxu0 %v2494
      %v2933 = vpop.f32.mrb[0].mxu0
      %v2934 = vadd.f32 %v2825, %v2933
      %v2935 = vpop.f32.mrb[0].mxu0
      %v2936 = vadd.f32 %v2825, %v2935
      %2937 = vmatprep.mubr.f32.mxu0 %v2503
      %2938 = vmatmul.mubr.f32.gmra.mrb[0].mxu0 %v2502
      %v2939 = vpop.f32.mrb[0].mxu0
      %v2940 = vadd.f32 %v2830, %v2939
      %v2941 = vpop.f32.mrb[0].mxu0
      %v2942 = vadd.f32 %v2830, %v2941
      %2943 = vmatprep.mubr.f32.mxu0 %v2511
      %2944 = vmatmul.mubr.f32.gmra.mrb[0].mxu0 %v2510
      %v2945 = vpop.f32.mrb[0].mxu0
      %v2946 = vadd.f32 %v2835, %v2945
      %v2947 = vpop.f32.mrb[0].mxu0
      %v2948 = vadd.f32 %v2835, %v2947
      %2949 = vmatprep.mubr.f32.mxu0 %v2519
      %2950 = vmatmul.mubr.f32.gmra.mrb[0].mxu0 %v2518
      %v2951 = vpop.f32.mrb[0].mxu0
      %v2952 = vadd.f32 %v2840, %v2951
      %v2953 = vpop.f32.mrb[0].mxu0
      %v2954 = vadd.f32 %v2840, %v2953
      %2955 = vmatprep.mubr.f32.mxu0 %v2527
      %2956 = vmatmul.mubr.f32.gmra.mrb[0].mxu0 %v2526
      %v2957 = vpop.f32.mrb[0].mxu0
      %v2958 = vadd.f32 %v2845, %v2957
      %v2959 = vpop.f32.mrb[0].mxu0
      %v2960 = vadd.f32 %v2845, %v2959
      %2961 = vmatprep.mubr.f32.mxu0 %v2535
      %2962 = vmatmul.mubr.f32.gmra.mrb[0].mxu0 %v2534
      %v2963 = vpop.f32.mrb[0].mxu0
      %v2964 = vadd.f32 %v2850, %v2963
      %v2965 = vpop.f32.mrb[0].mxu0
      %v2966 = vadd.f32 %v2850, %v2965
      %2967 = vmatprep.mubr.f32.mxu0 %v2543
      %2968 = vmatmul.mubr.f32.gmra.mrb[0].mxu0 %v2542
      %v2969 = vpop.f32.mrb[0].mxu0
      %v2970 = vadd.f32 %v2855, %v2969
      %v2971 = vpop.f32.mrb[0].mxu0
      %v2972 = vadd.f32 %v2855, %v2971
      %2973 = vmatprep.mubr.f32.mxu0 %v2551
      %2974 = vmatmul.mubr.f32.gmra.mrb[0].mxu0 %v2550
      %v2975 = vpop.f32.mrb[0].mxu0
      %v2976 = vadd.f32 %v2860, %v2975
      %v2977 = vpop.f32.mrb[0].mxu0
      %v2978 = vadd.f32 %v2860, %v2977
      %2979 = vmatprep.mubr.f32.mxu0 %v2559
      %2980 = vmatmul.mubr.f32.gmra.mrb[0].mxu0 %v2558
      %v2981 = vpop.f32.mrb[0].mxu0
      %v2982 = vadd.f32 %v2865, %v2981
      %v2983 = vpop.f32.mrb[0].mxu0
      %v2984 = vadd.f32 %v2865, %v2983
      %2985 = vdwg.mxu0
      %2986 = vmatprep.subr.mxu0 %v2631
      %2987 = vmatpush1.msra.mxu0 %v2630
      %2988 = vmatprep.subr.mxu0 %v2633
      %2989 = vmatpush1.msra.mxu0 %v2632
      %2990 = vmatprep.subr.mxu0 %v2635
      %2991 = vmatpush1.msra.mxu0 %v2634
      %2992 = vmatprep.subr.mxu0 %v2637
      %2993 = vmatpush1.msra.mxu0 %v2636
      %2994 = vmatprep.subr.mxu0 %v2639
      %2995 = vmatpush1.msra.mxu0 %v2638
      %2996 = vmatprep.subr.mxu0 %v2641
      %2997 = vmatpush1.msra.mxu0 %v2640
      %2998 = vmatprep.subr.mxu0 %v2643
      %2999 = vmatpush1.msra.mxu0 %v2642
      %3000 = vmatprep.subr.mxu0 %v2645
      %3001 = vmatpush1.msra.mxu0 %v2644
      %3002 = vmatprep.subr.mxu0 %v2647
      %3003 = vmatpush1.msra.mxu0 %v2646
      %3004 = vmatprep.subr.mxu0 %v2649
      %3005 = vmatpush1.msra.mxu0 %v2648
      %3006 = vmatprep.subr.mxu0 %v2651
      %3007 = vmatpush1.msra.mxu0 %v2650
      %3008 = vmatprep.subr.mxu0 %v2653
      %3009 = vmatpush1.msra.mxu0 %v2652
      %3010 = vmatprep.subr.mxu0 %v2655
      %3011 = vmatpush1.msra.mxu0 %v2654
      %3012 = vmatprep.subr.mxu0 %v2657
      %3013 = vmatpush1.msra.mxu0 %v2656
      %3014 = vmatprep.subr.mxu0 %v2659
      %3015 = vmatpush1.msra.mxu0 %v2658
      %3016 = vmatprep.subr.mxu0 %v2661
      %3017 = vmatpush1.msra.mxu0 %v2660
      %3018 = vmatprep.subr.mxu0 %v2663
      %3019 = vmatpush1.msra.mxu0 %v2662
      %3020 = vmatprep.subr.mxu0 %v2665
      %3021 = vmatpush1.msra.mxu0 %v2664
      %3022 = vmatprep.subr.mxu0 %v2667
      %3023 = vmatpush1.msra.mxu0 %v2666
      %3024 = vmatprep.subr.mxu0 %v2669
      %3025 = vmatpush1.msra.mxu0 %v2668
      %3026 = vmatprep.subr.mxu0 %v2671
      %3027 = vmatpush1.msra.mxu0 %v2670
      %3028 = vmatprep.subr.mxu0 %v2673
      %3029 = vmatpush1.msra.mxu0 %v2672
      %3030 = vmatprep.subr.mxu0 %v2675
      %3031 = vmatpush1.msra.mxu0 %v2674
      %3032 = vmatprep.subr.mxu0 %v2677
      %3033 = vmatpush1.msra.mxu0 %v2676
      %3034 = vmatprep.subr.mxu0 %v2679
      %3035 = vmatpush1.msra.mxu0 %v2678
      %3036 = vmatprep.subr.mxu0 %v2681
      %3037 = vmatpush1.msra.mxu0 %v2680
      %3038 = vmatprep.subr.mxu0 %v2683
      %3039 = vmatpush1.msra.mxu0 %v2682
      %3040 = vmatprep.subr.mxu0 %v2685
      %3041 = vmatpush1.msra.mxu0 %v2684
      %3042 = vmatprep.subr.mxu0 %v2687
      %3043 = vmatpush1.msra.mxu0 %v2686
      %3044 = vmatprep.subr.mxu0 %v2689
      %3045 = vmatpush1.msra.mxu0 %v2688
      %3046 = vmatprep.subr.mxu0 %v2691
      %3047 = vmatpush1.msra.mxu0 %v2690
      %3048 = vmatprep.subr.mxu0 %v2693
      %3049 = vmatpush1.msra.mxu0 %v2692
      %3050 = vmatprep.mubr.f32.mxu0 %v2497
      %3051 = vmatmul.mubr.f32.gmra.mrb[0].mxu0 %v2496
      %v3052 = vpop.f32.mrb[0].mxu0
      %v3053 = vadd.f32 %v2934, %v3052
      %v3054 = vpop.f32.mrb[0].mxu0
      %v3055 = vadd.f32 %v2936, %v3054
      %3056 = vmatprep.mubr.f32.mxu0 %v2505
      %3057 = vmatmul.mubr.f32.gmra.mrb[0].mxu0 %v2504
      %v3058 = vpop.f32.mrb[0].mxu0
      %v3059 = vadd.f32 %v2940, %v3058
      %v3060 = vpop.f32.mrb[0].mxu0
      %v3061 = vadd.f32 %v2942, %v3060
      %3062 = vmatprep.mubr.f32.mxu0 %v2513
      %3063 = vmatmul.mubr.f32.gmra.mrb[0].mxu0 %v2512
      %v3064 = vpop.f32.mrb[0].mxu0
      %v3065 = vadd.f32 %v2946, %v3064
      %v3066 = vpop.f32.mrb[0].mxu0
      %v3067 = vadd.f32 %v2948, %v3066
      %3068 = vmatprep.mubr.f32.mxu0 %v2521
      %3069 = vmatmul.mubr.f32.gmra.mrb[0].mxu0 %v2520
      %v3070 = vpop.f32.mrb[0].mxu0
      %v3071 = vadd.f32 %v2952, %v3070
      %v3072 = vpop.f32.mrb[0].mxu0
      %v3073 = vadd.f32 %v2954, %v3072
      %3074 = vmatprep.mubr.f32.mxu0 %v2529
      %3075 = vmatmul.mubr.f32.gmra.mrb[0].mxu0 %v2528
      %v3076 = vpop.f32.mrb[0].mxu0
      %v3077 = vadd.f32 %v2958, %v3076
      %v3078 = vpop.f32.mrb[0].mxu0
      %v3079 = vadd.f32 %v2960, %v3078
      %3080 = vmatprep.mubr.f32.mxu0 %v2537
      %3081 = vmatmul.mubr.f32.gmra.mrb[0].mxu0 %v2536
      %v3082 = vpop.f32.mrb[0].mxu0
      %v3083 = vadd.f32 %v2964, %v3082
      %v3084 = vpop.f32.mrb[0].mxu0
      %v3085 = vadd.f32 %v2966, %v3084
      %3086 = vmatprep.mubr.f32.mxu0 %v2545
      %3087 = vmatmul.mubr.f32.gmra.mrb[0].mxu0 %v2544
      %v3088 = vpop.f32.mrb[0].mxu0
      %v3089 = vadd.f32 %v2970, %v3088
      %v3090 = vpop.f32.mrb[0].mxu0
      %v3091 = vadd.f32 %v2972, %v3090
      %3092 = vmatprep.mubr.f32.mxu0 %v2553
      %3093 = vmatmul.mubr.f32.gmra.mrb[0].mxu0 %v2552
      %v3094 = vpop.f32.mrb[0].mxu0
      %v3095 = vadd.f32 %v2976, %v3094
      %v3096 = vpop.f32.mrb[0].mxu0
      %v3097 = vadd.f32 %v2978, %v3096
      %3098 = vmatprep.mubr.f32.mxu0 %v2561
      %3099 = vmatmul.mubr.f32.gmra.mrb[0].mxu0 %v2560
      %v3100 = vpop.f32.mrb[0].mxu0
      %v3101 = vadd.f32 %v2982, %v3100
      %v3102 = vpop.f32.mrb[0].mxu0
      %v3103 = vadd.f32 %v2984, %v3102
      %3104 = vdwg.mxu0
      %3105 = vmatprep.subr.mxu0 %v2695
      %3106 = vmatpush1.msra.mxu0 %v2694
      %3107 = vmatprep.subr.mxu0 %v2697
      %3108 = vmatpush1.msra.mxu0 %v2696
      %3109 = vmatprep.subr.mxu0 %v2699
      %3110 = vmatpush1.msra.mxu0 %v2698
      %3111 = vmatprep.subr.mxu0 %v2701
      %3112 = vmatpush1.msra.mxu0 %v2700
      %3113 = vmatprep.subr.mxu0 %v2703
      %3114 = vmatpush1.msra.mxu0 %v2702
      %3115 = vmatprep.subr.mxu0 %v2705
      %3116 = vmatpush1.msra.mxu0 %v2704
      %3117 = vmatprep.subr.mxu0 %v2707
      %3118 = vmatpush1.msra.mxu0 %v2706
      %3119 = vmatprep.subr.mxu0 %v2709
      %3120 = vmatpush1.msra.mxu0 %v2708
      %3121 = vmatprep.subr.mxu0 %v2711
      %3122 = vmatpush1.msra.mxu0 %v2710
      %3123 = vmatprep.subr.mxu0 %v2713
      %3124 = vmatpush1.msra.mxu0 %v2712
      %3125 = vmatprep.subr.mxu0 %v2715
      %3126 = vmatpush1.msra.mxu0 %v2714
      %3127 = vmatprep.subr.mxu0 %v2717
      %3128 = vmatpush1.msra.mxu0 %v2716
      %3129 = vmatprep.subr.mxu0 %v2719
      %3130 = vmatpush1.msra.mxu0 %v2718
      %3131 = vmatprep.subr.mxu0 %v2721
      %3132 = vmatpush1.msra.mxu0 %v2720
      %3133 = vmatprep.subr.mxu0 %v2723
      %3134 = vmatpush1.msra.mxu0 %v2722
      %3135 = vmatprep.subr.mxu0 %v2725
      %3136 = vmatpush1.msra.mxu0 %v2724
      %3137 = vmatprep.subr.mxu0 %v2727
      %3138 = vmatpush1.msra.mxu0 %v2726
      %3139 = vmatprep.subr.mxu0 %v2729
      %3140 = vmatpush1.msra.mxu0 %v2728
      %3141 = vmatprep.subr.mxu0 %v2731
      %3142 = vmatpush1.msra.mxu0 %v2730
      %3143 = vmatprep.subr.mxu0 %v2733
      %3144 = vmatpush1.msra.mxu0 %v2732
      %3145 = vmatprep.subr.mxu0 %v2735
      %3146 = vmatpush1.msra.mxu0 %v2734
      %3147 = vmatprep.subr.mxu0 %v2737
      %3148 = vmatpush1.msra.mxu0 %v2736
      %3149 = vmatprep.subr.mxu0 %v2739
      %3150 = vmatpush1.msra.mxu0 %v2738
      %3151 = vmatprep.subr.mxu0 %v2741
      %3152 = vmatpush1.msra.mxu0 %v2740
      %3153 = vmatprep.subr.mxu0 %v2743
      %3154 = vmatpush1.msra.mxu0 %v2742
      %3155 = vmatprep.subr.mxu0 %v2745
      %3156 = vmatpush1.msra.mxu0 %v2744
      %3157 = vmatprep.subr.mxu0 %v2747
      %3158 = vmatpush1.msra.mxu0 %v2746
      %3159 = vmatprep.subr.mxu0 %v2749
      %3160 = vmatpush1.msra.mxu0 %v2748
      %3161 = vmatprep.subr.mxu0 %v2751
      %3162 = vmatpush1.msra.mxu0 %v2750
      %3163 = vmatprep.subr.mxu0 %v2753
      %3164 = vmatpush1.msra.mxu0 %v2752
      %3165 = vmatprep.subr.mxu0 %v2755
      %3166 = vmatpush1.msra.mxu0 %v2754
      %3167 = vmatprep.subr.mxu0 %v2757
      %3168 = vmatpush1.msra.mxu0 %v2756
      %3169 = vmatprep.mubr.f32.mxu0 %v2499
      %3170 = vmatmul.mubr.f32.gmra.mrb[0].mxu0 %v2498
      %v3171 = vpop.f32.mrb[0].mxu0
      %v3172 = vadd.f32 %v3053, %v3171
      %v3173 = vpop.f32.mrb[0].mxu0
      %v3174 = vadd.f32 %v3055, %v3173
      %3175 = vmatprep.mubr.f32.mxu0 %v2507
      %3176 = vmatmul.mubr.f32.gmra.mrb[0].mxu0 %v2506
      %v3177 = vpop.f32.mrb[0].mxu0
      %v3178 = vadd.f32 %v3059, %v3177
      %v3179 = vpop.f32.mrb[0].mxu0
      %v3180 = vadd.f32 %v3061, %v3179
      %3181 = vmatprep.mubr.f32.mxu0 %v2515
      %3182 = vmatmul.mubr.f32.gmra.mrb[0].mxu0 %v2514
      %v3183 = vpop.f32.mrb[0].mxu0
      %v3184 = vadd.f32 %v3065, %v3183
      %v3185 = vpop.f32.mrb[0].mxu0
      %v3186 = vadd.f32 %v3067, %v3185
      %3187 = vmatprep.mubr.f32.mxu0 %v2523
      %3188 = vmatmul.mubr.f32.gmra.mrb[0].mxu0 %v2522
      %v3189 = vpop.f32.mrb[0].mxu0
      %v3190 = vadd.f32 %v3071, %v3189
      %v3191 = vpop.f32.mrb[0].mxu0
      %v3192 = vadd.f32 %v3073, %v3191
      %3193 = vmatprep.mubr.f32.mxu0 %v2531
      %3194 = vmatmul.mubr.f32.gmra.mrb[0].mxu0 %v2530
      %v3195 = vpop.f32.mrb[0].mxu0
      %v3196 = vadd.f32 %v3077, %v3195
      %v3197 = vpop.f32.mrb[0].mxu0
      %v3198 = vadd.f32 %v3079, %v3197
      %3199 = vmatprep.mubr.f32.mxu0 %v2539
      %3200 = vmatmul.mubr.f32.gmra.mrb[0].mxu0 %v2538
      %v3201 = vpop.f32.mrb[0].mxu0
      %v3202 = vadd.f32 %v3083, %v3201
      %v3203 = vpop.f32.mrb[0].mxu0
      %v3204 = vadd.f32 %v3085, %v3203
      %3205 = vmatprep.mubr.f32.mxu0 %v2547
      %3206 = vmatmul.mubr.f32.gmra.mrb[0].mxu0 %v2546
      %v3207 = vpop.f32.mrb[0].mxu0
      %v3208 = vadd.f32 %v3089, %v3207
      %v3209 = vpop.f32.mrb[0].mxu0
      %v3210 = vadd.f32 %v3091, %v3209
      %3211 = vmatprep.mubr.f32.mxu0 %v2555
      %3212 = vmatmul.mubr.f32.gmra.mrb[0].mxu0 %v2554
      %v3213 = vpop.f32.mrb[0].mxu0
      %v3214 = vadd.f32 %v3095, %v3213
      %v3215 = vpop.f32.mrb[0].mxu0
      %v3216 = vadd.f32 %v3097, %v3215
      %3217 = vmatprep.mubr.f32.mxu0 %v2563
      %3218 = vmatmul.mubr.f32.gmra.mrb[0].mxu0 %v2562
      %v3219 = vpop.f32.mrb[0].mxu0
      %v3220 = vadd.f32 %v3101, %v3219
      %v3221 = vpop.f32.mrb[0].mxu0
      %v3222 = vadd.f32 %v3103, %v3221
      %3223 = vdwg.mxu0
      %3224 = vmatprep.subr.mxu0 %v2759
      %3225 = vmatpush1.msra.mxu0 %v2758
      %3226 = vmatprep.subr.mxu0 %v2761
      %3227 = vmatpush1.msra.mxu0 %v2760
      %3228 = vmatprep.subr.mxu0 %v2763
      %3229 = vmatpush1.msra.mxu0 %v2762
      %3230 = vmatprep.subr.mxu0 %v2765
      %3231 = vmatpush1.msra.mxu0 %v2764
      %3232 = vmatprep.subr.mxu0 %v2767
      %3233 = vmatpush1.msra.mxu0 %v2766
      %3234 = vmatprep.subr.mxu0 %v2769
      %3235 = vmatpush1.msra.mxu0 %v2768
      %3236 = vmatprep.subr.mxu0 %v2771
      %3237 = vmatpush1.msra.mxu0 %v2770
      %3238 = vmatprep.subr.mxu0 %v2773
      %3239 = vmatpush1.msra.mxu0 %v2772
      %3240 = vmatprep.subr.mxu0 %v2775
      %3241 = vmatpush1.msra.mxu0 %v2774
      %3242 = vmatprep.subr.mxu0 %v2777
      %3243 = vmatpush1.msra.mxu0 %v2776
      %3244 = vmatprep.subr.mxu0 %v2779
      %3245 = vmatpush1.msra.mxu0 %v2778
      %3246 = vmatprep.subr.mxu0 %v2781
      %3247 = vmatpush1.msra.mxu0 %v2780
      %3248 = vmatprep.subr.mxu0 %v2783
      %3249 = vmatpush1.msra.mxu0 %v2782
      %3250 = vmatprep.subr.mxu0 %v2785
      %3251 = vmatpush1.msra.mxu0 %v2784
      %3252 = vmatprep.subr.mxu0 %v2787
      %3253 = vmatpush1.msra.mxu0 %v2786
      %3254 = vmatprep.subr.mxu0 %v2789
      %3255 = vmatpush1.msra.mxu0 %v2788
      %3256 = vmatprep.subr.mxu0 %v2791
      %3257 = vmatpush1.msra.mxu0 %v2790
      %3258 = vmatprep.subr.mxu0 %v2793
      %3259 = vmatpush1.msra.mxu0 %v2792
      %3260 = vmatprep.subr.mxu0 %v2795
      %3261 = vmatpush1.msra.mxu0 %v2794
      %3262 = vmatprep.subr.mxu0 %v2797
      %3263 = vmatpush1.msra.mxu0 %v2796
      %3264 = vmatprep.subr.mxu0 %v2799
      %3265 = vmatpush1.msra.mxu0 %v2798
      %3266 = vmatprep.subr.mxu0 %v2801
      %3267 = vmatpush1.msra.mxu0 %v2800
      %3268 = vmatprep.subr.mxu0 %v2803
      %3269 = vmatpush1.msra.mxu0 %v2802
      %3270 = vmatprep.subr.mxu0 %v2805
      %3271 = vmatpush1.msra.mxu0 %v2804
      %3272 = vmatprep.subr.mxu0 %v2807
      %3273 = vmatpush1.msra.mxu0 %v2806
      %3274 = vmatprep.subr.mxu0 %v2809
      %3275 = vmatpush1.msra.mxu0 %v2808
      %3276 = vmatprep.subr.mxu0 %v2811
      %3277 = vmatpush1.msra.mxu0 %v2810
      %3278 = vmatprep.subr.mxu0 %v2813
      %3279 = vmatpush1.msra.mxu0 %v2812
      %3280 = vmatprep.subr.mxu0 %v2815
      %3281 = vmatpush1.msra.mxu0 %v2814
      %3282 = vmatprep.subr.mxu0 %v2817
      %3283 = vmatpush1.msra.mxu0 %v2816
      %3284 = vmatprep.subr.mxu0 %v2819
      %3285 = vmatpush1.msra.mxu0 %v2818
      %3286 = vmatprep.subr.mxu0 %v2821
      %3287 = vmatpush1.msra.mxu0 %v2820
      %3288 = vmatprep.mubr.f32.mxu0 %v2501
      %3289 = vmatmul.mubr.f32.gmra.mrb[0].mxu0 %v2500
      %v3290 = vpop.f32.mrb[0].mxu0
      %v3291 = vadd.f32 %v3172, %v3290
      %v3292 = vpop.f32.mrb[0].mxu0
      %v3293 = vadd.f32 %v3174, %v3292
      %3294 = vmatprep.mubr.f32.mxu0 %v2509
      %3295 = vmatmul.mubr.f32.gmra.mrb[0].mxu0 %v2508
      %v3296 = vpop.f32.mrb[0].mxu0
      %v3297 = vadd.f32 %v3178, %v3296
      %v3298 = vpop.f32.mrb[0].mxu0
      %v3299 = vadd.f32 %v3180, %v3298
      %3300 = vmatprep.mubr.f32.mxu0 %v2517
      %3301 = vmatmul.mubr.f32.gmra.mrb[0].mxu0 %v2516
      %v3302 = vpop.f32.mrb[0].mxu0
      %v3303 = vadd.f32 %v3184, %v3302
      %v3304 = vpop.f32.mrb[0].mxu0
      %v3305 = vadd.f32 %v3186, %v3304
      %3306 = vmatprep.mubr.f32.mxu0 %v2525
      %3307 = vmatmul.mubr.f32.gmra.mrb[0].mxu0 %v2524
      %v3308 = vpop.f32.mrb[0].mxu0
      %v3309 = vadd.f32 %v3190, %v3308
      %v3310 = vpop.f32.mrb[0].mxu0
      %v3311 = vadd.f32 %v3192, %v3310
      %3312 = vmatprep.mubr.f32.mxu0 %v2533
      %3313 = vmatmul.mubr.f32.gmra.mrb[0].mxu0 %v2532
      %v3314 = vpop.f32.mrb[0].mxu0
      %v3315 = vadd.f32 %v3196, %v3314
      %v3316 = vpop.f32.mrb[0].mxu0
      %v3317 = vadd.f32 %v3198, %v3316
      %3318 = vmatprep.mubr.f32.mxu0 %v2541
      %3319 = vmatmul.mubr.f32.gmra.mrb[0].mxu0 %v2540
      %v3320 = vpop.f32.mrb[0].mxu0
      %v3321 = vadd.f32 %v3202, %v3320
      %v3322 = vpop.f32.mrb[0].mxu0
      %v3323 = vadd.f32 %v3204, %v3322
      %3324 = vmatprep.mubr.f32.mxu0 %v2549
      %3325 = vmatmul.mubr.f32.gmra.mrb[0].mxu0 %v2548
      %v3326 = vpop.f32.mrb[0].mxu0
      %v3327 = vadd.f32 %v3208, %v3326
      %v3328 = vpop.f32.mrb[0].mxu0
      %v3329 = vadd.f32 %v3210, %v3328
      %3330 = vmatprep.mubr.f32.mxu0 %v2557
      %3331 = vmatmul.mubr.f32.gmra.mrb[0].mxu0 %v2556
      %v3332 = vpop.f32.mrb[0].mxu0
      %v3333 = vadd.f32 %v3214, %v3332
      %v3334 = vpop.f32.mrb[0].mxu0
      %v3335 = vadd.f32 %v3216, %v3334
      %3336 = vmatprep.mubr.f32.mxu0 %v2565
      %3337 = vmatmul.mubr.f32.gmra.mrb[0].mxu0 %v2564
      %v3338 = vpop.f32.mrb[0].mxu0
      %v3339 = vadd.f32 %v3220, %v3338
      %v3340 = vpop.f32.mrb[0].mxu0
      %v3341 = vadd.f32 %v3222, %v3340
      %3342 = vdwg.mxu0
      %v3343 = vmax.f32 %v3291, 0.0
      %v3344 = vmax.f32 %v3293, 0.0
      %v3345 = vmax.f32 %v3297, 0.0
      %v3346 = vmax.f32 %v3299, 0.0
      %v3347 = vmax.f32 %v3303, 0.0
      %v3348 = vmax.f32 %v3305, 0.0
      %v3349 = vmax.f32 %v3309, 0.0
      %v3350 = vmax.f32 %v3311, 0.0
      %v3351 = vmax.f32 %v3315, 0.0
      %v3352 = vmax.f32 %v3317, 0.0
      %v3353 = vmax.f32 %v3321, 0.0
      %v3354 = vmax.f32 %v3323, 0.0
      %v3355 = vmax.f32 %v3327, 0.0
      %v3356 = vmax.f32 %v3329, 0.0
      %v3357 = vmax.f32 %v3333, 0.0
      %v3358 = vmax.f32 %v3335, 0.0
      %v3359 = vmax.f32 %v3339, 0.0
      %v3360 = vmax.f32 %v3341, 0.0
      %v3361 = vld [vmem:[%s4] sm:$0xff]
      %v3362 = vld [vmem:[%s4 + $0x8] sm:$0xff]
      %v3363 = vld [vmem:[%s4 + $0x10] sm:$0xff]
      %v3364 = vld [vmem:[%s4 + $0x18] sm:$0xff]
      %v3365 = vld [vmem:[%s4 + $0x20] sm:$0xff]
      %v3366 = vld [vmem:[%s4 + $0x28] sm:$0xff]
      %v3367 = vld [vmem:[%s4 + $0x30] sm:$0xff]
      %v3368 = vld [vmem:[%s4 + $0x38] sm:$0xff]
      %v3369 = vld [vmem:[%s4 + $0x40] sm:$0xff]
      %v3370 = vld [vmem:[%s4 + $0x48] sm:$0xff]
      %v3371 = vld [vmem:[%s4 + $0x50] sm:$0xff]
      %v3372 = vld [vmem:[%s4 + $0x58] sm:$0xff]
      %v3373 = vld [vmem:[%s4 + $0x60] sm:$0xff]
      %v3374 = vld [vmem:[%s4 + $0x68] sm:$0xff]
      %v3375 = vld [vmem:[%s4 + $0x70] sm:$0xff]
      %v3376 = vld [vmem:[%s4 + $0x78] sm:$0xff]
      %v3377 = vld [vmem:[%s4 + $0x80] sm:$0xff]
      %v3378 = vld [vmem:[%s4 + $0x88] sm:$0xff]
      %v3379 = vld [vmem:[%s4 + $0x90] sm:$0xff]
      %v3380 = vld [vmem:[%s4 + $0x98] sm:$0xff]
      %v3381 = vld [vmem:[%s4 + $0xa0] sm:$0xff]
      %v3382 = vld [vmem:[%s4 + $0xa8] sm:$0xff]
      %v3383 = vld [vmem:[%s4 + $0xb0] sm:$0xff]
      %v3384 = vld [vmem:[%s4 + $0xb8] sm:$0xff]
      %v3385 = vld [vmem:[%s4 + $0xc0] sm:$0xff]
      %v3386 = vld [vmem:[%s4 + $0xc8] sm:$0xff]
      %v3387 = vld [vmem:[%s4 + $0xd0] sm:$0xff]
      %v3388 = vld [vmem:[%s4 + $0xd8] sm:$0xff]
      %v3389 = vld [vmem:[%s4 + $0xe0] sm:$0xff]
      %v3390 = vld [vmem:[%s4 + $0xe8] sm:$0xff]
      %v3391 = vld [vmem:[%s4 + $0xf0] sm:$0xff]
      %v3392 = vld [vmem:[%s4 + $0xf8] sm:$0xff]
      %3393 = vmatprep.subr.mxu0 0.0
      %3394 = vmatpush1.msra.mxu0 %v3361
      %3395 = vmatprep.subr.mxu0 0.0
      %3396 = vmatpush1.msra.mxu0 %v3362
      %3397 = vmatprep.subr.mxu0 0.0
      %3398 = vmatpush1.msra.mxu0 %v3363
      %3399 = vmatprep.subr.mxu0 0.0
      %3400 = vmatpush1.msra.mxu0 %v3364
      %3401 = vmatprep.subr.mxu0 0.0
      %3402 = vmatpush1.msra.mxu0 %v3365
      %3403 = vmatprep.subr.mxu0 0.0
      %3404 = vmatpush1.msra.mxu0 %v3366
      %3405 = vmatprep.subr.mxu0 0.0
      %3406 = vmatpush1.msra.mxu0 %v3367
      %3407 = vmatprep.subr.mxu0 0.0
      %3408 = vmatpush1.msra.mxu0 %v3368
      %3409 = vmatprep.subr.mxu0 0.0
      %3410 = vmatpush1.msra.mxu0 %v3369
      %3411 = vmatprep.subr.mxu0 0.0
      %3412 = vmatpush1.msra.mxu0 %v3370
      %3413 = vmatprep.subr.mxu0 0.0
      %3414 = vmatpush1.msra.mxu0 %v3371
      %3415 = vmatprep.subr.mxu0 0.0
      %3416 = vmatpush1.msra.mxu0 %v3372
      %3417 = vmatprep.subr.mxu0 0.0
      %3418 = vmatpush1.msra.mxu0 %v3373
      %3419 = vmatprep.subr.mxu0 0.0
      %3420 = vmatpush1.msra.mxu0 %v3374
      %3421 = vmatprep.subr.mxu0 0.0
      %3422 = vmatpush1.msra.mxu0 %v3375
      %3423 = vmatprep.subr.mxu0 0.0
      %3424 = vmatpush1.msra.mxu0 %v3376
      %3425 = vmatprep.subr.mxu0 0.0
      %3426 = vmatpush1.msra.mxu0 %v3377
      %3427 = vmatprep.subr.mxu0 0.0
      %3428 = vmatpush1.msra.mxu0 %v3378
      %3429 = vmatprep.subr.mxu0 0.0
      %3430 = vmatpush1.msra.mxu0 %v3379
      %3431 = vmatprep.subr.mxu0 0.0
      %3432 = vmatpush1.msra.mxu0 %v3380
      %3433 = vmatprep.subr.mxu0 0.0
      %3434 = vmatpush1.msra.mxu0 %v3381
      %3435 = vmatprep.subr.mxu0 0.0
      %3436 = vmatpush1.msra.mxu0 %v3382
      %3437 = vmatprep.subr.mxu0 0.0
      %3438 = vmatpush1.msra.mxu0 %v3383
      %3439 = vmatprep.subr.mxu0 0.0
      %3440 = vmatpush1.msra.mxu0 %v3384
      %3441 = vmatprep.subr.mxu0 0.0
      %3442 = vmatpush1.msra.mxu0 %v3385
      %3443 = vmatprep.subr.mxu0 0.0
      %3444 = vmatpush1.msra.mxu0 %v3386
      %3445 = vmatprep.subr.mxu0 0.0
      %3446 = vmatpush1.msra.mxu0 %v3387
      %3447 = vmatprep.subr.mxu0 0.0
      %3448 = vmatpush1.msra.mxu0 %v3388
      %3449 = vmatprep.subr.mxu0 0.0
      %3450 = vmatpush1.msra.mxu0 %v3389
      %3451 = vmatprep.subr.mxu0 0.0
      %3452 = vmatpush1.msra.mxu0 %v3390
      %3453 = vmatprep.subr.mxu0 0.0
      %3454 = vmatpush1.msra.mxu0 %v3391
      %3455 = vmatprep.subr.mxu0 0.0
      %3456 = vmatpush1.msra.mxu0 %v3392
      %3457 = vmatprep.mubr.f32.mxu0 %v3344
      %3458 = vmatmul.mubr.f32.gmra.mrb[0].mxu0 %v3343
      %v3459 = vpop.f32.mrb[0].mxu0
      %v3460 = vadd.f32 0.0, %v3459
      %v3461 = vpop.f32.mrb[0].mxu0
      %3462 = vmatprep.mubr.f32.mxu0 %v3346
      %3463 = vmatmul.mubr.f32.gmra.mrb[0].mxu0 %v3345
      %v3464 = vpop.f32.mrb[0].mxu0
      %v3465 = vadd.f32 0.0, %v3464
      %v3466 = vpop.f32.mrb[0].mxu0
      %3467 = vmatprep.mubr.f32.mxu0 %v3348
      %3468 = vmatmul.mubr.f32.gmra.mrb[0].mxu0 %v3347
      %v3469 = vpop.f32.mrb[0].mxu0
      %v3470 = vadd.f32 0.0, %v3469
      %v3471 = vpop.f32.mrb[0].mxu0
      %3472 = vmatprep.mubr.f32.mxu0 %v3350
      %3473 = vmatmul.mubr.f32.gmra.mrb[0].mxu0 %v3349
      %v3474 = vpop.f32.mrb[0].mxu0
      %v3475 = vadd.f32 0.0, %v3474
      %v3476 = vpop.f32.mrb[0].mxu0
      %3477 = vmatprep.mubr.f32.mxu0 %v3352
      %3478 = vmatmul.mubr.f32.gmra.mrb[0].mxu0 %v3351
      %v3479 = vpop.f32.mrb[0].mxu0
      %v3480 = vadd.f32 0.0, %v3479
      %v3481 = vpop.f32.mrb[0].mxu0
      %3482 = vmatprep.mubr.f32.mxu0 %v3354
      %3483 = vmatmul.mubr.f32.gmra.mrb[0].mxu0 %v3353
      %v3484 = vpop.f32.mrb[0].mxu0
      %v3485 = vadd.f32 0.0, %v3484
      %v3486 = vpop.f32.mrb[0].mxu0
      %3487 = vmatprep.mubr.f32.mxu0 %v3356
      %3488 = vmatmul.mubr.f32.gmra.mrb[0].mxu0 %v3355
      %v3489 = vpop.f32.mrb[0].mxu0
      %v3490 = vadd.f32 0.0, %v3489
      %v3491 = vpop.f32.mrb[0].mxu0
      %3492 = vmatprep.mubr.f32.mxu0 %v3358
      %3493 = vmatmul.mubr.f32.gmra.mrb[0].mxu0 %v3357
      %v3494 = vpop.f32.mrb[0].mxu0
      %v3495 = vadd.f32 0.0, %v3494
      %v3496 = vpop.f32.mrb[0].mxu0
      %3497 = vmatprep.mubr.f32.mxu0 %v3360
      %3498 = vmatmul.mubr.f32.gmra.mrb[0].mxu0 %v3359
      %v3499 = vpop.f32.mrb[0].mxu0
      %v3500 = vadd.f32 0.0, %v3499
      %v3501 = vpop.f32.mrb[0].mxu0
      %3502 = vdwg.mxu0
      %v3503 = vld [vmem:[%s3] sm:$0xff]
      %v3504 = vld [vmem:[%s3 + $0x8] sm:$0xff]
      %v3505 = vld [vmem:[%s3 + $0x10] sm:$0xff]
      %v3506 = vld [vmem:[%s3 + $0x18] sm:$0xff]
      %v3507 = vld [vmem:[%s3 + $0x20] sm:$0xff]
      %v3508 = vld [vmem:[%s3 + $0x28] sm:$0xff]
      %v3509 = vld [vmem:[%s3 + $0x30] sm:$0x3f]
      %v3510 = vld [vmem:[%s2] sm:$0xff]
      %v3511 = vld [vmem:[%s2 + $0x8] sm:$0xff]
      %v3512 = vld [vmem:[%s2 + $0x10] sm:$0xff]
      %v3513 = vld [vmem:[%s2 + $0x18] sm:$0xff]
      %v3514 = vld [vmem:[%s2 + $0x20] sm:$0xff]
      %v3515 = vld [vmem:[%s2 + $0x28] sm:$0xff]
      %v3516 = vld [vmem:[%s2 + $0x30] sm:$0x3f]
      %3518 = vset.pattern.permute.xlu0 1
      %3519 = vperm.xlu0 %3518, %v3503
      %v3520 = vpop.permute.xlu0 %3519
      %3523 = vset.pattern.permute.xlu0 1
      %3524 = vperm.xlu0 %3523, %v3504
      %v3525 = vpop.permute.xlu0 %3524
      %3528 = vset.pattern.permute.xlu0 1
      %3529 = vperm.xlu0 %3528, %v3505
      %v3530 = vpop.permute.xlu0 %3529
      %3533 = vset.pattern.permute.xlu0 1
      %3534 = vperm.xlu0 %3533, %v3506
      %v3535 = vpop.permute.xlu0 %3534
      %3538 = vset.pattern.permute.xlu0 1
      %3539 = vperm.xlu0 %3538, %v3507
      %v3540 = vpop.permute.xlu0 %3539
      %3543 = vset.pattern.permute.xlu0 1
      %3544 = vperm.xlu0 %3543, %v3508
      %v3545 = vpop.permute.xlu0 %3544
      %3548 = vset.pattern.permute.xlu0 1
      %3549 = vperm.xlu0 %3548, %v3509
      %v3550 = vpop.permute.xlu0 %3549
      %v3553 = vsel %vm405, %v3510, 0
      %v3556 = vsel %vm405, %v3511, 0
      %v3559 = vsel %vm405, %v3512, 0
      %v3562 = vsel %vm405, %v3513, 0
      %v3565 = vsel %vm405, %v3514, 0
      %v3568 = vsel %vm405, %v3515, 0
      %v3571 = vsel %vm405, %v3516, 0
      %3573 = vmatprep.subr.mxu0 0.0
      %3574 = vmatpush1.msra.mxu0 %v3460
      %3575 = vmatprep.subr.mxu0 0.0
      %3576 = vmatpush1.msra.mxu0 %v3465
      %3577 = vmatprep.subr.mxu0 0.0
      %3578 = vmatpush1.msra.mxu0 %v3470
      %3579 = vmatprep.subr.mxu0 0.0
      %3580 = vmatpush1.msra.mxu0 %v3475
      %3581 = vmatprep.subr.mxu0 0.0
      %3582 = vmatpush1.msra.mxu0 %v3480
      %3583 = vmatprep.subr.mxu0 0.0
      %3584 = vmatpush1.msra.mxu0 %v3485
      %3585 = vmatprep.subr.mxu0 0.0
      %3586 = vmatpush1.msra.mxu0 %v3490
      %3587 = vmatprep.subr.mxu0 0.0
      %3588 = vmatpush1.msra.mxu0 %v3495
      %3589 = vmatprep.subr.mxu0 0.0
      %3590 = vmatpush1.msra.mxu0 %v3500
      %3591 = vmatprep.subr.mxu0 0.0
      %3592 = vmatpush1.msra.mxu0 0.0
      %3593 = vmatprep.subr.mxu0 0.0
      %3594 = vmatpush1.msra.mxu0 0.0
      %3595 = vmatprep.subr.mxu0 0.0
      %3596 = vmatpush1.msra.mxu0 0.0
      %3597 = vmatprep.subr.mxu0 0.0
      %3598 = vmatpush1.msra.mxu0 0.0
      %3599 = vmatprep.subr.mxu0 0.0
      %3600 = vmatpush1.msra.mxu0 0.0
      %3601 = vmatprep.subr.mxu0 0.0
      %3602 = vmatpush1.msra.mxu0 0.0
      %3603 = vmatprep.subr.mxu0 0.0
      %3604 = vmatpush1.msra.mxu0 0.0
      %3605 = vmatprep.subr.mxu0 0.0
      %3606 = vmatpush1.msra.mxu0 0.0
      %3607 = vmatprep.subr.mxu0 0.0
      %3608 = vmatpush1.msra.mxu0 0.0
      %3609 = vmatprep.subr.mxu0 0.0
      %3610 = vmatpush1.msra.mxu0 0.0
      %3611 = vmatprep.subr.mxu0 0.0
      %3612 = vmatpush1.msra.mxu0 0.0
      %3613 = vmatprep.subr.mxu0 0.0
      %3614 = vmatpush1.msra.mxu0 0.0
      %3615 = vmatprep.subr.mxu0 0.0
      %3616 = vmatpush1.msra.mxu0 0.0
      %3617 = vmatprep.subr.mxu0 0.0
      %3618 = vmatpush1.msra.mxu0 0.0
      %3619 = vmatprep.subr.mxu0 0.0
      %3620 = vmatpush1.msra.mxu0 0.0
      %3621 = vmatprep.subr.mxu0 0.0
      %3622 = vmatpush1.msra.mxu0 0.0
      %3623 = vmatprep.subr.mxu0 0.0
      %3624 = vmatpush1.msra.mxu0 0.0
      %3625 = vmatprep.subr.mxu0 0.0
      %3626 = vmatpush1.msra.mxu0 0.0
      %3627 = vmatprep.subr.mxu0 0.0
      %3628 = vmatpush1.msra.mxu0 0.0
      %3629 = vmatprep.subr.mxu0 0.0
      %3630 = vmatpush1.msra.mxu0 0.0
      %3631 = vmatprep.subr.mxu0 0.0
      %3632 = vmatpush1.msra.mxu0 0.0
      %3633 = vmatprep.subr.mxu0 0.0
      %3634 = vmatpush1.msra.mxu0 0.0
      %3635 = vmatprep.subr.mxu0 0.0
      %3636 = vmatpush1.msra.mxu0 0.0
      %3637 = vmatprep.mubr.f32.mxu0 0.0
      %3638 = vmatmul.mubr.f32.gmra.mrb[0].mxu0 %v3553
      %v3639 = vpop.f32.mrb[0].mxu0
      %v3640 = vadd.f32 %v3520, %v3639
      %v3641 = vpop.f32.mrb[0].mxu0
      %3642 = vmatprep.mubr.f32.mxu0 0.0
      %3643 = vmatmul.mubr.f32.gmra.mrb[0].mxu0 %v3556
      %v3644 = vpop.f32.mrb[0].mxu0
      %v3645 = vadd.f32 %v3525, %v3644
      %v3646 = vpop.f32.mrb[0].mxu0
      %3647 = vmatprep.mubr.f32.mxu0 0.0
      %3648 = vmatmul.mubr.f32.gmra.mrb[0].mxu0 %v3559
      %v3649 = vpop.f32.mrb[0].mxu0
      %v3650 = vadd.f32 %v3530, %v3649
      %v3651 = vpop.f32.mrb[0].mxu0
      %3652 = vmatprep.mubr.f32.mxu0 0.0
      %3653 = vmatmul.mubr.f32.gmra.mrb[0].mxu0 %v3562
      %v3654 = vpop.f32.mrb[0].mxu0
      %v3655 = vadd.f32 %v3535, %v3654
      %v3656 = vpop.f32.mrb[0].mxu0
      %3657 = vmatprep.mubr.f32.mxu0 0.0
      %3658 = vmatmul.mubr.f32.gmra.mrb[0].mxu0 %v3565
      %v3659 = vpop.f32.mrb[0].mxu0
      %v3660 = vadd.f32 %v3540, %v3659
      %v3661 = vpop.f32.mrb[0].mxu0
      %3662 = vmatprep.mubr.f32.mxu0 0.0
      %3663 = vmatmul.mubr.f32.gmra.mrb[0].mxu0 %v3568
      %v3664 = vpop.f32.mrb[0].mxu0
      %v3665 = vadd.f32 %v3545, %v3664
      %v3666 = vpop.f32.mrb[0].mxu0
      %3667 = vmatprep.mubr.f32.mxu0 0.0
      %3668 = vmatmul.mubr.f32.gmra.mrb[0].mxu0 %v3571
      %v3669 = vpop.f32.mrb[0].mxu0
      %v3670 = vadd.f32 %v3550, %v3669
      %v3671 = vpop.f32.mrb[0].mxu0
      %3672 = vdwg.mxu0
      %v3673 = vmax.f32 %v3640, 0.0
      %v3674 = vmax.f32 %v3645, 0.0
      %v3675 = vmax.f32 %v3650, 0.0
      %v3676 = vmax.f32 %v3655, 0.0
      %v3677 = vmax.f32 %v3660, 0.0
      %v3678 = vmax.f32 %v3665, 0.0
      %v3679 = vmax.f32 %v3670, 0.0
      %v3680 = vld [vmem:[%s5] sm:$0xff]
      %v3681 = vld [vmem:[%s5 + $0x8] sm:$0xff]
      %v3682 = vld [vmem:[%s5 + $0x10] sm:$0xff]
      %v3684 = vsel %vm519, %v3673, 0
      %v3687 = vsel %vm519, %v3674, 0
      %v3690 = vsel %vm519, %v3675, 0
      %v3693 = vsel %vm519, %v3676, 0
      %v3696 = vsel %vm519, %v3677, 0
      %v3699 = vsel %vm519, %v3678, 0
      %v3702 = vsel %vm519, %v3679, 0
      %3704 = vmatprep.subr.mxu0 0.0
      %3705 = vmatpush1.msra.mxu0 %v3680
      %3706 = vmatprep.subr.mxu0 0.0
      %3707 = vmatpush1.msra.mxu0 %v3681
      %3708 = vmatprep.subr.mxu0 0.0
      %3709 = vmatpush1.msra.mxu0 %v3682
      %3710 = vmatprep.subr.mxu0 0.0
      %3711 = vmatpush1.msra.mxu0 0.0
      %3712 = vmatprep.subr.mxu0 0.0
      %3713 = vmatpush1.msra.mxu0 0.0
      %3714 = vmatprep.subr.mxu0 0.0
      %3715 = vmatpush1.msra.mxu0 0.0
      %3716 = vmatprep.subr.mxu0 0.0
      %3717 = vmatpush1.msra.mxu0 0.0
      %3718 = vmatprep.subr.mxu0 0.0
      %3719 = vmatpush1.msra.mxu0 0.0
      %3720 = vmatprep.subr.mxu0 0.0
      %3721 = vmatpush1.msra.mxu0 0.0
      %3722 = vmatprep.subr.mxu0 0.0
      %3723 = vmatpush1.msra.mxu0 0.0
      %3724 = vmatprep.subr.mxu0 0.0
      %3725 = vmatpush1.msra.mxu0 0.0
      %3726 = vmatprep.subr.mxu0 0.0
      %3727 = vmatpush1.msra.mxu0 0.0
      %3728 = vmatprep.subr.mxu0 0.0
      %3729 = vmatpush1.msra.mxu0 0.0
      %3730 = vmatprep.subr.mxu0 0.0
      %3731 = vmatpush1.msra.mxu0 0.0
      %3732 = vmatprep.subr.mxu0 0.0
      %3733 = vmatpush1.msra.mxu0 0.0
      %3734 = vmatprep.subr.mxu0 0.0
      %3735 = vmatpush1.msra.mxu0 0.0
      %3736 = vmatprep.subr.mxu0 0.0
      %3737 = vmatpush1.msra.mxu0 0.0
      %3738 = vmatprep.subr.mxu0 0.0
      %3739 = vmatpush1.msra.mxu0 0.0
      %3740 = vmatprep.subr.mxu0 0.0
      %3741 = vmatpush1.msra.mxu0 0.0
      %3742 = vmatprep.subr.mxu0 0.0
      %3743 = vmatpush1.msra.mxu0 0.0
      %3744 = vmatprep.subr.mxu0 0.0
      %3745 = vmatpush1.msra.mxu0 0.0
      %3746 = vmatprep.subr.mxu0 0.0
      %3747 = vmatpush1.msra.mxu0 0.0
      %3748 = vmatprep.subr.mxu0 0.0
      %3749 = vmatpush1.msra.mxu0 0.0
      %3750 = vmatprep.subr.mxu0 0.0
      %3751 = vmatpush1.msra.mxu0 0.0
      %3752 = vmatprep.subr.mxu0 0.0
      %3753 = vmatpush1.msra.mxu0 0.0
      %3754 = vmatprep.subr.mxu0 0.0
      %3755 = vmatpush1.msra.mxu0 0.0
      %3756 = vmatprep.subr.mxu0 0.0
      %3757 = vmatpush1.msra.mxu0 0.0
      %3758 = vmatprep.subr.mxu0 0.0
      %3759 = vmatpush1.msra.mxu0 0.0
      %3760 = vmatprep.subr.mxu0 0.0
      %3761 = vmatpush1.msra.mxu0 0.0
      %3762 = vmatprep.subr.mxu0 0.0
      %3763 = vmatpush1.msra.mxu0 0.0
      %3764 = vmatprep.subr.mxu0 0.0
      %3765 = vmatpush1.msra.mxu0 0.0
      %3766 = vmatprep.subr.mxu0 0.0
      %3767 = vmatpush1.msra.mxu0 0.0
      %3768 = vmatprep.mubr.f32.mxu0 0.0
      %3769 = vmatmul.mubr.f32.gmra.mrb[0].mxu0 %v3684
      %v3770 = vpop.f32.mrb[0].mxu0
      %v3771 = vadd.f32 0.0, %v3770
      %v3772 = vpop.f32.mrb[0].mxu0
      %3773 = vmatprep.mubr.f32.mxu0 0.0
      %3774 = vmatmul.mubr.f32.gmra.mrb[0].mxu0 %v3687
      %v3775 = vpop.f32.mrb[0].mxu0
      %v3776 = vadd.f32 0.0, %v3775
      %v3777 = vpop.f32.mrb[0].mxu0
      %3778 = vmatprep.mubr.f32.mxu0 0.0
      %3779 = vmatmul.mubr.f32.gmra.mrb[0].mxu0 %v3690
      %v3780 = vpop.f32.mrb[0].mxu0
      %v3781 = vadd.f32 0.0, %v3780
      %v3782 = vpop.f32.mrb[0].mxu0
      %3783 = vmatprep.mubr.f32.mxu0 0.0
      %3784 = vmatmul.mubr.f32.gmra.mrb[0].mxu0 %v3693
      %v3785 = vpop.f32.mrb[0].mxu0
      %v3786 = vadd.f32 0.0, %v3785
      %v3787 = vpop.f32.mrb[0].mxu0
      %3788 = vmatprep.mubr.f32.mxu0 0.0
      %3789 = vmatmul.mubr.f32.gmra.mrb[0].mxu0 %v3696
      %v3790 = vpop.f32.mrb[0].mxu0
      %v3791 = vadd.f32 0.0, %v3790
      %v3792 = vpop.f32.mrb[0].mxu0
      %3793 = vmatprep.mubr.f32.mxu0 0.0
      %3794 = vmatmul.mubr.f32.gmra.mrb[0].mxu0 %v3699
      %v3795 = vpop.f32.mrb[0].mxu0
      %v3796 = vadd.f32 0.0, %v3795
      %v3797 = vpop.f32.mrb[0].mxu0
      %3798 = vmatprep.mubr.f32.mxu0 0.0
      %3799 = vmatmul.mubr.f32.gmra.mrb[0].mxu0 %v3702
      %v3800 = vpop.f32.mrb[0].mxu0
      %v3801 = vadd.f32 0.0, %v3800
      %v3802 = vpop.f32.mrb[0].mxu0
      %3803 = vdwg.mxu0
      %3804 = vset.pattern.permute.xlu0 2
      %3805 = vperm.xlu0 %3804, %v3503
      %v3806 = vpop.permute.xlu0 %3805
      %3808 = vset.pattern.permute.xlu0 2
      %3809 = vperm.xlu0 %3808, %v3504
      %v3810 = vpop.permute.xlu0 %3809
      %3812 = vset.pattern.permute.xlu0 2
      %3813 = vperm.xlu0 %3812, %v3505
      %v3814 = vpop.permute.xlu0 %3813
      %3816 = vset.pattern.permute.xlu0 2
      %3817 = vperm.xlu0 %3816, %v3506
      %v3818 = vpop.permute.xlu0 %3817
      %3820 = vset.pattern.permute.xlu0 2
      %3821 = vperm.xlu0 %3820, %v3507
      %v3822 = vpop.permute.xlu0 %3821
      %3824 = vset.pattern.permute.xlu0 2
      %3825 = vperm.xlu0 %3824, %v3508
      %v3826 = vpop.permute.xlu0 %3825
      %3828 = vset.pattern.permute.xlu0 2
      %3829 = vperm.xlu0 %3828, %v3509
      %v3830 = vpop.permute.xlu0 %3829
      %v3832 = vmul.f32 %v3771, %v3806
      %v3833 = vmul.f32 %v3776, %v3810
      %v3834 = vmul.f32 %v3781, %v3814
      %v3835 = vmul.f32 %v3786, %v3818
      %v3836 = vmul.f32 %v3791, %v3822
      %v3837 = vmul.f32 %v3796, %v3826
      %v3838 = vmul.f32 %v3801, %v3830
      %3839 = vset.pattern.permute.xlu0 3
      %3840 = vperm.xlu0 %3839, %v3503
      %v3841 = vpop.permute.xlu0 %3840
      %3843 = vset.pattern.permute.xlu0 3
      %3844 = vperm.xlu0 %3843, %v3504
      %v3845 = vpop.permute.xlu0 %3844
      %3847 = vset.pattern.permute.xlu0 3
      %3848 = vperm.xlu0 %3847, %v3505
      %v3849 = vpop.permute.xlu0 %3848
      %3851 = vset.pattern.permute.xlu0 3
      %3852 = vperm.xlu0 %3851, %v3506
      %v3853 = vpop.permute.xlu0 %3852
      %3855 = vset.pattern.permute.xlu0 3
      %3856 = vperm.xlu0 %3855, %v3507
      %v3857 = vpop.permute.xlu0 %3856
      %3859 = vset.pattern.permute.xlu0 3
      %3860 = vperm.xlu0 %3859, %v3508
      %v3861 = vpop.permute.xlu0 %3860
      %3863 = vset.pattern.permute.xlu0 3
      %3864 = vperm.xlu0 %3863, %v3509
      %v3865 = vpop.permute.xlu0 %3864
      %v3867 = vadd.f32 %v3832, %v3841
      %v3868 = vadd.f32 %v3833, %v3845
      %v3869 = vadd.f32 %v3834, %v3849
      %v3870 = vadd.f32 %v3835, %v3853
      %v3871 = vadd.f32 %v3836, %v3857
      %v3872 = vadd.f32 %v3837, %v3861
      %v3873 = vadd.f32 %v3838, %v3865
      %v3874 = vmul.f32 %v3867, %v3867
      %v3875 = vmul.f32 %v3868, %v3868
      %v3876 = vmul.f32 %v3869, %v3869
      %v3877 = vmul.f32 %v3870, %v3870
      %v3878 = vmul.f32 %v3871, %v3871
      %v3879 = vmul.f32 %v3872, %v3872
      %v3880 = vmul.f32 %v3873, %v3873
      %v3881 = vlog2.pop %v3874
      %v3882 = vmul.f32 %v3881, 0.6931472
      %v3883 = vlog2.pop %v3875
      %v3884 = vmul.f32 %v3883, 0.6931472
      %v3885 = vlog2.pop %v3876
      %v3886 = vmul.f32 %v3885, 0.6931472
      %v3887 = vlog2.pop %v3877
      %v3888 = vmul.f32 %v3887, 0.6931472
      %v3889 = vlog2.pop %v3878
      %v3890 = vmul.f32 %v3889, 0.6931472
      %v3891 = vlog2.pop %v3879
      %v3892 = vmul.f32 %v3891, 0.6931472
      %v3893 = vlog2.pop %v3880
      %v3894 = vmul.f32 %v3893, 0.6931472
      %v3895 = vld [vmem:[%s6] sm:$0xff]
      %v3896 = vld [vmem:[%s6 + $0x8] sm:$0xff]
      %v3897 = vld [vmem:[%s6 + $0x10] sm:$0xff]
      %v3898 = vld [vmem:[%s6 + $0x18] sm:$0xff]
      %v3899 = vld [vmem:[%s6 + $0x20] sm:$0xff]
      %v3900 = vld [vmem:[%s6 + $0x28] sm:$0xff]
      %v3901 = vld [vmem:[%s6 + $0x30] sm:$0xff]
      %v3902 = vld [vmem:[%s6 + $0x38] sm:$0xff]
      %v3903 = vld [vmem:[%s6 + $0x40] sm:$0xff]
      %v3904 = vld [vmem:[%s6 + $0x48] sm:$0xff]
      %v3905 = vld [vmem:[%s6 + $0x50] sm:$0xff]
      %v3906 = vld [vmem:[%s6 + $0x58] sm:$0xff]
      %v3907 = vld [vmem:[%s6 + $0x60] sm:$0x3f]
      %v3908 = vld [vmem:[%s6 + $0x68] sm:$0x3f]
      %v3909 = vld [vmem:[%s6 + $0x60] sm:$0xc0]
      %v3910 = vld [vmem:[%s6 + $0x68] sm:$0xc0]
      %v3911 = vld [vmem:[%s6 + $0x70] sm:$0xff]
      %v3912 = vld [vmem:[%s6 + $0x78] sm:$0xff]
      %v3913 = vld [vmem:[%s6 + $0x80] sm:$0xff]
      %v3914 = vld [vmem:[%s6 + $0x88] sm:$0xff]
      %v3915 = vld [vmem:[%s6 + $0x90] sm:$0xff]
      %v3916 = vld [vmem:[%s6 + $0x98] sm:$0xff]
      %v3917 = vld [vmem:[%s6 + $0xa0] sm:$0xff]
      %v3918 = vld [vmem:[%s6 + $0xa8] sm:$0xff]
      %v3919 = vld [vmem:[%s6 + $0xb0] sm:$0xff]
      %v3920 = vld [vmem:[%s6 + $0xb8] sm:$0xff]
      %v3921 = vld [vmem:[%s6 + $0xc0] sm:$0x7]
      %v3922 = vld [vmem:[%s6 + $0xc8] sm:$0x7]
      %s3923 = scalar_lea.vmem %s6, 195
      %v3924 = vld [vmem:[%s3923] ss:$8 sm:$0x3]
      %s3925 = scalar_lea.vmem %s6, 196
      %v3926 = vld [vmem:[%s3925] ss:$8 sm:$0x3]
      %3927 = vxpose.xlu0.b32.start [1/16] %v3882, 128
      %3928 = vxpose.xlu0.b32.cont [2/16] %v3884, 128
      %3929 = vxpose.xlu0.b32.cont [3/16] %v3886, 128
      %3930 = vxpose.xlu0.b32.cont [4/16] %v3888, 128
      %3931 = vxpose.xlu0.b32.cont [5/16] %v3890, 128
      %3932 = vxpose.xlu0.b32.cont [6/16] %v3892, 128
      %3933 = vxpose.xlu0.b32.cont [7/16] %v3894, 128
      %3934 = vxpose.xlu0.b32.cont [8/16] 0.0, 128
      %3935 = vxpose.xlu0.b32.cont [9/16] 0.0, 128
      %3936 = vxpose.xlu0.b32.cont [10/16] 0.0, 128
      %3937 = vxpose.xlu0.b32.cont [11/16] 0.0, 128
      %3938 = vxpose.xlu0.b32.cont [12/16] 0.0, 128
      %3939 = vxpose.xlu0.b32.cont [13/16] 0.0, 128
      %3940 = vxpose.xlu0.b32.cont [14/16] 0.0, 128
      %3941 = vxpose.xlu0.b32.cont [15/16] 0.0, 128
      %3942 = vxpose.xlu0.b32.end [16/16] 0.0, 128
      %v3943 = vpop.trf.xlu0
      %v3944 = vpop.trf.xlu0
      %v3945 = vpop.trf.xlu0
      %v3946 = vpop.trf.xlu0
      %v3947 = vpop.trf.xlu0
      %v3948 = vpop.trf.xlu0
      %v3949 = vpop.trf.xlu0
      %v3950 = vpop.trf.xlu0
      %v3951 = vpop.trf.xlu0
      %v3952 = vpop.trf.xlu0
      %v3953 = vpop.trf.xlu0
      %v3954 = vpop.trf.xlu0
      %v3955 = vpop.trf.xlu0
      %v3956 = vpop.trf.xlu0
      %v3957 = vpop.trf.xlu0
      %v3958 = vpop.trf.xlu0
      %v3960 = vlaneseq
      %v3961 = vshrl.u32 %v3960, 7
      %v3962 = vsub.s32 0, %v3961
      %v3963 = vrot.slane %v3924, %v3962
      %v3964 = vlaneseq
      %v3965 = vshrl.u32 %v3964, 7
      %v3966 = vsub.s32 1, %v3965
      %v3967 = vrot.slane %v3924, %v3966
      %vm3970 = vcmask 441344
      %v3972 = vsel %vm3970, %v3943, 0
      %vm3974 = vcmask 1045504
      %v3976 = vsel %vm3974, %v3907, 0
      %v3979 = vsel %vm3974, %v3908, 0
      %3981 = vmatprep.subr.mxu0 %v3896
      %3982 = vmatpush1.msra.mxu0 %v3895
      %3983 = vmatprep.subr.mxu0 %v3898
      %3984 = vmatpush1.msra.mxu0 %v3897
      %3985 = vmatprep.subr.mxu0 %v3900
      %3986 = vmatpush1.msra.mxu0 %v3899
      %3987 = vmatprep.subr.mxu0 %v3902
      %3988 = vmatpush1.msra.mxu0 %v3901
      %3989 = vmatprep.subr.mxu0 %v3904
      %3990 = vmatpush1.msra.mxu0 %v3903
      %3991 = vmatprep.subr.mxu0 %v3906
      %3992 = vmatpush1.msra.mxu0 %v3905
      %3993 = vmatprep.subr.mxu0 %v3979
      %3994 = vmatpush1.msra.mxu0 %v3976
      %3995 = vmatprep.subr.mxu0 0.0
      %3996 = vmatpush1.msra.mxu0 0.0
      %3997 = vmatprep.subr.mxu0 0.0
      %3998 = vmatpush1.msra.mxu0 0.0
      %3999 = vmatprep.subr.mxu0 0.0
      %4000 = vmatpush1.msra.mxu0 0.0
      %4001 = vmatprep.subr.mxu0 0.0
      %4002 = vmatpush1.msra.mxu0 0.0
      %4003 = vmatprep.subr.mxu0 0.0
      %4004 = vmatpush1.msra.mxu0 0.0
      %4005 = vmatprep.subr.mxu0 0.0
      %4006 = vmatpush1.msra.mxu0 0.0
      %4007 = vmatprep.subr.mxu0 0.0
      %4008 = vmatpush1.msra.mxu0 0.0
      %4009 = vmatprep.subr.mxu0 0.0
      %4010 = vmatpush1.msra.mxu0 0.0
      %4011 = vmatprep.subr.mxu0 0.0
      %4012 = vmatpush1.msra.mxu0 0.0
      %4013 = vmatprep.subr.mxu0 0.0
      %4014 = vmatpush1.msra.mxu0 0.0
      %4015 = vmatprep.subr.mxu0 0.0
      %4016 = vmatpush1.msra.mxu0 0.0
      %4017 = vmatprep.subr.mxu0 0.0
      %4018 = vmatpush1.msra.mxu0 0.0
      %4019 = vmatprep.subr.mxu0 0.0
      %4020 = vmatpush1.msra.mxu0 0.0
      %4021 = vmatprep.subr.mxu0 0.0
      %4022 = vmatpush1.msra.mxu0 0.0
      %4023 = vmatprep.subr.mxu0 0.0
      %4024 = vmatpush1.msra.mxu0 0.0
      %4025 = vmatprep.subr.mxu0 0.0
      %4026 = vmatpush1.msra.mxu0 0.0
      %4027 = vmatprep.subr.mxu0 0.0
      %4028 = vmatpush1.msra.mxu0 0.0
      %4029 = vmatprep.subr.mxu0 0.0
      %4030 = vmatpush1.msra.mxu0 0.0
      %4031 = vmatprep.subr.mxu0 0.0
      %4032 = vmatpush1.msra.mxu0 0.0
      %4033 = vmatprep.subr.mxu0 0.0
      %4034 = vmatpush1.msra.mxu0 0.0
      %4035 = vmatprep.subr.mxu0 0.0
      %4036 = vmatpush1.msra.mxu0 0.0
      %4037 = vmatprep.subr.mxu0 0.0
      %4038 = vmatpush1.msra.mxu0 0.0
      %4039 = vmatprep.subr.mxu0 0.0
      %4040 = vmatpush1.msra.mxu0 0.0
      %4041 = vmatprep.subr.mxu0 0.0
      %4042 = vmatpush1.msra.mxu0 0.0
      %4043 = vmatprep.subr.mxu0 0.0
      %4044 = vmatpush1.msra.mxu0 0.0
      %4045 = vmatprep.mubr.f32.mxu0 0.0
      %4046 = vmatmul.mubr.f32.gmra.mrb[0].mxu0 %v3972
      %v4047 = vpop.f32.mrb[0].mxu0
      %v4048 = vadd.f32 %v3963, %v4047
      %v4049 = vpop.f32.mrb[0].mxu0
      %v4050 = vadd.f32 %v3967, %v4049
      %4051 = vdwg.mxu0
      %vm4066 = vcmask 1041408
      %v4067 = vrot.slane %v3909, 6
      %v4068 = vrot.slane %v3911, 6
      %v4069 = vsel %vm4066, %v4067, %v4068
      %v4070 = vrot.slane %v3910, 6
      %v4071 = vrot.slane %v3912, 6
      %v4072 = vsel %vm4066, %v4070, %v4071
      %v4073 = vrot.slane %v3913, 6
      %v4074 = vsel %vm4066, %v4068, %v4073
      %v4075 = vrot.slane %v3914, 6
      %v4076 = vsel %vm4066, %v4071, %v4075
      %v4077 = vrot.slane %v3915, 6
      %v4078 = vsel %vm4066, %v4073, %v4077
      %v4079 = vrot.slane %v3916, 6
      %v4080 = vsel %vm4066, %v4075, %v4079
      %v4081 = vrot.slane %v3917, 6
      %v4082 = vsel %vm4066, %v4077, %v4081
      %v4083 = vrot.slane %v3918, 6
      %v4084 = vsel %vm4066, %v4079, %v4083
      %v4085 = vrot.slane %v3919, 6
      %v4086 = vsel %vm4066, %v4081, %v4085
      %v4087 = vrot.slane %v3920, 6
      %v4088 = vsel %vm4066, %v4083, %v4087
      %v4089 = vrot.slane %v3921, 6
      %v4090 = vsel %vm4066, %v4085, %v4089
      %v4091 = vrot.slane %v3922, 6
      %v4092 = vsel %vm4066, %v4087, %v4091
      %vm4103 = vcmask 367616
      %v4105 = vsel %vm4103, 0.0, 0
      %vm4107 = vcmask 1044480
      %v4108 = vsel %vm4107, %v4090, 0
      %v4110 = vsel %vm4107, %v4092, 0
      %4112 = vmatprep.subr.mxu0 %v4072
      %4113 = vmatpush1.msra.mxu0 %v4069
      %4114 = vmatprep.subr.mxu0 %v4076
      %4115 = vmatpush1.msra.mxu0 %v4074
      %4116 = vmatprep.subr.mxu0 %v4080
      %4117 = vmatpush1.msra.mxu0 %v4078
      %4118 = vmatprep.subr.mxu0 %v4084
      %4119 = vmatpush1.msra.mxu0 %v4082
      %4120 = vmatprep.subr.mxu0 %v4088
      %4121 = vmatpush1.msra.mxu0 %v4086
      %4122 = vmatprep.subr.mxu0 %v4110
      %4123 = vmatpush1.msra.mxu0 %v4108
      %4124 = vmatprep.subr.mxu0 0.0
      %4125 = vmatpush1.msra.mxu0 0.0
      %4126 = vmatprep.subr.mxu0 0.0
      %4127 = vmatpush1.msra.mxu0 0.0
      %4128 = vmatprep.subr.mxu0 0.0
      %4129 = vmatpush1.msra.mxu0 0.0
      %4130 = vmatprep.subr.mxu0 0.0
      %4131 = vmatpush1.msra.mxu0 0.0
      %4132 = vmatprep.subr.mxu0 0.0
      %4133 = vmatpush1.msra.mxu0 0.0
      %4134 = vmatprep.subr.mxu0 0.0
      %4135 = vmatpush1.msra.mxu0 0.0
      %4136 = vmatprep.subr.mxu0 0.0
      %4137 = vmatpush1.msra.mxu0 0.0
      %4138 = vmatprep.subr.mxu0 0.0
      %4139 = vmatpush1.msra.mxu0 0.0
      %4140 = vmatprep.subr.mxu0 0.0
      %4141 = vmatpush1.msra.mxu0 0.0
      %4142 = vmatprep.subr.mxu0 0.0
      %4143 = vmatpush1.msra.mxu0 0.0
      %4144 = vmatprep.subr.mxu0 0.0
      %4145 = vmatpush1.msra.mxu0 0.0
      %4146 = vmatprep.subr.mxu0 0.0
      %4147 = vmatpush1.msra.mxu0 0.0
      %4148 = vmatprep.subr.mxu0 0.0
      %4149 = vmatpush1.msra.mxu0 0.0
      %4150 = vmatprep.subr.mxu0 0.0
      %4151 = vmatpush1.msra.mxu0 0.0
      %4152 = vmatprep.subr.mxu0 0.0
      %4153 = vmatpush1.msra.mxu0 0.0
      %4154 = vmatprep.subr.mxu0 0.0
      %4155 = vmatpush1.msra.mxu0 0.0
      %4156 = vmatprep.subr.mxu0 0.0
      %4157 = vmatpush1.msra.mxu0 0.0
      %4158 = vmatprep.subr.mxu0 0.0
      %4159 = vmatpush1.msra.mxu0 0.0
      %4160 = vmatprep.subr.mxu0 0.0
      %4161 = vmatpush1.msra.mxu0 0.0
      %4162 = vmatprep.subr.mxu0 0.0
      %4163 = vmatpush1.msra.mxu0 0.0
      %4164 = vmatprep.subr.mxu0 0.0
      %4165 = vmatpush1.msra.mxu0 0.0
      %4166 = vmatprep.subr.mxu0 0.0
      %4167 = vmatpush1.msra.mxu0 0.0
      %4168 = vmatprep.subr.mxu0 0.0
      %4169 = vmatpush1.msra.mxu0 0.0
      %4170 = vmatprep.subr.mxu0 0.0
      %4171 = vmatpush1.msra.mxu0 0.0
      %4172 = vmatprep.subr.mxu0 0.0
      %4173 = vmatpush1.msra.mxu0 0.0
      %4174 = vmatprep.subr.mxu0 0.0
      %4175 = vmatpush1.msra.mxu0 0.0
      %4176 = vmatprep.mubr.f32.mxu0 0.0
      %4177 = vmatmul.mubr.f32.gmra.mrb[0].mxu0 %v4105
      %v4178 = vpop.f32.mrb[0].mxu0
      %v4179 = vadd.f32 0.0, %v4178
      %v4180 = vpop.f32.mrb[0].mxu0
      %v4181 = vadd.f32 0.0, %v4180
      %4182 = vdwg.mxu0
      %v4183 = vadd.f32 %v4048, %v4179
      %v4184 = vadd.f32 %v4050, %v4181
      %v4185 = vsub.f32 0.0, %v4183
      %v4186 = vmul.f32 %v4185, 1.442695
      %v4187 = vpow.pop %v4186
      %v4188 = vadd.f32 %v4187, 1.0
      %v4189 = vrcp.pop %v4188
      %v4190 = vtanh.pop %v4183
      %v4191 = vtanh.pop %v4184
      %v4192 = vsub.f32 0.0, %v4184
      %v4193 = vmul.f32 %v4192, 1.442695
      %v4194 = vpow.pop %v4193
      %v4195 = vadd.f32 %v4194, 1.0
      %v4196 = vrcp.pop %v4195
      %v4197 = vmul.f32 %v4189, 0.0
      %4200 = vrot.lane.b32.xlu0 %v4190, 38
      %v4201 = vpop.permute.xlu0 %4200
      %4202 = vrot.lane.b32.xlu0 %v4191, 38
      %v4203 = vpop.permute.xlu0 %4202
      %vm4204 = vcmask 310272
      %v4205 = vsel %vm4204, %v4201, %v4203
      %v4207 = vmul.f32 %v4189, %v4205
      %4209 = vrot.lane.b32.xlu0 %v4207, 45
      %v4210 = vpop.permute.xlu0 %4209
      %v4212 = vadd.f32 %v4197, %v4210
      %v4213 = vtanh.pop %v4212
      %4215 = vrot.lane.b32.xlu0 %v4213, 90
      %v4216 = vpop.permute.xlu0 %4215
      %v4218 = vmul.f32 %v4196, %v4216
      %4220 = vrot.lane.b32.xlu0 %v4218, 121
      %v4221 = vpop.permute.xlu0 %4220
      %v4222 = vsel %vm4103, %v4221, 0
      %4224 = vmatprep.subr.mxu0 %v4072
      %4225 = vmatpush1.msra.mxu0 %v4069
      %4226 = vmatprep.subr.mxu0 %v4076
      %4227 = vmatpush1.msra.mxu0 %v4074
      %4228 = vmatprep.subr.mxu0 %v4080
      %4229 = vmatpush1.msra.mxu0 %v4078
      %4230 = vmatprep.subr.mxu0 %v4084
      %4231 = vmatpush1.msra.mxu0 %v4082
      %4232 = vmatprep.subr.mxu0 %v4088
      %4233 = vmatpush1.msra.mxu0 %v4086
      %4234 = vmatprep.subr.mxu0 %v4110
      %4235 = vmatpush1.msra.mxu0 %v4108
      %4236 = vmatprep.subr.mxu0 0.0
      %4237 = vmatpush1.msra.mxu0 0.0
      %4238 = vmatprep.subr.mxu0 0.0
      %4239 = vmatpush1.msra.mxu0 0.0
      %4240 = vmatprep.subr.mxu0 0.0
      %4241 = vmatpush1.msra.mxu0 0.0
      %4242 = vmatprep.subr.mxu0 0.0
      %4243 = vmatpush1.msra.mxu0 0.0
      %4244 = vmatprep.subr.mxu0 0.0
      %4245 = vmatpush1.msra.mxu0 0.0
      %4246 = vmatprep.subr.mxu0 0.0
      %4247 = vmatpush1.msra.mxu0 0.0
      %4248 = vmatprep.subr.mxu0 0.0
      %4249 = vmatpush1.msra.mxu0 0.0
      %4250 = vmatprep.subr.mxu0 0.0
      %4251 = vmatpush1.msra.mxu0 0.0
      %4252 = vmatprep.subr.mxu0 0.0
      %4253 = vmatpush1.msra.mxu0 0.0
      %4254 = vmatprep.subr.mxu0 0.0
      %4255 = vmatpush1.msra.mxu0 0.0
      %4256 = vmatprep.subr.mxu0 0.0
      %4257 = vmatpush1.msra.mxu0 0.0
      %4258 = vmatprep.subr.mxu0 0.0
      %4259 = vmatpush1.msra.mxu0 0.0
      %4260 = vmatprep.subr.mxu0 0.0
      %4261 = vmatpush1.msra.mxu0 0.0
      %4262 = vmatprep.subr.mxu0 0.0
      %4263 = vmatpush1.msra.mxu0 0.0
      %4264 = vmatprep.subr.mxu0 0.0
      %4265 = vmatpush1.msra.mxu0 0.0
      %4266 = vmatprep.subr.mxu0 0.0
      %4267 = vmatpush1.msra.mxu0 0.0
      %4268 = vmatprep.subr.mxu0 0.0
      %4269 = vmatpush1.msra.mxu0 0.0
      %4270 = vmatprep.subr.mxu0 0.0
      %4271 = vmatpush1.msra.mxu0 0.0
      %4272 = vmatprep.subr.mxu0 0.0
      %4273 = vmatpush1.msra.mxu0 0.0
      %4274 = vmatprep.subr.mxu0 0.0
      %4275 = vmatpush1.msra.mxu0 0.0
      %4276 = vmatprep.subr.mxu0 0.0
      %4277 = vmatpush1.msra.mxu0 0.0
      %4278 = vmatprep.subr.mxu0 0.0
      %4279 = vmatpush1.msra.mxu0 0.0
      %4280 = vmatprep.subr.mxu0 0.0
      %4281 = vmatpush1.msra.mxu0 0.0
      %4282 = vmatprep.subr.mxu0 0.0
      %4283 = vmatpush1.msra.mxu0 0.0
      %4284 = vmatprep.subr.mxu0 0.0
      %4285 = vmatpush1.msra.mxu0 0.0
      %4286 = vmatprep.subr.mxu0 0.0
      %4287 = vmatpush1.msra.mxu0 0.0
      %4288 = vmatprep.mubr.f32.mxu0 0.0
      %4289 = vmatmul.mubr.f32.gmra.mrb[0].mxu0 %v4222
      %v4290 = vpop.f32.mrb[0].mxu0
      %v4291 = vadd.f32 0.0, %v4290
      %v4292 = vpop.f32.mrb[0].mxu0
      %v4293 = vadd.f32 0.0, %v4292
      %4294 = vdwg.mxu0
      %v4297 = vrot.slane %v4291, 7
      %v4298 = vrot.slane %v4293, 7
      %v4301 = vadd.f32 %v4048, %v4297
      %v4302 = vadd.f32 %v4050, %v4298
      %v4303 = vsub.f32 0.0, %v4301
      %v4304 = vmul.f32 %v4303, 1.442695
      %v4305 = vpow.pop %v4304
      %v4306 = vadd.f32 %v4305, 1.0
      %v4307 = vrcp.pop %v4306
      %v4308 = vtanh.pop %v4301
      %v4309 = vtanh.pop %v4302
      %v4310 = vsub.f32 0.0, %v4302
      %v4311 = vmul.f32 %v4310, 1.442695
      %v4312 = vpow.pop %v4311
      %v4313 = vadd.f32 %v4312, 1.0
      %v4314 = vrcp.pop %v4313
      %v4316 = vrot.slane %v4212, 7
      %v4318 = vmul.f32 %v4307, %v4316
      %4321 = vrot.lane.b32.xlu0 %v4308, 38
      %v4322 = vpop.permute.xlu0 %4321
      %4323 = vrot.lane.b32.xlu0 %v4309, 38
      %v4324 = vpop.permute.xlu0 %4323
      %v4325 = vsel %vm4204, %v4322, %v4324
      %v4327 = vmul.f32 %v4307, %v4325
      %4329 = vrot.lane.b32.xlu0 %v4327, 45
      %v4330 = vpop.permute.xlu0 %4329
      %v4332 = vadd.f32 %v4318, %v4330
      %v4333 = vtanh.pop %v4332
      %4335 = vrot.lane.b32.xlu0 %v4333, 90
      %v4336 = vpop.permute.xlu0 %4335
      %v4338 = vmul.f32 %v4314, %v4336
      %v4340 = vrot.slane %v4338, 1
      %4341 = vrot.lane.b32.xlu0 %v4340, 121
      %v4342 = vpop.permute.xlu0 %4341
      %v4343 = vsel %vm4103, %v4342, 0
      %4345 = vmatprep.subr.mxu0 %v4072
      %4346 = vmatpush1.msra.mxu0 %v4069
      %4347 = vmatprep.subr.mxu0 %v4076
      %4348 = vmatpush1.msra.mxu0 %v4074
      %4349 = vmatprep.subr.mxu0 %v4080
      %4350 = vmatpush1.msra.mxu0 %v4078
      %4351 = vmatprep.subr.mxu0 %v4084
      %4352 = vmatpush1.msra.mxu0 %v4082
      %4353 = vmatprep.subr.mxu0 %v4088
      %4354 = vmatpush1.msra.mxu0 %v4086
      %4355 = vmatprep.subr.mxu0 %v4110
      %4356 = vmatpush1.msra.mxu0 %v4108
      %4357 = vmatprep.subr.mxu0 0.0
      %4358 = vmatpush1.msra.mxu0 0.0
      %4359 = vmatprep.subr.mxu0 0.0
      %4360 = vmatpush1.msra.mxu0 0.0
      %4361 = vmatprep.subr.mxu0 0.0
      %4362 = vmatpush1.msra.mxu0 0.0
      %4363 = vmatprep.subr.mxu0 0.0
      %4364 = vmatpush1.msra.mxu0 0.0
      %4365 = vmatprep.subr.mxu0 0.0
      %4366 = vmatpush1.msra.mxu0 0.0
      %4367 = vmatprep.subr.mxu0 0.0
      %4368 = vmatpush1.msra.mxu0 0.0
      %4369 = vmatprep.subr.mxu0 0.0
      %4370 = vmatpush1.msra.mxu0 0.0
      %4371 = vmatprep.subr.mxu0 0.0
      %4372 = vmatpush1.msra.mxu0 0.0
      %4373 = vmatprep.subr.mxu0 0.0
      %4374 = vmatpush1.msra.mxu0 0.0
      %4375 = vmatprep.subr.mxu0 0.0
      %4376 = vmatpush1.msra.mxu0 0.0
      %4377 = vmatprep.subr.mxu0 0.0
      %4378 = vmatpush1.msra.mxu0 0.0
      %4379 = vmatprep.subr.mxu0 0.0
      %4380 = vmatpush1.msra.mxu0 0.0
      %4381 = vmatprep.subr.mxu0 0.0
      %4382 = vmatpush1.msra.mxu0 0.0
      %4383 = vmatprep.subr.mxu0 0.0
      %4384 = vmatpush1.msra.mxu0 0.0
      %4385 = vmatprep.subr.mxu0 0.0
      %4386 = vmatpush1.msra.mxu0 0.0
      %4387 = vmatprep.subr.mxu0 0.0
      %4388 = vmatpush1.msra.mxu0 0.0
      %4389 = vmatprep.subr.mxu0 0.0
      %4390 = vmatpush1.msra.mxu0 0.0
      %4391 = vmatprep.subr.mxu0 0.0
      %4392 = vmatpush1.msra.mxu0 0.0
      %4393 = vmatprep.subr.mxu0 0.0
      %4394 = vmatpush1.msra.mxu0 0.0
      %4395 = vmatprep.subr.mxu0 0.0
      %4396 = vmatpush1.msra.mxu0 0.0
      %4397 = vmatprep.subr.mxu0 0.0
      %4398 = vmatpush1.msra.mxu0 0.0
      %4399 = vmatprep.subr.mxu0 0.0
      %4400 = vmatpush1.msra.mxu0 0.0
      %4401 = vmatprep.subr.mxu0 0.0
      %4402 = vmatpush1.msra.mxu0 0.0
      %4403 = vmatprep.subr.mxu0 0.0
      %4404 = vmatpush1.msra.mxu0 0.0
      %4405 = vmatprep.subr.mxu0 0.0
      %4406 = vmatpush1.msra.mxu0 0.0
      %4407 = vmatprep.subr.mxu0 0.0
      %4408 = vmatpush1.msra.mxu0 0.0
      %4409 = vmatprep.mubr.f32.mxu0 0.0
      %4410 = vmatmul.mubr.f32.gmra.mrb[0].mxu0 %v4343
      %v4411 = vpop.f32.mrb[0].mxu0
      %v4412 = vadd.f32 0.0, %v4411
      %v4413 = vpop.f32.mrb[0].mxu0
      %v4414 = vadd.f32 0.0, %v4413
      %4415 = vdwg.mxu0
      %v4418 = vrot.slane %v4412, 6
      %v4419 = vrot.slane %v4414, 6
      %v4422 = vadd.f32 %v4048, %v4418
      %v4423 = vadd.f32 %v4050, %v4419
      %v4424 = vsub.f32 0.0, %v4422
      %v4425 = vmul.f32 %v4424, 1.442695
      %v4426 = vpow.pop %v4425
      %v4427 = vadd.f32 %v4426, 1.0
      %v4428 = vrcp.pop %v4427
      %v4429 = vtanh.pop %v4422
      %v4430 = vtanh.pop %v4423
      %v4431 = vsub.f32 0.0, %v4423
      %v4432 = vmul.f32 %v4431, 1.442695
      %v4433 = vpow.pop %v4432
      %v4434 = vadd.f32 %v4433, 1.0
      %v4435 = vrcp.pop %v4434
      %v4437 = vrot.slane %v4332, 7
      %v4439 = vmul.f32 %v4428, %v4437
      %4442 = vrot.lane.b32.xlu0 %v4429, 38
      %v4443 = vpop.permute.xlu0 %4442
      %4444 = vrot.lane.b32.xlu0 %v4430, 38
      %v4445 = vpop.permute.xlu0 %4444
      %v4446 = vsel %vm4204, %v4443, %v4445
      %v4448 = vmul.f32 %v4428, %v4446
      %4450 = vrot.lane.b32.xlu0 %v4448, 45
      %v4451 = vpop.permute.xlu0 %4450
      %v4453 = vadd.f32 %v4439, %v4451
      %v4454 = vtanh.pop %v4453
      %4456 = vrot.lane.b32.xlu0 %v4454, 90
      %v4457 = vpop.permute.xlu0 %4456
      %v4459 = vmul.f32 %v4435, %v4457
      %v4461 = vlaneseq
      %v4462 = vshrl.u32 %v4461, 7
      %v4463 = vsub.s32 0, %v4462
      %v4464 = vrot.slane %v3926, %v4463
      %4465 = vrot.lane.b32.xlu0 %v4464, 7
      %v4466 = vpop.permute.xlu0 %4465
      %v4468 = vmul.f32 %v4459, %v4466
      %4470 = vrot.lane.b32.xlu0 %v4468, 121
      %v4471 = vpop.permute.xlu0 %4470
      %vm4473 = vcmask 362498
      %v4474 = vsel %vm4473, %v4471, 0.0
      %4475 = vadd.xlane.f32.xlu0 %v4474
      %v4476 = vpop.xlane.xlu0 %4475
      %4477 = vrot.lane.b32.xlu0 %v4464, 83
      %v4478 = vpop.permute.xlu0 %4477
      %v4480 = vadd.f32 %v4476, %v4478
      %v4481 = vmax.f32 %v4480, 0.0
      %vm4482 = vcmask 2050
      %4483 = vst.msk [vmem:[%s274 - $0x2] sm:$0x4] %vm4482, %v4481
      %p4484 = scmp.lt.s32.totalorder %s18, 1
      %s4485 = scalar_select %p4484, %s18, 1
      %s4486 = scalar_lea.vmem %s7, %s4485
      // Predicated region
      $region49: #{tsception2_forward.1} parent=47 // pred_check
        %p4487 = pneg %p188
      $region50: #{tsception2_forward.1} parent=47 // pred_check_branch
        %4489 = sbr.rel (%p4487) target = $region52
      $region51: #{tsception2_forward.1} parent=47 // pred_region
        _
      $region52: #{tsception2_forward.1} parent=47 // pred_fallthru
        _
    $region48: #{tsception2_forward.1} parent=5 // pred_fallthru
      _
    %p4490 = scmp.le.s32.totalorder 2, %s13
    // Predicated region
    $region53: #{tsception2_forward.1} parent=5 // pred_check
      %p4491 = pneg %p4490
    $region54: #{tsception2_forward.1} parent=5 // pred_check_branch
      %4493 = sbr.rel (%p4491) target = $region56
    $region55: #{tsception2_forward.1} parent=5 // pred_region
      %s4494 = ssub.s32 %s13, 2
      // Predicated region
      $region57: #{tsception2_forward.1} parent=55 // pred_check
        %p4495 = pneg %p194
      $region58: #{tsception2_forward.1} parent=55 // pred_check_branch
        %4497 = sbr.rel (%p4495) target = $region60
      $region59: #{tsception2_forward.1} parent=55 // pred_region
        %p4498 = scmp.lt.s32.totalorder %s19, 1
        %s4499 = scalar_select %p4498, %s19, 1
        %s4500 = scalar_lea.vmem %s7, %s4499
      $region60: #{tsception2_forward.1} parent=55 // pred_fallthru
        _
    $region56: #{tsception2_forward.1} parent=5 // pred_fallthru
      _
  $region6: #{tsception2_forward.1} parent=0 // loop_footer
    %s17 = sadd.s32 1, %s13
  $region7: #{tsception2_forward.1} parent=0 // loop_footer_branch
    %12 = sbr.rel target = $region3
  $region8: #{tsception2_forward.1} parent=0 // loop_exit
    _

</llo_original>
